<compile_context>
chip_gen: v7x
topology: tpu7x:2x2x1
jax: 0.10.0
libtpu: 0.0.40
codegen_flags: <defaults>
</compile_context>

<pallas_src>
import functools

import jax
import jax.numpy as jnp
import numpy as np
from jax.experimental import pallas as pl
from jax.experimental.pallas import tpu as pltpu

NEG_SLOPE = 0.01   # PyTorch nn.LeakyReLU default
LN_EPS = 1e-5      # PyTorch nn.LayerNorm default
LANE = 128


def _layernorm(x, gamma, beta):
    mu = jnp.mean(x, axis=-1, keepdims=True)
    xc = x - mu
    var = jnp.mean(xc * xc, axis=-1, keepdims=True)
    return xc * jax.lax.rsqrt(var + LN_EPS) * gamma + beta


def _leaky(x):
    return jnp.where(x >= 0, x, NEG_SLOPE * x)


# ----------------------------- fused generator kernel ------------------------
def generator_kernel(num_heads,
                     z_tile_ref, z_full_ref,
                     w_emb, w_q, w_kv, w_o, w_1, w_2, w_r1, w_r2, w_out,
                     bias_ref, b_kv_ref, b_out_ref,
                     out_ref):
    f32 = jnp.float32
    bf16 = jnp.bfloat16

    def mm(a, b):  # bf16 operands on the MXU, f32 accumulation
        return jnp.dot(a.astype(bf16), b, preferred_element_type=f32)

    # packed (1, H) parameters (kept f32 for VPU math)
    bias = bias_ref[...]
    b_emb, b_q, b_o = bias[0:1], bias[1:2], bias[2:3]       # b_q pre-scaled
    g1, be1 = bias[3:4], bias[4:5]
    b_1, b_2 = bias[5:6], bias[6:7]
    g2, be2 = bias[7:8], bias[8:9]
    b_r1, b_r2 = bias[9:10], bias[10:11]

    # ---- embedding: residual-stream row tile + full sequence (for K/V) ----
    h = mm(z_tile_ref[...], w_emb[...]) + b_emb              # (tm, H)  f32
    h_full = mm(z_full_ref[...], w_emb[...]) + b_emb         # (S,  H)  f32

    # ---- multi-head self-attention over the full sequence ----
    q = mm(h, w_q[...]) + b_q                                # scale folded in
    kv = mm(h_full, w_kv[...]) + b_kv_ref[...]               # (S, 2H)
    hidden = h.shape[-1]
    head = hidden // num_heads
    k, v = kv[:, :hidden], kv[:, hidden:]

    ctx = []
    for hi in range(num_heads):
        sl = slice(hi * head, (hi + 1) * head)
        s = jnp.einsum('qd,kd->qk', q[:, sl].astype(bf16), k[:, sl].astype(bf16),
                       preferred_element_type=f32)           # (tm, S) lane-dense
        m = jnp.max(s, axis=-1, keepdims=True)
        e = jnp.exp(s - m)
        p = e * pl.reciprocal(jnp.sum(e, axis=-1, keepdims=True), approx=True)
        ctx.append(jnp.dot(p.astype(bf16), v[:, sl].astype(bf16),
                           preferred_element_type=f32))      # (tm, head)
    ctx = jnp.concatenate(ctx, axis=-1)                      # (tm, H)
    attn = mm(ctx, w_o[...]) + b_o                           # single K=H matmul

    # ---- post-norm transformer encoder layer (dropout = identity) ----
    h = _layernorm(h + attn, g1, be1)
    ff = jnp.maximum(mm(h, w_1[...]) + b_1, 0.0)
    ff = mm(ff, w_2[...]) + b_2
    h = _layernorm(h + ff, g2, be2)

    # ---- generator head: LeakyReLU, ResidualBlock x2, Linear ----
    y = _leaky(h)
    y = y + _leaky(mm(y, w_r1[...]) + b_r1)
    y = y + _leaky(mm(y, w_r2[...]) + b_r2)
    out_ref[...] = mm(y, w_out[...]) + b_out_ref[...]        # (tm, 128-padded)


# --------------------------------- wrapper -----------------------------------
def _prep_kernel_params(params, num_heads, data_pad):
    """Fold softmax scale into Q, fuse K/V, cast matmul weights to bf16, pack
    the small (1,H) parameters, pad the output projection to a lane-dense slab."""
    bf16 = jnp.bfloat16
    H = params["w_emb"].shape[1]
    scale = 1.0 / float(np.sqrt(H // num_heads))

    w_list = [
        params["w_emb"].astype(bf16),
        (params["wq"] * scale).astype(bf16),
        jnp.concatenate([params["wk"], params["wv"]], axis=1).astype(bf16),
        params["wo"].astype(bf16),
        params["w1"].astype(bf16),
        params["w2"].astype(bf16),
        params["wr1"].astype(bf16),
        params["wr2"].astype(bf16),
    ]
    bias_pack = jnp.concatenate(
        [params["b_emb"], params["bq"] * scale, params["bo"],
         params["g1"], params["be1"], params["b1"], params["b2"],
         params["g2"], params["be2"], params["br1"], params["br2"]],
        axis=0).astype(jnp.float32)
    b_kv = jnp.concatenate([params["bk"], params["bv"]], axis=1).astype(jnp.float32)

    data_dim = params["w_out"].shape[1]
    pad = data_pad - data_dim
    w_list.append(jnp.pad(params["w_out"], ((0, 0), (0, pad))).astype(bf16))
    b_out = jnp.pad(params["b_out"], ((0, 0), (0, pad))).astype(jnp.float32)
    return w_list, bias_pack, b_kv, b_out


def run_generator(z, params, num_heads=2, row_tile=128,
                  single_buffer_invariants=True):
    S, zdim = z.shape
    data_dim = params["w_out"].shape[1]
    # On single-TC v5e/v6e a larger row_tile (<=512) amortizes per-step grid
    # overhead; keep >=2 steps on v7x so both TensorCores get work.
    tm = min(row_tile, S)
    assert S % tm == 0 and (tm % 8 == 0 or tm == S)
    data_pad = ((data_dim + LANE - 1) // LANE) * LANE

    w_list, bias_pack, b_kv, b_out_pad = _prep_kernel_params(
        params, num_heads, data_pad)

    grid = (S // tm,)
    kernel = functools.partial(generator_kernel, num_heads)

    def build(single_buffer):
        def inv_spec(a):
            kwargs = {}
            if single_buffer:
                # grid-invariant input: no double-buffering needed
                kwargs["pipeline_mode"] = pl.Buffered(1)
            return pl.BlockSpec(a.shape, lambda i: (0, 0), **kwargs)

        in_specs = ([pl.BlockSpec((tm, zdim), lambda i: (i, 0)),   # query tile
                     inv_spec(z)]                                  # full seq
                    + [inv_spec(a) for a in w_list]
                    + [inv_spec(bias_pack), inv_spec(b_kv), inv_spec(b_out_pad)])
        return pl.pallas_call(
            kernel,
            grid=grid,
            in_specs=in_specs,
            out_specs=pl.BlockSpec((tm, data_pad), lambda i: (i, 0)),
            out_shape=jax.ShapeDtypeStruct((S, data_pad), jnp.float32),
            compiler_params=pltpu.CompilerParams(
                dimension_semantics=("parallel",)),
        )

    args = (z, z, *w_list, bias_pack, b_kv, b_out_pad)
    if single_buffer_invariants:
        try:
            out = jax.block_until_ready(build(True)(*args))
        except Exception:  # pl.Buffered(1) unsupported -> default buffering
            out = build(False)(*args)
    else:
        out = build(False)(*args)
    return out[:, :data_dim]


# --------------------------- params & pure-JAX reference ---------------------
def init_params(key, z_dim, hidden_dim, data_dim):
    """Deterministic, PyTorch-Linear-style uniform init (no checkpoint load)."""
    keys = jax.random.split(key, 10)

    def lin(k, fan_in, fan_out):
        kw, kb = jax.random.split(k)
        bound = 1.0 / float(np.sqrt(fan_in))
        w = jax.random.uniform(kw, (fan_in, fan_out), jnp.float32, -bound, bound)
        b = jax.random.uniform(kb, (1, fan_out), jnp.float32, -bound, bound)
        return w, b

    p = {}
    p["w_emb"], p["b_emb"] = lin(keys[0], z_dim, hidden_dim)
    p["wq"], p["bq"] = lin(keys[1], hidden_dim, hidden_dim)
    p["wk"], p["bk"] = lin(keys[2], hidden_dim, hidden_dim)
    p["wv"], p["bv"] = lin(keys[3], hidden_dim, hidden_dim)
    p["wo"], p["bo"] = lin(keys[4], hidden_dim, hidden_dim)
    p["g1"] = jnp.ones((1, hidden_dim), jnp.float32)
    p["be1"] = jnp.zeros((1, hidden_dim), jnp.float32)
    p["g2"] = jnp.ones((1, hidden_dim), jnp.float32)
    p["be2"] = jnp.zeros((1, hidden_dim), jnp.float32)
    p["w1"], p["b1"] = lin(keys[5], hidden_dim, hidden_dim)   # dim_feedforward == H
    p["w2"], p["b2"] = lin(keys[6], hidden_dim, hidden_dim)
    p["wr1"], p["br1"] = lin(keys[7], hidden_dim, hidden_dim)
    p["wr2"], p["br2"] = lin(keys[8], hidden_dim, hidden_dim)
    p["w_out"], p["b_out"] = lin(keys[9], hidden_dim, data_dim)
    return p


def reference_forward(z, p, num_heads=2, mm_dtype=jnp.float32):
    """Pure-JAX reference of the same forward pass.  mm_dtype=bfloat16 mirrors
    the kernel's MXU operand precision (f32 accumulation) for validation."""
    f32 = jnp.float32

    def mm(a, b):
        return jnp.dot(a.astype(mm_dtype), b.astype(mm_dtype),
                       preferred_element_type=f32)

    def ln(x, g, b):
        mu = x.mean(-1, keepdims=True)
        var = ((x - mu) ** 2).mean(-1, keepdims=True)
        return (x - mu) / jnp.sqrt(var + LN_EPS) * g + b

    leaky = lambda x: jnp.where(x >= 0, x, NEG_SLOPE * x)

    h = mm(z, p["w_emb"]) + p["b_emb"]
    H = h.shape[-1]
    q = mm(h, p["wq"]) + p["bq"]
    k = mm(h, p["wk"]) + p["bk"]
    v = mm(h, p["wv"]) + p["bv"]
    hd = H // num_heads
    scale = 1.0 / float(np.sqrt(hd))
    heads = []
    for hi in range(num_heads):
        sl = slice(hi * hd, (hi + 1) * hd)
        s = mm(q[:, sl], k[:, sl].T) * scale
        heads.append(mm(jax.nn.softmax(s, axis=-1), v[:, sl]))
    attn = mm(jnp.concatenate(heads, axis=-1), p["wo"]) + p["bo"]
    h = ln(h + attn, p["g1"], p["be1"])
    ff = mm(jnp.maximum(mm(h, p["w1"]) + p["b1"], 0.0), p["w2"]) + p["b2"]
    h = ln(h + ff, p["g2"], p["be2"])
    y = leaky(h)
    t = mm(y, p["wr1"]) + p["br1"]
    y = y + leaky(t)
    t = mm(y, p["wr2"]) + p["br2"]
    y = y + leaky(t)
    return mm(y, p["w_out"]) + p["b_out"]


if __name__ == "__main__":
    # Small but MXU/lane-friendly row count; the (N, feat) input is one
    # unbatched sequence of length N under batch_first=False.
    S, NOISE_DIM, COND_DIM, HIDDEN_DIM, DATA_DIM, NUM_HEADS = 256, 16, 8, 32, 16, 2
    Z_DIM = NOISE_DIM + COND_DIM

    key = jax.random.PRNGKey(0)
    kz, kp = jax.random.split(key)
    z = jax.random.normal(kz, (S, Z_DIM), jnp.float32)
    params = init_params(kp, Z_DIM, HIDDEN_DIM, DATA_DIM)

    out = run_generator(z, params, num_heads=NUM_HEADS, row_tile=128)
    out = jax.block_until_ready(out)
    assert out.shape == (S, DATA_DIM), out.shape

    # Validate against a pure-JAX reference that mirrors the kernel's matmul
    # precision (bf16 operands, f32 accumulation); remaining differences are
    # the EUP approx-reciprocal softmax denominator and accumulation order.
    ref = reference_forward(z, params, num_heads=NUM_HEADS, mm_dtype=jnp.bfloat16)
    np.testing.assert_allclose(np.asarray(out), np.asarray(ref),
                               atol=1e-2, rtol=1e-2)
    print("KERNEL_OK")
</pallas_src>

<mosaic_0001>
module attributes {stable_mosaic.version = 11 : i64} {
  func.func @generator_kernel(%arg0: i32, %arg1: memref<128x24xf32, #tpu.memory_space<vmem>>, %arg2: memref<256x24xf32, #tpu.memory_space<vmem>>, %arg3: memref<24x32xbf16, #tpu.memory_space<vmem>>, %arg4: memref<32x32xbf16, #tpu.memory_space<vmem>>, %arg5: memref<32x64xbf16, #tpu.memory_space<vmem>>, %arg6: memref<32x32xbf16, #tpu.memory_space<vmem>>, %arg7: memref<32x32xbf16, #tpu.memory_space<vmem>>, %arg8: memref<32x32xbf16, #tpu.memory_space<vmem>>, %arg9: memref<32x32xbf16, #tpu.memory_space<vmem>>, %arg10: memref<32x32xbf16, #tpu.memory_space<vmem>>, %arg11: memref<32x128xbf16, #tpu.memory_space<vmem>>, %arg12: memref<11x32xf32, #tpu.memory_space<vmem>>, %arg13: memref<1x64xf32, #tpu.memory_space<vmem>>, %arg14: memref<1x128xf32, #tpu.memory_space<vmem>>, %arg15: memref<128x128xf32, #tpu.memory_space<vmem>>) attributes {dimension_semantics = [#tpu.dimension_semantics<parallel>], iteration_bounds = array<i64: 2>, scalar_prefetch = 0 : i64, scratch_operands = 0 : i64, tpu.core_type = #tpu.core_type<tc>, window_params = [{transform_indices = @transform_0, window_bounds = array<i64: 128, 24>}, {pipeline_mode = #tpu.pipeline_mode<synchronous>, transform_indices = @transform_1, window_bounds = array<i64: 256, 24>}, {pipeline_mode = #tpu.pipeline_mode<synchronous>, transform_indices = @transform_2, window_bounds = array<i64: 24, 32>}, {pipeline_mode = #tpu.pipeline_mode<synchronous>, transform_indices = @transform_3, window_bounds = array<i64: 32, 32>}, {pipeline_mode = #tpu.pipeline_mode<synchronous>, transform_indices = @transform_4, window_bounds = array<i64: 32, 64>}, {pipeline_mode = #tpu.pipeline_mode<synchronous>, transform_indices = @transform_5, window_bounds = array<i64: 32, 32>}, {pipeline_mode = #tpu.pipeline_mode<synchronous>, transform_indices = @transform_6, window_bounds = array<i64: 32, 32>}, {pipeline_mode = #tpu.pipeline_mode<synchronous>, transform_indices = @transform_7, window_bounds = array<i64: 32, 32>}, {pipeline_mode = #tpu.pipeline_mode<synchronous>, transform_indices = @transform_8, window_bounds = array<i64: 32, 32>}, {pipeline_mode = #tpu.pipeline_mode<synchronous>, transform_indices = @transform_9, window_bounds = array<i64: 32, 32>}, {pipeline_mode = #tpu.pipeline_mode<synchronous>, transform_indices = @transform_10, window_bounds = array<i64: 32, 128>}, {pipeline_mode = #tpu.pipeline_mode<synchronous>, transform_indices = @transform_11, window_bounds = array<i64: 11, 32>}, {pipeline_mode = #tpu.pipeline_mode<synchronous>, transform_indices = @transform_12, window_bounds = array<i64: 1, 64>}, {pipeline_mode = #tpu.pipeline_mode<synchronous>, transform_indices = @transform_13, window_bounds = array<i64: 1, 128>}, {transform_indices = @transform_14, window_bounds = array<i64: 128, 128>}]} {
    %c0 = arith.constant 0 : index
    %c0_0 = arith.constant 0 : index
    %0 = vector.load %arg12[%c0, %c0_0] : memref<11x32xf32, #tpu.memory_space<vmem>>, vector<11x32xf32>
    %1 = vector.extract_strided_slice %0 {offsets = [0, 0], sizes = [1, 32], strides = [1, 1]} : vector<11x32xf32> to vector<1x32xf32>
    %2 = vector.extract_strided_slice %0 {offsets = [1, 0], sizes = [1, 32], strides = [1, 1]} : vector<11x32xf32> to vector<1x32xf32>
    %3 = vector.extract_strided_slice %0 {offsets = [2, 0], sizes = [1, 32], strides = [1, 1]} : vector<11x32xf32> to vector<1x32xf32>
    %4 = vector.extract_strided_slice %0 {offsets = [3, 0], sizes = [1, 32], strides = [1, 1]} : vector<11x32xf32> to vector<1x32xf32>
    %5 = vector.extract_strided_slice %0 {offsets = [4, 0], sizes = [1, 32], strides = [1, 1]} : vector<11x32xf32> to vector<1x32xf32>
    %6 = vector.extract_strided_slice %0 {offsets = [5, 0], sizes = [1, 32], strides = [1, 1]} : vector<11x32xf32> to vector<1x32xf32>
    %7 = vector.extract_strided_slice %0 {offsets = [6, 0], sizes = [1, 32], strides = [1, 1]} : vector<11x32xf32> to vector<1x32xf32>
    %8 = vector.extract_strided_slice %0 {offsets = [7, 0], sizes = [1, 32], strides = [1, 1]} : vector<11x32xf32> to vector<1x32xf32>
    %9 = vector.extract_strided_slice %0 {offsets = [8, 0], sizes = [1, 32], strides = [1, 1]} : vector<11x32xf32> to vector<1x32xf32>
    %10 = vector.extract_strided_slice %0 {offsets = [9, 0], sizes = [1, 32], strides = [1, 1]} : vector<11x32xf32> to vector<1x32xf32>
    %11 = vector.extract_strided_slice %0 {offsets = [10, 0], sizes = [1, 32], strides = [1, 1]} : vector<11x32xf32> to vector<1x32xf32>
    %c0_1 = arith.constant 0 : index
    %c0_2 = arith.constant 0 : index
    %12 = vector.load %arg1[%c0_1, %c0_2] : memref<128x24xf32, #tpu.memory_space<vmem>>, vector<128x24xf32>
    %c0_3 = arith.constant 0 : index
    %c0_4 = arith.constant 0 : index
    %13 = vector.load %arg3[%c0_3, %c0_4] : memref<24x32xbf16, #tpu.memory_space<vmem>>, vector<24x32xbf16>
    %14 = arith.truncf %12 : vector<128x24xf32> to vector<128x24xbf16>
    %cst = arith.constant dense<0.000000e+00> : vector<128x32xf32>
    %15 = tpu.matmul %14, %13, %cst {dimension_numbers = #tpu.dot_dimension_numbers<[1], [0], [0], [1], [0, 0, 1, 1], [], []>} : vector<128x24xbf16>, vector<24x32xbf16>, vector<128x32xf32> -> vector<128x32xf32>
    %16 = vector.broadcast %1 : vector<1x32xf32> to vector<128x32xf32>
    %17 = arith.addf %15, %16 : vector<128x32xf32>
    %c0_5 = arith.constant 0 : index
    %c0_6 = arith.constant 0 : index
    %18 = vector.load %arg2[%c0_5, %c0_6] : memref<256x24xf32, #tpu.memory_space<vmem>>, vector<256x24xf32>
    %c0_7 = arith.constant 0 : index
    %c0_8 = arith.constant 0 : index
    %19 = vector.load %arg3[%c0_7, %c0_8] : memref<24x32xbf16, #tpu.memory_space<vmem>>, vector<24x32xbf16>
    %20 = arith.truncf %18 : vector<256x24xf32> to vector<256x24xbf16>
    %cst_9 = arith.constant dense<0.000000e+00> : vector<256x32xf32>
    %21 = tpu.matmul %20, %19, %cst_9 {dimension_numbers = #tpu.dot_dimension_numbers<[1], [0], [0], [1], [0, 0, 1, 1], [], []>} : vector<256x24xbf16>, vector<24x32xbf16>, vector<256x32xf32> -> vector<256x32xf32>
    %22 = vector.broadcast %1 : vector<1x32xf32> to vector<256x32xf32>
    %23 = arith.addf %21, %22 : vector<256x32xf32>
    %c0_10 = arith.constant 0 : index
    %c0_11 = arith.constant 0 : index
    %24 = vector.load %arg4[%c0_10, %c0_11] : memref<32x32xbf16, #tpu.memory_space<vmem>>, vector<32x32xbf16>
    %25 = arith.truncf %17 : vector<128x32xf32> to vector<128x32xbf16>
    %cst_12 = arith.constant dense<0.000000e+00> : vector<128x32xf32>
    %26 = tpu.matmul %25, %24, %cst_12 {dimension_numbers = #tpu.dot_dimension_numbers<[1], [0], [0], [1], [0, 0, 1, 1], [], []>} : vector<128x32xbf16>, vector<32x32xbf16>, vector<128x32xf32> -> vector<128x32xf32>
    %27 = vector.broadcast %2 : vector<1x32xf32> to vector<128x32xf32>
    %28 = arith.addf %26, %27 : vector<128x32xf32>
    %c0_13 = arith.constant 0 : index
    %c0_14 = arith.constant 0 : index
    %29 = vector.load %arg5[%c0_13, %c0_14] : memref<32x64xbf16, #tpu.memory_space<vmem>>, vector<32x64xbf16>
    %30 = arith.truncf %23 : vector<256x32xf32> to vector<256x32xbf16>
    %cst_15 = arith.constant dense<0.000000e+00> : vector<256x64xf32>
    %31 = tpu.matmul %30, %29, %cst_15 {dimension_numbers = #tpu.dot_dimension_numbers<[1], [0], [0], [1], [0, 0, 1, 1], [], []>} : vector<256x32xbf16>, vector<32x64xbf16>, vector<256x64xf32> -> vector<256x64xf32>
    %c0_16 = arith.constant 0 : index
    %c0_17 = arith.constant 0 : index
    %32 = vector.load %arg13[%c0_16, %c0_17] : memref<1x64xf32, #tpu.memory_space<vmem>>, vector<1x64xf32>
    %33 = vector.broadcast %32 : vector<1x64xf32> to vector<256x64xf32>
    %34 = arith.addf %31, %33 : vector<256x64xf32>
    %35 = vector.extract_strided_slice %34 {offsets = [0, 0], sizes = [256, 32], strides = [1, 1]} : vector<256x64xf32> to vector<256x32xf32>
    %36 = vector.extract_strided_slice %34 {offsets = [0, 32], sizes = [256, 32], strides = [1, 1]} : vector<256x64xf32> to vector<256x32xf32>
    %37 = vector.extract_strided_slice %28 {offsets = [0, 0], sizes = [128, 16], strides = [1, 1]} : vector<128x32xf32> to vector<128x16xf32>
    %38 = arith.truncf %37 : vector<128x16xf32> to vector<128x16xbf16>
    %39 = vector.extract_strided_slice %35 {offsets = [0, 0], sizes = [256, 16], strides = [1, 1]} : vector<256x32xf32> to vector<256x16xf32>
    %40 = arith.truncf %39 : vector<256x16xf32> to vector<256x16xbf16>
    "tpu.trace_start"() <{level = 10 : i32, message = "qd,kd->qk"}> : () -> ()
    %cst_18 = arith.constant dense<0.000000e+00> : vector<128x256xf32>
    %41 = tpu.matmul %38, %40, %cst_18 {dimension_numbers = #tpu.dot_dimension_numbers<[1], [1], [0], [0], [0, 0, 1, 0], [], []>} : vector<128x16xbf16>, vector<256x16xbf16>, vector<128x256xf32> -> vector<128x256xf32>
    "tpu.trace_stop"() : () -> ()
    %cst_19 = arith.constant dense<0xFF800000> : vector<128xf32>
    %42 = vector.multi_reduction <maximumf>, %41, %cst_19 [1] : vector<128x256xf32> to vector<128xf32>
    %43 = vector.shape_cast %42 : vector<128xf32> to vector<128x1xf32>
    %44 = vector.broadcast %43 : vector<128x1xf32> to vector<128x256xf32>
    %45 = arith.subf %41, %44 : vector<128x256xf32>
    %46 = math.exp %45 : vector<128x256xf32>
    %cst_20 = arith.constant dense<0.000000e+00> : vector<128xf32>
    %47 = vector.multi_reduction <add>, %46, %cst_20 [1] : vector<128x256xf32> to vector<128xf32>
    %48 = vector.shape_cast %47 : vector<128xf32> to vector<128x1xf32>
    %49 = tpu.reciprocal %48 {approx = true} : vector<128x1xf32> -> vector<128x1xf32>
    %50 = vector.broadcast %49 : vector<128x1xf32> to vector<128x256xf32>
    %51 = arith.mulf %46, %50 : vector<128x256xf32>
    %52 = arith.truncf %51 : vector<128x256xf32> to vector<128x256xbf16>
    %53 = vector.extract_strided_slice %36 {offsets = [0, 0], sizes = [256, 16], strides = [1, 1]} : vector<256x32xf32> to vector<256x16xf32>
    %54 = arith.truncf %53 : vector<256x16xf32> to vector<256x16xbf16>
    %cst_21 = arith.constant dense<0.000000e+00> : vector<128x16xf32>
    %55 = tpu.matmul %52, %54, %cst_21 {dimension_numbers = #tpu.dot_dimension_numbers<[1], [0], [0], [1], [0, 0, 1, 1], [], []>} : vector<128x256xbf16>, vector<256x16xbf16>, vector<128x16xf32> -> vector<128x16xf32>
    %56 = vector.extract_strided_slice %28 {offsets = [0, 16], sizes = [128, 16], strides = [1, 1]} : vector<128x32xf32> to vector<128x16xf32>
    %57 = arith.truncf %56 : vector<128x16xf32> to vector<128x16xbf16>
    %58 = vector.extract_strided_slice %35 {offsets = [0, 16], sizes = [256, 16], strides = [1, 1]} : vector<256x32xf32> to vector<256x16xf32>
    %59 = arith.truncf %58 : vector<256x16xf32> to vector<256x16xbf16>
    "tpu.trace_start"() <{level = 10 : i32, message = "qd,kd->qk"}> : () -> ()
    %cst_22 = arith.constant dense<0.000000e+00> : vector<128x256xf32>
    %60 = tpu.matmul %57, %59, %cst_22 {dimension_numbers = #tpu.dot_dimension_numbers<[1], [1], [0], [0], [0, 0, 1, 0], [], []>} : vector<128x16xbf16>, vector<256x16xbf16>, vector<128x256xf32> -> vector<128x256xf32>
    "tpu.trace_stop"() : () -> ()
    %cst_23 = arith.constant dense<0xFF800000> : vector<128xf32>
    %61 = vector.multi_reduction <maximumf>, %60, %cst_23 [1] : vector<128x256xf32> to vector<128xf32>
    %62 = vector.shape_cast %61 : vector<128xf32> to vector<128x1xf32>
    %63 = vector.broadcast %62 : vector<128x1xf32> to vector<128x256xf32>
    %64 = arith.subf %60, %63 : vector<128x256xf32>
    %65 = math.exp %64 : vector<128x256xf32>
    %cst_24 = arith.constant dense<0.000000e+00> : vector<128xf32>
    %66 = vector.multi_reduction <add>, %65, %cst_24 [1] : vector<128x256xf32> to vector<128xf32>
    %67 = vector.shape_cast %66 : vector<128xf32> to vector<128x1xf32>
    %68 = tpu.reciprocal %67 {approx = true} : vector<128x1xf32> -> vector<128x1xf32>
    %69 = vector.broadcast %68 : vector<128x1xf32> to vector<128x256xf32>
    %70 = arith.mulf %65, %69 : vector<128x256xf32>
    %71 = arith.truncf %70 : vector<128x256xf32> to vector<128x256xbf16>
    %72 = vector.extract_strided_slice %36 {offsets = [0, 16], sizes = [256, 16], strides = [1, 1]} : vector<256x32xf32> to vector<256x16xf32>
    %73 = arith.truncf %72 : vector<256x16xf32> to vector<256x16xbf16>
    %cst_25 = arith.constant dense<0.000000e+00> : vector<128x16xf32>
    %74 = tpu.matmul %71, %73, %cst_25 {dimension_numbers = #tpu.dot_dimension_numbers<[1], [0], [0], [1], [0, 0, 1, 1], [], []>} : vector<128x256xbf16>, vector<256x16xbf16>, vector<128x16xf32> -> vector<128x16xf32>
    %75 = tpu.concatenate %55, %74 in 1 : vector<128x16xf32>, vector<128x16xf32> -> vector<128x32xf32>
    %c0_26 = arith.constant 0 : index
    %c0_27 = arith.constant 0 : index
    %76 = vector.load %arg6[%c0_26, %c0_27] : memref<32x32xbf16, #tpu.memory_space<vmem>>, vector<32x32xbf16>
    %77 = arith.truncf %75 : vector<128x32xf32> to vector<128x32xbf16>
    %cst_28 = arith.constant dense<0.000000e+00> : vector<128x32xf32>
    %78 = tpu.matmul %77, %76, %cst_28 {dimension_numbers = #tpu.dot_dimension_numbers<[1], [0], [0], [1], [0, 0, 1, 1], [], []>} : vector<128x32xbf16>, vector<32x32xbf16>, vector<128x32xf32> -> vector<128x32xf32>
    %79 = vector.broadcast %3 : vector<1x32xf32> to vector<128x32xf32>
    %80 = arith.addf %78, %79 : vector<128x32xf32>
    %81 = arith.addf %17, %80 : vector<128x32xf32>
    %cst_29 = arith.constant dense<0.000000e+00> : vector<128xf32>
    %82 = vector.multi_reduction <add>, %81, %cst_29 [1] : vector<128x32xf32> to vector<128xf32>
    %83 = vector.shape_cast %82 : vector<128xf32> to vector<128x1xf32>
    %cst_30 = arith.constant 3.200000e+01 : f32
    %84 = vector.broadcast %cst_30 : f32 to vector<128x1xf32>
    %85 = arith.divf %83, %84 : vector<128x1xf32>
    %86 = vector.broadcast %85 : vector<128x1xf32> to vector<128x32xf32>
    %87 = arith.subf %81, %86 : vector<128x32xf32>
    %88 = arith.mulf %87, %87 : vector<128x32xf32>
    %cst_31 = arith.constant dense<0.000000e+00> : vector<128xf32>
    %89 = vector.multi_reduction <add>, %88, %cst_31 [1] : vector<128x32xf32> to vector<128xf32>
    %90 = vector.shape_cast %89 : vector<128xf32> to vector<128x1xf32>
    %cst_32 = arith.constant 3.200000e+01 : f32
    %91 = vector.broadcast %cst_32 : f32 to vector<128x1xf32>
    %92 = arith.divf %90, %91 : vector<128x1xf32>
    %cst_33 = arith.constant 9.99999974E-6 : f32
    %93 = vector.broadcast %cst_33 : f32 to vector<128x1xf32>
    %94 = arith.addf %92, %93 : vector<128x1xf32>
    %95 = math.rsqrt %94 : vector<128x1xf32>
    %96 = vector.broadcast %95 : vector<128x1xf32> to vector<128x32xf32>
    %97 = arith.mulf %87, %96 : vector<128x32xf32>
    %98 = vector.broadcast %4 : vector<1x32xf32> to vector<128x32xf32>
    %99 = arith.mulf %97, %98 : vector<128x32xf32>
    %100 = vector.broadcast %5 : vector<1x32xf32> to vector<128x32xf32>
    %101 = arith.addf %99, %100 : vector<128x32xf32>
    %c0_34 = arith.constant 0 : index
    %c0_35 = arith.constant 0 : index
    %102 = vector.load %arg7[%c0_34, %c0_35] : memref<32x32xbf16, #tpu.memory_space<vmem>>, vector<32x32xbf16>
    %103 = arith.truncf %101 : vector<128x32xf32> to vector<128x32xbf16>
    %cst_36 = arith.constant dense<0.000000e+00> : vector<128x32xf32>
    %104 = tpu.matmul %103, %102, %cst_36 {dimension_numbers = #tpu.dot_dimension_numbers<[1], [0], [0], [1], [0, 0, 1, 1], [], []>} : vector<128x32xbf16>, vector<32x32xbf16>, vector<128x32xf32> -> vector<128x32xf32>
    %105 = vector.broadcast %6 : vector<1x32xf32> to vector<128x32xf32>
    %106 = arith.addf %104, %105 : vector<128x32xf32>
    %cst_37 = arith.constant 0.000000e+00 : f32
    %107 = vector.broadcast %cst_37 : f32 to vector<128x32xf32>
    %108 = arith.maximumf %106, %107 : vector<128x32xf32>
    %c0_38 = arith.constant 0 : index
    %c0_39 = arith.constant 0 : index
    %109 = vector.load %arg8[%c0_38, %c0_39] : memref<32x32xbf16, #tpu.memory_space<vmem>>, vector<32x32xbf16>
    %110 = arith.truncf %108 : vector<128x32xf32> to vector<128x32xbf16>
    %cst_40 = arith.constant dense<0.000000e+00> : vector<128x32xf32>
    %111 = tpu.matmul %110, %109, %cst_40 {dimension_numbers = #tpu.dot_dimension_numbers<[1], [0], [0], [1], [0, 0, 1, 1], [], []>} : vector<128x32xbf16>, vector<32x32xbf16>, vector<128x32xf32> -> vector<128x32xf32>
    %112 = vector.broadcast %7 : vector<1x32xf32> to vector<128x32xf32>
    %113 = arith.addf %111, %112 : vector<128x32xf32>
    %114 = arith.addf %101, %113 : vector<128x32xf32>
    %cst_41 = arith.constant dense<0.000000e+00> : vector<128xf32>
    %115 = vector.multi_reduction <add>, %114, %cst_41 [1] : vector<128x32xf32> to vector<128xf32>
    %116 = vector.shape_cast %115 : vector<128xf32> to vector<128x1xf32>
    %cst_42 = arith.constant 3.200000e+01 : f32
    %117 = vector.broadcast %cst_42 : f32 to vector<128x1xf32>
    %118 = arith.divf %116, %117 : vector<128x1xf32>
    %119 = vector.broadcast %118 : vector<128x1xf32> to vector<128x32xf32>
    %120 = arith.subf %114, %119 : vector<128x32xf32>
    %121 = arith.mulf %120, %120 : vector<128x32xf32>
    %cst_43 = arith.constant dense<0.000000e+00> : vector<128xf32>
    %122 = vector.multi_reduction <add>, %121, %cst_43 [1] : vector<128x32xf32> to vector<128xf32>
    %123 = vector.shape_cast %122 : vector<128xf32> to vector<128x1xf32>
    %cst_44 = arith.constant 3.200000e+01 : f32
    %124 = vector.broadcast %cst_44 : f32 to vector<128x1xf32>
    %125 = arith.divf %123, %124 : vector<128x1xf32>
    %cst_45 = arith.constant 9.99999974E-6 : f32
    %126 = vector.broadcast %cst_45 : f32 to vector<128x1xf32>
    %127 = arith.addf %125, %126 : vector<128x1xf32>
    %128 = math.rsqrt %127 : vector<128x1xf32>
    %129 = vector.broadcast %128 : vector<128x1xf32> to vector<128x32xf32>
    %130 = arith.mulf %120, %129 : vector<128x32xf32>
    %131 = vector.broadcast %8 : vector<1x32xf32> to vector<128x32xf32>
    %132 = arith.mulf %130, %131 : vector<128x32xf32>
    %133 = vector.broadcast %9 : vector<1x32xf32> to vector<128x32xf32>
    %134 = arith.addf %132, %133 : vector<128x32xf32>
    %cst_46 = arith.constant 0.000000e+00 : f32
    %135 = vector.broadcast %cst_46 : f32 to vector<128x32xf32>
    %136 = arith.cmpf oge, %134, %135 : vector<128x32xf32>
    %cst_47 = arith.constant 0.00999999977 : f32
    %137 = vector.broadcast %cst_47 : f32 to vector<128x32xf32>
    %138 = arith.mulf %137, %134 : vector<128x32xf32>
    %139 = arith.select %136, %134, %138 : vector<128x32xi1>, vector<128x32xf32>
    %c0_48 = arith.constant 0 : index
    %c0_49 = arith.constant 0 : index
    %140 = vector.load %arg9[%c0_48, %c0_49] : memref<32x32xbf16, #tpu.memory_space<vmem>>, vector<32x32xbf16>
    %141 = arith.truncf %139 : vector<128x32xf32> to vector<128x32xbf16>
    %cst_50 = arith.constant dense<0.000000e+00> : vector<128x32xf32>
    %142 = tpu.matmul %141, %140, %cst_50 {dimension_numbers = #tpu.dot_dimension_numbers<[1], [0], [0], [1], [0, 0, 1, 1], [], []>} : vector<128x32xbf16>, vector<32x32xbf16>, vector<128x32xf32> -> vector<128x32xf32>
    %143 = vector.broadcast %10 : vector<1x32xf32> to vector<128x32xf32>
    %144 = arith.addf %142, %143 : vector<128x32xf32>
    %cst_51 = arith.constant 0.000000e+00 : f32
    %145 = vector.broadcast %cst_51 : f32 to vector<128x32xf32>
    %146 = arith.cmpf oge, %144, %145 : vector<128x32xf32>
    %cst_52 = arith.constant 0.00999999977 : f32
    %147 = vector.broadcast %cst_52 : f32 to vector<128x32xf32>
    %148 = arith.mulf %147, %144 : vector<128x32xf32>
    %149 = arith.select %146, %144, %148 : vector<128x32xi1>, vector<128x32xf32>
    %150 = arith.addf %139, %149 : vector<128x32xf32>
    %c0_53 = arith.constant 0 : index
    %c0_54 = arith.constant 0 : index
    %151 = vector.load %arg10[%c0_53, %c0_54] : memref<32x32xbf16, #tpu.memory_space<vmem>>, vector<32x32xbf16>
    %152 = arith.truncf %150 : vector<128x32xf32> to vector<128x32xbf16>
    %cst_55 = arith.constant dense<0.000000e+00> : vector<128x32xf32>
    %153 = tpu.matmul %152, %151, %cst_55 {dimension_numbers = #tpu.dot_dimension_numbers<[1], [0], [0], [1], [0, 0, 1, 1], [], []>} : vector<128x32xbf16>, vector<32x32xbf16>, vector<128x32xf32> -> vector<128x32xf32>
    %154 = vector.broadcast %11 : vector<1x32xf32> to vector<128x32xf32>
    %155 = arith.addf %153, %154 : vector<128x32xf32>
    %cst_56 = arith.constant 0.000000e+00 : f32
    %156 = vector.broadcast %cst_56 : f32 to vector<128x32xf32>
    %157 = arith.cmpf oge, %155, %156 : vector<128x32xf32>
    %cst_57 = arith.constant 0.00999999977 : f32
    %158 = vector.broadcast %cst_57 : f32 to vector<128x32xf32>
    %159 = arith.mulf %158, %155 : vector<128x32xf32>
    %160 = arith.select %157, %155, %159 : vector<128x32xi1>, vector<128x32xf32>
    %161 = arith.addf %150, %160 : vector<128x32xf32>
    %c0_58 = arith.constant 0 : index
    %c0_59 = arith.constant 0 : index
    %162 = vector.load %arg11[%c0_58, %c0_59] : memref<32x128xbf16, #tpu.memory_space<vmem>>, vector<32x128xbf16>
    %163 = arith.truncf %161 : vector<128x32xf32> to vector<128x32xbf16>
    %cst_60 = arith.constant dense<0.000000e+00> : vector<128x128xf32>
    %164 = tpu.matmul %163, %162, %cst_60 {dimension_numbers = #tpu.dot_dimension_numbers<[1], [0], [0], [1], [0, 0, 1, 1], [], []>} : vector<128x32xbf16>, vector<32x128xbf16>, vector<128x128xf32> -> vector<128x128xf32>
    %c0_61 = arith.constant 0 : index
    %c0_62 = arith.constant 0 : index
    %165 = vector.load %arg14[%c0_61, %c0_62] : memref<1x128xf32, #tpu.memory_space<vmem>>, vector<1x128xf32>
    %166 = vector.broadcast %165 : vector<1x128xf32> to vector<128x128xf32>
    %167 = arith.addf %164, %166 : vector<128x128xf32>
    %c0_63 = arith.constant 0 : index
    %c0_64 = arith.constant 0 : index
    %168 = vector.load %arg15[%c0_63, %c0_64] : memref<128x128xf32, #tpu.memory_space<vmem>>, vector<128x128xf32>
    tpu.vector_store %arg15[%c0_63, %c0_64], %167 {strides = array<i32>} : memref<128x128xf32, #tpu.memory_space<vmem>>, vector<128x128xf32>,
    return
  }
  func.func @transform_0(%arg0: i32) -> (i32, i32) {
    %c0_i32 = arith.constant 0 : i32
    %c0_i32_0 = arith.constant 0 : i32
    return %arg0, %c0_i32 : i32, i32
  }
  func.func @transform_1(%arg0: i32) -> (i32, i32) {
    %c0_i32 = arith.constant 0 : i32
    %c0_i32_0 = arith.constant 0 : i32
    %c0_i32_1 = arith.constant 0 : i32
    return %c0_i32, %c0_i32_0 : i32, i32
  }
  func.func @transform_2(%arg0: i32) -> (i32, i32) {
    %c0_i32 = arith.constant 0 : i32
    %c0_i32_0 = arith.constant 0 : i32
    %c0_i32_1 = arith.constant 0 : i32
    return %c0_i32, %c0_i32_0 : i32, i32
  }
  func.func @transform_3(%arg0: i32) -> (i32, i32) {
    %c0_i32 = arith.constant 0 : i32
    %c0_i32_0 = arith.constant 0 : i32
    %c0_i32_1 = arith.constant 0 : i32
    return %c0_i32, %c0_i32_0 : i32, i32
  }
  func.func @transform_4(%arg0: i32) -> (i32, i32) {
    %c0_i32 = arith.constant 0 : i32
    %c0_i32_0 = arith.constant 0 : i32
    %c0_i32_1 = arith.constant 0 : i32
    return %c0_i32, %c0_i32_0 : i32, i32
  }
  func.func @transform_5(%arg0: i32) -> (i32, i32) {
    %c0_i32 = arith.constant 0 : i32
    %c0_i32_0 = arith.constant 0 : i32
    %c0_i32_1 = arith.constant 0 : i32
    return %c0_i32, %c0_i32_0 : i32, i32
  }
  func.func @transform_6(%arg0: i32) -> (i32, i32) {
    %c0_i32 = arith.constant 0 : i32
    %c0_i32_0 = arith.constant 0 : i32
    %c0_i32_1 = arith.constant 0 : i32
    return %c0_i32, %c0_i32_0 : i32, i32
  }
  func.func @transform_7(%arg0: i32) -> (i32, i32) {
    %c0_i32 = arith.constant 0 : i32
    %c0_i32_0 = arith.constant 0 : i32
    %c0_i32_1 = arith.constant 0 : i32
    return %c0_i32, %c0_i32_0 : i32, i32
  }
  func.func @transform_8(%arg0: i32) -> (i32, i32) {
    %c0_i32 = arith.constant 0 : i32
    %c0_i32_0 = arith.constant 0 : i32
    %c0_i32_1 = arith.constant 0 : i32
    return %c0_i32, %c0_i32_0 : i32, i32
  }
  func.func @transform_9(%arg0: i32) -> (i32, i32) {
    %c0_i32 = arith.constant 0 : i32
    %c0_i32_0 = arith.constant 0 : i32
    %c0_i32_1 = arith.constant 0 : i32
    return %c0_i32, %c0_i32_0 : i32, i32
  }
  func.func @transform_10(%arg0: i32) -> (i32, i32) {
    %c0_i32 = arith.constant 0 : i32
    %c0_i32_0 = arith.constant 0 : i32
    %c0_i32_1 = arith.constant 0 : i32
    return %c0_i32, %c0_i32_0 : i32, i32
  }
  func.func @transform_11(%arg0: i32) -> (i32, i32) {
    %c0_i32 = arith.constant 0 : i32
    %c0_i32_0 = arith.constant 0 : i32
    %c0_i32_1 = arith.constant 0 : i32
    return %c0_i32, %c0_i32_0 : i32, i32
  }
  func.func @transform_12(%arg0: i32) -> (i32, i32) {
    %c0_i32 = arith.constant 0 : i32
    %c0_i32_0 = arith.constant 0 : i32
    %c0_i32_1 = arith.constant 0 : i32
    return %c0_i32, %c0_i32_0 : i32, i32
  }
  func.func @transform_13(%arg0: i32) -> (i32, i32) {
    %c0_i32 = arith.constant 0 : i32
    %c0_i32_0 = arith.constant 0 : i32
    %c0_i32_1 = arith.constant 0 : i32
    return %c0_i32, %c0_i32_0 : i32, i32
  }
  func.func @transform_14(%arg0: i32) -> (i32, i32) {
    %c0_i32 = arith.constant 0 : i32
    %c0_i32_0 = arith.constant 0 : i32
    return %arg0, %c0_i32 : i32, i32
  }
}

module attributes {stable_mosaic.version = 11 : i64} {
  func.func @generator_kernel(%arg0: i32, %arg1: memref<128x24xf32, #tpu.memory_space<vmem>>, %arg2: memref<256x24xf32, #tpu.memory_space<vmem>>, %arg3: memref<24x32xbf16, #tpu.memory_space<vmem>>, %arg4: memref<32x32xbf16, #tpu.memory_space<vmem>>, %arg5: memref<32x64xbf16, #tpu.memory_space<vmem>>, %arg6: memref<32x32xbf16, #tpu.memory_space<vmem>>, %arg7: memref<32x32xbf16, #tpu.memory_space<vmem>>, %arg8: memref<32x32xbf16, #tpu.memory_space<vmem>>, %arg9: memref<32x32xbf16, #tpu.memory_space<vmem>>, %arg10: memref<32x32xbf16, #tpu.memory_space<vmem>>, %arg11: memref<32x128xbf16, #tpu.memory_space<vmem>>, %arg12: memref<11x32xf32, #tpu.memory_space<vmem>>, %arg13: memref<1x64xf32, #tpu.memory_space<vmem>>, %arg14: memref<1x128xf32, #tpu.memory_space<vmem>>, %arg15: memref<128x128xf32, #tpu.memory_space<vmem>>) attributes {dimension_semantics = [#tpu.dimension_semantics<parallel>], iteration_bounds = array<i64: 2>, scalar_prefetch = 0 : i64, scratch_operands = 0 : i64, tpu.core_type = #tpu.core_type<tc>, window_params = [{transform_indices = @transform_0, window_bounds = array<i64: 128, 24>}, {pipeline_mode = #tpu.pipeline_mode<synchronous>, transform_indices = @transform_1, window_bounds = array<i64: 256, 24>}, {pipeline_mode = #tpu.pipeline_mode<synchronous>, transform_indices = @transform_2, window_bounds = array<i64: 24, 32>}, {pipeline_mode = #tpu.pipeline_mode<synchronous>, transform_indices = @transform_3, window_bounds = array<i64: 32, 32>}, {pipeline_mode = #tpu.pipeline_mode<synchronous>, transform_indices = @transform_4, window_bounds = array<i64: 32, 64>}, {pipeline_mode = #tpu.pipeline_mode<synchronous>, transform_indices = @transform_5, window_bounds = array<i64: 32, 32>}, {pipeline_mode = #tpu.pipeline_mode<synchronous>, transform_indices = @transform_6, window_bounds = array<i64: 32, 32>}, {pipeline_mode = #tpu.pipeline_mode<synchronous>, transform_indices = @transform_7, window_bounds = array<i64: 32, 32>}, {pipeline_mode = #tpu.pipeline_mode<synchronous>, transform_indices = @transform_8, window_bounds = array<i64: 32, 32>}, {pipeline_mode = #tpu.pipeline_mode<synchronous>, transform_indices = @transform_9, window_bounds = array<i64: 32, 32>}, {pipeline_mode = #tpu.pipeline_mode<synchronous>, transform_indices = @transform_10, window_bounds = array<i64: 32, 128>}, {pipeline_mode = #tpu.pipeline_mode<synchronous>, transform_indices = @transform_11, window_bounds = array<i64: 11, 32>}, {pipeline_mode = #tpu.pipeline_mode<synchronous>, transform_indices = @transform_12, window_bounds = array<i64: 1, 64>}, {pipeline_mode = #tpu.pipeline_mode<synchronous>, transform_indices = @transform_13, window_bounds = array<i64: 1, 128>}, {transform_indices = @transform_14, window_bounds = array<i64: 128, 128>}]} {
    %c0 = arith.constant 0 : index
    %c0_0 = arith.constant 0 : index
    %0 = vector.load %arg12[%c0, %c0_0] : memref<11x32xf32, #tpu.memory_space<vmem>>, vector<11x32xf32>
    %1 = vector.extract_strided_slice %0 {offsets = [0, 0], sizes = [1, 32], strides = [1, 1]} : vector<11x32xf32> to vector<1x32xf32>
    %2 = vector.extract_strided_slice %0 {offsets = [1, 0], sizes = [1, 32], strides = [1, 1]} : vector<11x32xf32> to vector<1x32xf32>
    %3 = vector.extract_strided_slice %0 {offsets = [2, 0], sizes = [1, 32], strides = [1, 1]} : vector<11x32xf32> to vector<1x32xf32>
    %4 = vector.extract_strided_slice %0 {offsets = [3, 0], sizes = [1, 32], strides = [1, 1]} : vector<11x32xf32> to vector<1x32xf32>
    %5 = vector.extract_strided_slice %0 {offsets = [4, 0], sizes = [1, 32], strides = [1, 1]} : vector<11x32xf32> to vector<1x32xf32>
    %6 = vector.extract_strided_slice %0 {offsets = [5, 0], sizes = [1, 32], strides = [1, 1]} : vector<11x32xf32> to vector<1x32xf32>
    %7 = vector.extract_strided_slice %0 {offsets = [6, 0], sizes = [1, 32], strides = [1, 1]} : vector<11x32xf32> to vector<1x32xf32>
    %8 = vector.extract_strided_slice %0 {offsets = [7, 0], sizes = [1, 32], strides = [1, 1]} : vector<11x32xf32> to vector<1x32xf32>
    %9 = vector.extract_strided_slice %0 {offsets = [8, 0], sizes = [1, 32], strides = [1, 1]} : vector<11x32xf32> to vector<1x32xf32>
    %10 = vector.extract_strided_slice %0 {offsets = [9, 0], sizes = [1, 32], strides = [1, 1]} : vector<11x32xf32> to vector<1x32xf32>
    %11 = vector.extract_strided_slice %0 {offsets = [10, 0], sizes = [1, 32], strides = [1, 1]} : vector<11x32xf32> to vector<1x32xf32>
    %c0_1 = arith.constant 0 : index
    %c0_2 = arith.constant 0 : index
    %12 = vector.load %arg1[%c0_1, %c0_2] : memref<128x24xf32, #tpu.memory_space<vmem>>, vector<128x24xf32>
    %c0_3 = arith.constant 0 : index
    %c0_4 = arith.constant 0 : index
    %13 = vector.load %arg3[%c0_3, %c0_4] : memref<24x32xbf16, #tpu.memory_space<vmem>>, vector<24x32xbf16>
    %14 = arith.truncf %12 : vector<128x24xf32> to vector<128x24xbf16>
    %cst = arith.constant dense<0.000000e+00> : vector<128x32xf32>
    %15 = tpu.matmul %14, %13, %cst {dimension_numbers = #tpu.dot_dimension_numbers<[1], [0], [0], [1], [0, 0, 1, 1], [], []>} : vector<128x24xbf16>, vector<24x32xbf16>, vector<128x32xf32> -> vector<128x32xf32>
    %16 = vector.broadcast %1 : vector<1x32xf32> to vector<128x32xf32>
    %17 = arith.addf %15, %16 : vector<128x32xf32>
    %c0_5 = arith.constant 0 : index
    %c0_6 = arith.constant 0 : index
    %18 = vector.load %arg2[%c0_5, %c0_6] : memref<256x24xf32, #tpu.memory_space<vmem>>, vector<256x24xf32>
    %c0_7 = arith.constant 0 : index
    %c0_8 = arith.constant 0 : index
    %19 = vector.load %arg3[%c0_7, %c0_8] : memref<24x32xbf16, #tpu.memory_space<vmem>>, vector<24x32xbf16>
    %20 = arith.truncf %18 : vector<256x24xf32> to vector<256x24xbf16>
    %cst_9 = arith.constant dense<0.000000e+00> : vector<256x32xf32>
    %21 = tpu.matmul %20, %19, %cst_9 {dimension_numbers = #tpu.dot_dimension_numbers<[1], [0], [0], [1], [0, 0, 1, 1], [], []>} : vector<256x24xbf16>, vector<24x32xbf16>, vector<256x32xf32> -> vector<256x32xf32>
    %22 = vector.broadcast %1 : vector<1x32xf32> to vector<256x32xf32>
    %23 = arith.addf %21, %22 : vector<256x32xf32>
    %c0_10 = arith.constant 0 : index
    %c0_11 = arith.constant 0 : index
    %24 = vector.load %arg4[%c0_10, %c0_11] : memref<32x32xbf16, #tpu.memory_space<vmem>>, vector<32x32xbf16>
    %25 = arith.truncf %17 : vector<128x32xf32> to vector<128x32xbf16>
    %cst_12 = arith.constant dense<0.000000e+00> : vector<128x32xf32>
    %26 = tpu.matmul %25, %24, %cst_12 {dimension_numbers = #tpu.dot_dimension_numbers<[1], [0], [0], [1], [0, 0, 1, 1], [], []>} : vector<128x32xbf16>, vector<32x32xbf16>, vector<128x32xf32> -> vector<128x32xf32>
    %27 = vector.broadcast %2 : vector<1x32xf32> to vector<128x32xf32>
    %28 = arith.addf %26, %27 : vector<128x32xf32>
    %c0_13 = arith.constant 0 : index
    %c0_14 = arith.constant 0 : index
    %29 = vector.load %arg5[%c0_13, %c0_14] : memref<32x64xbf16, #tpu.memory_space<vmem>>, vector<32x64xbf16>
    %30 = arith.truncf %23 : vector<256x32xf32> to vector<256x32xbf16>
    %cst_15 = arith.constant dense<0.000000e+00> : vector<256x64xf32>
    %31 = tpu.matmul %30, %29, %cst_15 {dimension_numbers = #tpu.dot_dimension_numbers<[1], [0], [0], [1], [0, 0, 1, 1], [], []>} : vector<256x32xbf16>, vector<32x64xbf16>, vector<256x64xf32> -> vector<256x64xf32>
    %c0_16 = arith.constant 0 : index
    %c0_17 = arith.constant 0 : index
    %32 = vector.load %arg13[%c0_16, %c0_17] : memref<1x64xf32, #tpu.memory_space<vmem>>, vector<1x64xf32>
    %33 = vector.broadcast %32 : vector<1x64xf32> to vector<256x64xf32>
    %34 = arith.addf %31, %33 : vector<256x64xf32>
    %35 = vector.extract_strided_slice %34 {offsets = [0, 0], sizes = [256, 32], strides = [1, 1]} : vector<256x64xf32> to vector<256x32xf32>
    %36 = vector.extract_strided_slice %34 {offsets = [0, 32], sizes = [256, 32], strides = [1, 1]} : vector<256x64xf32> to vector<256x32xf32>
    %37 = vector.extract_strided_slice %28 {offsets = [0, 0], sizes = [128, 16], strides = [1, 1]} : vector<128x32xf32> to vector<128x16xf32>
    %38 = arith.truncf %37 : vector<128x16xf32> to vector<128x16xbf16>
    %39 = vector.extract_strided_slice %35 {offsets = [0, 0], sizes = [256, 16], strides = [1, 1]} : vector<256x32xf32> to vector<256x16xf32>
    %40 = arith.truncf %39 : vector<256x16xf32> to vector<256x16xbf16>
    "tpu.trace_start"() <{level = 10 : i32, message = "qd,kd->qk"}> : () -> ()
    %cst_18 = arith.constant dense<0.000000e+00> : vector<128x256xf32>
    %41 = tpu.matmul %38, %40, %cst_18 {dimension_numbers = #tpu.dot_dimension_numbers<[1], [1], [0], [0], [0, 0, 1, 0], [], []>} : vector<128x16xbf16>, vector<256x16xbf16>, vector<128x256xf32> -> vector<128x256xf32>
    "tpu.trace_stop"() : () -> ()
    %cst_19 = arith.constant dense<0xFF800000> : vector<128xf32>
    %42 = vector.multi_reduction <maximumf>, %41, %cst_19 [1] : vector<128x256xf32> to vector<128xf32>
    %43 = vector.shape_cast %42 : vector<128xf32> to vector<128x1xf32>
    %44 = vector.broadcast %43 : vector<128x1xf32> to vector<128x256xf32>
    %45 = arith.subf %41, %44 : vector<128x256xf32>
    %46 = math.exp %45 : vector<128x256xf32>
    %cst_20 = arith.constant dense<0.000000e+00> : vector<128xf32>
    %47 = vector.multi_reduction <add>, %46, %cst_20 [1] : vector<128x256xf32> to vector<128xf32>
    %48 = vector.shape_cast %47 : vector<128xf32> to vector<128x1xf32>
    %49 = tpu.reciprocal %48 {approx = true} : vector<128x1xf32> -> vector<128x1xf32>
    %50 = vector.broadcast %49 : vector<128x1xf32> to vector<128x256xf32>
    %51 = arith.mulf %46, %50 : vector<128x256xf32>
    %52 = arith.truncf %51 : vector<128x256xf32> to vector<128x256xbf16>
    %53 = vector.extract_strided_slice %36 {offsets = [0, 0], sizes = [256, 16], strides = [1, 1]} : vector<256x32xf32> to vector<256x16xf32>
    %54 = arith.truncf %53 : vector<256x16xf32> to vector<256x16xbf16>
    %cst_21 = arith.constant dense<0.000000e+00> : vector<128x16xf32>
    %55 = tpu.matmul %52, %54, %cst_21 {dimension_numbers = #tpu.dot_dimension_numbers<[1], [0], [0], [1], [0, 0, 1, 1], [], []>} : vector<128x256xbf16>, vector<256x16xbf16>, vector<128x16xf32> -> vector<128x16xf32>
    %56 = vector.extract_strided_slice %28 {offsets = [0, 16], sizes = [128, 16], strides = [1, 1]} : vector<128x32xf32> to vector<128x16xf32>
    %57 = arith.truncf %56 : vector<128x16xf32> to vector<128x16xbf16>
    %58 = vector.extract_strided_slice %35 {offsets = [0, 16], sizes = [256, 16], strides = [1, 1]} : vector<256x32xf32> to vector<256x16xf32>
    %59 = arith.truncf %58 : vector<256x16xf32> to vector<256x16xbf16>
    "tpu.trace_start"() <{level = 10 : i32, message = "qd,kd->qk"}> : () -> ()
    %cst_22 = arith.constant dense<0.000000e+00> : vector<128x256xf32>
    %60 = tpu.matmul %57, %59, %cst_22 {dimension_numbers = #tpu.dot_dimension_numbers<[1], [1], [0], [0], [0, 0, 1, 0], [], []>} : vector<128x16xbf16>, vector<256x16xbf16>, vector<128x256xf32> -> vector<128x256xf32>
    "tpu.trace_stop"() : () -> ()
    %cst_23 = arith.constant dense<0xFF800000> : vector<128xf32>
    %61 = vector.multi_reduction <maximumf>, %60, %cst_23 [1] : vector<128x256xf32> to vector<128xf32>
    %62 = vector.shape_cast %61 : vector<128xf32> to vector<128x1xf32>
    %63 = vector.broadcast %62 : vector<128x1xf32> to vector<128x256xf32>
    %64 = arith.subf %60, %63 : vector<128x256xf32>
    %65 = math.exp %64 : vector<128x256xf32>
    %cst_24 = arith.constant dense<0.000000e+00> : vector<128xf32>
    %66 = vector.multi_reduction <add>, %65, %cst_24 [1] : vector<128x256xf32> to vector<128xf32>
    %67 = vector.shape_cast %66 : vector<128xf32> to vector<128x1xf32>
    %68 = tpu.reciprocal %67 {approx = true} : vector<128x1xf32> -> vector<128x1xf32>
    %69 = vector.broadcast %68 : vector<128x1xf32> to vector<128x256xf32>
    %70 = arith.mulf %65, %69 : vector<128x256xf32>
    %71 = arith.truncf %70 : vector<128x256xf32> to vector<128x256xbf16>
    %72 = vector.extract_strided_slice %36 {offsets = [0, 16], sizes = [256, 16], strides = [1, 1]} : vector<256x32xf32> to vector<256x16xf32>
    %73 = arith.truncf %72 : vector<256x16xf32> to vector<256x16xbf16>
    %cst_25 = arith.constant dense<0.000000e+00> : vector<128x16xf32>
    %74 = tpu.matmul %71, %73, %cst_25 {dimension_numbers = #tpu.dot_dimension_numbers<[1], [0], [0], [1], [0, 0, 1, 1], [], []>} : vector<128x256xbf16>, vector<256x16xbf16>, vector<128x16xf32> -> vector<128x16xf32>
    %75 = tpu.concatenate %55, %74 in 1 : vector<128x16xf32>, vector<128x16xf32> -> vector<128x32xf32>
    %c0_26 = arith.constant 0 : index
    %c0_27 = arith.constant 0 : index
    %76 = vector.load %arg6[%c0_26, %c0_27] : memref<32x32xbf16, #tpu.memory_space<vmem>>, vector<32x32xbf16>
    %77 = arith.truncf %75 : vector<128x32xf32> to vector<128x32xbf16>
    %cst_28 = arith.constant dense<0.000000e+00> : vector<128x32xf32>
    %78 = tpu.matmul %77, %76, %cst_28 {dimension_numbers = #tpu.dot_dimension_numbers<[1], [0], [0], [1], [0, 0, 1, 1], [], []>} : vector<128x32xbf16>, vector<32x32xbf16>, vector<128x32xf32> -> vector<128x32xf32>
    %79 = vector.broadcast %3 : vector<1x32xf32> to vector<128x32xf32>
    %80 = arith.addf %78, %79 : vector<128x32xf32>
    %81 = arith.addf %17, %80 : vector<128x32xf32>
    %cst_29 = arith.constant dense<0.000000e+00> : vector<128xf32>
    %82 = vector.multi_reduction <add>, %81, %cst_29 [1] : vector<128x32xf32> to vector<128xf32>
    %83 = vector.shape_cast %82 : vector<128xf32> to vector<128x1xf32>
    %cst_30 = arith.constant 3.200000e+01 : f32
    %84 = vector.broadcast %cst_30 : f32 to vector<128x1xf32>
    %85 = arith.divf %83, %84 : vector<128x1xf32>
    %86 = vector.broadcast %85 : vector<128x1xf32> to vector<128x32xf32>
    %87 = arith.subf %81, %86 : vector<128x32xf32>
    %88 = arith.mulf %87, %87 : vector<128x32xf32>
    %cst_31 = arith.constant dense<0.000000e+00> : vector<128xf32>
    %89 = vector.multi_reduction <add>, %88, %cst_31 [1] : vector<128x32xf32> to vector<128xf32>
    %90 = vector.shape_cast %89 : vector<128xf32> to vector<128x1xf32>
    %cst_32 = arith.constant 3.200000e+01 : f32
    %91 = vector.broadcast %cst_32 : f32 to vector<128x1xf32>
    %92 = arith.divf %90, %91 : vector<128x1xf32>
    %cst_33 = arith.constant 9.99999974E-6 : f32
    %93 = vector.broadcast %cst_33 : f32 to vector<128x1xf32>
    %94 = arith.addf %92, %93 : vector<128x1xf32>
    %95 = math.rsqrt %94 : vector<128x1xf32>
    %96 = vector.broadcast %95 : vector<128x1xf32> to vector<128x32xf32>
    %97 = arith.mulf %87, %96 : vector<128x32xf32>
    %98 = vector.broadcast %4 : vector<1x32xf32> to vector<128x32xf32>
    %99 = arith.mulf %97, %98 : vector<128x32xf32>
    %100 = vector.broadcast %5 : vector<1x32xf32> to vector<128x32xf32>
    %101 = arith.addf %99, %100 : vector<128x32xf32>
    %c0_34 = arith.constant 0 : index
    %c0_35 = arith.constant 0 : index
    %102 = vector.load %arg7[%c0_34, %c0_35] : memref<32x32xbf16, #tpu.memory_space<vmem>>, vector<32x32xbf16>
    %103 = arith.truncf %101 : vector<128x32xf32> to vector<128x32xbf16>
    %cst_36 = arith.constant dense<0.000000e+00> : vector<128x32xf32>
    %104 = tpu.matmul %103, %102, %cst_36 {dimension_numbers = #tpu.dot_dimension_numbers<[1], [0], [0], [1], [0, 0, 1, 1], [], []>} : vector<128x32xbf16>, vector<32x32xbf16>, vector<128x32xf32> -> vector<128x32xf32>
    %105 = vector.broadcast %6 : vector<1x32xf32> to vector<128x32xf32>
    %106 = arith.addf %104, %105 : vector<128x32xf32>
    %cst_37 = arith.constant 0.000000e+00 : f32
    %107 = vector.broadcast %cst_37 : f32 to vector<128x32xf32>
    %108 = arith.maximumf %106, %107 : vector<128x32xf32>
    %c0_38 = arith.constant 0 : index
    %c0_39 = arith.constant 0 : index
    %109 = vector.load %arg8[%c0_38, %c0_39] : memref<32x32xbf16, #tpu.memory_space<vmem>>, vector<32x32xbf16>
    %110 = arith.truncf %108 : vector<128x32xf32> to vector<128x32xbf16>
    %cst_40 = arith.constant dense<0.000000e+00> : vector<128x32xf32>
    %111 = tpu.matmul %110, %109, %cst_40 {dimension_numbers = #tpu.dot_dimension_numbers<[1], [0], [0], [1], [0, 0, 1, 1], [], []>} : vector<128x32xbf16>, vector<32x32xbf16>, vector<128x32xf32> -> vector<128x32xf32>
    %112 = vector.broadcast %7 : vector<1x32xf32> to vector<128x32xf32>
    %113 = arith.addf %111, %112 : vector<128x32xf32>
    %114 = arith.addf %101, %113 : vector<128x32xf32>
    %cst_41 = arith.constant dense<0.000000e+00> : vector<128xf32>
    %115 = vector.multi_reduction <add>, %114, %cst_41 [1] : vector<128x32xf32> to vector<128xf32>
    %116 = vector.shape_cast %115 : vector<128xf32> to vector<128x1xf32>
    %cst_42 = arith.constant 3.200000e+01 : f32
    %117 = vector.broadcast %cst_42 : f32 to vector<128x1xf32>
    %118 = arith.divf %116, %117 : vector<128x1xf32>
    %119 = vector.broadcast %118 : vector<128x1xf32> to vector<128x32xf32>
    %120 = arith.subf %114, %119 : vector<128x32xf32>
    %121 = arith.mulf %120, %120 : vector<128x32xf32>
    %cst_43 = arith.constant dense<0.000000e+00> : vector<128xf32>
    %122 = vector.multi_reduction <add>, %121, %cst_43 [1] : vector<128x32xf32> to vector<128xf32>
    %123 = vector.shape_cast %122 : vector<128xf32> to vector<128x1xf32>
    %cst_44 = arith.constant 3.200000e+01 : f32
    %124 = vector.broadcast %cst_44 : f32 to vector<128x1xf32>
    %125 = arith.divf %123, %124 : vector<128x1xf32>
    %cst_45 = arith.constant 9.99999974E-6 : f32
    %126 = vector.broadcast %cst_45 : f32 to vector<128x1xf32>
    %127 = arith.addf %125, %126 : vector<128x1xf32>
    %128 = math.rsqrt %127 : vector<128x1xf32>
    %129 = vector.broadcast %128 : vector<128x1xf32> to vector<128x32xf32>
    %130 = arith.mulf %120, %129 : vector<128x32xf32>
    %131 = vector.broadcast %8 : vector<1x32xf32> to vector<128x32xf32>
    %132 = arith.mulf %130, %131 : vector<128x32xf32>
    %133 = vector.broadcast %9 : vector<1x32xf32> to vector<128x32xf32>
    %134 = arith.addf %132, %133 : vector<128x32xf32>
    %cst_46 = arith.constant 0.000000e+00 : f32
    %135 = vector.broadcast %cst_46 : f32 to vector<128x32xf32>
    %136 = arith.cmpf oge, %134, %135 : vector<128x32xf32>
    %cst_47 = arith.constant 0.00999999977 : f32
    %137 = vector.broadcast %cst_47 : f32 to vector<128x32xf32>
    %138 = arith.mulf %137, %134 : vector<128x32xf32>
    %139 = arith.select %136, %134, %138 : vector<128x32xi1>, vector<128x32xf32>
    %c0_48 = arith.constant 0 : index
    %c0_49 = arith.constant 0 : index
    %140 = vector.load %arg9[%c0_48, %c0_49] : memref<32x32xbf16, #tpu.memory_space<vmem>>, vector<32x32xbf16>
    %141 = arith.truncf %139 : vector<128x32xf32> to vector<128x32xbf16>
    %cst_50 = arith.constant dense<0.000000e+00> : vector<128x32xf32>
    %142 = tpu.matmul %141, %140, %cst_50 {dimension_numbers = #tpu.dot_dimension_numbers<[1], [0], [0], [1], [0, 0, 1, 1], [], []>} : vector<128x32xbf16>, vector<32x32xbf16>, vector<128x32xf32> -> vector<128x32xf32>
    %143 = vector.broadcast %10 : vector<1x32xf32> to vector<128x32xf32>
    %144 = arith.addf %142, %143 : vector<128x32xf32>
    %cst_51 = arith.constant 0.000000e+00 : f32
    %145 = vector.broadcast %cst_51 : f32 to vector<128x32xf32>
    %146 = arith.cmpf oge, %144, %145 : vector<128x32xf32>
    %cst_52 = arith.constant 0.00999999977 : f32
    %147 = vector.broadcast %cst_52 : f32 to vector<128x32xf32>
    %148 = arith.mulf %147, %144 : vector<128x32xf32>
    %149 = arith.select %146, %144, %148 : vector<128x32xi1>, vector<128x32xf32>
    %150 = arith.addf %139, %149 : vector<128x32xf32>
    %c0_53 = arith.constant 0 : index
    %c0_54 = arith.constant 0 : index
    %151 = vector.load %arg10[%c0_53, %c0_54] : memref<32x32xbf16, #tpu.memory_space<vmem>>, vector<32x32xbf16>
    %152 = arith.truncf %150 : vector<128x32xf32> to vector<128x32xbf16>
    %cst_55 = arith.constant dense<0.000000e+00> : vector<128x32xf32>
    %153 = tpu.matmul %152, %151, %cst_55 {dimension_numbers = #tpu.dot_dimension_numbers<[1], [0], [0], [1], [0, 0, 1, 1], [], []>} : vector<128x32xbf16>, vector<32x32xbf16>, vector<128x32xf32> -> vector<128x32xf32>
    %154 = vector.broadcast %11 : vector<1x32xf32> to vector<128x32xf32>
    %155 = arith.addf %153, %154 : vector<128x32xf32>
    %cst_56 = arith.constant 0.000000e+00 : f32
    %156 = vector.broadcast %cst_56 : f32 to vector<128x32xf32>
    %157 = arith.cmpf oge, %155, %156 : vector<128x32xf32>
    %cst_57 = arith.constant 0.00999999977 : f32
    %158 = vector.broadcast %cst_57 : f32 to vector<128x32xf32>
    %159 = arith.mulf %158, %155 : vector<128x32xf32>
    %160 = arith.select %157, %155, %159 : vector<128x32xi1>, vector<128x32xf32>
    %161 = arith.addf %150, %160 : vector<128x32xf32>
    %c0_58 = arith.constant 0 : index
    %c0_59 = arith.constant 0 : index
    %162 = vector.load %arg11[%c0_58, %c0_59] : memref<32x128xbf16, #tpu.memory_space<vmem>>, vector<32x128xbf16>
    %163 = arith.truncf %161 : vector<128x32xf32> to vector<128x32xbf16>
    %cst_60 = arith.constant dense<0.000000e+00> : vector<128x128xf32>
    %164 = tpu.matmul %163, %162, %cst_60 {dimension_numbers = #tpu.dot_dimension_numbers<[1], [0], [0], [1], [0, 0, 1, 1], [], []>} : vector<128x32xbf16>, vector<32x128xbf16>, vector<128x128xf32> -> vector<128x128xf32>
    %c0_61 = arith.constant 0 : index
    %c0_62 = arith.constant 0 : index
    %165 = vector.load %arg14[%c0_61, %c0_62] : memref<1x128xf32, #tpu.memory_space<vmem>>, vector<1x128xf32>
    %166 = vector.broadcast %165 : vector<1x128xf32> to vector<128x128xf32>
    %167 = arith.addf %164, %166 : vector<128x128xf32>
    %c0_63 = arith.constant 0 : index
    %c0_64 = arith.constant 0 : index
    %168 = vector.load %arg15[%c0_63, %c0_64] : memref<128x128xf32, #tpu.memory_space<vmem>>, vector<128x128xf32>
    tpu.vector_store %arg15[%c0_63, %c0_64], %167 {strides = array<i32>} : memref<128x128xf32, #tpu.memory_space<vmem>>, vector<128x128xf32>,
    return
  }
  func.func @transform_0(%arg0: i32) -> (i32, i32) {
    %c0_i32 = arith.constant 0 : i32
    %c0_i32_0 = arith.constant 0 : i32
    return %arg0, %c0_i32 : i32, i32
  }
  func.func @transform_1(%arg0: i32) -> (i32, i32) {
    %c0_i32 = arith.constant 0 : i32
    %c0_i32_0 = arith.constant 0 : i32
    %c0_i32_1 = arith.constant 0 : i32
    return %c0_i32, %c0_i32_0 : i32, i32
  }
  func.func @transform_2(%arg0: i32) -> (i32, i32) {
    %c0_i32 = arith.constant 0 : i32
    %c0_i32_0 = arith.constant 0 : i32
    %c0_i32_1 = arith.constant 0 : i32
    return %c0_i32, %c0_i32_0 : i32, i32
  }
  func.func @transform_3(%arg0: i32) -> (i32, i32) {
    %c0_i32 = arith.constant 0 : i32
    %c0_i32_0 = arith.constant 0 : i32
    %c0_i32_1 = arith.constant 0 : i32
    return %c0_i32, %c0_i32_0 : i32, i32
  }
  func.func @transform_4(%arg0: i32) -> (i32, i32) {
    %c0_i32 = arith.constant 0 : i32
    %c0_i32_0 = arith.constant 0 : i32
    %c0_i32_1 = arith.constant 0 : i32
    return %c0_i32, %c0_i32_0 : i32, i32
  }
  func.func @transform_5(%arg0: i32) -> (i32, i32) {
    %c0_i32 = arith.constant 0 : i32
    %c0_i32_0 = arith.constant 0 : i32
    %c0_i32_1 = arith.constant 0 : i32
    return %c0_i32, %c0_i32_0 : i32, i32
  }
  func.func @transform_6(%arg0: i32) -> (i32, i32) {
    %c0_i32 = arith.constant 0 : i32
    %c0_i32_0 = arith.constant 0 : i32
    %c0_i32_1 = arith.constant 0 : i32
    return %c0_i32, %c0_i32_0 : i32, i32
  }
  func.func @transform_7(%arg0: i32) -> (i32, i32) {
    %c0_i32 = arith.constant 0 : i32
    %c0_i32_0 = arith.constant 0 : i32
    %c0_i32_1 = arith.constant 0 : i32
    return %c0_i32, %c0_i32_0 : i32, i32
  }
  func.func @transform_8(%arg0: i32) -> (i32, i32) {
    %c0_i32 = arith.constant 0 : i32
    %c0_i32_0 = arith.constant 0 : i32
    %c0_i32_1 = arith.constant 0 : i32
    return %c0_i32, %c0_i32_0 : i32, i32
  }
  func.func @transform_9(%arg0: i32) -> (i32, i32) {
    %c0_i32 = arith.constant 0 : i32
    %c0_i32_0 = arith.constant 0 : i32
    %c0_i32_1 = arith.constant 0 : i32
    return %c0_i32, %c0_i32_0 : i32, i32
  }
  func.func @transform_10(%arg0: i32) -> (i32, i32) {
    %c0_i32 = arith.constant 0 : i32
    %c0_i32_0 = arith.constant 0 : i32
    %c0_i32_1 = arith.constant 0 : i32
    return %c0_i32, %c0_i32_0 : i32, i32
  }
  func.func @transform_11(%arg0: i32) -> (i32, i32) {
    %c0_i32 = arith.constant 0 : i32
    %c0_i32_0 = arith.constant 0 : i32
    %c0_i32_1 = arith.constant 0 : i32
    return %c0_i32, %c0_i32_0 : i32, i32
  }
  func.func @transform_12(%arg0: i32) -> (i32, i32) {
    %c0_i32 = arith.constant 0 : i32
    %c0_i32_0 = arith.constant 0 : i32
    %c0_i32_1 = arith.constant 0 : i32
    return %c0_i32, %c0_i32_0 : i32, i32
  }
  func.func @transform_13(%arg0: i32) -> (i32, i32) {
    %c0_i32 = arith.constant 0 : i32
    %c0_i32_0 = arith.constant 0 : i32
    %c0_i32_1 = arith.constant 0 : i32
    return %c0_i32, %c0_i32_0 : i32, i32
  }
  func.func @transform_14(%arg0: i32) -> (i32, i32) {
    %c0_i32 = arith.constant 0 : i32
    %c0_i32_0 = arith.constant 0 : i32
    return %arg0, %c0_i32 : i32, i32
  }
}

</mosaic_0001>

<llo_original>
// kernel: tpu_custom_call.1
$region0: #{tpu_custom_call.1}
  #allocation0 [shape = 'u32[]', space=smem, size = 0x4, offset = 0x4, fixed_abs, tag = 'smem constant byte address 0x4 - core index']
  #allocation1 [shape = 'u32[144,128]{1,0:T(1,128)}', space=vmem, size = 0x12000, scoped, tag = 'internal scratch']
  %s0 = inlined_call_operand.vmem [shape: f32[256,24], index: 0, kind: input, shape index: {}]
  %s1 = inlined_call_operand.vmem [shape: f32[256,24], index: 1, kind: input, shape index: {}]
  %s2 = inlined_call_operand.vmem [shape: bf16[24,32], index: 2, kind: input, shape index: {}]
  %s3 = inlined_call_operand.vmem [shape: bf16[32,32], index: 3, kind: input, shape index: {}]
  %s4 = inlined_call_operand.vmem [shape: bf16[32,64], index: 4, kind: input, shape index: {}]
  %s5 = inlined_call_operand.vmem [shape: bf16[32,32], index: 5, kind: input, shape index: {}]
  %s6 = inlined_call_operand.vmem [shape: bf16[32,32], index: 6, kind: input, shape index: {}]
  %s7 = inlined_call_operand.vmem [shape: bf16[32,32], index: 7, kind: input, shape index: {}]
  %s8 = inlined_call_operand.vmem [shape: bf16[32,32], index: 8, kind: input, shape index: {}]
  %s9 = inlined_call_operand.vmem [shape: bf16[32,32], index: 9, kind: input, shape index: {}]
  %s10 = inlined_call_operand.vmem [shape: bf16[32,128], index: 10, kind: input, shape index: {}]
  %s11 = inlined_call_operand.vmem [shape: f32[11,32], index: 11, kind: input, shape index: {}]
  %s12 = inlined_call_operand.vmem [shape: f32[1,64], index: 12, kind: input, shape index: {}]
  %s13 = inlined_call_operand.vmem [shape: f32[1,128], index: 13, kind: input, shape index: {}]
  %s14 = inlined_call_operand.hbm [shape: f32[256,128], index: 14, kind: output, shape index: {}]
  %s15 = sld [smem:[#allocation0]]
  $region89: #{tpu_custom_call.1} parent=0
    _
  %s17 = ssub.s32 1, %s15
  %s18 = scalar_select 0, %s17, %s15
  $region1: #{tpu_custom_call.1} parent=0
    #allocation2 [shape = 'u8[131072]{0}', space=vmem, size = 0x20000, scoped, tag = 'output window, operand 0']
    #allocation3 [shape = 's32[2]{0}', space=sflag, size = 0x8, scoped, tag = 'scoped memory for tpu_custom_call.1']
    %19 = vsyncpa [#allocation3], 0
    %s20 = scalar_lea.sflag [#allocation3], 1
    %21 = vsyncpa %s20, 0
    loop: start=0, step=1, limit=4
    $region2: #{tpu_custom_call.1} parent=1 // loop_pre_header
      _
    $region3: #{tpu_custom_call.1} parent=1 // loop_header
      %s23 = sphi 0, %s27
      %p24 = scmp.ge.s32.totalorder %s23, 4
      %s33 = sphi 0, %s35
      %s36 = sphi 0, %s33
      %s37 = sphi 0, %s36
      %s53 = sphi 0, %s37
      %s57 = sphi 0, %s57
      %s59 = sphi 0, %s57
      %s60 = sphi 0, %s59
      %s74 = sphi 0, %s60
      %s78 = sphi 0, %s78
      %s80 = sphi 0, %s78
      %s81 = sphi 0, %s80
      %s95 = sphi 0, %s81
      %s99 = sphi 0, %s99
      %s101 = sphi 0, %s99
      %s102 = sphi 0, %s101
      %s116 = sphi 0, %s102
      %s120 = sphi 0, %s120
      %s122 = sphi 0, %s120
      %s123 = sphi 0, %s122
      %s137 = sphi 0, %s123
      %s141 = sphi 0, %s141
      %s143 = sphi 0, %s141
      %s144 = sphi 0, %s143
      %s158 = sphi 0, %s144
      %s162 = sphi 0, %s162
      %s164 = sphi 0, %s162
      %s165 = sphi 0, %s164
      %s179 = sphi 0, %s165
      %s183 = sphi 0, %s183
      %s185 = sphi 0, %s183
      %s186 = sphi 0, %s185
      %s200 = sphi 0, %s186
      %s204 = sphi 0, %s204
      %s206 = sphi 0, %s204
      %s207 = sphi 0, %s206
      %s221 = sphi 0, %s207
      %s225 = sphi 0, %s225
      %s227 = sphi 0, %s225
      %s228 = sphi 0, %s227
      %s242 = sphi 0, %s228
      %s246 = sphi 0, %s246
      %s248 = sphi 0, %s246
      %s249 = sphi 0, %s248
      %s263 = sphi 0, %s249
      %s267 = sphi 0, %s267
      %s269 = sphi 0, %s267
      %s270 = sphi 0, %s269
      %s284 = sphi 0, %s270
      %s288 = sphi 0, %s288
      %s290 = sphi 0, %s288
      %s291 = sphi 0, %s290
      %s305 = sphi 0, %s291
      %s309 = sphi 0, %s309
      %s311 = sphi 0, %s309
      %s312 = sphi 0, %s311
      %s326 = sphi 0, %s312
      %s332 = sphi 0, %s334
      %s335 = sphi 0, %s332
      %s336 = sphi 0, %s335
      %s352 = sphi 0, %s336
    $region4: #{tpu_custom_call.1} parent=1 // loop_header_branch
      %26 = sbr.rel (%p24) target = $region8
    $region5: #{tpu_custom_call.1} parent=1 // loop_body
      %s28 = ssub.s32 %s23, 1
      %s29 = ssub.s32 %s23, 2
      %s30 = sadd.s32 %s23, 1
      %s31 = ssub.s32 %s23, %s30
      %p32 = scmp.eq.s32.totalorder %s31, 0
      %s34 = sadd.s32 %s33, 1
      %s35 = scalar_select %p32, %s33, %s34
      %p38 = pneg %p32
      %p39 = scmp.eq.s32.totalorder %s23, 1
      %p40 = por %p38, %p39
      %p41 = scmp.ne.s32.totalorder %s33, %s36
      %p42 = scmp.eq.s32.totalorder %s23, 0
      %p43 = por %p41, %p42
      %p44 = scmp.ne.s32.totalorder %s33, %s36
      %p45 = scmp.eq.s32.totalorder %s28, 1
      %p46 = por %p44, %p45
      %p47 = scmp.ne.s32.totalorder %s36, %s37
      %p48 = scmp.eq.s32.totalorder %s28, 0
      %p49 = por %p47, %p48
      %p50 = scmp.ne.s32.totalorder %s36, %s37
      %p51 = scmp.eq.s32.totalorder %s29, 1
      %p52 = por %p50, %p51
      %p54 = scmp.ne.s32.totalorder %s37, %s53
      %p55 = scmp.eq.s32.totalorder %s29, 0
      %p56 = por %p54, %p55
      %s58 = sadd.s32 %s57, 1
      %p61 = scmp.eq.s32.totalorder %s23, 1
      %p62 = scmp.ne.s32.totalorder %s57, %s59
      %p63 = scmp.eq.s32.totalorder %s23, 0
      %p64 = por %p62, %p63
      %p65 = scmp.ne.s32.totalorder %s57, %s59
      %p66 = scmp.eq.s32.totalorder %s28, 1
      %p67 = por %p65, %p66
      %p68 = scmp.ne.s32.totalorder %s59, %s60
      %p69 = scmp.eq.s32.totalorder %s28, 0
      %p70 = por %p68, %p69
      %p71 = scmp.ne.s32.totalorder %s59, %s60
      %p72 = scmp.eq.s32.totalorder %s29, 1
      %p73 = por %p71, %p72
      %p75 = scmp.ne.s32.totalorder %s60, %s74
      %p76 = scmp.eq.s32.totalorder %s29, 0
      %p77 = por %p75, %p76
      %s79 = sadd.s32 %s78, 1
      %p82 = scmp.eq.s32.totalorder %s23, 1
      %p83 = scmp.ne.s32.totalorder %s78, %s80
      %p84 = scmp.eq.s32.totalorder %s23, 0
      %p85 = por %p83, %p84
      %p86 = scmp.ne.s32.totalorder %s78, %s80
      %p87 = scmp.eq.s32.totalorder %s28, 1
      %p88 = por %p86, %p87
      %p89 = scmp.ne.s32.totalorder %s80, %s81
      %p90 = scmp.eq.s32.totalorder %s28, 0
      %p91 = por %p89, %p90
      %p92 = scmp.ne.s32.totalorder %s80, %s81
      %p93 = scmp.eq.s32.totalorder %s29, 1
      %p94 = por %p92, %p93
      %p96 = scmp.ne.s32.totalorder %s81, %s95
      %p97 = scmp.eq.s32.totalorder %s29, 0
      %p98 = por %p96, %p97
      %s100 = sadd.s32 %s99, 1
      %p103 = scmp.eq.s32.totalorder %s23, 1
      %p104 = scmp.ne.s32.totalorder %s99, %s101
      %p105 = scmp.eq.s32.totalorder %s23, 0
      %p106 = por %p104, %p105
      %p107 = scmp.ne.s32.totalorder %s99, %s101
      %p108 = scmp.eq.s32.totalorder %s28, 1
      %p109 = por %p107, %p108
      %p110 = scmp.ne.s32.totalorder %s101, %s102
      %p111 = scmp.eq.s32.totalorder %s28, 0
      %p112 = por %p110, %p111
      %p113 = scmp.ne.s32.totalorder %s101, %s102
      %p114 = scmp.eq.s32.totalorder %s29, 1
      %p115 = por %p113, %p114
      %p117 = scmp.ne.s32.totalorder %s102, %s116
      %p118 = scmp.eq.s32.totalorder %s29, 0
      %p119 = por %p117, %p118
      %s121 = sadd.s32 %s120, 1
      %p124 = scmp.eq.s32.totalorder %s23, 1
      %p125 = scmp.ne.s32.totalorder %s120, %s122
      %p126 = scmp.eq.s32.totalorder %s23, 0
      %p127 = por %p125, %p126
      %p128 = scmp.ne.s32.totalorder %s120, %s122
      %p129 = scmp.eq.s32.totalorder %s28, 1
      %p130 = por %p128, %p129
      %p131 = scmp.ne.s32.totalorder %s122, %s123
      %p132 = scmp.eq.s32.totalorder %s28, 0
      %p133 = por %p131, %p132
      %p134 = scmp.ne.s32.totalorder %s122, %s123
      %p135 = scmp.eq.s32.totalorder %s29, 1
      %p136 = por %p134, %p135
      %p138 = scmp.ne.s32.totalorder %s123, %s137
      %p139 = scmp.eq.s32.totalorder %s29, 0
      %p140 = por %p138, %p139
      %s142 = sadd.s32 %s141, 1
      %p145 = scmp.eq.s32.totalorder %s23, 1
      %p146 = scmp.ne.s32.totalorder %s141, %s143
      %p147 = scmp.eq.s32.totalorder %s23, 0
      %p148 = por %p146, %p147
      %p149 = scmp.ne.s32.totalorder %s141, %s143
      %p150 = scmp.eq.s32.totalorder %s28, 1
      %p151 = por %p149, %p150
      %p152 = scmp.ne.s32.totalorder %s143, %s144
      %p153 = scmp.eq.s32.totalorder %s28, 0
      %p154 = por %p152, %p153
      %p155 = scmp.ne.s32.totalorder %s143, %s144
      %p156 = scmp.eq.s32.totalorder %s29, 1
      %p157 = por %p155, %p156
      %p159 = scmp.ne.s32.totalorder %s144, %s158
      %p160 = scmp.eq.s32.totalorder %s29, 0
      %p161 = por %p159, %p160
      %s163 = sadd.s32 %s162, 1
      %p166 = scmp.eq.s32.totalorder %s23, 1
      %p167 = scmp.ne.s32.totalorder %s162, %s164
      %p168 = scmp.eq.s32.totalorder %s23, 0
      %p169 = por %p167, %p168
      %p170 = scmp.ne.s32.totalorder %s162, %s164
      %p171 = scmp.eq.s32.totalorder %s28, 1
      %p172 = por %p170, %p171
      %p173 = scmp.ne.s32.totalorder %s164, %s165
      %p174 = scmp.eq.s32.totalorder %s28, 0
      %p175 = por %p173, %p174
      %p176 = scmp.ne.s32.totalorder %s164, %s165
      %p177 = scmp.eq.s32.totalorder %s29, 1
      %p178 = por %p176, %p177
      %p180 = scmp.ne.s32.totalorder %s165, %s179
      %p181 = scmp.eq.s32.totalorder %s29, 0
      %p182 = por %p180, %p181
      %s184 = sadd.s32 %s183, 1
      %p187 = scmp.eq.s32.totalorder %s23, 1
      %p188 = scmp.ne.s32.totalorder %s183, %s185
      %p189 = scmp.eq.s32.totalorder %s23, 0
      %p190 = por %p188, %p189
      %p191 = scmp.ne.s32.totalorder %s183, %s185
      %p192 = scmp.eq.s32.totalorder %s28, 1
      %p193 = por %p191, %p192
      %p194 = scmp.ne.s32.totalorder %s185, %s186
      %p195 = scmp.eq.s32.totalorder %s28, 0
      %p196 = por %p194, %p195
      %p197 = scmp.ne.s32.totalorder %s185, %s186
      %p198 = scmp.eq.s32.totalorder %s29, 1
      %p199 = por %p197, %p198
      %p201 = scmp.ne.s32.totalorder %s186, %s200
      %p202 = scmp.eq.s32.totalorder %s29, 0
      %p203 = por %p201, %p202
      %s205 = sadd.s32 %s204, 1
      %p208 = scmp.eq.s32.totalorder %s23, 1
      %p209 = scmp.ne.s32.totalorder %s204, %s206
      %p210 = scmp.eq.s32.totalorder %s23, 0
      %p211 = por %p209, %p210
      %p212 = scmp.ne.s32.totalorder %s204, %s206
      %p213 = scmp.eq.s32.totalorder %s28, 1
      %p214 = por %p212, %p213
      %p215 = scmp.ne.s32.totalorder %s206, %s207
      %p216 = scmp.eq.s32.totalorder %s28, 0
      %p217 = por %p215, %p216
      %p218 = scmp.ne.s32.totalorder %s206, %s207
      %p219 = scmp.eq.s32.totalorder %s29, 1
      %p220 = por %p218, %p219
      %p222 = scmp.ne.s32.totalorder %s207, %s221
      %p223 = scmp.eq.s32.totalorder %s29, 0
      %p224 = por %p222, %p223
      %s226 = sadd.s32 %s225, 1
      %p229 = scmp.eq.s32.totalorder %s23, 1
      %p230 = scmp.ne.s32.totalorder %s225, %s227
      %p231 = scmp.eq.s32.totalorder %s23, 0
      %p232 = por %p230, %p231
      %p233 = scmp.ne.s32.totalorder %s225, %s227
      %p234 = scmp.eq.s32.totalorder %s28, 1
      %p235 = por %p233, %p234
      %p236 = scmp.ne.s32.totalorder %s227, %s228
      %p237 = scmp.eq.s32.totalorder %s28, 0
      %p238 = por %p236, %p237
      %p239 = scmp.ne.s32.totalorder %s227, %s228
      %p240 = scmp.eq.s32.totalorder %s29, 1
      %p241 = por %p239, %p240
      %p243 = scmp.ne.s32.totalorder %s228, %s242
      %p244 = scmp.eq.s32.totalorder %s29, 0
      %p245 = por %p243, %p244
      %s247 = sadd.s32 %s246, 1
      %p250 = scmp.eq.s32.totalorder %s23, 1
      %p251 = scmp.ne.s32.totalorder %s246, %s248
      %p252 = scmp.eq.s32.totalorder %s23, 0
      %p253 = por %p251, %p252
      %p254 = scmp.ne.s32.totalorder %s246, %s248
      %p255 = scmp.eq.s32.totalorder %s28, 1
      %p256 = por %p254, %p255
      %p257 = scmp.ne.s32.totalorder %s248, %s249
      %p258 = scmp.eq.s32.totalorder %s28, 0
      %p259 = por %p257, %p258
      %p260 = scmp.ne.s32.totalorder %s248, %s249
      %p261 = scmp.eq.s32.totalorder %s29, 1
      %p262 = por %p260, %p261
      %p264 = scmp.ne.s32.totalorder %s249, %s263
      %p265 = scmp.eq.s32.totalorder %s29, 0
      %p266 = por %p264, %p265
      %s268 = sadd.s32 %s267, 1
      %p271 = scmp.eq.s32.totalorder %s23, 1
      %p272 = scmp.ne.s32.totalorder %s267, %s269
      %p273 = scmp.eq.s32.totalorder %s23, 0
      %p274 = por %p272, %p273
      %p275 = scmp.ne.s32.totalorder %s267, %s269
      %p276 = scmp.eq.s32.totalorder %s28, 1
      %p277 = por %p275, %p276
      %p278 = scmp.ne.s32.totalorder %s269, %s270
      %p279 = scmp.eq.s32.totalorder %s28, 0
      %p280 = por %p278, %p279
      %p281 = scmp.ne.s32.totalorder %s269, %s270
      %p282 = scmp.eq.s32.totalorder %s29, 1
      %p283 = por %p281, %p282
      %p285 = scmp.ne.s32.totalorder %s270, %s284
      %p286 = scmp.eq.s32.totalorder %s29, 0
      %p287 = por %p285, %p286
      %s289 = sadd.s32 %s288, 1
      %p292 = scmp.eq.s32.totalorder %s23, 1
      %p293 = scmp.ne.s32.totalorder %s288, %s290
      %p294 = scmp.eq.s32.totalorder %s23, 0
      %p295 = por %p293, %p294
      %p296 = scmp.ne.s32.totalorder %s288, %s290
      %p297 = scmp.eq.s32.totalorder %s28, 1
      %p298 = por %p296, %p297
      %p299 = scmp.ne.s32.totalorder %s290, %s291
      %p300 = scmp.eq.s32.totalorder %s28, 0
      %p301 = por %p299, %p300
      %p302 = scmp.ne.s32.totalorder %s290, %s291
      %p303 = scmp.eq.s32.totalorder %s29, 1
      %p304 = por %p302, %p303
      %p306 = scmp.ne.s32.totalorder %s291, %s305
      %p307 = scmp.eq.s32.totalorder %s29, 0
      %p308 = por %p306, %p307
      %s310 = sadd.s32 %s309, 1
      %p313 = scmp.eq.s32.totalorder %s23, 1
      %p314 = scmp.ne.s32.totalorder %s309, %s311
      %p315 = scmp.eq.s32.totalorder %s23, 0
      %p316 = por %p314, %p315
      %p317 = scmp.ne.s32.totalorder %s309, %s311
      %p318 = scmp.eq.s32.totalorder %s28, 1
      %p319 = por %p317, %p318
      %p320 = scmp.ne.s32.totalorder %s311, %s312
      %p321 = scmp.eq.s32.totalorder %s28, 0
      %p322 = por %p320, %p321
      %p323 = scmp.ne.s32.totalorder %s311, %s312
      %p324 = scmp.eq.s32.totalorder %s29, 1
      %p325 = por %p323, %p324
      %p327 = scmp.ne.s32.totalorder %s312, %s326
      %p328 = scmp.eq.s32.totalorder %s29, 0
      %p329 = por %p327, %p328
      %s330 = ssub.s32 %s23, %s30
      %p331 = scmp.eq.s32.totalorder %s330, 0
      %s333 = sadd.s32 %s332, 1
      %s334 = scalar_select %p331, %s332, %s333
      %p337 = pneg %p331
      %p338 = scmp.eq.s32.totalorder %s23, 1
      %p339 = por %p337, %p338
      %p340 = scmp.ne.s32.totalorder %s332, %s335
      %p341 = scmp.eq.s32.totalorder %s23, 0
      %p342 = por %p340, %p341
      %p343 = scmp.ne.s32.totalorder %s332, %s335
      %p344 = scmp.eq.s32.totalorder %s28, 1
      %p345 = por %p343, %p344
      %p346 = scmp.ne.s32.totalorder %s335, %s336
      %p347 = scmp.eq.s32.totalorder %s28, 0
      %p348 = por %p346, %p347
      %p349 = scmp.ne.s32.totalorder %s335, %s336
      %p350 = scmp.eq.s32.totalorder %s29, 1
      %p351 = por %p349, %p350
      %p353 = scmp.ne.s32.totalorder %s336, %s352
      %p354 = scmp.eq.s32.totalorder %s29, 0
      %p355 = por %p353, %p354
      %p356 = scmp.le.s32.totalorder 1, %s23
      %p357 = scmp.lt.s32.totalorder %s23, 3
      %p358 = pnand %p356, %p357
      %p359 = pneg %p358
      // Predicated region
      $region9: #{tpu_custom_call.1} parent=5 // pred_check
        _
      $region10: #{tpu_custom_call.1} parent=5 // pred_check_branch
        %361 = sbr.rel (%p358) target = $region12
      $region11: #{tpu_custom_call.1} parent=5 // pred_region
        %s362 = ssub.s32 %s23, 1
        // Predicated region
        $region13: #{tpu_custom_call.1} parent=11 // pred_check
          %p363 = pneg %p70
        $region14: #{tpu_custom_call.1} parent=11 // pred_check_branch
          %365 = sbr.rel (%p363) target = $region16
        $region15: #{tpu_custom_call.1} parent=11 // pred_region
          _
        $region16: #{tpu_custom_call.1} parent=11 // pred_fallthru
          _
        // Predicated region
        $region17: #{tpu_custom_call.1} parent=11 // pred_check
          %p366 = pneg %p91
        $region18: #{tpu_custom_call.1} parent=11 // pred_check_branch
          %368 = sbr.rel (%p366) target = $region20
        $region19: #{tpu_custom_call.1} parent=11 // pred_region
          _
        $region20: #{tpu_custom_call.1} parent=11 // pred_fallthru
          _
        // Predicated region
        $region21: #{tpu_custom_call.1} parent=11 // pred_check
          %p369 = pneg %p112
        $region22: #{tpu_custom_call.1} parent=11 // pred_check_branch
          %371 = sbr.rel (%p369) target = $region24
        $region23: #{tpu_custom_call.1} parent=11 // pred_region
          _
        $region24: #{tpu_custom_call.1} parent=11 // pred_fallthru
          _
        // Predicated region
        $region25: #{tpu_custom_call.1} parent=11 // pred_check
          %p372 = pneg %p133
        $region26: #{tpu_custom_call.1} parent=11 // pred_check_branch
          %374 = sbr.rel (%p372) target = $region28
        $region27: #{tpu_custom_call.1} parent=11 // pred_region
          _
        $region28: #{tpu_custom_call.1} parent=11 // pred_fallthru
          _
        // Predicated region
        $region29: #{tpu_custom_call.1} parent=11 // pred_check
          %p375 = pneg %p154
        $region30: #{tpu_custom_call.1} parent=11 // pred_check_branch
          %377 = sbr.rel (%p375) target = $region32
        $region31: #{tpu_custom_call.1} parent=11 // pred_region
          _
        $region32: #{tpu_custom_call.1} parent=11 // pred_fallthru
          _
        // Predicated region
        $region33: #{tpu_custom_call.1} parent=11 // pred_check
          %p378 = pneg %p175
        $region34: #{tpu_custom_call.1} parent=11 // pred_check_branch
          %380 = sbr.rel (%p378) target = $region36
        $region35: #{tpu_custom_call.1} parent=11 // pred_region
          _
        $region36: #{tpu_custom_call.1} parent=11 // pred_fallthru
          _
        // Predicated region
        $region37: #{tpu_custom_call.1} parent=11 // pred_check
          %p381 = pneg %p196
        $region38: #{tpu_custom_call.1} parent=11 // pred_check_branch
          %383 = sbr.rel (%p381) target = $region40
        $region39: #{tpu_custom_call.1} parent=11 // pred_region
          _
        $region40: #{tpu_custom_call.1} parent=11 // pred_fallthru
          _
        // Predicated region
        $region41: #{tpu_custom_call.1} parent=11 // pred_check
          %p384 = pneg %p217
        $region42: #{tpu_custom_call.1} parent=11 // pred_check_branch
          %386 = sbr.rel (%p384) target = $region44
        $region43: #{tpu_custom_call.1} parent=11 // pred_region
          _
        $region44: #{tpu_custom_call.1} parent=11 // pred_fallthru
          _
        // Predicated region
        $region45: #{tpu_custom_call.1} parent=11 // pred_check
          %p387 = pneg %p238
        $region46: #{tpu_custom_call.1} parent=11 // pred_check_branch
          %389 = sbr.rel (%p387) target = $region48
        $region47: #{tpu_custom_call.1} parent=11 // pred_region
          _
        $region48: #{tpu_custom_call.1} parent=11 // pred_fallthru
          _
        // Predicated region
        $region49: #{tpu_custom_call.1} parent=11 // pred_check
          %p390 = pneg %p259
        $region50: #{tpu_custom_call.1} parent=11 // pred_check_branch
          %392 = sbr.rel (%p390) target = $region52
        $region51: #{tpu_custom_call.1} parent=11 // pred_region
          _
        $region52: #{tpu_custom_call.1} parent=11 // pred_fallthru
          _
        // Predicated region
        $region53: #{tpu_custom_call.1} parent=11 // pred_check
          %p393 = pneg %p280
        $region54: #{tpu_custom_call.1} parent=11 // pred_check_branch
          %395 = sbr.rel (%p393) target = $region56
        $region55: #{tpu_custom_call.1} parent=11 // pred_region
          _
        $region56: #{tpu_custom_call.1} parent=11 // pred_fallthru
          _
        // Predicated region
        $region57: #{tpu_custom_call.1} parent=11 // pred_check
          %p396 = pneg %p301
        $region58: #{tpu_custom_call.1} parent=11 // pred_check_branch
          %398 = sbr.rel (%p396) target = $region60
        $region59: #{tpu_custom_call.1} parent=11 // pred_region
          _
        $region60: #{tpu_custom_call.1} parent=11 // pred_fallthru
          _
        // Predicated region
        $region61: #{tpu_custom_call.1} parent=11 // pred_check
          %p399 = pneg %p322
        $region62: #{tpu_custom_call.1} parent=11 // pred_check_branch
          %401 = sbr.rel (%p399) target = $region64
        $region63: #{tpu_custom_call.1} parent=11 // pred_region
          _
        $region64: #{tpu_custom_call.1} parent=11 // pred_fallthru
          _
      $region12: #{tpu_custom_call.1} parent=5 // pred_fallthru
        _
      %p402 = scmp.lt.s32.totalorder %s23, 2
      // Predicated region
      $region65: #{tpu_custom_call.1} parent=5 // pred_check
        %p403 = pneg %p402
      $region66: #{tpu_custom_call.1} parent=5 // pred_check_branch
        %405 = sbr.rel (%p403) target = $region68
      $region67: #{tpu_custom_call.1} parent=5 // pred_region
        // Predicated region
        $region69: #{tpu_custom_call.1} parent=67 // pred_check
          %p406 = pneg %p43
        $region70: #{tpu_custom_call.1} parent=67 // pred_check_branch
          %408 = sbr.rel (%p406) target = $region72
        $region71: #{tpu_custom_call.1} parent=67 // pred_region
          %s409 = smul.u32 16, %s23
          %p410 = scmp.lt.s32.totalorder %s409, 31
          %s411 = scalar_select %p410, %s409, 31
          %s412 = smul.addr %s411, 8
          %s413 = scalar_lea.vmem %s0, %s412
          %s414 = smul.u32 16, %s23
        $region72: #{tpu_custom_call.1} parent=67 // pred_fallthru
          _
      $region68: #{tpu_custom_call.1} parent=5 // pred_fallthru
        _
      %p415 = scmp.le.s32.totalorder 1, %s23
      %p416 = scmp.lt.s32.totalorder %s23, 3
      %p417 = pnand %p415, %p416
      %p418 = pneg %p417
      // Predicated region
      $region73: #{tpu_custom_call.1} parent=5 // pred_check
        _
      $region74: #{tpu_custom_call.1} parent=5 // pred_check_branch
        %420 = sbr.rel (%p417) target = $region76
      $region75: #{tpu_custom_call.1} parent=5 // pred_region
        %s421 = ssub.s32 %s23, 1
        %s422 = smul.u32 16, %s28
        %p423 = scmp.lt.s32.totalorder %s422, 31
        %s424 = scalar_select %p423, %s422, 31
        %s425 = smul.addr %s424, 8
        %s426 = scalar_lea.vmem %s0, %s425
        %p427 = pneg %p49
        %p428 = pneg %p46
        %p429 = pneg %p70
        %p430 = pneg %p67
        %p431 = pneg %p91
        %p432 = pneg %p88
        %p433 = pneg %p112
        %p434 = pneg %p109
        %p435 = pneg %p133
        %p436 = pneg %p130
        %p437 = pneg %p154
        %p438 = pneg %p151
        %p439 = pneg %p175
        %p440 = pneg %p172
        %p441 = pneg %p196
        %p442 = pneg %p193
        %p443 = pneg %p217
        %p444 = pneg %p214
        %p445 = pneg %p238
        %p446 = pneg %p235
        %p447 = pneg %p259
        %p448 = pneg %p256
        %p449 = pneg %p280
        %p450 = pneg %p277
        %p451 = pneg %p301
        %p452 = pneg %p298
        %p453 = pneg %p322
        %p454 = pneg %p319
        %p455 = pneg %p348
        %p456 = pneg %p345
        %s457 = sand.u32 %s335, 1
        %s458 = scalar_lea.sflag [#allocation3], %s457
        %s459 = sand.u32 %s335, 1
        %s460 = smul.addr %s459, 128
        %s461 = scalar_lea.vmem [#allocation2], %s460
        %s462 = smul.u32 16, %s28
        %p463 = scmp.lt.s32.totalorder %s462, 31
        %s464 = scalar_select %p463, %s462, 31
        %s465 = smul.addr %s464, 8
        %s466 = scalar_lea.vmem %s0, %s465
        %s467 = smul.u32 16, %s28
        %s468 = smul.u32 16, %s28
        %v470 = vld [vmem:[%s11] sm:$0xff]
        %v471 = vld [vmem:[%s11 + $0x8] sm:$0x7]
        %v472 = vld [vmem:[%s466] sm:$0xff]
        %v473 = vld [vmem:[%s466 + $0x8] sm:$0xff]
        %v474 = vld [vmem:[%s466 + $0x10] sm:$0xff]
        %v475 = vld [vmem:[%s466 + $0x18] sm:$0xff]
        %v476 = vld [vmem:[%s466 + $0x20] sm:$0xff]
        %v477 = vld [vmem:[%s466 + $0x28] sm:$0xff]
        %v478 = vld [vmem:[%s466 + $0x30] sm:$0xff]
        %v479 = vld [vmem:[%s466 + $0x38] sm:$0xff]
        %v480 = vld [vmem:[%s466 + $0x40] sm:$0xff]
        %v481 = vld [vmem:[%s466 + $0x48] sm:$0xff]
        %v482 = vld [vmem:[%s466 + $0x50] sm:$0xff]
        %v483 = vld [vmem:[%s466 + $0x58] sm:$0xff]
        %v484 = vld [vmem:[%s466 + $0x60] sm:$0xff]
        %v485 = vld [vmem:[%s466 + $0x68] sm:$0xff]
        %v486 = vld [vmem:[%s466 + $0x70] sm:$0xff]
        %v487 = vld [vmem:[%s466 + $0x78] sm:$0xff]
        %v488 = vld [vmem:[%s2] sm:$0xf]
        %v489 = vld [vmem:[%s2 + $0x4] sm:$0xf]
        %v490 = vld [vmem:[%s2 + $0x8] sm:$0xf]
        %v491 = vpack.c.bf16 %v473, %v472
        %v492 = vpack.c.bf16 %v475, %v474
        %v493 = vpack.c.bf16 %v477, %v476
        %v494 = vpack.c.bf16 %v479, %v478
        %v495 = vpack.c.bf16 %v481, %v480
        %v496 = vpack.c.bf16 %v483, %v482
        %v497 = vpack.c.bf16 %v485, %v484
        %v498 = vpack.c.bf16 %v487, %v486
        %v499 = vlaneseq
        %v500 = vshrl.u32 %v499, 7
        %v501 = vsub.s32 0, %v500
        %v502 = vrot.slane %v470, %v501
        %v506 = vunpack.c.l.b16 %v488
        %v507 = vunpack.c.l.b16 %v489
        %v508 = vunpack.c.l.b16 %v490
        %v509 = vpack.c.b16 %v507, %v506
        %v510 = vpack.c.b16 %v508, %v508
        %vm512 = vcmask 195584
        %v514 = vsel %vm512, %v491, 0
        %v517 = vsel %vm512, %v492, 0
        %v520 = vsel %vm512, %v493, 0
        %v523 = vsel %vm512, %v494, 0
        %v526 = vsel %vm512, %v495, 0
        %v529 = vsel %vm512, %v496, 0
        %v532 = vsel %vm512, %v497, 0
        %v535 = vsel %vm512, %v498, 0
        %vm537 = vcmask 1043456
        %v539 = vsel %vm537, %v510, 0
        %541 = vmatprep.subr.bf16.mxu0 0
        %542 = vmatpush1.bf16.msra.mxu0 %v509
        %543 = vmatprep.subr.bf16.mxu0 0
        %544 = vmatpush1.bf16.msra.mxu0 %v539
        %545 = vmatprep.subr.bf16.mxu0 0
        %546 = vmatpush1.bf16.msra.mxu0 0
        %547 = vmatprep.subr.bf16.mxu0 0
        %548 = vmatpush1.bf16.msra.mxu0 0
        %549 = vmatprep.subr.bf16.mxu0 0
        %550 = vmatpush1.bf16.msra.mxu0 0
        %551 = vmatprep.subr.bf16.mxu0 0
        %552 = vmatpush1.bf16.msra.mxu0 0
        %553 = vmatprep.subr.bf16.mxu0 0
        %554 = vmatpush1.bf16.msra.mxu0 0
        %555 = vmatprep.subr.bf16.mxu0 0
        %556 = vmatpush1.bf16.msra.mxu0 0
        %557 = vmatprep.subr.bf16.mxu0 0
        %558 = vmatpush1.bf16.msra.mxu0 0
        %559 = vmatprep.subr.bf16.mxu0 0
        %560 = vmatpush1.bf16.msra.mxu0 0
        %561 = vmatprep.subr.bf16.mxu0 0
        %562 = vmatpush1.bf16.msra.mxu0 0
        %563 = vmatprep.subr.bf16.mxu0 0
        %564 = vmatpush1.bf16.msra.mxu0 0
        %565 = vmatprep.subr.bf16.mxu0 0
        %566 = vmatpush1.bf16.msra.mxu0 0
        %567 = vmatprep.subr.bf16.mxu0 0
        %568 = vmatpush1.bf16.msra.mxu0 0
        %569 = vmatprep.subr.bf16.mxu0 0
        %570 = vmatpush1.bf16.msra.mxu0 0
        %571 = vmatprep.subr.bf16.mxu0 0
        %572 = vmatpush1.bf16.msra.mxu0 0
        %573 = vmatprep.mubr.bf16.mxu0 0
        %574 = vmatmul.mubr.bf16.gmra.mrb[0].mxu0 %v514
        %v575 = vpop.f32.mrb[0].mxu0
        %v576 = vadd.f32 %v502, %v575
        %v577 = vpop.f32.mrb[0].mxu0
        %v578 = vpop.f32.mrb[0].mxu0
        %v579 = vadd.f32 %v502, %v578
        %v580 = vpop.f32.mrb[0].mxu0
        %581 = vmatprep.mubr.bf16.mxu0 0
        %582 = vmatmul.mubr.bf16.gmra.mrb[0].mxu0 %v517
        %v583 = vpop.f32.mrb[0].mxu0
        %v584 = vadd.f32 %v502, %v583
        %v585 = vpop.f32.mrb[0].mxu0
        %v586 = vpop.f32.mrb[0].mxu0
        %v587 = vadd.f32 %v502, %v586
        %v588 = vpop.f32.mrb[0].mxu0
        %589 = vmatprep.mubr.bf16.mxu0 0
        %590 = vmatmul.mubr.bf16.gmra.mrb[0].mxu0 %v520
        %v591 = vpop.f32.mrb[0].mxu0
        %v592 = vadd.f32 %v502, %v591
        %v593 = vpop.f32.mrb[0].mxu0
        %v594 = vpop.f32.mrb[0].mxu0
        %v595 = vadd.f32 %v502, %v594
        %v596 = vpop.f32.mrb[0].mxu0
        %597 = vmatprep.mubr.bf16.mxu0 0
        %598 = vmatmul.mubr.bf16.gmra.mrb[0].mxu0 %v523
        %v599 = vpop.f32.mrb[0].mxu0
        %v600 = vadd.f32 %v502, %v599
        %v601 = vpop.f32.mrb[0].mxu0
        %v602 = vpop.f32.mrb[0].mxu0
        %v603 = vadd.f32 %v502, %v602
        %v604 = vpop.f32.mrb[0].mxu0
        %605 = vmatprep.mubr.bf16.mxu0 0
        %606 = vmatmul.mubr.bf16.gmra.mrb[0].mxu0 %v526
        %v607 = vpop.f32.mrb[0].mxu0
        %v608 = vadd.f32 %v502, %v607
        %v609 = vpop.f32.mrb[0].mxu0
        %v610 = vpop.f32.mrb[0].mxu0
        %v611 = vadd.f32 %v502, %v610
        %v612 = vpop.f32.mrb[0].mxu0
        %613 = vmatprep.mubr.bf16.mxu0 0
        %614 = vmatmul.mubr.bf16.gmra.mrb[0].mxu0 %v529
        %v615 = vpop.f32.mrb[0].mxu0
        %v616 = vadd.f32 %v502, %v615
        %v617 = vpop.f32.mrb[0].mxu0
        %v618 = vpop.f32.mrb[0].mxu0
        %v619 = vadd.f32 %v502, %v618
        %v620 = vpop.f32.mrb[0].mxu0
        %621 = vmatprep.mubr.bf16.mxu0 0
        %622 = vmatmul.mubr.bf16.gmra.mrb[0].mxu0 %v532
        %v623 = vpop.f32.mrb[0].mxu0
        %v624 = vadd.f32 %v502, %v623
        %v625 = vpop.f32.mrb[0].mxu0
        %v626 = vpop.f32.mrb[0].mxu0
        %v627 = vadd.f32 %v502, %v626
        %v628 = vpop.f32.mrb[0].mxu0
        %629 = vmatprep.mubr.bf16.mxu0 0
        %630 = vmatmul.mubr.bf16.gmra.mrb[0].mxu0 %v535
        %v631 = vpop.f32.mrb[0].mxu0
        %v632 = vadd.f32 %v502, %v631
        %v633 = vpop.f32.mrb[0].mxu0
        %v634 = vpop.f32.mrb[0].mxu0
        %v635 = vadd.f32 %v502, %v634
        %v636 = vpop.f32.mrb[0].mxu0
        %637 = vdwg.mxu0
        %v638 = vld [vmem:[%s1] sm:$0xff]
        %v639 = vld [vmem:[%s1 + $0x8] sm:$0xff]
        %v640 = vld [vmem:[%s1 + $0x10] sm:$0xff]
        %v641 = vld [vmem:[%s1 + $0x18] sm:$0xff]
        %v642 = vld [vmem:[%s1 + $0x20] sm:$0xff]
        %v643 = vld [vmem:[%s1 + $0x28] sm:$0xff]
        %v644 = vld [vmem:[%s1 + $0x30] sm:$0xff]
        %v645 = vld [vmem:[%s1 + $0x38] sm:$0xff]
        %v646 = vld [vmem:[%s1 + $0x40] sm:$0xff]
        %v647 = vld [vmem:[%s1 + $0x48] sm:$0xff]
        %v648 = vld [vmem:[%s1 + $0x50] sm:$0xff]
        %v649 = vld [vmem:[%s1 + $0x58] sm:$0xff]
        %v650 = vld [vmem:[%s1 + $0x60] sm:$0xff]
        %v651 = vld [vmem:[%s1 + $0x68] sm:$0xff]
        %v652 = vld [vmem:[%s1 + $0x70] sm:$0xff]
        %v653 = vld [vmem:[%s1 + $0x78] sm:$0xff]
        %v654 = vld [vmem:[%s1 + $0x80] sm:$0xff]
        %v655 = vld [vmem:[%s1 + $0x88] sm:$0xff]
        %v656 = vld [vmem:[%s1 + $0x90] sm:$0xff]
        %v657 = vld [vmem:[%s1 + $0x98] sm:$0xff]
        %v658 = vld [vmem:[%s1 + $0xa0] sm:$0xff]
        %v659 = vld [vmem:[%s1 + $0xa8] sm:$0xff]
        %v660 = vld [vmem:[%s1 + $0xb0] sm:$0xff]
        %v661 = vld [vmem:[%s1 + $0xb8] sm:$0xff]
        %v662 = vld [vmem:[%s1 + $0xc0] sm:$0xff]
        %v663 = vld [vmem:[%s1 + $0xc8] sm:$0xff]
        %v664 = vld [vmem:[%s1 + $0xd0] sm:$0xff]
        %v665 = vld [vmem:[%s1 + $0xd8] sm:$0xff]
        %v666 = vld [vmem:[%s1 + $0xe0] sm:$0xff]
        %v667 = vld [vmem:[%s1 + $0xe8] sm:$0xff]
        %v668 = vld [vmem:[%s1 + $0xf0] sm:$0xff]
        %v669 = vld [vmem:[%s1 + $0xf8] sm:$0xff]
        %v670 = vpack.c.bf16 %v639, %v638
        %v671 = vpack.c.bf16 %v641, %v640
        %v672 = vpack.c.bf16 %v643, %v642
        %v673 = vpack.c.bf16 %v645, %v644
        %v674 = vpack.c.bf16 %v647, %v646
        %v675 = vpack.c.bf16 %v649, %v648
        %v676 = vpack.c.bf16 %v651, %v650
        %v677 = vpack.c.bf16 %v653, %v652
        %v678 = vpack.c.bf16 %v655, %v654
        %v679 = vpack.c.bf16 %v657, %v656
        %v680 = vpack.c.bf16 %v659, %v658
        %v681 = vpack.c.bf16 %v661, %v660
        %v682 = vpack.c.bf16 %v663, %v662
        %v683 = vpack.c.bf16 %v665, %v664
        %v684 = vpack.c.bf16 %v667, %v666
        %v685 = vpack.c.bf16 %v669, %v668
        %v687 = vsel %vm512, %v670, 0
        %v690 = vsel %vm512, %v671, 0
        %v693 = vsel %vm512, %v672, 0
        %v696 = vsel %vm512, %v673, 0
        %v699 = vsel %vm512, %v674, 0
        %v702 = vsel %vm512, %v675, 0
        %v705 = vsel %vm512, %v676, 0
        %v708 = vsel %vm512, %v677, 0
        %v711 = vsel %vm512, %v678, 0
        %v714 = vsel %vm512, %v679, 0
        %v717 = vsel %vm512, %v680, 0
        %v720 = vsel %vm512, %v681, 0
        %v723 = vsel %vm512, %v682, 0
        %v726 = vsel %vm512, %v683, 0
        %v729 = vsel %vm512, %v684, 0
        %v732 = vsel %vm512, %v685, 0
        %734 = vmatprep.subr.bf16.mxu0 0
        %735 = vmatpush1.bf16.msra.mxu0 %v509
        %736 = vmatprep.subr.bf16.mxu0 0
        %737 = vmatpush1.bf16.msra.mxu0 %v539
        %738 = vmatprep.subr.bf16.mxu0 0
        %739 = vmatpush1.bf16.msra.mxu0 0
        %740 = vmatprep.subr.bf16.mxu0 0
        %741 = vmatpush1.bf16.msra.mxu0 0
        %742 = vmatprep.subr.bf16.mxu0 0
        %743 = vmatpush1.bf16.msra.mxu0 0
        %744 = vmatprep.subr.bf16.mxu0 0
        %745 = vmatpush1.bf16.msra.mxu0 0
        %746 = vmatprep.subr.bf16.mxu0 0
        %747 = vmatpush1.bf16.msra.mxu0 0
        %748 = vmatprep.subr.bf16.mxu0 0
        %749 = vmatpush1.bf16.msra.mxu0 0
        %750 = vmatprep.subr.bf16.mxu0 0
        %751 = vmatpush1.bf16.msra.mxu0 0
        %752 = vmatprep.subr.bf16.mxu0 0
        %753 = vmatpush1.bf16.msra.mxu0 0
        %754 = vmatprep.subr.bf16.mxu0 0
        %755 = vmatpush1.bf16.msra.mxu0 0
        %756 = vmatprep.subr.bf16.mxu0 0
        %757 = vmatpush1.bf16.msra.mxu0 0
        %758 = vmatprep.subr.bf16.mxu0 0
        %759 = vmatpush1.bf16.msra.mxu0 0
        %760 = vmatprep.subr.bf16.mxu0 0
        %761 = vmatpush1.bf16.msra.mxu0 0
        %762 = vmatprep.subr.bf16.mxu0 0
        %763 = vmatpush1.bf16.msra.mxu0 0
        %764 = vmatprep.subr.bf16.mxu0 0
        %765 = vmatpush1.bf16.msra.mxu0 0
        %766 = vmatprep.mubr.bf16.mxu0 0
        %767 = vmatmul.mubr.bf16.gmra.mrb[0].mxu0 %v687
        %v768 = vpop.f32.mrb[0].mxu0
        %v769 = vadd.f32 %v502, %v768
        %v770 = vpop.f32.mrb[0].mxu0
        %v771 = vpop.f32.mrb[0].mxu0
        %v772 = vadd.f32 %v502, %v771
        %v773 = vpop.f32.mrb[0].mxu0
        %774 = vmatprep.mubr.bf16.mxu0 0
        %775 = vmatmul.mubr.bf16.gmra.mrb[0].mxu0 %v690
        %v776 = vpop.f32.mrb[0].mxu0
        %v777 = vadd.f32 %v502, %v776
        %v778 = vpop.f32.mrb[0].mxu0
        %v779 = vpop.f32.mrb[0].mxu0
        %v780 = vadd.f32 %v502, %v779
        %v781 = vpop.f32.mrb[0].mxu0
        %782 = vmatprep.mubr.bf16.mxu0 0
        %783 = vmatmul.mubr.bf16.gmra.mrb[0].mxu0 %v693
        %v784 = vpop.f32.mrb[0].mxu0
        %v785 = vadd.f32 %v502, %v784
        %v786 = vpop.f32.mrb[0].mxu0
        %v787 = vpop.f32.mrb[0].mxu0
        %v788 = vadd.f32 %v502, %v787
        %v789 = vpop.f32.mrb[0].mxu0
        %790 = vmatprep.mubr.bf16.mxu0 0
        %791 = vmatmul.mubr.bf16.gmra.mrb[0].mxu0 %v696
        %v792 = vpop.f32.mrb[0].mxu0
        %v793 = vadd.f32 %v502, %v792
        %v794 = vpop.f32.mrb[0].mxu0
        %v795 = vpop.f32.mrb[0].mxu0
        %v796 = vadd.f32 %v502, %v795
        %v797 = vpop.f32.mrb[0].mxu0
        %798 = vmatprep.mubr.bf16.mxu0 0
        %799 = vmatmul.mubr.bf16.gmra.mrb[0].mxu0 %v699
        %v800 = vpop.f32.mrb[0].mxu0
        %v801 = vadd.f32 %v502, %v800
        %v802 = vpop.f32.mrb[0].mxu0
        %v803 = vpop.f32.mrb[0].mxu0
        %v804 = vadd.f32 %v502, %v803
        %v805 = vpop.f32.mrb[0].mxu0
        %806 = vmatprep.mubr.bf16.mxu0 0
        %807 = vmatmul.mubr.bf16.gmra.mrb[0].mxu0 %v702
        %v808 = vpop.f32.mrb[0].mxu0
        %v809 = vadd.f32 %v502, %v808
        %v810 = vpop.f32.mrb[0].mxu0
        %v811 = vpop.f32.mrb[0].mxu0
        %v812 = vadd.f32 %v502, %v811
        %v813 = vpop.f32.mrb[0].mxu0
        %814 = vmatprep.mubr.bf16.mxu0 0
        %815 = vmatmul.mubr.bf16.gmra.mrb[0].mxu0 %v705
        %v816 = vpop.f32.mrb[0].mxu0
        %v817 = vadd.f32 %v502, %v816
        %v818 = vpop.f32.mrb[0].mxu0
        %v819 = vpop.f32.mrb[0].mxu0
        %v820 = vadd.f32 %v502, %v819
        %v821 = vpop.f32.mrb[0].mxu0
        %822 = vmatprep.mubr.bf16.mxu0 0
        %823 = vmatmul.mubr.bf16.gmra.mrb[0].mxu0 %v708
        %v824 = vpop.f32.mrb[0].mxu0
        %v825 = vadd.f32 %v502, %v824
        %v826 = vpop.f32.mrb[0].mxu0
        %v827 = vpop.f32.mrb[0].mxu0
        %v828 = vadd.f32 %v502, %v827
        %v829 = vpop.f32.mrb[0].mxu0
        %830 = vmatprep.mubr.bf16.mxu0 0
        %831 = vmatmul.mubr.bf16.gmra.mrb[0].mxu0 %v711
        %v832 = vpop.f32.mrb[0].mxu0
        %v833 = vadd.f32 %v502, %v832
        %v834 = vpop.f32.mrb[0].mxu0
        %v835 = vpop.f32.mrb[0].mxu0
        %v836 = vadd.f32 %v502, %v835
        %v837 = vpop.f32.mrb[0].mxu0
        %838 = vmatprep.mubr.bf16.mxu0 0
        %839 = vmatmul.mubr.bf16.gmra.mrb[0].mxu0 %v714
        %v840 = vpop.f32.mrb[0].mxu0
        %v841 = vadd.f32 %v502, %v840
        %v842 = vpop.f32.mrb[0].mxu0
        %v843 = vpop.f32.mrb[0].mxu0
        %v844 = vadd.f32 %v502, %v843
        %v845 = vpop.f32.mrb[0].mxu0
        %846 = vmatprep.mubr.bf16.mxu0 0
        %847 = vmatmul.mubr.bf16.gmra.mrb[0].mxu0 %v717
        %v848 = vpop.f32.mrb[0].mxu0
        %v849 = vadd.f32 %v502, %v848
        %v850 = vpop.f32.mrb[0].mxu0
        %v851 = vpop.f32.mrb[0].mxu0
        %v852 = vadd.f32 %v502, %v851
        %v853 = vpop.f32.mrb[0].mxu0
        %854 = vmatprep.mubr.bf16.mxu0 0
        %855 = vmatmul.mubr.bf16.gmra.mrb[0].mxu0 %v720
        %v856 = vpop.f32.mrb[0].mxu0
        %v857 = vadd.f32 %v502, %v856
        %v858 = vpop.f32.mrb[0].mxu0
        %v859 = vpop.f32.mrb[0].mxu0
        %v860 = vadd.f32 %v502, %v859
        %v861 = vpop.f32.mrb[0].mxu0
        %862 = vmatprep.mubr.bf16.mxu0 0
        %863 = vmatmul.mubr.bf16.gmra.mrb[0].mxu0 %v723
        %v864 = vpop.f32.mrb[0].mxu0
        %v865 = vadd.f32 %v502, %v864
        %v866 = vpop.f32.mrb[0].mxu0
        %v867 = vpop.f32.mrb[0].mxu0
        %v868 = vadd.f32 %v502, %v867
        %v869 = vpop.f32.mrb[0].mxu0
        %870 = vmatprep.mubr.bf16.mxu0 0
        %871 = vmatmul.mubr.bf16.gmra.mrb[0].mxu0 %v726
        %v872 = vpop.f32.mrb[0].mxu0
        %v873 = vadd.f32 %v502, %v872
        %v874 = vpop.f32.mrb[0].mxu0
        %v875 = vpop.f32.mrb[0].mxu0
        %v876 = vadd.f32 %v502, %v875
        %v877 = vpop.f32.mrb[0].mxu0
        %878 = vmatprep.mubr.bf16.mxu0 0
        %879 = vmatmul.mubr.bf16.gmra.mrb[0].mxu0 %v729
        %v880 = vpop.f32.mrb[0].mxu0
        %v881 = vadd.f32 %v502, %v880
        %v882 = vpop.f32.mrb[0].mxu0
        %v883 = vpop.f32.mrb[0].mxu0
        %v884 = vadd.f32 %v502, %v883
        %v885 = vpop.f32.mrb[0].mxu0
        %886 = vmatprep.mubr.bf16.mxu0 0
        %887 = vmatmul.mubr.bf16.gmra.mrb[0].mxu0 %v732
        %v888 = vpop.f32.mrb[0].mxu0
        %v889 = vadd.f32 %v502, %v888
        %v890 = vpop.f32.mrb[0].mxu0
        %v891 = vpop.f32.mrb[0].mxu0
        %v892 = vadd.f32 %v502, %v891
        %v893 = vpop.f32.mrb[0].mxu0
        %894 = vdwg.mxu0
        %v895 = vld [vmem:[%s3] sm:$0xf]
        %v896 = vld [vmem:[%s3 + $0x4] sm:$0xf]
        %v897 = vld [vmem:[%s3 + $0x8] sm:$0xf]
        %v898 = vld [vmem:[%s3 + $0xc] sm:$0xf]
        %v899 = vpack.c.bf16 %v579, %v576
        %v900 = vpack.c.bf16 %v587, %v584
        %v901 = vpack.c.bf16 %v595, %v592
        %v902 = vpack.c.bf16 %v603, %v600
        %v903 = vpack.c.bf16 %v611, %v608
        %v904 = vpack.c.bf16 %v619, %v616
        %v905 = vpack.c.bf16 %v627, %v624
        %v906 = vpack.c.bf16 %v635, %v632
        %v907 = vlaneseq
        %v908 = vshrl.u32 %v907, 7
        %v909 = vsub.s32 1, %v908
        %v910 = vrot.slane %v470, %v909
        %v915 = vunpack.c.l.b16 %v895
        %v916 = vunpack.c.l.b16 %v896
        %v917 = vunpack.c.l.b16 %v897
        %v918 = vunpack.c.l.b16 %v898
        %v919 = vpack.c.b16 %v916, %v915
        %v920 = vpack.c.b16 %v918, %v917
        %vm923 = vcmask 261120
        %v925 = vsel %vm923, %v899, 0
        %v928 = vsel %vm923, %v900, 0
        %v931 = vsel %vm923, %v901, 0
        %v934 = vsel %vm923, %v902, 0
        %v937 = vsel %vm923, %v903, 0
        %v940 = vsel %vm923, %v904, 0
        %v943 = vsel %vm923, %v905, 0
        %v946 = vsel %vm923, %v906, 0
        %948 = vmatprep.subr.bf16.mxu0 0
        %949 = vmatpush1.bf16.msra.mxu0 %v919
        %950 = vmatprep.subr.bf16.mxu0 0
        %951 = vmatpush1.bf16.msra.mxu0 %v920
        %952 = vmatprep.subr.bf16.mxu0 0
        %953 = vmatpush1.bf16.msra.mxu0 0
        %954 = vmatprep.subr.bf16.mxu0 0
        %955 = vmatpush1.bf16.msra.mxu0 0
        %956 = vmatprep.subr.bf16.mxu0 0
        %957 = vmatpush1.bf16.msra.mxu0 0
        %958 = vmatprep.subr.bf16.mxu0 0
        %959 = vmatpush1.bf16.msra.mxu0 0
        %960 = vmatprep.subr.bf16.mxu0 0
        %961 = vmatpush1.bf16.msra.mxu0 0
        %962 = vmatprep.subr.bf16.mxu0 0
        %963 = vmatpush1.bf16.msra.mxu0 0
        %964 = vmatprep.subr.bf16.mxu0 0
        %965 = vmatpush1.bf16.msra.mxu0 0
        %966 = vmatprep.subr.bf16.mxu0 0
        %967 = vmatpush1.bf16.msra.mxu0 0
        %968 = vmatprep.subr.bf16.mxu0 0
        %969 = vmatpush1.bf16.msra.mxu0 0
        %970 = vmatprep.subr.bf16.mxu0 0
        %971 = vmatpush1.bf16.msra.mxu0 0
        %972 = vmatprep.subr.bf16.mxu0 0
        %973 = vmatpush1.bf16.msra.mxu0 0
        %974 = vmatprep.subr.bf16.mxu0 0
        %975 = vmatpush1.bf16.msra.mxu0 0
        %976 = vmatprep.subr.bf16.mxu0 0
        %977 = vmatpush1.bf16.msra.mxu0 0
        %978 = vmatprep.subr.bf16.mxu0 0
        %979 = vmatpush1.bf16.msra.mxu0 0
        %980 = vmatprep.mubr.bf16.mxu0 0
        %981 = vmatmul.mubr.bf16.gmra.mrb[0].mxu0 %v925
        %v982 = vpop.f32.mrb[0].mxu0
        %v983 = vadd.f32 %v910, %v982
        %v984 = vpop.f32.mrb[0].mxu0
        %v985 = vpop.f32.mrb[0].mxu0
        %v986 = vadd.f32 %v910, %v985
        %v987 = vpop.f32.mrb[0].mxu0
        %988 = vmatprep.mubr.bf16.mxu0 0
        %989 = vmatmul.mubr.bf16.gmra.mrb[0].mxu0 %v928
        %v990 = vpop.f32.mrb[0].mxu0
        %v991 = vadd.f32 %v910, %v990
        %v992 = vpop.f32.mrb[0].mxu0
        %v993 = vpop.f32.mrb[0].mxu0
        %v994 = vadd.f32 %v910, %v993
        %v995 = vpop.f32.mrb[0].mxu0
        %996 = vmatprep.mubr.bf16.mxu0 0
        %997 = vmatmul.mubr.bf16.gmra.mrb[0].mxu0 %v931
        %v998 = vpop.f32.mrb[0].mxu0
        %v999 = vadd.f32 %v910, %v998
        %v1000 = vpop.f32.mrb[0].mxu0
        %v1001 = vpop.f32.mrb[0].mxu0
        %v1002 = vadd.f32 %v910, %v1001
        %v1003 = vpop.f32.mrb[0].mxu0
        %1004 = vmatprep.mubr.bf16.mxu0 0
        %1005 = vmatmul.mubr.bf16.gmra.mrb[0].mxu0 %v934
        %v1006 = vpop.f32.mrb[0].mxu0
        %v1007 = vadd.f32 %v910, %v1006
        %v1008 = vpop.f32.mrb[0].mxu0
        %v1009 = vpop.f32.mrb[0].mxu0
        %v1010 = vadd.f32 %v910, %v1009
        %v1011 = vpop.f32.mrb[0].mxu0
        %1012 = vmatprep.mubr.bf16.mxu0 0
        %1013 = vmatmul.mubr.bf16.gmra.mrb[0].mxu0 %v937
        %v1014 = vpop.f32.mrb[0].mxu0
        %v1015 = vadd.f32 %v910, %v1014
        %v1016 = vpop.f32.mrb[0].mxu0
        %v1017 = vpop.f32.mrb[0].mxu0
        %v1018 = vadd.f32 %v910, %v1017
        %v1019 = vpop.f32.mrb[0].mxu0
        %1020 = vmatprep.mubr.bf16.mxu0 0
        %1021 = vmatmul.mubr.bf16.gmra.mrb[0].mxu0 %v940
        %v1022 = vpop.f32.mrb[0].mxu0
        %v1023 = vadd.f32 %v910, %v1022
        %v1024 = vpop.f32.mrb[0].mxu0
        %v1025 = vpop.f32.mrb[0].mxu0
        %v1026 = vadd.f32 %v910, %v1025
        %v1027 = vpop.f32.mrb[0].mxu0
        %1028 = vmatprep.mubr.bf16.mxu0 0
        %1029 = vmatmul.mubr.bf16.gmra.mrb[0].mxu0 %v943
        %v1030 = vpop.f32.mrb[0].mxu0
        %v1031 = vadd.f32 %v910, %v1030
        %v1032 = vpop.f32.mrb[0].mxu0
        %v1033 = vpop.f32.mrb[0].mxu0
        %v1034 = vadd.f32 %v910, %v1033
        %v1035 = vpop.f32.mrb[0].mxu0
        %1036 = vmatprep.mubr.bf16.mxu0 0
        %1037 = vmatmul.mubr.bf16.gmra.mrb[0].mxu0 %v946
        %v1038 = vpop.f32.mrb[0].mxu0
        %v1039 = vadd.f32 %v910, %v1038
        %v1040 = vpop.f32.mrb[0].mxu0
        %v1041 = vpop.f32.mrb[0].mxu0
        %v1042 = vadd.f32 %v910, %v1041
        %v1043 = vpop.f32.mrb[0].mxu0
        %1044 = vdwg.mxu0
        %v1045 = vld [vmem:[%s4] sm:$0xf]
        %v1046 = vld [vmem:[%s4 + $0x4] sm:$0xf]
        %v1047 = vld [vmem:[%s4 + $0x8] sm:$0xf]
        %v1048 = vld [vmem:[%s4 + $0xc] sm:$0xf]
        %v1049 = vpack.c.bf16 %v772, %v769
        %v1050 = vpack.c.bf16 %v780, %v777
        %v1051 = vpack.c.bf16 %v788, %v785
        %v1052 = vpack.c.bf16 %v796, %v793
        %v1053 = vpack.c.bf16 %v804, %v801
        %v1054 = vpack.c.bf16 %v812, %v809
        %v1055 = vpack.c.bf16 %v820, %v817
        %v1056 = vpack.c.bf16 %v828, %v825
        %v1057 = vpack.c.bf16 %v836, %v833
        %v1058 = vpack.c.bf16 %v844, %v841
        %v1059 = vpack.c.bf16 %v852, %v849
        %v1060 = vpack.c.bf16 %v860, %v857
        %v1061 = vpack.c.bf16 %v868, %v865
        %v1062 = vpack.c.bf16 %v876, %v873
        %v1063 = vpack.c.bf16 %v884, %v881
        %v1064 = vpack.c.bf16 %v892, %v889
        %v1065 = vld [vmem:[%s12] sm:$0x1]
        %v1067 = vlaneseq
        %v1068 = vshrl.u32 %v1067, 7
        %v1069 = vsub.s32 0, %v1068
        %v1070 = vrot.slane %v1065, %v1069
        %v1076 = vunpack.c.l.b16 %v1045
        %v1077 = vunpack.c.l.b16 %v1046
        %v1078 = vunpack.c.l.b16 %v1047
        %v1079 = vunpack.c.l.b16 %v1048
        %v1080 = vpack.c.b16 %v1077, %v1076
        %v1081 = vpack.c.b16 %v1079, %v1078
        %v1085 = vsel %vm923, %v1049, 0
        %v1088 = vsel %vm923, %v1050, 0
        %v1091 = vsel %vm923, %v1051, 0
        %v1094 = vsel %vm923, %v1052, 0
        %v1097 = vsel %vm923, %v1053, 0
        %v1100 = vsel %vm923, %v1054, 0
        %v1103 = vsel %vm923, %v1055, 0
        %v1106 = vsel %vm923, %v1056, 0
        %v1109 = vsel %vm923, %v1057, 0
        %v1112 = vsel %vm923, %v1058, 0
        %v1115 = vsel %vm923, %v1059, 0
        %v1118 = vsel %vm923, %v1060, 0
        %v1121 = vsel %vm923, %v1061, 0
        %v1124 = vsel %vm923, %v1062, 0
        %v1127 = vsel %vm923, %v1063, 0
        %v1130 = vsel %vm923, %v1064, 0
        %1132 = vmatprep.subr.bf16.mxu0 0
        %1133 = vmatpush1.bf16.msra.mxu0 %v1080
        %1134 = vmatprep.subr.bf16.mxu0 0
        %1135 = vmatpush1.bf16.msra.mxu0 %v1081
        %1136 = vmatprep.subr.bf16.mxu0 0
        %1137 = vmatpush1.bf16.msra.mxu0 0
        %1138 = vmatprep.subr.bf16.mxu0 0
        %1139 = vmatpush1.bf16.msra.mxu0 0
        %1140 = vmatprep.subr.bf16.mxu0 0
        %1141 = vmatpush1.bf16.msra.mxu0 0
        %1142 = vmatprep.subr.bf16.mxu0 0
        %1143 = vmatpush1.bf16.msra.mxu0 0
        %1144 = vmatprep.subr.bf16.mxu0 0
        %1145 = vmatpush1.bf16.msra.mxu0 0
        %1146 = vmatprep.subr.bf16.mxu0 0
        %1147 = vmatpush1.bf16.msra.mxu0 0
        %1148 = vmatprep.subr.bf16.mxu0 0
        %1149 = vmatpush1.bf16.msra.mxu0 0
        %1150 = vmatprep.subr.bf16.mxu0 0
        %1151 = vmatpush1.bf16.msra.mxu0 0
        %1152 = vmatprep.subr.bf16.mxu0 0
        %1153 = vmatpush1.bf16.msra.mxu0 0
        %1154 = vmatprep.subr.bf16.mxu0 0
        %1155 = vmatpush1.bf16.msra.mxu0 0
        %1156 = vmatprep.subr.bf16.mxu0 0
        %1157 = vmatpush1.bf16.msra.mxu0 0
        %1158 = vmatprep.subr.bf16.mxu0 0
        %1159 = vmatpush1.bf16.msra.mxu0 0
        %1160 = vmatprep.subr.bf16.mxu0 0
        %1161 = vmatpush1.bf16.msra.mxu0 0
        %1162 = vmatprep.subr.bf16.mxu0 0
        %1163 = vmatpush1.bf16.msra.mxu0 0
        %1164 = vmatprep.mubr.bf16.mxu0 0
        %1165 = vmatmul.mubr.bf16.gmra.mrb[0].mxu0 %v1085
        %v1166 = vpop.f32.mrb[0].mxu0
        %v1167 = vadd.f32 %v1070, %v1166
        %v1168 = vpop.f32.mrb[0].mxu0
        %v1169 = vpop.f32.mrb[0].mxu0
        %v1170 = vadd.f32 %v1070, %v1169
        %v1171 = vpop.f32.mrb[0].mxu0
        %1172 = vmatprep.mubr.bf16.mxu0 0
        %1173 = vmatmul.mubr.bf16.gmra.mrb[0].mxu0 %v1088
        %v1174 = vpop.f32.mrb[0].mxu0
        %v1175 = vadd.f32 %v1070, %v1174
        %v1176 = vpop.f32.mrb[0].mxu0
        %v1177 = vpop.f32.mrb[0].mxu0
        %v1178 = vadd.f32 %v1070, %v1177
        %v1179 = vpop.f32.mrb[0].mxu0
        %1180 = vmatprep.mubr.bf16.mxu0 0
        %1181 = vmatmul.mubr.bf16.gmra.mrb[0].mxu0 %v1091
        %v1182 = vpop.f32.mrb[0].mxu0
        %v1183 = vadd.f32 %v1070, %v1182
        %v1184 = vpop.f32.mrb[0].mxu0
        %v1185 = vpop.f32.mrb[0].mxu0
        %v1186 = vadd.f32 %v1070, %v1185
        %v1187 = vpop.f32.mrb[0].mxu0
        %1188 = vmatprep.mubr.bf16.mxu0 0
        %1189 = vmatmul.mubr.bf16.gmra.mrb[0].mxu0 %v1094
        %v1190 = vpop.f32.mrb[0].mxu0
        %v1191 = vadd.f32 %v1070, %v1190
        %v1192 = vpop.f32.mrb[0].mxu0
        %v1193 = vpop.f32.mrb[0].mxu0
        %v1194 = vadd.f32 %v1070, %v1193
        %v1195 = vpop.f32.mrb[0].mxu0
        %1196 = vmatprep.mubr.bf16.mxu0 0
        %1197 = vmatmul.mubr.bf16.gmra.mrb[0].mxu0 %v1097
        %v1198 = vpop.f32.mrb[0].mxu0
        %v1199 = vadd.f32 %v1070, %v1198
        %v1200 = vpop.f32.mrb[0].mxu0
        %v1201 = vpop.f32.mrb[0].mxu0
        %v1202 = vadd.f32 %v1070, %v1201
        %v1203 = vpop.f32.mrb[0].mxu0
        %1204 = vmatprep.mubr.bf16.mxu0 0
        %1205 = vmatmul.mubr.bf16.gmra.mrb[0].mxu0 %v1100
        %v1206 = vpop.f32.mrb[0].mxu0
        %v1207 = vadd.f32 %v1070, %v1206
        %v1208 = vpop.f32.mrb[0].mxu0
        %v1209 = vpop.f32.mrb[0].mxu0
        %v1210 = vadd.f32 %v1070, %v1209
        %v1211 = vpop.f32.mrb[0].mxu0
        %1212 = vmatprep.mubr.bf16.mxu0 0
        %1213 = vmatmul.mubr.bf16.gmra.mrb[0].mxu0 %v1103
        %v1214 = vpop.f32.mrb[0].mxu0
        %v1215 = vadd.f32 %v1070, %v1214
        %v1216 = vpop.f32.mrb[0].mxu0
        %v1217 = vpop.f32.mrb[0].mxu0
        %v1218 = vadd.f32 %v1070, %v1217
        %v1219 = vpop.f32.mrb[0].mxu0
        %1220 = vmatprep.mubr.bf16.mxu0 0
        %1221 = vmatmul.mubr.bf16.gmra.mrb[0].mxu0 %v1106
        %v1222 = vpop.f32.mrb[0].mxu0
        %v1223 = vadd.f32 %v1070, %v1222
        %v1224 = vpop.f32.mrb[0].mxu0
        %v1225 = vpop.f32.mrb[0].mxu0
        %v1226 = vadd.f32 %v1070, %v1225
        %v1227 = vpop.f32.mrb[0].mxu0
        %1228 = vmatprep.mubr.bf16.mxu0 0
        %1229 = vmatmul.mubr.bf16.gmra.mrb[0].mxu0 %v1109
        %v1230 = vpop.f32.mrb[0].mxu0
        %v1231 = vadd.f32 %v1070, %v1230
        %v1232 = vpop.f32.mrb[0].mxu0
        %v1233 = vpop.f32.mrb[0].mxu0
        %v1234 = vadd.f32 %v1070, %v1233
        %v1235 = vpop.f32.mrb[0].mxu0
        %1236 = vmatprep.mubr.bf16.mxu0 0
        %1237 = vmatmul.mubr.bf16.gmra.mrb[0].mxu0 %v1112
        %v1238 = vpop.f32.mrb[0].mxu0
        %v1239 = vadd.f32 %v1070, %v1238
        %v1240 = vpop.f32.mrb[0].mxu0
        %v1241 = vpop.f32.mrb[0].mxu0
        %v1242 = vadd.f32 %v1070, %v1241
        %v1243 = vpop.f32.mrb[0].mxu0
        %1244 = vmatprep.mubr.bf16.mxu0 0
        %1245 = vmatmul.mubr.bf16.gmra.mrb[0].mxu0 %v1115
        %v1246 = vpop.f32.mrb[0].mxu0
        %v1247 = vadd.f32 %v1070, %v1246
        %v1248 = vpop.f32.mrb[0].mxu0
        %v1249 = vpop.f32.mrb[0].mxu0
        %v1250 = vadd.f32 %v1070, %v1249
        %v1251 = vpop.f32.mrb[0].mxu0
        %1252 = vmatprep.mubr.bf16.mxu0 0
        %1253 = vmatmul.mubr.bf16.gmra.mrb[0].mxu0 %v1118
        %v1254 = vpop.f32.mrb[0].mxu0
        %v1255 = vadd.f32 %v1070, %v1254
        %v1256 = vpop.f32.mrb[0].mxu0
        %v1257 = vpop.f32.mrb[0].mxu0
        %v1258 = vadd.f32 %v1070, %v1257
        %v1259 = vpop.f32.mrb[0].mxu0
        %1260 = vmatprep.mubr.bf16.mxu0 0
        %1261 = vmatmul.mubr.bf16.gmra.mrb[0].mxu0 %v1121
        %v1262 = vpop.f32.mrb[0].mxu0
        %v1263 = vadd.f32 %v1070, %v1262
        %v1264 = vpop.f32.mrb[0].mxu0
        %v1265 = vpop.f32.mrb[0].mxu0
        %v1266 = vadd.f32 %v1070, %v1265
        %v1267 = vpop.f32.mrb[0].mxu0
        %1268 = vmatprep.mubr.bf16.mxu0 0
        %1269 = vmatmul.mubr.bf16.gmra.mrb[0].mxu0 %v1124
        %v1270 = vpop.f32.mrb[0].mxu0
        %v1271 = vadd.f32 %v1070, %v1270
        %v1272 = vpop.f32.mrb[0].mxu0
        %v1273 = vpop.f32.mrb[0].mxu0
        %v1274 = vadd.f32 %v1070, %v1273
        %v1275 = vpop.f32.mrb[0].mxu0
        %1276 = vmatprep.mubr.bf16.mxu0 0
        %1277 = vmatmul.mubr.bf16.gmra.mrb[0].mxu0 %v1127
        %v1278 = vpop.f32.mrb[0].mxu0
        %v1279 = vadd.f32 %v1070, %v1278
        %v1280 = vpop.f32.mrb[0].mxu0
        %v1281 = vpop.f32.mrb[0].mxu0
        %v1282 = vadd.f32 %v1070, %v1281
        %v1283 = vpop.f32.mrb[0].mxu0
        %1284 = vmatprep.mubr.bf16.mxu0 0
        %1285 = vmatmul.mubr.bf16.gmra.mrb[0].mxu0 %v1130
        %v1286 = vpop.f32.mrb[0].mxu0
        %v1287 = vadd.f32 %v1070, %v1286
        %v1288 = vpop.f32.mrb[0].mxu0
        %v1289 = vpop.f32.mrb[0].mxu0
        %v1290 = vadd.f32 %v1070, %v1289
        %v1291 = vpop.f32.mrb[0].mxu0
        %1292 = vdwg.mxu0
        %v1293 = vpack.c.bf16 %v986, %v983
        %v1294 = vpack.c.bf16 %v994, %v991
        %v1295 = vpack.c.bf16 %v1002, %v999
        %v1296 = vpack.c.bf16 %v1010, %v1007
        %v1297 = vpack.c.bf16 %v1018, %v1015
        %v1298 = vpack.c.bf16 %v1026, %v1023
        %v1299 = vpack.c.bf16 %v1034, %v1031
        %v1300 = vpack.c.bf16 %v1042, %v1039
        %v1301 = vpack.c.bf16 %v1170, %v1167
        %v1302 = vpack.c.bf16 %v1178, %v1175
        %v1303 = vpack.c.bf16 %v1186, %v1183
        %v1304 = vpack.c.bf16 %v1194, %v1191
        %v1305 = vpack.c.bf16 %v1202, %v1199
        %v1306 = vpack.c.bf16 %v1210, %v1207
        %v1307 = vpack.c.bf16 %v1218, %v1215
        %v1308 = vpack.c.bf16 %v1226, %v1223
        %v1309 = vpack.c.bf16 %v1234, %v1231
        %v1310 = vpack.c.bf16 %v1242, %v1239
        %v1311 = vpack.c.bf16 %v1250, %v1247
        %v1312 = vpack.c.bf16 %v1258, %v1255
        %v1313 = vpack.c.bf16 %v1266, %v1263
        %v1314 = vpack.c.bf16 %v1274, %v1271
        %v1315 = vpack.c.bf16 %v1282, %v1279
        %v1316 = vpack.c.bf16 %v1290, %v1287
        %vm1317 = vcmask 130048
        %v1319 = vsel %vm1317, %v1293, 0
        %v1322 = vsel %vm1317, %v1294, 0
        %v1325 = vsel %vm1317, %v1295, 0
        %v1328 = vsel %vm1317, %v1296, 0
        %v1331 = vsel %vm1317, %v1297, 0
        %v1334 = vsel %vm1317, %v1298, 0
        %v1337 = vsel %vm1317, %v1299, 0
        %v1340 = vsel %vm1317, %v1300, 0
        %v1343 = vsel %vm1317, %v1301, 0
        %v1346 = vsel %vm1317, %v1302, 0
        %v1349 = vsel %vm1317, %v1303, 0
        %v1352 = vsel %vm1317, %v1304, 0
        %v1355 = vsel %vm1317, %v1305, 0
        %v1358 = vsel %vm1317, %v1306, 0
        %v1361 = vsel %vm1317, %v1307, 0
        %v1364 = vsel %vm1317, %v1308, 0
        %v1367 = vsel %vm1317, %v1309, 0
        %v1370 = vsel %vm1317, %v1310, 0
        %v1373 = vsel %vm1317, %v1311, 0
        %v1376 = vsel %vm1317, %v1312, 0
        %v1379 = vsel %vm1317, %v1313, 0
        %v1382 = vsel %vm1317, %v1314, 0
        %v1385 = vsel %vm1317, %v1315, 0
        %v1388 = vsel %vm1317, %v1316, 0
        %1390 = vmatprep.subr.bf16.mxu0 0
        %1391 = vmatpush1.bf16.xpose.msra.mxu0 %v1343
        %1392 = vmatprep.subr.bf16.mxu0 0
        %1393 = vmatpush1.bf16.xpose.msra.mxu0 %v1346
        %1394 = vmatprep.subr.bf16.mxu0 0
        %1395 = vmatpush1.bf16.xpose.msra.mxu0 %v1349
        %1396 = vmatprep.subr.bf16.mxu0 0
        %1397 = vmatpush1.bf16.xpose.msra.mxu0 %v1352
        %1398 = vmatprep.subr.bf16.mxu0 0
        %1399 = vmatpush1.bf16.xpose.msra.mxu0 %v1355
        %1400 = vmatprep.subr.bf16.mxu0 0
        %1401 = vmatpush1.bf16.xpose.msra.mxu0 %v1358
        %1402 = vmatprep.subr.bf16.mxu0 0
        %1403 = vmatpush1.bf16.xpose.msra.mxu0 %v1361
        %1404 = vmatprep.subr.bf16.mxu0 0
        %1405 = vmatpush1.bf16.xpose.msra.mxu0 %v1364
        %1406 = vmatprep.subr.bf16.mxu0 0
        %1407 = vmatpush1.bf16.xpose.msra.mxu0 %v1367
        %1408 = vmatprep.subr.bf16.mxu0 0
        %1409 = vmatpush1.bf16.xpose.msra.mxu0 %v1370
        %1410 = vmatprep.subr.bf16.mxu0 0
        %1411 = vmatpush1.bf16.xpose.msra.mxu0 %v1373
        %1412 = vmatprep.subr.bf16.mxu0 0
        %1413 = vmatpush1.bf16.xpose.msra.mxu0 %v1376
        %1414 = vmatprep.subr.bf16.mxu0 0
        %1415 = vmatpush1.bf16.xpose.msra.mxu0 %v1379
        %1416 = vmatprep.subr.bf16.mxu0 0
        %1417 = vmatpush1.bf16.xpose.msra.mxu0 %v1382
        %1418 = vmatprep.subr.bf16.mxu0 0
        %1419 = vmatpush1.bf16.xpose.msra.mxu0 %v1385
        %1420 = vmatprep.subr.bf16.mxu0 0
        %1421 = vmatpush1.bf16.xpose.msra.mxu0 %v1388
        %1422 = vmatprep.mubr.bf16.mxu0 0
        %1423 = vmatmul.mubr.bf16.gmra.mrb[0].mxu0 %v1319
        %v1424 = vpop.f32.mrb[0].mxu0
        %v1425 = vadd.f32 0.0, %v1424
        %v1426 = vpop.f32.mrb[0].mxu0
        %v1427 = vadd.f32 0.0, %v1426
        %v1428 = vpop.f32.mrb[0].mxu0
        %v1429 = vadd.f32 0.0, %v1428
        %v1430 = vpop.f32.mrb[0].mxu0
        %v1431 = vadd.f32 0.0, %v1430
        %1432 = vmatprep.mubr.bf16.mxu0 0
        %1433 = vmatmul.mubr.bf16.gmra.mrb[0].mxu0 %v1322
        %v1434 = vpop.f32.mrb[0].mxu0
        %v1435 = vadd.f32 0.0, %v1434
        %v1436 = vpop.f32.mrb[0].mxu0
        %v1437 = vadd.f32 0.0, %v1436
        %v1438 = vpop.f32.mrb[0].mxu0
        %v1439 = vadd.f32 0.0, %v1438
        %v1440 = vpop.f32.mrb[0].mxu0
        %v1441 = vadd.f32 0.0, %v1440
        %1442 = vmatprep.mubr.bf16.mxu0 0
        %1443 = vmatmul.mubr.bf16.gmra.mrb[0].mxu0 %v1325
        %v1444 = vpop.f32.mrb[0].mxu0
        %v1445 = vadd.f32 0.0, %v1444
        %v1446 = vpop.f32.mrb[0].mxu0
        %v1447 = vadd.f32 0.0, %v1446
        %v1448 = vpop.f32.mrb[0].mxu0
        %v1449 = vadd.f32 0.0, %v1448
        %v1450 = vpop.f32.mrb[0].mxu0
        %v1451 = vadd.f32 0.0, %v1450
        %1452 = vmatprep.mubr.bf16.mxu0 0
        %1453 = vmatmul.mubr.bf16.gmra.mrb[0].mxu0 %v1328
        %v1454 = vpop.f32.mrb[0].mxu0
        %v1455 = vadd.f32 0.0, %v1454
        %v1456 = vpop.f32.mrb[0].mxu0
        %v1457 = vadd.f32 0.0, %v1456
        %v1458 = vpop.f32.mrb[0].mxu0
        %v1459 = vadd.f32 0.0, %v1458
        %v1460 = vpop.f32.mrb[0].mxu0
        %v1461 = vadd.f32 0.0, %v1460
        %1462 = vmatprep.mubr.bf16.mxu0 0
        %1463 = vmatmul.mubr.bf16.gmra.mrb[0].mxu0 %v1331
        %v1464 = vpop.f32.mrb[0].mxu0
        %v1465 = vadd.f32 0.0, %v1464
        %v1466 = vpop.f32.mrb[0].mxu0
        %v1467 = vadd.f32 0.0, %v1466
        %v1468 = vpop.f32.mrb[0].mxu0
        %v1469 = vadd.f32 0.0, %v1468
        %v1470 = vpop.f32.mrb[0].mxu0
        %v1471 = vadd.f32 0.0, %v1470
        %1472 = vmatprep.mubr.bf16.mxu0 0
        %1473 = vmatmul.mubr.bf16.gmra.mrb[0].mxu0 %v1334
        %v1474 = vpop.f32.mrb[0].mxu0
        %v1475 = vadd.f32 0.0, %v1474
        %v1476 = vpop.f32.mrb[0].mxu0
        %v1477 = vadd.f32 0.0, %v1476
        %v1478 = vpop.f32.mrb[0].mxu0
        %v1479 = vadd.f32 0.0, %v1478
        %v1480 = vpop.f32.mrb[0].mxu0
        %v1481 = vadd.f32 0.0, %v1480
        %1482 = vmatprep.mubr.bf16.mxu0 0
        %1483 = vmatmul.mubr.bf16.gmra.mrb[0].mxu0 %v1337
        %v1484 = vpop.f32.mrb[0].mxu0
        %v1485 = vadd.f32 0.0, %v1484
        %v1486 = vpop.f32.mrb[0].mxu0
        %v1487 = vadd.f32 0.0, %v1486
        %v1488 = vpop.f32.mrb[0].mxu0
        %v1489 = vadd.f32 0.0, %v1488
        %v1490 = vpop.f32.mrb[0].mxu0
        %v1491 = vadd.f32 0.0, %v1490
        %1492 = vmatprep.mubr.bf16.mxu0 0
        %1493 = vmatmul.mubr.bf16.gmra.mrb[0].mxu0 %v1340
        %v1494 = vpop.f32.mrb[0].mxu0
        %v1495 = vadd.f32 0.0, %v1494
        %v1496 = vpop.f32.mrb[0].mxu0
        %v1497 = vadd.f32 0.0, %v1496
        %v1498 = vpop.f32.mrb[0].mxu0
        %v1499 = vadd.f32 0.0, %v1498
        %v1500 = vpop.f32.mrb[0].mxu0
        %v1501 = vadd.f32 0.0, %v1500
        %1502 = vdwg.mxu0
        %v1503 = vmax.f32 %v1425, %v1427
        %1504 = vmax.xlane.f32.xlu0 %v1503
        %v1505 = vpop.xlane.xlu0 %1504
        %v1506 = vmax.f32 %v1429, %v1431
        %1507 = vmax.xlane.f32.xlu0 %v1506
        %v1508 = vpop.xlane.xlu0 %1507
        %v1509 = vmax.f32 %v1435, %v1437
        %1510 = vmax.xlane.f32.xlu0 %v1509
        %v1511 = vpop.xlane.xlu0 %1510
        %v1512 = vmax.f32 %v1439, %v1441
        %1513 = vmax.xlane.f32.xlu0 %v1512
        %v1514 = vpop.xlane.xlu0 %1513
        %v1515 = vmax.f32 %v1445, %v1447
        %1516 = vmax.xlane.f32.xlu0 %v1515
        %v1517 = vpop.xlane.xlu0 %1516
        %v1518 = vmax.f32 %v1449, %v1451
        %1519 = vmax.xlane.f32.xlu0 %v1518
        %v1520 = vpop.xlane.xlu0 %1519
        %v1521 = vmax.f32 %v1455, %v1457
        %1522 = vmax.xlane.f32.xlu0 %v1521
        %v1523 = vpop.xlane.xlu0 %1522
        %v1524 = vmax.f32 %v1459, %v1461
        %1525 = vmax.xlane.f32.xlu0 %v1524
        %v1526 = vpop.xlane.xlu0 %1525
        %v1527 = vmax.f32 %v1465, %v1467
        %1528 = vmax.xlane.f32.xlu0 %v1527
        %v1529 = vpop.xlane.xlu0 %1528
        %v1530 = vmax.f32 %v1469, %v1471
        %1531 = vmax.xlane.f32.xlu0 %v1530
        %v1532 = vpop.xlane.xlu0 %1531
        %v1533 = vmax.f32 %v1475, %v1477
        %1534 = vmax.xlane.f32.xlu0 %v1533
        %v1535 = vpop.xlane.xlu0 %1534
        %v1536 = vmax.f32 %v1479, %v1481
        %1537 = vmax.xlane.f32.xlu0 %v1536
        %v1538 = vpop.xlane.xlu0 %1537
        %v1539 = vmax.f32 %v1485, %v1487
        %1540 = vmax.xlane.f32.xlu0 %v1539
        %v1541 = vpop.xlane.xlu0 %1540
        %v1542 = vmax.f32 %v1489, %v1491
        %1543 = vmax.xlane.f32.xlu0 %v1542
        %v1544 = vpop.xlane.xlu0 %1543
        %v1545 = vmax.f32 %v1495, %v1497
        %1546 = vmax.xlane.f32.xlu0 %v1545
        %v1547 = vpop.xlane.xlu0 %1546
        %v1548 = vmax.f32 %v1499, %v1501
        %1549 = vmax.xlane.f32.xlu0 %v1548
        %v1550 = vpop.xlane.xlu0 %1549
        %v1551 = vsub.f32 %v1425, %v1505
        %v1552 = vsub.f32 %v1427, %v1505
        %v1553 = vsub.f32 %v1429, %v1508
        %v1554 = vsub.f32 %v1431, %v1508
        %v1555 = vsub.f32 %v1435, %v1511
        %v1556 = vsub.f32 %v1437, %v1511
        %v1557 = vsub.f32 %v1439, %v1514
        %v1558 = vsub.f32 %v1441, %v1514
        %v1559 = vsub.f32 %v1445, %v1517
        %v1560 = vsub.f32 %v1447, %v1517
        %v1561 = vsub.f32 %v1449, %v1520
        %v1562 = vsub.f32 %v1451, %v1520
        %v1563 = vsub.f32 %v1455, %v1523
        %v1564 = vsub.f32 %v1457, %v1523
        %v1565 = vsub.f32 %v1459, %v1526
        %v1566 = vsub.f32 %v1461, %v1526
        %v1567 = vsub.f32 %v1465, %v1529
        %v1568 = vsub.f32 %v1467, %v1529
        %v1569 = vsub.f32 %v1469, %v1532
        %v1570 = vsub.f32 %v1471, %v1532
        %v1571 = vsub.f32 %v1475, %v1535
        %v1572 = vsub.f32 %v1477, %v1535
        %v1573 = vsub.f32 %v1479, %v1538
        %v1574 = vsub.f32 %v1481, %v1538
        %v1575 = vsub.f32 %v1485, %v1541
        %v1576 = vsub.f32 %v1487, %v1541
        %v1577 = vsub.f32 %v1489, %v1544
        %v1578 = vsub.f32 %v1491, %v1544
        %v1579 = vsub.f32 %v1495, %v1547
        %v1580 = vsub.f32 %v1497, %v1547
        %v1581 = vsub.f32 %v1499, %v1550
        %v1582 = vsub.f32 %v1501, %v1550
        %v1583 = vmul.f32 %v1551, 1.442695
        %v1584 = vpow.pop %v1583
        %v1585 = vmul.f32 %v1552, 1.442695
        %v1586 = vpow.pop %v1585
        %v1587 = vmul.f32 %v1553, 1.442695
        %v1588 = vpow.pop %v1587
        %v1589 = vmul.f32 %v1554, 1.442695
        %v1590 = vpow.pop %v1589
        %v1591 = vmul.f32 %v1555, 1.442695
        %v1592 = vpow.pop %v1591
        %v1593 = vmul.f32 %v1556, 1.442695
        %v1594 = vpow.pop %v1593
        %v1595 = vmul.f32 %v1557, 1.442695
        %v1596 = vpow.pop %v1595
        %v1597 = vmul.f32 %v1558, 1.442695
        %v1598 = vpow.pop %v1597
        %v1599 = vmul.f32 %v1559, 1.442695
        %v1600 = vpow.pop %v1599
        %v1601 = vmul.f32 %v1560, 1.442695
        %v1602 = vpow.pop %v1601
        %v1603 = vmul.f32 %v1561, 1.442695
        %v1604 = vpow.pop %v1603
        %v1605 = vmul.f32 %v1562, 1.442695
        %v1606 = vpow.pop %v1605
        %v1607 = vmul.f32 %v1563, 1.442695
        %v1608 = vpow.pop %v1607
        %v1609 = vmul.f32 %v1564, 1.442695
        %v1610 = vpow.pop %v1609
        %v1611 = vmul.f32 %v1565, 1.442695
        %v1612 = vpow.pop %v1611
        %v1613 = vmul.f32 %v1566, 1.442695
        %v1614 = vpow.pop %v1613
        %v1615 = vmul.f32 %v1567, 1.442695
        %v1616 = vpow.pop %v1615
        %v1617 = vmul.f32 %v1568, 1.442695
        %v1618 = vpow.pop %v1617
        %v1619 = vmul.f32 %v1569, 1.442695
        %v1620 = vpow.pop %v1619
        %v1621 = vmul.f32 %v1570, 1.442695
        %v1622 = vpow.pop %v1621
        %v1623 = vmul.f32 %v1571, 1.442695
        %v1624 = vpow.pop %v1623
        %v1625 = vmul.f32 %v1572, 1.442695
        %v1626 = vpow.pop %v1625
        %v1627 = vmul.f32 %v1573, 1.442695
        %v1628 = vpow.pop %v1627
        %v1629 = vmul.f32 %v1574, 1.442695
        %v1630 = vpow.pop %v1629
        %v1631 = vmul.f32 %v1575, 1.442695
        %v1632 = vpow.pop %v1631
        %v1633 = vmul.f32 %v1576, 1.442695
        %v1634 = vpow.pop %v1633
        %v1635 = vmul.f32 %v1577, 1.442695
        %v1636 = vpow.pop %v1635
        %v1637 = vmul.f32 %v1578, 1.442695
        %v1638 = vpow.pop %v1637
        %v1639 = vmul.f32 %v1579, 1.442695
        %v1640 = vpow.pop %v1639
        %v1641 = vmul.f32 %v1580, 1.442695
        %v1642 = vpow.pop %v1641
        %v1643 = vmul.f32 %v1581, 1.442695
        %v1644 = vpow.pop %v1643
        %v1645 = vmul.f32 %v1582, 1.442695
        %v1646 = vpow.pop %v1645
        %v1647 = vadd.f32 %v1584, %v1586
        %1648 = vadd.xlane.f32.xlu0 %v1647
        %v1649 = vpop.xlane.xlu0 %1648
        %v1650 = vadd.f32 %v1588, %v1590
        %1651 = vadd.xlane.f32.xlu0 %v1650
        %v1652 = vpop.xlane.xlu0 %1651
        %v1653 = vadd.f32 %v1592, %v1594
        %1654 = vadd.xlane.f32.xlu0 %v1653
        %v1655 = vpop.xlane.xlu0 %1654
        %v1656 = vadd.f32 %v1596, %v1598
        %1657 = vadd.xlane.f32.xlu0 %v1656
        %v1658 = vpop.xlane.xlu0 %1657
        %v1659 = vadd.f32 %v1600, %v1602
        %1660 = vadd.xlane.f32.xlu0 %v1659
        %v1661 = vpop.xlane.xlu0 %1660
        %v1662 = vadd.f32 %v1604, %v1606
        %1663 = vadd.xlane.f32.xlu0 %v1662
        %v1664 = vpop.xlane.xlu0 %1663
        %v1665 = vadd.f32 %v1608, %v1610
        %1666 = vadd.xlane.f32.xlu0 %v1665
        %v1667 = vpop.xlane.xlu0 %1666
        %v1668 = vadd.f32 %v1612, %v1614
        %1669 = vadd.xlane.f32.xlu0 %v1668
        %v1670 = vpop.xlane.xlu0 %1669
        %v1671 = vadd.f32 %v1616, %v1618
        %1672 = vadd.xlane.f32.xlu0 %v1671
        %v1673 = vpop.xlane.xlu0 %1672
        %v1674 = vadd.f32 %v1620, %v1622
        %1675 = vadd.xlane.f32.xlu0 %v1674
        %v1676 = vpop.xlane.xlu0 %1675
        %v1677 = vadd.f32 %v1624, %v1626
        %1678 = vadd.xlane.f32.xlu0 %v1677
        %v1679 = vpop.xlane.xlu0 %1678
        %v1680 = vadd.f32 %v1628, %v1630
        %1681 = vadd.xlane.f32.xlu0 %v1680
        %v1682 = vpop.xlane.xlu0 %1681
        %v1683 = vadd.f32 %v1632, %v1634
        %1684 = vadd.xlane.f32.xlu0 %v1683
        %v1685 = vpop.xlane.xlu0 %1684
        %v1686 = vadd.f32 %v1636, %v1638
        %1687 = vadd.xlane.f32.xlu0 %v1686
        %v1688 = vpop.xlane.xlu0 %1687
        %v1689 = vadd.f32 %v1640, %v1642
        %1690 = vadd.xlane.f32.xlu0 %v1689
        %v1691 = vpop.xlane.xlu0 %1690
        %v1692 = vadd.f32 %v1644, %v1646
        %1693 = vadd.xlane.f32.xlu0 %v1692
        %v1694 = vpop.xlane.xlu0 %1693
        %v1695 = vrcp.pop %v1649
        %v1696 = vrcp.pop %v1652
        %v1697 = vrcp.pop %v1655
        %v1698 = vrcp.pop %v1658
        %v1699 = vrcp.pop %v1661
        %v1700 = vrcp.pop %v1664
        %v1701 = vrcp.pop %v1667
        %v1702 = vrcp.pop %v1670
        %v1703 = vrcp.pop %v1673
        %v1704 = vrcp.pop %v1676
        %v1705 = vrcp.pop %v1679
        %v1706 = vrcp.pop %v1682
        %v1707 = vrcp.pop %v1685
        %v1708 = vrcp.pop %v1688
        %v1709 = vrcp.pop %v1691
        %v1710 = vrcp.pop %v1694
        %v1711 = vmul.f32 %v1584, %v1695
        %v1712 = vmul.f32 %v1586, %v1695
        %v1713 = vmul.f32 %v1588, %v1696
        %v1714 = vmul.f32 %v1590, %v1696
        %v1715 = vmul.f32 %v1592, %v1697
        %v1716 = vmul.f32 %v1594, %v1697
        %v1717 = vmul.f32 %v1596, %v1698
        %v1718 = vmul.f32 %v1598, %v1698
        %v1719 = vmul.f32 %v1600, %v1699
        %v1720 = vmul.f32 %v1602, %v1699
        %v1721 = vmul.f32 %v1604, %v1700
        %v1722 = vmul.f32 %v1606, %v1700
        %v1723 = vmul.f32 %v1608, %v1701
        %v1724 = vmul.f32 %v1610, %v1701
        %v1725 = vmul.f32 %v1612, %v1702
        %v1726 = vmul.f32 %v1614, %v1702
        %v1727 = vmul.f32 %v1616, %v1703
        %v1728 = vmul.f32 %v1618, %v1703
        %v1729 = vmul.f32 %v1620, %v1704
        %v1730 = vmul.f32 %v1622, %v1704
        %v1731 = vmul.f32 %v1624, %v1705
        %v1732 = vmul.f32 %v1626, %v1705
        %v1733 = vmul.f32 %v1628, %v1706
        %v1734 = vmul.f32 %v1630, %v1706
        %v1735 = vmul.f32 %v1632, %v1707
        %v1736 = vmul.f32 %v1634, %v1707
        %v1737 = vmul.f32 %v1636, %v1708
        %v1738 = vmul.f32 %v1638, %v1708
        %v1739 = vmul.f32 %v1640, %v1709
        %v1740 = vmul.f32 %v1642, %v1709
        %v1741 = vmul.f32 %v1644, %v1710
        %v1742 = vmul.f32 %v1646, %v1710
        %v1743 = vpack.c.bf16 %v1713, %v1711
        %v1744 = vpack.c.bf16 %v1714, %v1712
        %v1745 = vpack.c.bf16 %v1717, %v1715
        %v1746 = vpack.c.bf16 %v1718, %v1716
        %v1747 = vpack.c.bf16 %v1721, %v1719
        %v1748 = vpack.c.bf16 %v1722, %v1720
        %v1749 = vpack.c.bf16 %v1725, %v1723
        %v1750 = vpack.c.bf16 %v1726, %v1724
        %v1751 = vpack.c.bf16 %v1729, %v1727
        %v1752 = vpack.c.bf16 %v1730, %v1728
        %v1753 = vpack.c.bf16 %v1733, %v1731
        %v1754 = vpack.c.bf16 %v1734, %v1732
        %v1755 = vpack.c.bf16 %v1737, %v1735
        %v1756 = vpack.c.bf16 %v1738, %v1736
        %v1757 = vpack.c.bf16 %v1741, %v1739
        %v1758 = vpack.c.bf16 %v1742, %v1740
        %1775 = vrot.lane.b32.xlu0 %v1301, 96
        %v1776 = vpop.permute.xlu0 %1775
        %1777 = vrot.lane.b32.xlu0 %v1302, 96
        %v1778 = vpop.permute.xlu0 %1777
        %1779 = vrot.lane.b32.xlu0 %v1303, 96
        %v1780 = vpop.permute.xlu0 %1779
        %1781 = vrot.lane.b32.xlu0 %v1304, 96
        %v1782 = vpop.permute.xlu0 %1781
        %1783 = vrot.lane.b32.xlu0 %v1305, 96
        %v1784 = vpop.permute.xlu0 %1783
        %1785 = vrot.lane.b32.xlu0 %v1306, 96
        %v1786 = vpop.permute.xlu0 %1785
        %1787 = vrot.lane.b32.xlu0 %v1307, 96
        %v1788 = vpop.permute.xlu0 %1787
        %1789 = vrot.lane.b32.xlu0 %v1308, 96
        %v1790 = vpop.permute.xlu0 %1789
        %1791 = vrot.lane.b32.xlu0 %v1309, 96
        %v1792 = vpop.permute.xlu0 %1791
        %1793 = vrot.lane.b32.xlu0 %v1310, 96
        %v1794 = vpop.permute.xlu0 %1793
        %1795 = vrot.lane.b32.xlu0 %v1311, 96
        %v1796 = vpop.permute.xlu0 %1795
        %1797 = vrot.lane.b32.xlu0 %v1312, 96
        %v1798 = vpop.permute.xlu0 %1797
        %1799 = vrot.lane.b32.xlu0 %v1313, 96
        %v1800 = vpop.permute.xlu0 %1799
        %1801 = vrot.lane.b32.xlu0 %v1314, 96
        %v1802 = vpop.permute.xlu0 %1801
        %1803 = vrot.lane.b32.xlu0 %v1315, 96
        %v1804 = vpop.permute.xlu0 %1803
        %1805 = vrot.lane.b32.xlu0 %v1316, 96
        %v1806 = vpop.permute.xlu0 %1805
        %1823 = vmatprep.subr.bf16.mxu0 0
        %1824 = vmatpush1.bf16.msra.mxu0 %v1776
        %1825 = vmatprep.subr.bf16.mxu0 0
        %1826 = vmatpush1.bf16.msra.mxu0 %v1778
        %1827 = vmatprep.subr.bf16.mxu0 0
        %1828 = vmatpush1.bf16.msra.mxu0 %v1780
        %1829 = vmatprep.subr.bf16.mxu0 0
        %1830 = vmatpush1.bf16.msra.mxu0 %v1782
        %1831 = vmatprep.subr.bf16.mxu0 0
        %1832 = vmatpush1.bf16.msra.mxu0 %v1784
        %1833 = vmatprep.subr.bf16.mxu0 0
        %1834 = vmatpush1.bf16.msra.mxu0 %v1786
        %1835 = vmatprep.subr.bf16.mxu0 0
        %1836 = vmatpush1.bf16.msra.mxu0 %v1788
        %1837 = vmatprep.subr.bf16.mxu0 0
        %1838 = vmatpush1.bf16.msra.mxu0 %v1790
        %1839 = vmatprep.subr.bf16.mxu0 0
        %1840 = vmatpush1.bf16.msra.mxu0 %v1792
        %1841 = vmatprep.subr.bf16.mxu0 0
        %1842 = vmatpush1.bf16.msra.mxu0 %v1794
        %1843 = vmatprep.subr.bf16.mxu0 0
        %1844 = vmatpush1.bf16.msra.mxu0 %v1796
        %1845 = vmatprep.subr.bf16.mxu0 0
        %1846 = vmatpush1.bf16.msra.mxu0 %v1798
        %1847 = vmatprep.subr.bf16.mxu0 0
        %1848 = vmatpush1.bf16.msra.mxu0 %v1800
        %1849 = vmatprep.subr.bf16.mxu0 0
        %1850 = vmatpush1.bf16.msra.mxu0 %v1802
        %1851 = vmatprep.subr.bf16.mxu0 0
        %1852 = vmatpush1.bf16.msra.mxu0 %v1804
        %1853 = vmatprep.subr.bf16.mxu0 0
        %1854 = vmatpush1.bf16.msra.mxu0 %v1806
        %1855 = vmatprep.mubr.bf16.mxu0 %v1744
        %1856 = vmatmul.mubr.bf16.gmra.mrb[0].mxu0 %v1743
        %v1857 = vpop.f32.mrb[0].mxu0
        %v1858 = vadd.f32 0.0, %v1857
        %v1859 = vpop.f32.mrb[0].mxu0
        %v1860 = vpop.f32.mrb[0].mxu0
        %v1861 = vadd.f32 0.0, %v1860
        %v1862 = vpop.f32.mrb[0].mxu0
        %1863 = vmatprep.mubr.bf16.mxu0 %v1746
        %1864 = vmatmul.mubr.bf16.gmra.mrb[0].mxu0 %v1745
        %v1865 = vpop.f32.mrb[0].mxu0
        %v1866 = vadd.f32 0.0, %v1865
        %v1867 = vpop.f32.mrb[0].mxu0
        %v1868 = vpop.f32.mrb[0].mxu0
        %v1869 = vadd.f32 0.0, %v1868
        %v1870 = vpop.f32.mrb[0].mxu0
        %1871 = vmatprep.mubr.bf16.mxu0 %v1748
        %1872 = vmatmul.mubr.bf16.gmra.mrb[0].mxu0 %v1747
        %v1873 = vpop.f32.mrb[0].mxu0
        %v1874 = vadd.f32 0.0, %v1873
        %v1875 = vpop.f32.mrb[0].mxu0
        %v1876 = vpop.f32.mrb[0].mxu0
        %v1877 = vadd.f32 0.0, %v1876
        %v1878 = vpop.f32.mrb[0].mxu0
        %1879 = vmatprep.mubr.bf16.mxu0 %v1750
        %1880 = vmatmul.mubr.bf16.gmra.mrb[0].mxu0 %v1749
        %v1881 = vpop.f32.mrb[0].mxu0
        %v1882 = vadd.f32 0.0, %v1881
        %v1883 = vpop.f32.mrb[0].mxu0
        %v1884 = vpop.f32.mrb[0].mxu0
        %v1885 = vadd.f32 0.0, %v1884
        %v1886 = vpop.f32.mrb[0].mxu0
        %1887 = vmatprep.mubr.bf16.mxu0 %v1752
        %1888 = vmatmul.mubr.bf16.gmra.mrb[0].mxu0 %v1751
        %v1889 = vpop.f32.mrb[0].mxu0
        %v1890 = vadd.f32 0.0, %v1889
        %v1891 = vpop.f32.mrb[0].mxu0
        %v1892 = vpop.f32.mrb[0].mxu0
        %v1893 = vadd.f32 0.0, %v1892
        %v1894 = vpop.f32.mrb[0].mxu0
        %1895 = vmatprep.mubr.bf16.mxu0 %v1754
        %1896 = vmatmul.mubr.bf16.gmra.mrb[0].mxu0 %v1753
        %v1897 = vpop.f32.mrb[0].mxu0
        %v1898 = vadd.f32 0.0, %v1897
        %v1899 = vpop.f32.mrb[0].mxu0
        %v1900 = vpop.f32.mrb[0].mxu0
        %v1901 = vadd.f32 0.0, %v1900
        %v1902 = vpop.f32.mrb[0].mxu0
        %1903 = vmatprep.mubr.bf16.mxu0 %v1756
        %1904 = vmatmul.mubr.bf16.gmra.mrb[0].mxu0 %v1755
        %v1905 = vpop.f32.mrb[0].mxu0
        %v1906 = vadd.f32 0.0, %v1905
        %v1907 = vpop.f32.mrb[0].mxu0
        %v1908 = vpop.f32.mrb[0].mxu0
        %v1909 = vadd.f32 0.0, %v1908
        %v1910 = vpop.f32.mrb[0].mxu0
        %1911 = vmatprep.mubr.bf16.mxu0 %v1758
        %1912 = vmatmul.mubr.bf16.gmra.mrb[0].mxu0 %v1757
        %v1913 = vpop.f32.mrb[0].mxu0
        %v1914 = vadd.f32 0.0, %v1913
        %v1915 = vpop.f32.mrb[0].mxu0
        %v1916 = vpop.f32.mrb[0].mxu0
        %v1917 = vadd.f32 0.0, %v1916
        %v1918 = vpop.f32.mrb[0].mxu0
        %1919 = vdwg.mxu0
        %1928 = vrot.lane.b32.xlu0 %v1293, 112
        %v1929 = vpop.permute.xlu0 %1928
        %1930 = vrot.lane.b32.xlu0 %v1294, 112
        %v1931 = vpop.permute.xlu0 %1930
        %1932 = vrot.lane.b32.xlu0 %v1295, 112
        %v1933 = vpop.permute.xlu0 %1932
        %1934 = vrot.lane.b32.xlu0 %v1296, 112
        %v1935 = vpop.permute.xlu0 %1934
        %1936 = vrot.lane.b32.xlu0 %v1297, 112
        %v1937 = vpop.permute.xlu0 %1936
        %1938 = vrot.lane.b32.xlu0 %v1298, 112
        %v1939 = vpop.permute.xlu0 %1938
        %1940 = vrot.lane.b32.xlu0 %v1299, 112
        %v1941 = vpop.permute.xlu0 %1940
        %1942 = vrot.lane.b32.xlu0 %v1300, 112
        %v1943 = vpop.permute.xlu0 %1942
        %1944 = vrot.lane.b32.xlu0 %v1301, 112
        %v1945 = vpop.permute.xlu0 %1944
        %1946 = vrot.lane.b32.xlu0 %v1302, 112
        %v1947 = vpop.permute.xlu0 %1946
        %1948 = vrot.lane.b32.xlu0 %v1303, 112
        %v1949 = vpop.permute.xlu0 %1948
        %1950 = vrot.lane.b32.xlu0 %v1304, 112
        %v1951 = vpop.permute.xlu0 %1950
        %1952 = vrot.lane.b32.xlu0 %v1305, 112
        %v1953 = vpop.permute.xlu0 %1952
        %1954 = vrot.lane.b32.xlu0 %v1306, 112
        %v1955 = vpop.permute.xlu0 %1954
        %1956 = vrot.lane.b32.xlu0 %v1307, 112
        %v1957 = vpop.permute.xlu0 %1956
        %1958 = vrot.lane.b32.xlu0 %v1308, 112
        %v1959 = vpop.permute.xlu0 %1958
        %1960 = vrot.lane.b32.xlu0 %v1309, 112
        %v1961 = vpop.permute.xlu0 %1960
        %1962 = vrot.lane.b32.xlu0 %v1310, 112
        %v1963 = vpop.permute.xlu0 %1962
        %1964 = vrot.lane.b32.xlu0 %v1311, 112
        %v1965 = vpop.permute.xlu0 %1964
        %1966 = vrot.lane.b32.xlu0 %v1312, 112
        %v1967 = vpop.permute.xlu0 %1966
        %1968 = vrot.lane.b32.xlu0 %v1313, 112
        %v1969 = vpop.permute.xlu0 %1968
        %1970 = vrot.lane.b32.xlu0 %v1314, 112
        %v1971 = vpop.permute.xlu0 %1970
        %1972 = vrot.lane.b32.xlu0 %v1315, 112
        %v1973 = vpop.permute.xlu0 %1972
        %1974 = vrot.lane.b32.xlu0 %v1316, 112
        %v1975 = vpop.permute.xlu0 %1974
        %v1977 = vsel %vm1317, %v1929, 0
        %v1980 = vsel %vm1317, %v1931, 0
        %v1983 = vsel %vm1317, %v1933, 0
        %v1986 = vsel %vm1317, %v1935, 0
        %v1989 = vsel %vm1317, %v1937, 0
        %v1992 = vsel %vm1317, %v1939, 0
        %v1995 = vsel %vm1317, %v1941, 0
        %v1998 = vsel %vm1317, %v1943, 0
        %v2001 = vsel %vm1317, %v1945, 0
        %v2004 = vsel %vm1317, %v1947, 0
        %v2007 = vsel %vm1317, %v1949, 0
        %v2010 = vsel %vm1317, %v1951, 0
        %v2013 = vsel %vm1317, %v1953, 0
        %v2016 = vsel %vm1317, %v1955, 0
        %v2019 = vsel %vm1317, %v1957, 0
        %v2022 = vsel %vm1317, %v1959, 0
        %v2025 = vsel %vm1317, %v1961, 0
        %v2028 = vsel %vm1317, %v1963, 0
        %v2031 = vsel %vm1317, %v1965, 0
        %v2034 = vsel %vm1317, %v1967, 0
        %v2037 = vsel %vm1317, %v1969, 0
        %v2040 = vsel %vm1317, %v1971, 0
        %v2043 = vsel %vm1317, %v1973, 0
        %v2046 = vsel %vm1317, %v1975, 0
        %2048 = vmatprep.subr.bf16.mxu0 0
        %2049 = vmatpush1.bf16.xpose.msra.mxu0 %v2001
        %2050 = vmatprep.subr.bf16.mxu0 0
        %2051 = vmatpush1.bf16.xpose.msra.mxu0 %v2004
        %2052 = vmatprep.subr.bf16.mxu0 0
        %2053 = vmatpush1.bf16.xpose.msra.mxu0 %v2007
        %2054 = vmatprep.subr.bf16.mxu0 0
        %2055 = vmatpush1.bf16.xpose.msra.mxu0 %v2010
        %2056 = vmatprep.subr.bf16.mxu0 0
        %2057 = vmatpush1.bf16.xpose.msra.mxu0 %v2013
        %2058 = vmatprep.subr.bf16.mxu0 0
        %2059 = vmatpush1.bf16.xpose.msra.mxu0 %v2016
        %2060 = vmatprep.subr.bf16.mxu0 0
        %2061 = vmatpush1.bf16.xpose.msra.mxu0 %v2019
        %2062 = vmatprep.subr.bf16.mxu0 0
        %2063 = vmatpush1.bf16.xpose.msra.mxu0 %v2022
        %2064 = vmatprep.subr.bf16.mxu0 0
        %2065 = vmatpush1.bf16.xpose.msra.mxu0 %v2025
        %2066 = vmatprep.subr.bf16.mxu0 0
        %2067 = vmatpush1.bf16.xpose.msra.mxu0 %v2028
        %2068 = vmatprep.subr.bf16.mxu0 0
        %2069 = vmatpush1.bf16.xpose.msra.mxu0 %v2031
        %2070 = vmatprep.subr.bf16.mxu0 0
        %2071 = vmatpush1.bf16.xpose.msra.mxu0 %v2034
        %2072 = vmatprep.subr.bf16.mxu0 0
        %2073 = vmatpush1.bf16.xpose.msra.mxu0 %v2037
        %2074 = vmatprep.subr.bf16.mxu0 0
        %2075 = vmatpush1.bf16.xpose.msra.mxu0 %v2040
        %2076 = vmatprep.subr.bf16.mxu0 0
        %2077 = vmatpush1.bf16.xpose.msra.mxu0 %v2043
        %2078 = vmatprep.subr.bf16.mxu0 0
        %2079 = vmatpush1.bf16.xpose.msra.mxu0 %v2046
        %2080 = vmatprep.mubr.bf16.mxu0 0
        %2081 = vmatmul.mubr.bf16.gmra.mrb[0].mxu0 %v1977
        %v2082 = vpop.f32.mrb[0].mxu0
        %v2083 = vadd.f32 0.0, %v2082
        %v2084 = vpop.f32.mrb[0].mxu0
        %v2085 = vadd.f32 0.0, %v2084
        %v2086 = vpop.f32.mrb[0].mxu0
        %v2087 = vadd.f32 0.0, %v2086
        %v2088 = vpop.f32.mrb[0].mxu0
        %v2089 = vadd.f32 0.0, %v2088
        %2090 = vmatprep.mubr.bf16.mxu0 0
        %2091 = vmatmul.mubr.bf16.gmra.mrb[0].mxu0 %v1980
        %v2092 = vpop.f32.mrb[0].mxu0
        %v2093 = vadd.f32 0.0, %v2092
        %v2094 = vpop.f32.mrb[0].mxu0
        %v2095 = vadd.f32 0.0, %v2094
        %v2096 = vpop.f32.mrb[0].mxu0
        %v2097 = vadd.f32 0.0, %v2096
        %v2098 = vpop.f32.mrb[0].mxu0
        %v2099 = vadd.f32 0.0, %v2098
        %2100 = vmatprep.mubr.bf16.mxu0 0
        %2101 = vmatmul.mubr.bf16.gmra.mrb[0].mxu0 %v1983
        %v2102 = vpop.f32.mrb[0].mxu0
        %v2103 = vadd.f32 0.0, %v2102
        %v2104 = vpop.f32.mrb[0].mxu0
        %v2105 = vadd.f32 0.0, %v2104
        %v2106 = vpop.f32.mrb[0].mxu0
        %v2107 = vadd.f32 0.0, %v2106
        %v2108 = vpop.f32.mrb[0].mxu0
        %v2109 = vadd.f32 0.0, %v2108
        %2110 = vmatprep.mubr.bf16.mxu0 0
        %2111 = vmatmul.mubr.bf16.gmra.mrb[0].mxu0 %v1986
        %v2112 = vpop.f32.mrb[0].mxu0
        %v2113 = vadd.f32 0.0, %v2112
        %v2114 = vpop.f32.mrb[0].mxu0
        %v2115 = vadd.f32 0.0, %v2114
        %v2116 = vpop.f32.mrb[0].mxu0
        %v2117 = vadd.f32 0.0, %v2116
        %v2118 = vpop.f32.mrb[0].mxu0
        %v2119 = vadd.f32 0.0, %v2118
        %2120 = vmatprep.mubr.bf16.mxu0 0
        %2121 = vmatmul.mubr.bf16.gmra.mrb[0].mxu0 %v1989
        %v2122 = vpop.f32.mrb[0].mxu0
        %v2123 = vadd.f32 0.0, %v2122
        %v2124 = vpop.f32.mrb[0].mxu0
        %v2125 = vadd.f32 0.0, %v2124
        %v2126 = vpop.f32.mrb[0].mxu0
        %v2127 = vadd.f32 0.0, %v2126
        %v2128 = vpop.f32.mrb[0].mxu0
        %v2129 = vadd.f32 0.0, %v2128
        %2130 = vmatprep.mubr.bf16.mxu0 0
        %2131 = vmatmul.mubr.bf16.gmra.mrb[0].mxu0 %v1992
        %v2132 = vpop.f32.mrb[0].mxu0
        %v2133 = vadd.f32 0.0, %v2132
        %v2134 = vpop.f32.mrb[0].mxu0
        %v2135 = vadd.f32 0.0, %v2134
        %v2136 = vpop.f32.mrb[0].mxu0
        %v2137 = vadd.f32 0.0, %v2136
        %v2138 = vpop.f32.mrb[0].mxu0
        %v2139 = vadd.f32 0.0, %v2138
        %2140 = vmatprep.mubr.bf16.mxu0 0
        %2141 = vmatmul.mubr.bf16.gmra.mrb[0].mxu0 %v1995
        %v2142 = vpop.f32.mrb[0].mxu0
        %v2143 = vadd.f32 0.0, %v2142
        %v2144 = vpop.f32.mrb[0].mxu0
        %v2145 = vadd.f32 0.0, %v2144
        %v2146 = vpop.f32.mrb[0].mxu0
        %v2147 = vadd.f32 0.0, %v2146
        %v2148 = vpop.f32.mrb[0].mxu0
        %v2149 = vadd.f32 0.0, %v2148
        %2150 = vmatprep.mubr.bf16.mxu0 0
        %2151 = vmatmul.mubr.bf16.gmra.mrb[0].mxu0 %v1998
        %v2152 = vpop.f32.mrb[0].mxu0
        %v2153 = vadd.f32 0.0, %v2152
        %v2154 = vpop.f32.mrb[0].mxu0
        %v2155 = vadd.f32 0.0, %v2154
        %v2156 = vpop.f32.mrb[0].mxu0
        %v2157 = vadd.f32 0.0, %v2156
        %v2158 = vpop.f32.mrb[0].mxu0
        %v2159 = vadd.f32 0.0, %v2158
        %2160 = vdwg.mxu0
        %v2161 = vmax.f32 %v2083, %v2085
        %2162 = vmax.xlane.f32.xlu0 %v2161
        %v2163 = vpop.xlane.xlu0 %2162
        %v2164 = vmax.f32 %v2087, %v2089
        %2165 = vmax.xlane.f32.xlu0 %v2164
        %v2166 = vpop.xlane.xlu0 %2165
        %v2167 = vmax.f32 %v2093, %v2095
        %2168 = vmax.xlane.f32.xlu0 %v2167
        %v2169 = vpop.xlane.xlu0 %2168
        %v2170 = vmax.f32 %v2097, %v2099
        %2171 = vmax.xlane.f32.xlu0 %v2170
        %v2172 = vpop.xlane.xlu0 %2171
        %v2173 = vmax.f32 %v2103, %v2105
        %2174 = vmax.xlane.f32.xlu0 %v2173
        %v2175 = vpop.xlane.xlu0 %2174
        %v2176 = vmax.f32 %v2107, %v2109
        %2177 = vmax.xlane.f32.xlu0 %v2176
        %v2178 = vpop.xlane.xlu0 %2177
        %v2179 = vmax.f32 %v2113, %v2115
        %2180 = vmax.xlane.f32.xlu0 %v2179
        %v2181 = vpop.xlane.xlu0 %2180
        %v2182 = vmax.f32 %v2117, %v2119
        %2183 = vmax.xlane.f32.xlu0 %v2182
        %v2184 = vpop.xlane.xlu0 %2183
        %v2185 = vmax.f32 %v2123, %v2125
        %2186 = vmax.xlane.f32.xlu0 %v2185
        %v2187 = vpop.xlane.xlu0 %2186
        %v2188 = vmax.f32 %v2127, %v2129
        %2189 = vmax.xlane.f32.xlu0 %v2188
        %v2190 = vpop.xlane.xlu0 %2189
        %v2191 = vmax.f32 %v2133, %v2135
        %2192 = vmax.xlane.f32.xlu0 %v2191
        %v2193 = vpop.xlane.xlu0 %2192
        %v2194 = vmax.f32 %v2137, %v2139
        %2195 = vmax.xlane.f32.xlu0 %v2194
        %v2196 = vpop.xlane.xlu0 %2195
        %v2197 = vmax.f32 %v2143, %v2145
        %2198 = vmax.xlane.f32.xlu0 %v2197
        %v2199 = vpop.xlane.xlu0 %2198
        %v2200 = vmax.f32 %v2147, %v2149
        %2201 = vmax.xlane.f32.xlu0 %v2200
        %v2202 = vpop.xlane.xlu0 %2201
        %v2203 = vmax.f32 %v2153, %v2155
        %2204 = vmax.xlane.f32.xlu0 %v2203
        %v2205 = vpop.xlane.xlu0 %2204
        %v2206 = vmax.f32 %v2157, %v2159
        %2207 = vmax.xlane.f32.xlu0 %v2206
        %v2208 = vpop.xlane.xlu0 %2207
        %v2209 = vsub.f32 %v2083, %v2163
        %v2210 = vsub.f32 %v2085, %v2163
        %v2211 = vsub.f32 %v2087, %v2166
        %v2212 = vsub.f32 %v2089, %v2166
        %v2213 = vsub.f32 %v2093, %v2169
        %v2214 = vsub.f32 %v2095, %v2169
        %v2215 = vsub.f32 %v2097, %v2172
        %v2216 = vsub.f32 %v2099, %v2172
        %v2217 = vsub.f32 %v2103, %v2175
        %v2218 = vsub.f32 %v2105, %v2175
        %v2219 = vsub.f32 %v2107, %v2178
        %v2220 = vsub.f32 %v2109, %v2178
        %v2221 = vsub.f32 %v2113, %v2181
        %v2222 = vsub.f32 %v2115, %v2181
        %v2223 = vsub.f32 %v2117, %v2184
        %v2224 = vsub.f32 %v2119, %v2184
        %v2225 = vsub.f32 %v2123, %v2187
        %v2226 = vsub.f32 %v2125, %v2187
        %v2227 = vsub.f32 %v2127, %v2190
        %v2228 = vsub.f32 %v2129, %v2190
        %v2229 = vsub.f32 %v2133, %v2193
        %v2230 = vsub.f32 %v2135, %v2193
        %v2231 = vsub.f32 %v2137, %v2196
        %v2232 = vsub.f32 %v2139, %v2196
        %v2233 = vsub.f32 %v2143, %v2199
        %v2234 = vsub.f32 %v2145, %v2199
        %v2235 = vsub.f32 %v2147, %v2202
        %v2236 = vsub.f32 %v2149, %v2202
        %v2237 = vsub.f32 %v2153, %v2205
        %v2238 = vsub.f32 %v2155, %v2205
        %v2239 = vsub.f32 %v2157, %v2208
        %v2240 = vsub.f32 %v2159, %v2208
        %v2241 = vmul.f32 %v2209, 1.442695
        %v2242 = vpow.pop %v2241
        %v2243 = vmul.f32 %v2210, 1.442695
        %v2244 = vpow.pop %v2243
        %v2245 = vmul.f32 %v2211, 1.442695
        %v2246 = vpow.pop %v2245
        %v2247 = vmul.f32 %v2212, 1.442695
        %v2248 = vpow.pop %v2247
        %v2249 = vmul.f32 %v2213, 1.442695
        %v2250 = vpow.pop %v2249
        %v2251 = vmul.f32 %v2214, 1.442695
        %v2252 = vpow.pop %v2251
        %v2253 = vmul.f32 %v2215, 1.442695
        %v2254 = vpow.pop %v2253
        %v2255 = vmul.f32 %v2216, 1.442695
        %v2256 = vpow.pop %v2255
        %v2257 = vmul.f32 %v2217, 1.442695
        %v2258 = vpow.pop %v2257
        %v2259 = vmul.f32 %v2218, 1.442695
        %v2260 = vpow.pop %v2259
        %v2261 = vmul.f32 %v2219, 1.442695
        %v2262 = vpow.pop %v2261
        %v2263 = vmul.f32 %v2220, 1.442695
        %v2264 = vpow.pop %v2263
        %v2265 = vmul.f32 %v2221, 1.442695
        %v2266 = vpow.pop %v2265
        %v2267 = vmul.f32 %v2222, 1.442695
        %v2268 = vpow.pop %v2267
        %v2269 = vmul.f32 %v2223, 1.442695
        %v2270 = vpow.pop %v2269
        %v2271 = vmul.f32 %v2224, 1.442695
        %v2272 = vpow.pop %v2271
        %v2273 = vmul.f32 %v2225, 1.442695
        %v2274 = vpow.pop %v2273
        %v2275 = vmul.f32 %v2226, 1.442695
        %v2276 = vpow.pop %v2275
        %v2277 = vmul.f32 %v2227, 1.442695
        %v2278 = vpow.pop %v2277
        %v2279 = vmul.f32 %v2228, 1.442695
        %v2280 = vpow.pop %v2279
        %v2281 = vmul.f32 %v2229, 1.442695
        %v2282 = vpow.pop %v2281
        %v2283 = vmul.f32 %v2230, 1.442695
        %v2284 = vpow.pop %v2283
        %v2285 = vmul.f32 %v2231, 1.442695
        %v2286 = vpow.pop %v2285
        %v2287 = vmul.f32 %v2232, 1.442695
        %v2288 = vpow.pop %v2287
        %v2289 = vmul.f32 %v2233, 1.442695
        %v2290 = vpow.pop %v2289
        %v2291 = vmul.f32 %v2234, 1.442695
        %v2292 = vpow.pop %v2291
        %v2293 = vmul.f32 %v2235, 1.442695
        %v2294 = vpow.pop %v2293
        %v2295 = vmul.f32 %v2236, 1.442695
        %v2296 = vpow.pop %v2295
        %v2297 = vmul.f32 %v2237, 1.442695
        %v2298 = vpow.pop %v2297
        %v2299 = vmul.f32 %v2238, 1.442695
        %v2300 = vpow.pop %v2299
        %v2301 = vmul.f32 %v2239, 1.442695
        %v2302 = vpow.pop %v2301
        %v2303 = vmul.f32 %v2240, 1.442695
        %v2304 = vpow.pop %v2303
        %v2305 = vadd.f32 %v2242, %v2244
        %2306 = vadd.xlane.f32.xlu0 %v2305
        %v2307 = vpop.xlane.xlu0 %2306
        %v2308 = vadd.f32 %v2246, %v2248
        %2309 = vadd.xlane.f32.xlu0 %v2308
        %v2310 = vpop.xlane.xlu0 %2309
        %v2311 = vadd.f32 %v2250, %v2252
        %2312 = vadd.xlane.f32.xlu0 %v2311
        %v2313 = vpop.xlane.xlu0 %2312
        %v2314 = vadd.f32 %v2254, %v2256
        %2315 = vadd.xlane.f32.xlu0 %v2314
        %v2316 = vpop.xlane.xlu0 %2315
        %v2317 = vadd.f32 %v2258, %v2260
        %2318 = vadd.xlane.f32.xlu0 %v2317
        %v2319 = vpop.xlane.xlu0 %2318
        %v2320 = vadd.f32 %v2262, %v2264
        %2321 = vadd.xlane.f32.xlu0 %v2320
        %v2322 = vpop.xlane.xlu0 %2321
        %v2323 = vadd.f32 %v2266, %v2268
        %2324 = vadd.xlane.f32.xlu0 %v2323
        %v2325 = vpop.xlane.xlu0 %2324
        %v2326 = vadd.f32 %v2270, %v2272
        %2327 = vadd.xlane.f32.xlu0 %v2326
        %v2328 = vpop.xlane.xlu0 %2327
        %v2329 = vadd.f32 %v2274, %v2276
        %2330 = vadd.xlane.f32.xlu0 %v2329
        %v2331 = vpop.xlane.xlu0 %2330
        %v2332 = vadd.f32 %v2278, %v2280
        %2333 = vadd.xlane.f32.xlu0 %v2332
        %v2334 = vpop.xlane.xlu0 %2333
        %v2335 = vadd.f32 %v2282, %v2284
        %2336 = vadd.xlane.f32.xlu0 %v2335
        %v2337 = vpop.xlane.xlu0 %2336
        %v2338 = vadd.f32 %v2286, %v2288
        %2339 = vadd.xlane.f32.xlu0 %v2338
        %v2340 = vpop.xlane.xlu0 %2339
        %v2341 = vadd.f32 %v2290, %v2292
        %2342 = vadd.xlane.f32.xlu0 %v2341
        %v2343 = vpop.xlane.xlu0 %2342
        %v2344 = vadd.f32 %v2294, %v2296
        %2345 = vadd.xlane.f32.xlu0 %v2344
        %v2346 = vpop.xlane.xlu0 %2345
        %v2347 = vadd.f32 %v2298, %v2300
        %2348 = vadd.xlane.f32.xlu0 %v2347
        %v2349 = vpop.xlane.xlu0 %2348
        %v2350 = vadd.f32 %v2302, %v2304
        %2351 = vadd.xlane.f32.xlu0 %v2350
        %v2352 = vpop.xlane.xlu0 %2351
        %v2353 = vrcp.pop %v2307
        %v2354 = vrcp.pop %v2310
        %v2355 = vrcp.pop %v2313
        %v2356 = vrcp.pop %v2316
        %v2357 = vrcp.pop %v2319
        %v2358 = vrcp.pop %v2322
        %v2359 = vrcp.pop %v2325
        %v2360 = vrcp.pop %v2328
        %v2361 = vrcp.pop %v2331
        %v2362 = vrcp.pop %v2334
        %v2363 = vrcp.pop %v2337
        %v2364 = vrcp.pop %v2340
        %v2365 = vrcp.pop %v2343
        %v2366 = vrcp.pop %v2346
        %v2367 = vrcp.pop %v2349
        %v2368 = vrcp.pop %v2352
        %v2369 = vmul.f32 %v2242, %v2353
        %v2370 = vmul.f32 %v2244, %v2353
        %v2371 = vmul.f32 %v2246, %v2354
        %v2372 = vmul.f32 %v2248, %v2354
        %v2373 = vmul.f32 %v2250, %v2355
        %v2374 = vmul.f32 %v2252, %v2355
        %v2375 = vmul.f32 %v2254, %v2356
        %v2376 = vmul.f32 %v2256, %v2356
        %v2377 = vmul.f32 %v2258, %v2357
        %v2378 = vmul.f32 %v2260, %v2357
        %v2379 = vmul.f32 %v2262, %v2358
        %v2380 = vmul.f32 %v2264, %v2358
        %v2381 = vmul.f32 %v2266, %v2359
        %v2382 = vmul.f32 %v2268, %v2359
        %v2383 = vmul.f32 %v2270, %v2360
        %v2384 = vmul.f32 %v2272, %v2360
        %v2385 = vmul.f32 %v2274, %v2361
        %v2386 = vmul.f32 %v2276, %v2361
        %v2387 = vmul.f32 %v2278, %v2362
        %v2388 = vmul.f32 %v2280, %v2362
        %v2389 = vmul.f32 %v2282, %v2363
        %v2390 = vmul.f32 %v2284, %v2363
        %v2391 = vmul.f32 %v2286, %v2364
        %v2392 = vmul.f32 %v2288, %v2364
        %v2393 = vmul.f32 %v2290, %v2365
        %v2394 = vmul.f32 %v2292, %v2365
        %v2395 = vmul.f32 %v2294, %v2366
        %v2396 = vmul.f32 %v2296, %v2366
        %v2397 = vmul.f32 %v2298, %v2367
        %v2398 = vmul.f32 %v2300, %v2367
        %v2399 = vmul.f32 %v2302, %v2368
        %v2400 = vmul.f32 %v2304, %v2368
        %v2401 = vpack.c.bf16 %v2371, %v2369
        %v2402 = vpack.c.bf16 %v2372, %v2370
        %v2403 = vpack.c.bf16 %v2375, %v2373
        %v2404 = vpack.c.bf16 %v2376, %v2374
        %v2405 = vpack.c.bf16 %v2379, %v2377
        %v2406 = vpack.c.bf16 %v2380, %v2378
        %v2407 = vpack.c.bf16 %v2383, %v2381
        %v2408 = vpack.c.bf16 %v2384, %v2382
        %v2409 = vpack.c.bf16 %v2387, %v2385
        %v2410 = vpack.c.bf16 %v2388, %v2386
        %v2411 = vpack.c.bf16 %v2391, %v2389
        %v2412 = vpack.c.bf16 %v2392, %v2390
        %v2413 = vpack.c.bf16 %v2395, %v2393
        %v2414 = vpack.c.bf16 %v2396, %v2394
        %v2415 = vpack.c.bf16 %v2399, %v2397
        %v2416 = vpack.c.bf16 %v2400, %v2398
        %2417 = vrot.lane.b32.xlu0 %v1301, 80
        %v2418 = vpop.permute.xlu0 %2417
        %2419 = vrot.lane.b32.xlu0 %v1302, 80
        %v2420 = vpop.permute.xlu0 %2419
        %2421 = vrot.lane.b32.xlu0 %v1303, 80
        %v2422 = vpop.permute.xlu0 %2421
        %2423 = vrot.lane.b32.xlu0 %v1304, 80
        %v2424 = vpop.permute.xlu0 %2423
        %2425 = vrot.lane.b32.xlu0 %v1305, 80
        %v2426 = vpop.permute.xlu0 %2425
        %2427 = vrot.lane.b32.xlu0 %v1306, 80
        %v2428 = vpop.permute.xlu0 %2427
        %2429 = vrot.lane.b32.xlu0 %v1307, 80
        %v2430 = vpop.permute.xlu0 %2429
        %2431 = vrot.lane.b32.xlu0 %v1308, 80
        %v2432 = vpop.permute.xlu0 %2431
        %2433 = vrot.lane.b32.xlu0 %v1309, 80
        %v2434 = vpop.permute.xlu0 %2433
        %2435 = vrot.lane.b32.xlu0 %v1310, 80
        %v2436 = vpop.permute.xlu0 %2435
        %2437 = vrot.lane.b32.xlu0 %v1311, 80
        %v2438 = vpop.permute.xlu0 %2437
        %2439 = vrot.lane.b32.xlu0 %v1312, 80
        %v2440 = vpop.permute.xlu0 %2439
        %2441 = vrot.lane.b32.xlu0 %v1313, 80
        %v2442 = vpop.permute.xlu0 %2441
        %2443 = vrot.lane.b32.xlu0 %v1314, 80
        %v2444 = vpop.permute.xlu0 %2443
        %2445 = vrot.lane.b32.xlu0 %v1315, 80
        %v2446 = vpop.permute.xlu0 %2445
        %2447 = vrot.lane.b32.xlu0 %v1316, 80
        %v2448 = vpop.permute.xlu0 %2447
        %2465 = vmatprep.subr.bf16.mxu0 0
        %2466 = vmatpush1.bf16.msra.mxu0 %v2418
        %2467 = vmatprep.subr.bf16.mxu0 0
        %2468 = vmatpush1.bf16.msra.mxu0 %v2420
        %2469 = vmatprep.subr.bf16.mxu0 0
        %2470 = vmatpush1.bf16.msra.mxu0 %v2422
        %2471 = vmatprep.subr.bf16.mxu0 0
        %2472 = vmatpush1.bf16.msra.mxu0 %v2424
        %2473 = vmatprep.subr.bf16.mxu0 0
        %2474 = vmatpush1.bf16.msra.mxu0 %v2426
        %2475 = vmatprep.subr.bf16.mxu0 0
        %2476 = vmatpush1.bf16.msra.mxu0 %v2428
        %2477 = vmatprep.subr.bf16.mxu0 0
        %2478 = vmatpush1.bf16.msra.mxu0 %v2430
        %2479 = vmatprep.subr.bf16.mxu0 0
        %2480 = vmatpush1.bf16.msra.mxu0 %v2432
        %2481 = vmatprep.subr.bf16.mxu0 0
        %2482 = vmatpush1.bf16.msra.mxu0 %v2434
        %2483 = vmatprep.subr.bf16.mxu0 0
        %2484 = vmatpush1.bf16.msra.mxu0 %v2436
        %2485 = vmatprep.subr.bf16.mxu0 0
        %2486 = vmatpush1.bf16.msra.mxu0 %v2438
        %2487 = vmatprep.subr.bf16.mxu0 0
        %2488 = vmatpush1.bf16.msra.mxu0 %v2440
        %2489 = vmatprep.subr.bf16.mxu0 0
        %2490 = vmatpush1.bf16.msra.mxu0 %v2442
        %2491 = vmatprep.subr.bf16.mxu0 0
        %2492 = vmatpush1.bf16.msra.mxu0 %v2444
        %2493 = vmatprep.subr.bf16.mxu0 0
        %2494 = vmatpush1.bf16.msra.mxu0 %v2446
        %2495 = vmatprep.subr.bf16.mxu0 0
        %2496 = vmatpush1.bf16.msra.mxu0 %v2448
        %2497 = vmatprep.mubr.bf16.mxu0 %v2402
        %2498 = vmatmul.mubr.bf16.gmra.mrb[0].mxu0 %v2401
        %v2499 = vpop.f32.mrb[0].mxu0
        %v2500 = vadd.f32 0.0, %v2499
        %v2501 = vpop.f32.mrb[0].mxu0
        %v2502 = vpop.f32.mrb[0].mxu0
        %v2503 = vadd.f32 0.0, %v2502
        %v2504 = vpop.f32.mrb[0].mxu0
        %2505 = vmatprep.mubr.bf16.mxu0 %v2404
        %2506 = vmatmul.mubr.bf16.gmra.mrb[0].mxu0 %v2403
        %v2507 = vpop.f32.mrb[0].mxu0
        %v2508 = vadd.f32 0.0, %v2507
        %v2509 = vpop.f32.mrb[0].mxu0
        %v2510 = vpop.f32.mrb[0].mxu0
        %v2511 = vadd.f32 0.0, %v2510
        %v2512 = vpop.f32.mrb[0].mxu0
        %2513 = vmatprep.mubr.bf16.mxu0 %v2406
        %2514 = vmatmul.mubr.bf16.gmra.mrb[0].mxu0 %v2405
        %v2515 = vpop.f32.mrb[0].mxu0
        %v2516 = vadd.f32 0.0, %v2515
        %v2517 = vpop.f32.mrb[0].mxu0
        %v2518 = vpop.f32.mrb[0].mxu0
        %v2519 = vadd.f32 0.0, %v2518
        %v2520 = vpop.f32.mrb[0].mxu0
        %2521 = vmatprep.mubr.bf16.mxu0 %v2408
        %2522 = vmatmul.mubr.bf16.gmra.mrb[0].mxu0 %v2407
        %v2523 = vpop.f32.mrb[0].mxu0
        %v2524 = vadd.f32 0.0, %v2523
        %v2525 = vpop.f32.mrb[0].mxu0
        %v2526 = vpop.f32.mrb[0].mxu0
        %v2527 = vadd.f32 0.0, %v2526
        %v2528 = vpop.f32.mrb[0].mxu0
        %2529 = vmatprep.mubr.bf16.mxu0 %v2410
        %2530 = vmatmul.mubr.bf16.gmra.mrb[0].mxu0 %v2409
        %v2531 = vpop.f32.mrb[0].mxu0
        %v2532 = vadd.f32 0.0, %v2531
        %v2533 = vpop.f32.mrb[0].mxu0
        %v2534 = vpop.f32.mrb[0].mxu0
        %v2535 = vadd.f32 0.0, %v2534
        %v2536 = vpop.f32.mrb[0].mxu0
        %2537 = vmatprep.mubr.bf16.mxu0 %v2412
        %2538 = vmatmul.mubr.bf16.gmra.mrb[0].mxu0 %v2411
        %v2539 = vpop.f32.mrb[0].mxu0
        %v2540 = vadd.f32 0.0, %v2539
        %v2541 = vpop.f32.mrb[0].mxu0
        %v2542 = vpop.f32.mrb[0].mxu0
        %v2543 = vadd.f32 0.0, %v2542
        %v2544 = vpop.f32.mrb[0].mxu0
        %2545 = vmatprep.mubr.bf16.mxu0 %v2414
        %2546 = vmatmul.mubr.bf16.gmra.mrb[0].mxu0 %v2413
        %v2547 = vpop.f32.mrb[0].mxu0
        %v2548 = vadd.f32 0.0, %v2547
        %v2549 = vpop.f32.mrb[0].mxu0
        %v2550 = vpop.f32.mrb[0].mxu0
        %v2551 = vadd.f32 0.0, %v2550
        %v2552 = vpop.f32.mrb[0].mxu0
        %2553 = vmatprep.mubr.bf16.mxu0 %v2416
        %2554 = vmatmul.mubr.bf16.gmra.mrb[0].mxu0 %v2415
        %v2555 = vpop.f32.mrb[0].mxu0
        %v2556 = vadd.f32 0.0, %v2555
        %v2557 = vpop.f32.mrb[0].mxu0
        %v2558 = vpop.f32.mrb[0].mxu0
        %v2559 = vadd.f32 0.0, %v2558
        %v2560 = vpop.f32.mrb[0].mxu0
        %2561 = vdwg.mxu0
        %2578 = vrot.lane.b32.xlu0 %v2500, 16
        %v2579 = vpop.permute.xlu0 %2578
        %2580 = vrot.lane.b32.xlu0 %v2503, 16
        %v2581 = vpop.permute.xlu0 %2580
        %2582 = vrot.lane.b32.xlu0 %v2508, 16
        %v2583 = vpop.permute.xlu0 %2582
        %2584 = vrot.lane.b32.xlu0 %v2511, 16
        %v2585 = vpop.permute.xlu0 %2584
        %2586 = vrot.lane.b32.xlu0 %v2516, 16
        %v2587 = vpop.permute.xlu0 %2586
        %2588 = vrot.lane.b32.xlu0 %v2519, 16
        %v2589 = vpop.permute.xlu0 %2588
        %2590 = vrot.lane.b32.xlu0 %v2524, 16
        %v2591 = vpop.permute.xlu0 %2590
        %2592 = vrot.lane.b32.xlu0 %v2527, 16
        %v2593 = vpop.permute.xlu0 %2592
        %2594 = vrot.lane.b32.xlu0 %v2532, 16
        %v2595 = vpop.permute.xlu0 %2594
        %2596 = vrot.lane.b32.xlu0 %v2535, 16
        %v2597 = vpop.permute.xlu0 %2596
        %2598 = vrot.lane.b32.xlu0 %v2540, 16
        %v2599 = vpop.permute.xlu0 %2598
        %2600 = vrot.lane.b32.xlu0 %v2543, 16
        %v2601 = vpop.permute.xlu0 %2600
        %2602 = vrot.lane.b32.xlu0 %v2548, 16
        %v2603 = vpop.permute.xlu0 %2602
        %2604 = vrot.lane.b32.xlu0 %v2551, 16
        %v2605 = vpop.permute.xlu0 %2604
        %2606 = vrot.lane.b32.xlu0 %v2556, 16
        %v2607 = vpop.permute.xlu0 %2606
        %2608 = vrot.lane.b32.xlu0 %v2559, 16
        %v2609 = vpop.permute.xlu0 %2608
        %v2626 = vsel %vm1317, %v1858, %v2579
        %v2627 = vsel %vm1317, %v1861, %v2581
        %v2628 = vsel %vm1317, %v1866, %v2583
        %v2629 = vsel %vm1317, %v1869, %v2585
        %v2630 = vsel %vm1317, %v1874, %v2587
        %v2631 = vsel %vm1317, %v1877, %v2589
        %v2632 = vsel %vm1317, %v1882, %v2591
        %v2633 = vsel %vm1317, %v1885, %v2593
        %v2634 = vsel %vm1317, %v1890, %v2595
        %v2635 = vsel %vm1317, %v1893, %v2597
        %v2636 = vsel %vm1317, %v1898, %v2599
        %v2637 = vsel %vm1317, %v1901, %v2601
        %v2638 = vsel %vm1317, %v1906, %v2603
        %v2639 = vsel %vm1317, %v1909, %v2605
        %v2640 = vsel %vm1317, %v1914, %v2607
        %v2641 = vsel %vm1317, %v1917, %v2609
        %v2642 = vld [vmem:[%s5] sm:$0xf]
        %v2643 = vld [vmem:[%s5 + $0x4] sm:$0xf]
        %v2644 = vld [vmem:[%s5 + $0x8] sm:$0xf]
        %v2645 = vld [vmem:[%s5 + $0xc] sm:$0xf]
        %v2646 = vpack.c.bf16 %v2627, %v2626
        %v2647 = vpack.c.bf16 %v2629, %v2628
        %v2648 = vpack.c.bf16 %v2631, %v2630
        %v2649 = vpack.c.bf16 %v2633, %v2632
        %v2650 = vpack.c.bf16 %v2635, %v2634
        %v2651 = vpack.c.bf16 %v2637, %v2636
        %v2652 = vpack.c.bf16 %v2639, %v2638
        %v2653 = vpack.c.bf16 %v2641, %v2640
        %v2654 = vlaneseq
        %v2655 = vshrl.u32 %v2654, 7
        %v2656 = vsub.s32 2, %v2655
        %v2657 = vrot.slane %v470, %v2656
        %v2662 = vunpack.c.l.b16 %v2642
        %v2663 = vunpack.c.l.b16 %v2643
        %v2664 = vunpack.c.l.b16 %v2644
        %v2665 = vunpack.c.l.b16 %v2645
        %v2666 = vpack.c.b16 %v2663, %v2662
        %v2667 = vpack.c.b16 %v2665, %v2664
        %v2671 = vsel %vm923, %v2646, 0
        %v2674 = vsel %vm923, %v2647, 0
        %v2677 = vsel %vm923, %v2648, 0
        %v2680 = vsel %vm923, %v2649, 0
        %v2683 = vsel %vm923, %v2650, 0
        %v2686 = vsel %vm923, %v2651, 0
        %v2689 = vsel %vm923, %v2652, 0
        %v2692 = vsel %vm923, %v2653, 0
        %2694 = vmatprep.subr.bf16.mxu0 0
        %2695 = vmatpush1.bf16.msra.mxu0 %v2666
        %2696 = vmatprep.subr.bf16.mxu0 0
        %2697 = vmatpush1.bf16.msra.mxu0 %v2667
        %2698 = vmatprep.subr.bf16.mxu0 0
        %2699 = vmatpush1.bf16.msra.mxu0 0
        %2700 = vmatprep.subr.bf16.mxu0 0
        %2701 = vmatpush1.bf16.msra.mxu0 0
        %2702 = vmatprep.subr.bf16.mxu0 0
        %2703 = vmatpush1.bf16.msra.mxu0 0
        %2704 = vmatprep.subr.bf16.mxu0 0
        %2705 = vmatpush1.bf16.msra.mxu0 0
        %2706 = vmatprep.subr.bf16.mxu0 0
        %2707 = vmatpush1.bf16.msra.mxu0 0
        %2708 = vmatprep.subr.bf16.mxu0 0
        %2709 = vmatpush1.bf16.msra.mxu0 0
        %2710 = vmatprep.subr.bf16.mxu0 0
        %2711 = vmatpush1.bf16.msra.mxu0 0
        %2712 = vmatprep.subr.bf16.mxu0 0
        %2713 = vmatpush1.bf16.msra.mxu0 0
        %2714 = vmatprep.subr.bf16.mxu0 0
        %2715 = vmatpush1.bf16.msra.mxu0 0
        %2716 = vmatprep.subr.bf16.mxu0 0
        %2717 = vmatpush1.bf16.msra.mxu0 0
        %2718 = vmatprep.subr.bf16.mxu0 0
        %2719 = vmatpush1.bf16.msra.mxu0 0
        %2720 = vmatprep.subr.bf16.mxu0 0
        %2721 = vmatpush1.bf16.msra.mxu0 0
        %2722 = vmatprep.subr.bf16.mxu0 0
        %2723 = vmatpush1.bf16.msra.mxu0 0
        %2724 = vmatprep.subr.bf16.mxu0 0
        %2725 = vmatpush1.bf16.msra.mxu0 0
        %2726 = vmatprep.mubr.bf16.mxu0 0
        %2727 = vmatmul.mubr.bf16.gmra.mrb[0].mxu0 %v2671
        %v2728 = vpop.f32.mrb[0].mxu0
        %v2729 = vadd.f32 %v2657, %v2728
        %v2730 = vpop.f32.mrb[0].mxu0
        %v2731 = vpop.f32.mrb[0].mxu0
        %v2732 = vadd.f32 %v2657, %v2731
        %v2733 = vpop.f32.mrb[0].mxu0
        %2734 = vmatprep.mubr.bf16.mxu0 0
        %2735 = vmatmul.mubr.bf16.gmra.mrb[0].mxu0 %v2674
        %v2736 = vpop.f32.mrb[0].mxu0
        %v2737 = vadd.f32 %v2657, %v2736
        %v2738 = vpop.f32.mrb[0].mxu0
        %v2739 = vpop.f32.mrb[0].mxu0
        %v2740 = vadd.f32 %v2657, %v2739
        %v2741 = vpop.f32.mrb[0].mxu0
        %2742 = vmatprep.mubr.bf16.mxu0 0
        %2743 = vmatmul.mubr.bf16.gmra.mrb[0].mxu0 %v2677
        %v2744 = vpop.f32.mrb[0].mxu0
        %v2745 = vadd.f32 %v2657, %v2744
        %v2746 = vpop.f32.mrb[0].mxu0
        %v2747 = vpop.f32.mrb[0].mxu0
        %v2748 = vadd.f32 %v2657, %v2747
        %v2749 = vpop.f32.mrb[0].mxu0
        %2750 = vmatprep.mubr.bf16.mxu0 0
        %2751 = vmatmul.mubr.bf16.gmra.mrb[0].mxu0 %v2680
        %v2752 = vpop.f32.mrb[0].mxu0
        %v2753 = vadd.f32 %v2657, %v2752
        %v2754 = vpop.f32.mrb[0].mxu0
        %v2755 = vpop.f32.mrb[0].mxu0
        %v2756 = vadd.f32 %v2657, %v2755
        %v2757 = vpop.f32.mrb[0].mxu0
        %2758 = vmatprep.mubr.bf16.mxu0 0
        %2759 = vmatmul.mubr.bf16.gmra.mrb[0].mxu0 %v2683
        %v2760 = vpop.f32.mrb[0].mxu0
        %v2761 = vadd.f32 %v2657, %v2760
        %v2762 = vpop.f32.mrb[0].mxu0
        %v2763 = vpop.f32.mrb[0].mxu0
        %v2764 = vadd.f32 %v2657, %v2763
        %v2765 = vpop.f32.mrb[0].mxu0
        %2766 = vmatprep.mubr.bf16.mxu0 0
        %2767 = vmatmul.mubr.bf16.gmra.mrb[0].mxu0 %v2686
        %v2768 = vpop.f32.mrb[0].mxu0
        %v2769 = vadd.f32 %v2657, %v2768
        %v2770 = vpop.f32.mrb[0].mxu0
        %v2771 = vpop.f32.mrb[0].mxu0
        %v2772 = vadd.f32 %v2657, %v2771
        %v2773 = vpop.f32.mrb[0].mxu0
        %2774 = vmatprep.mubr.bf16.mxu0 0
        %2775 = vmatmul.mubr.bf16.gmra.mrb[0].mxu0 %v2689
        %v2776 = vpop.f32.mrb[0].mxu0
        %v2777 = vadd.f32 %v2657, %v2776
        %v2778 = vpop.f32.mrb[0].mxu0
        %v2779 = vpop.f32.mrb[0].mxu0
        %v2780 = vadd.f32 %v2657, %v2779
        %v2781 = vpop.f32.mrb[0].mxu0
        %2782 = vmatprep.mubr.bf16.mxu0 0
        %2783 = vmatmul.mubr.bf16.gmra.mrb[0].mxu0 %v2692
        %v2784 = vpop.f32.mrb[0].mxu0
        %v2785 = vadd.f32 %v2657, %v2784
        %v2786 = vpop.f32.mrb[0].mxu0
        %v2787 = vpop.f32.mrb[0].mxu0
        %v2788 = vadd.f32 %v2657, %v2787
        %v2789 = vpop.f32.mrb[0].mxu0
        %2790 = vdwg.mxu0
        %v2791 = vadd.f32 %v576, %v2729
        %v2792 = vadd.f32 %v579, %v2732
        %v2793 = vadd.f32 %v584, %v2737
        %v2794 = vadd.f32 %v587, %v2740
        %v2795 = vadd.f32 %v592, %v2745
        %v2796 = vadd.f32 %v595, %v2748
        %v2797 = vadd.f32 %v600, %v2753
        %v2798 = vadd.f32 %v603, %v2756
        %v2799 = vadd.f32 %v608, %v2761
        %v2800 = vadd.f32 %v611, %v2764
        %v2801 = vadd.f32 %v616, %v2769
        %v2802 = vadd.f32 %v619, %v2772
        %v2803 = vadd.f32 %v624, %v2777
        %v2804 = vadd.f32 %v627, %v2780
        %v2805 = vadd.f32 %v632, %v2785
        %v2806 = vadd.f32 %v635, %v2788
        %v2807 = vsel %vm923, %v2791, 0.0
        %2808 = vadd.xlane.f32.xlu0 %v2807
        %v2809 = vpop.xlane.xlu0 %2808
        %v2810 = vsel %vm923, %v2792, 0.0
        %2811 = vadd.xlane.f32.xlu0 %v2810
        %v2812 = vpop.xlane.xlu0 %2811
        %v2813 = vsel %vm923, %v2793, 0.0
        %2814 = vadd.xlane.f32.xlu0 %v2813
        %v2815 = vpop.xlane.xlu0 %2814
        %v2816 = vsel %vm923, %v2794, 0.0
        %2817 = vadd.xlane.f32.xlu0 %v2816
        %v2818 = vpop.xlane.xlu0 %2817
        %v2819 = vsel %vm923, %v2795, 0.0
        %2820 = vadd.xlane.f32.xlu0 %v2819
        %v2821 = vpop.xlane.xlu0 %2820
        %v2822 = vsel %vm923, %v2796, 0.0
        %2823 = vadd.xlane.f32.xlu0 %v2822
        %v2824 = vpop.xlane.xlu0 %2823
        %v2825 = vsel %vm923, %v2797, 0.0
        %2826 = vadd.xlane.f32.xlu0 %v2825
        %v2827 = vpop.xlane.xlu0 %2826
        %v2828 = vsel %vm923, %v2798, 0.0
        %2829 = vadd.xlane.f32.xlu0 %v2828
        %v2830 = vpop.xlane.xlu0 %2829
        %v2831 = vsel %vm923, %v2799, 0.0
        %2832 = vadd.xlane.f32.xlu0 %v2831
        %v2833 = vpop.xlane.xlu0 %2832
        %v2834 = vsel %vm923, %v2800, 0.0
        %2835 = vadd.xlane.f32.xlu0 %v2834
        %v2836 = vpop.xlane.xlu0 %2835
        %v2837 = vsel %vm923, %v2801, 0.0
        %2838 = vadd.xlane.f32.xlu0 %v2837
        %v2839 = vpop.xlane.xlu0 %2838
        %v2840 = vsel %vm923, %v2802, 0.0
        %2841 = vadd.xlane.f32.xlu0 %v2840
        %v2842 = vpop.xlane.xlu0 %2841
        %v2843 = vsel %vm923, %v2803, 0.0
        %2844 = vadd.xlane.f32.xlu0 %v2843
        %v2845 = vpop.xlane.xlu0 %2844
        %v2846 = vsel %vm923, %v2804, 0.0
        %2847 = vadd.xlane.f32.xlu0 %v2846
        %v2848 = vpop.xlane.xlu0 %2847
        %v2849 = vsel %vm923, %v2805, 0.0
        %2850 = vadd.xlane.f32.xlu0 %v2849
        %v2851 = vpop.xlane.xlu0 %2850
        %v2852 = vsel %vm923, %v2806, 0.0
        %2853 = vadd.xlane.f32.xlu0 %v2852
        %v2854 = vpop.xlane.xlu0 %2853
        %v2855 = vrcp.pop 32.0
        %v2856 = vmul.f32 %v2809, %v2855
        %v2857 = vmul.f32 %v2812, %v2855
        %v2858 = vmul.f32 %v2815, %v2855
        %v2859 = vmul.f32 %v2818, %v2855
        %v2860 = vmul.f32 %v2821, %v2855
        %v2861 = vmul.f32 %v2824, %v2855
        %v2862 = vmul.f32 %v2827, %v2855
        %v2863 = vmul.f32 %v2830, %v2855
        %v2864 = vmul.f32 %v2833, %v2855
        %v2865 = vmul.f32 %v2836, %v2855
        %v2866 = vmul.f32 %v2839, %v2855
        %v2867 = vmul.f32 %v2842, %v2855
        %v2868 = vmul.f32 %v2845, %v2855
        %v2869 = vmul.f32 %v2848, %v2855
        %v2870 = vmul.f32 %v2851, %v2855
        %v2871 = vmul.f32 %v2854, %v2855
        %v2872 = vsub.f32 %v2791, %v2856
        %v2873 = vsub.f32 %v2792, %v2857
        %v2874 = vsub.f32 %v2793, %v2858
        %v2875 = vsub.f32 %v2794, %v2859
        %v2876 = vsub.f32 %v2795, %v2860
        %v2877 = vsub.f32 %v2796, %v2861
        %v2878 = vsub.f32 %v2797, %v2862
        %v2879 = vsub.f32 %v2798, %v2863
        %v2880 = vsub.f32 %v2799, %v2864
        %v2881 = vsub.f32 %v2800, %v2865
        %v2882 = vsub.f32 %v2801, %v2866
        %v2883 = vsub.f32 %v2802, %v2867
        %v2884 = vsub.f32 %v2803, %v2868
        %v2885 = vsub.f32 %v2804, %v2869
        %v2886 = vsub.f32 %v2805, %v2870
        %v2887 = vsub.f32 %v2806, %v2871
        %v2888 = vmul.f32 %v2872, %v2872
        %v2889 = vmul.f32 %v2873, %v2873
        %v2890 = vmul.f32 %v2874, %v2874
        %v2891 = vmul.f32 %v2875, %v2875
        %v2892 = vmul.f32 %v2876, %v2876
        %v2893 = vmul.f32 %v2877, %v2877
        %v2894 = vmul.f32 %v2878, %v2878
        %v2895 = vmul.f32 %v2879, %v2879
        %v2896 = vmul.f32 %v2880, %v2880
        %v2897 = vmul.f32 %v2881, %v2881
        %v2898 = vmul.f32 %v2882, %v2882
        %v2899 = vmul.f32 %v2883, %v2883
        %v2900 = vmul.f32 %v2884, %v2884
        %v2901 = vmul.f32 %v2885, %v2885
        %v2902 = vmul.f32 %v2886, %v2886
        %v2903 = vmul.f32 %v2887, %v2887
        %v2904 = vsel %vm923, %v2888, 0.0
        %2905 = vadd.xlane.f32.xlu0 %v2904
        %v2906 = vpop.xlane.xlu0 %2905
        %v2907 = vsel %vm923, %v2889, 0.0
        %2908 = vadd.xlane.f32.xlu0 %v2907
        %v2909 = vpop.xlane.xlu0 %2908
        %v2910 = vsel %vm923, %v2890, 0.0
        %2911 = vadd.xlane.f32.xlu0 %v2910
        %v2912 = vpop.xlane.xlu0 %2911
        %v2913 = vsel %vm923, %v2891, 0.0
        %2914 = vadd.xlane.f32.xlu0 %v2913
        %v2915 = vpop.xlane.xlu0 %2914
        %v2916 = vsel %vm923, %v2892, 0.0
        %2917 = vadd.xlane.f32.xlu0 %v2916
        %v2918 = vpop.xlane.xlu0 %2917
        %v2919 = vsel %vm923, %v2893, 0.0
        %2920 = vadd.xlane.f32.xlu0 %v2919
        %v2921 = vpop.xlane.xlu0 %2920
        %v2922 = vsel %vm923, %v2894, 0.0
        %2923 = vadd.xlane.f32.xlu0 %v2922
        %v2924 = vpop.xlane.xlu0 %2923
        %v2925 = vsel %vm923, %v2895, 0.0
        %2926 = vadd.xlane.f32.xlu0 %v2925
        %v2927 = vpop.xlane.xlu0 %2926
        %v2928 = vsel %vm923, %v2896, 0.0
        %2929 = vadd.xlane.f32.xlu0 %v2928
        %v2930 = vpop.xlane.xlu0 %2929
        %v2931 = vsel %vm923, %v2897, 0.0
        %2932 = vadd.xlane.f32.xlu0 %v2931
        %v2933 = vpop.xlane.xlu0 %2932
        %v2934 = vsel %vm923, %v2898, 0.0
        %2935 = vadd.xlane.f32.xlu0 %v2934
        %v2936 = vpop.xlane.xlu0 %2935
        %v2937 = vsel %vm923, %v2899, 0.0
        %2938 = vadd.xlane.f32.xlu0 %v2937
        %v2939 = vpop.xlane.xlu0 %2938
        %v2940 = vsel %vm923, %v2900, 0.0
        %2941 = vadd.xlane.f32.xlu0 %v2940
        %v2942 = vpop.xlane.xlu0 %2941
        %v2943 = vsel %vm923, %v2901, 0.0
        %2944 = vadd.xlane.f32.xlu0 %v2943
        %v2945 = vpop.xlane.xlu0 %2944
        %v2946 = vsel %vm923, %v2902, 0.0
        %2947 = vadd.xlane.f32.xlu0 %v2946
        %v2948 = vpop.xlane.xlu0 %2947
        %v2949 = vsel %vm923, %v2903, 0.0
        %2950 = vadd.xlane.f32.xlu0 %v2949
        %v2951 = vpop.xlane.xlu0 %2950
        %v2952 = vmul.f32 %v2906, %v2855
        %v2953 = vmul.f32 %v2909, %v2855
        %v2954 = vmul.f32 %v2912, %v2855
        %v2955 = vmul.f32 %v2915, %v2855
        %v2956 = vmul.f32 %v2918, %v2855
        %v2957 = vmul.f32 %v2921, %v2855
        %v2958 = vmul.f32 %v2924, %v2855
        %v2959 = vmul.f32 %v2927, %v2855
        %v2960 = vmul.f32 %v2930, %v2855
        %v2961 = vmul.f32 %v2933, %v2855
        %v2962 = vmul.f32 %v2936, %v2855
        %v2963 = vmul.f32 %v2939, %v2855
        %v2964 = vmul.f32 %v2942, %v2855
        %v2965 = vmul.f32 %v2945, %v2855
        %v2966 = vmul.f32 %v2948, %v2855
        %v2967 = vmul.f32 %v2951, %v2855
        %v2968 = vadd.f32 %v2952, 1e-05
        %v2969 = vadd.f32 %v2953, 1e-05
        %v2970 = vadd.f32 %v2954, 1e-05
        %v2971 = vadd.f32 %v2955, 1e-05
        %v2972 = vadd.f32 %v2956, 1e-05
        %v2973 = vadd.f32 %v2957, 1e-05
        %v2974 = vadd.f32 %v2958, 1e-05
        %v2975 = vadd.f32 %v2959, 1e-05
        %v2976 = vadd.f32 %v2960, 1e-05
        %v2977 = vadd.f32 %v2961, 1e-05
        %v2978 = vadd.f32 %v2962, 1e-05
        %v2979 = vadd.f32 %v2963, 1e-05
        %v2980 = vadd.f32 %v2964, 1e-05
        %v2981 = vadd.f32 %v2965, 1e-05
        %v2982 = vadd.f32 %v2966, 1e-05
        %v2983 = vadd.f32 %v2967, 1e-05
        %v2984 = vrsqrt.pop %v2968
        %v2985 = vrsqrt.pop %v2969
        %v2986 = vrsqrt.pop %v2970
        %v2987 = vrsqrt.pop %v2971
        %v2988 = vrsqrt.pop %v2972
        %v2989 = vrsqrt.pop %v2973
        %v2990 = vrsqrt.pop %v2974
        %v2991 = vrsqrt.pop %v2975
        %v2992 = vrsqrt.pop %v2976
        %v2993 = vrsqrt.pop %v2977
        %v2994 = vrsqrt.pop %v2978
        %v2995 = vrsqrt.pop %v2979
        %v2996 = vrsqrt.pop %v2980
        %v2997 = vrsqrt.pop %v2981
        %v2998 = vrsqrt.pop %v2982
        %v2999 = vrsqrt.pop %v2983
        %v3000 = vmul.f32 %v2872, %v2984
        %v3001 = vmul.f32 %v2873, %v2985
        %v3002 = vmul.f32 %v2874, %v2986
        %v3003 = vmul.f32 %v2875, %v2987
        %v3004 = vmul.f32 %v2876, %v2988
        %v3005 = vmul.f32 %v2877, %v2989
        %v3006 = vmul.f32 %v2878, %v2990
        %v3007 = vmul.f32 %v2879, %v2991
        %v3008 = vmul.f32 %v2880, %v2992
        %v3009 = vmul.f32 %v2881, %v2993
        %v3010 = vmul.f32 %v2882, %v2994
        %v3011 = vmul.f32 %v2883, %v2995
        %v3012 = vmul.f32 %v2884, %v2996
        %v3013 = vmul.f32 %v2885, %v2997
        %v3014 = vmul.f32 %v2886, %v2998
        %v3015 = vmul.f32 %v2887, %v2999
        %v3016 = vlaneseq
        %v3017 = vshrl.u32 %v3016, 7
        %v3018 = vsub.s32 3, %v3017
        %v3019 = vrot.slane %v470, %v3018
        %v3020 = vmul.f32 %v3000, %v3019
        %v3021 = vmul.f32 %v3001, %v3019
        %v3022 = vmul.f32 %v3002, %v3019
        %v3023 = vmul.f32 %v3003, %v3019
        %v3024 = vmul.f32 %v3004, %v3019
        %v3025 = vmul.f32 %v3005, %v3019
        %v3026 = vmul.f32 %v3006, %v3019
        %v3027 = vmul.f32 %v3007, %v3019
        %v3028 = vmul.f32 %v3008, %v3019
        %v3029 = vmul.f32 %v3009, %v3019
        %v3030 = vmul.f32 %v3010, %v3019
        %v3031 = vmul.f32 %v3011, %v3019
        %v3032 = vmul.f32 %v3012, %v3019
        %v3033 = vmul.f32 %v3013, %v3019
        %v3034 = vmul.f32 %v3014, %v3019
        %v3035 = vmul.f32 %v3015, %v3019
        %v3036 = vlaneseq
        %v3037 = vshrl.u32 %v3036, 7
        %v3038 = vsub.s32 4, %v3037
        %v3039 = vrot.slane %v470, %v3038
        %v3040 = vadd.f32 %v3020, %v3039
        %v3041 = vadd.f32 %v3021, %v3039
        %v3042 = vadd.f32 %v3022, %v3039
        %v3043 = vadd.f32 %v3023, %v3039
        %v3044 = vadd.f32 %v3024, %v3039
        %v3045 = vadd.f32 %v3025, %v3039
        %v3046 = vadd.f32 %v3026, %v3039
        %v3047 = vadd.f32 %v3027, %v3039
        %v3048 = vadd.f32 %v3028, %v3039
        %v3049 = vadd.f32 %v3029, %v3039
        %v3050 = vadd.f32 %v3030, %v3039
        %v3051 = vadd.f32 %v3031, %v3039
        %v3052 = vadd.f32 %v3032, %v3039
        %v3053 = vadd.f32 %v3033, %v3039
        %v3054 = vadd.f32 %v3034, %v3039
        %v3055 = vadd.f32 %v3035, %v3039
        %v3056 = vld [vmem:[%s6] sm:$0xf]
        %v3057 = vld [vmem:[%s6 + $0x4] sm:$0xf]
        %v3058 = vld [vmem:[%s6 + $0x8] sm:$0xf]
        %v3059 = vld [vmem:[%s6 + $0xc] sm:$0xf]
        %v3060 = vpack.c.bf16 %v3041, %v3040
        %v3061 = vpack.c.bf16 %v3043, %v3042
        %v3062 = vpack.c.bf16 %v3045, %v3044
        %v3063 = vpack.c.bf16 %v3047, %v3046
        %v3064 = vpack.c.bf16 %v3049, %v3048
        %v3065 = vpack.c.bf16 %v3051, %v3050
        %v3066 = vpack.c.bf16 %v3053, %v3052
        %v3067 = vpack.c.bf16 %v3055, %v3054
        %v3068 = vlaneseq
        %v3069 = vshrl.u32 %v3068, 7
        %v3070 = vsub.s32 5, %v3069
        %v3071 = vrot.slane %v470, %v3070
        %v3076 = vunpack.c.l.b16 %v3056
        %v3077 = vunpack.c.l.b16 %v3057
        %v3078 = vunpack.c.l.b16 %v3058
        %v3079 = vunpack.c.l.b16 %v3059
        %v3080 = vpack.c.b16 %v3077, %v3076
        %v3081 = vpack.c.b16 %v3079, %v3078
        %v3085 = vsel %vm923, %v3060, 0
        %v3088 = vsel %vm923, %v3061, 0
        %v3091 = vsel %vm923, %v3062, 0
        %v3094 = vsel %vm923, %v3063, 0
        %v3097 = vsel %vm923, %v3064, 0
        %v3100 = vsel %vm923, %v3065, 0
        %v3103 = vsel %vm923, %v3066, 0
        %v3106 = vsel %vm923, %v3067, 0
        %3108 = vmatprep.subr.bf16.mxu0 0
        %3109 = vmatpush1.bf16.msra.mxu0 %v3080
        %3110 = vmatprep.subr.bf16.mxu0 0
        %3111 = vmatpush1.bf16.msra.mxu0 %v3081
        %3112 = vmatprep.subr.bf16.mxu0 0
        %3113 = vmatpush1.bf16.msra.mxu0 0
        %3114 = vmatprep.subr.bf16.mxu0 0
        %3115 = vmatpush1.bf16.msra.mxu0 0
        %3116 = vmatprep.subr.bf16.mxu0 0
        %3117 = vmatpush1.bf16.msra.mxu0 0
        %3118 = vmatprep.subr.bf16.mxu0 0
        %3119 = vmatpush1.bf16.msra.mxu0 0
        %3120 = vmatprep.subr.bf16.mxu0 0
        %3121 = vmatpush1.bf16.msra.mxu0 0
        %3122 = vmatprep.subr.bf16.mxu0 0
        %3123 = vmatpush1.bf16.msra.mxu0 0
        %3124 = vmatprep.subr.bf16.mxu0 0
        %3125 = vmatpush1.bf16.msra.mxu0 0
        %3126 = vmatprep.subr.bf16.mxu0 0
        %3127 = vmatpush1.bf16.msra.mxu0 0
        %3128 = vmatprep.subr.bf16.mxu0 0
        %3129 = vmatpush1.bf16.msra.mxu0 0
        %3130 = vmatprep.subr.bf16.mxu0 0
        %3131 = vmatpush1.bf16.msra.mxu0 0
        %3132 = vmatprep.subr.bf16.mxu0 0
        %3133 = vmatpush1.bf16.msra.mxu0 0
        %3134 = vmatprep.subr.bf16.mxu0 0
        %3135 = vmatpush1.bf16.msra.mxu0 0
        %3136 = vmatprep.subr.bf16.mxu0 0
        %3137 = vmatpush1.bf16.msra.mxu0 0
        %3138 = vmatprep.subr.bf16.mxu0 0
        %3139 = vmatpush1.bf16.msra.mxu0 0
        %3140 = vmatprep.mubr.bf16.mxu0 0
        %3141 = vmatmul.mubr.bf16.gmra.mrb[0].mxu0 %v3085
        %v3142 = vpop.f32.mrb[0].mxu0
        %v3143 = vadd.f32 %v3071, %v3142
        %v3144 = vpop.f32.mrb[0].mxu0
        %v3145 = vpop.f32.mrb[0].mxu0
        %v3146 = vadd.f32 %v3071, %v3145
        %v3147 = vpop.f32.mrb[0].mxu0
        %3148 = vmatprep.mubr.bf16.mxu0 0
        %3149 = vmatmul.mubr.bf16.gmra.mrb[0].mxu0 %v3088
        %v3150 = vpop.f32.mrb[0].mxu0
        %v3151 = vadd.f32 %v3071, %v3150
        %v3152 = vpop.f32.mrb[0].mxu0
        %v3153 = vpop.f32.mrb[0].mxu0
        %v3154 = vadd.f32 %v3071, %v3153
        %v3155 = vpop.f32.mrb[0].mxu0
        %3156 = vmatprep.mubr.bf16.mxu0 0
        %3157 = vmatmul.mubr.bf16.gmra.mrb[0].mxu0 %v3091
        %v3158 = vpop.f32.mrb[0].mxu0
        %v3159 = vadd.f32 %v3071, %v3158
        %v3160 = vpop.f32.mrb[0].mxu0
        %v3161 = vpop.f32.mrb[0].mxu0
        %v3162 = vadd.f32 %v3071, %v3161
        %v3163 = vpop.f32.mrb[0].mxu0
        %3164 = vmatprep.mubr.bf16.mxu0 0
        %3165 = vmatmul.mubr.bf16.gmra.mrb[0].mxu0 %v3094
        %v3166 = vpop.f32.mrb[0].mxu0
        %v3167 = vadd.f32 %v3071, %v3166
        %v3168 = vpop.f32.mrb[0].mxu0
        %v3169 = vpop.f32.mrb[0].mxu0
        %v3170 = vadd.f32 %v3071, %v3169
        %v3171 = vpop.f32.mrb[0].mxu0
        %3172 = vmatprep.mubr.bf16.mxu0 0
        %3173 = vmatmul.mubr.bf16.gmra.mrb[0].mxu0 %v3097
        %v3174 = vpop.f32.mrb[0].mxu0
        %v3175 = vadd.f32 %v3071, %v3174
        %v3176 = vpop.f32.mrb[0].mxu0
        %v3177 = vpop.f32.mrb[0].mxu0
        %v3178 = vadd.f32 %v3071, %v3177
        %v3179 = vpop.f32.mrb[0].mxu0
        %3180 = vmatprep.mubr.bf16.mxu0 0
        %3181 = vmatmul.mubr.bf16.gmra.mrb[0].mxu0 %v3100
        %v3182 = vpop.f32.mrb[0].mxu0
        %v3183 = vadd.f32 %v3071, %v3182
        %v3184 = vpop.f32.mrb[0].mxu0
        %v3185 = vpop.f32.mrb[0].mxu0
        %v3186 = vadd.f32 %v3071, %v3185
        %v3187 = vpop.f32.mrb[0].mxu0
        %3188 = vmatprep.mubr.bf16.mxu0 0
        %3189 = vmatmul.mubr.bf16.gmra.mrb[0].mxu0 %v3103
        %v3190 = vpop.f32.mrb[0].mxu0
        %v3191 = vadd.f32 %v3071, %v3190
        %v3192 = vpop.f32.mrb[0].mxu0
        %v3193 = vpop.f32.mrb[0].mxu0
        %v3194 = vadd.f32 %v3071, %v3193
        %v3195 = vpop.f32.mrb[0].mxu0
        %3196 = vmatprep.mubr.bf16.mxu0 0
        %3197 = vmatmul.mubr.bf16.gmra.mrb[0].mxu0 %v3106
        %v3198 = vpop.f32.mrb[0].mxu0
        %v3199 = vadd.f32 %v3071, %v3198
        %v3200 = vpop.f32.mrb[0].mxu0
        %v3201 = vpop.f32.mrb[0].mxu0
        %v3202 = vadd.f32 %v3071, %v3201
        %v3203 = vpop.f32.mrb[0].mxu0
        %3204 = vdwg.mxu0
        %v3205 = vmax.f32 %v3143, 0.0
        %v3206 = vmax.f32 %v3146, 0.0
        %v3207 = vmax.f32 %v3151, 0.0
        %v3208 = vmax.f32 %v3154, 0.0
        %v3209 = vmax.f32 %v3159, 0.0
        %v3210 = vmax.f32 %v3162, 0.0
        %v3211 = vmax.f32 %v3167, 0.0
        %v3212 = vmax.f32 %v3170, 0.0
        %v3213 = vmax.f32 %v3175, 0.0
        %v3214 = vmax.f32 %v3178, 0.0
        %v3215 = vmax.f32 %v3183, 0.0
        %v3216 = vmax.f32 %v3186, 0.0
        %v3217 = vmax.f32 %v3191, 0.0
        %v3218 = vmax.f32 %v3194, 0.0
        %v3219 = vmax.f32 %v3199, 0.0
        %v3220 = vmax.f32 %v3202, 0.0
        %v3221 = vld [vmem:[%s7] sm:$0xf]
        %v3222 = vld [vmem:[%s7 + $0x4] sm:$0xf]
        %v3223 = vld [vmem:[%s7 + $0x8] sm:$0xf]
        %v3224 = vld [vmem:[%s7 + $0xc] sm:$0xf]
        %v3225 = vpack.c.bf16 %v3206, %v3205
        %v3226 = vpack.c.bf16 %v3208, %v3207
        %v3227 = vpack.c.bf16 %v3210, %v3209
        %v3228 = vpack.c.bf16 %v3212, %v3211
        %v3229 = vpack.c.bf16 %v3214, %v3213
        %v3230 = vpack.c.bf16 %v3216, %v3215
        %v3231 = vpack.c.bf16 %v3218, %v3217
        %v3232 = vpack.c.bf16 %v3220, %v3219
        %v3233 = vlaneseq
        %v3234 = vshrl.u32 %v3233, 7
        %v3235 = vsub.s32 6, %v3234
        %v3236 = vrot.slane %v470, %v3235
        %v3241 = vunpack.c.l.b16 %v3221
        %v3242 = vunpack.c.l.b16 %v3222
        %v3243 = vunpack.c.l.b16 %v3223
        %v3244 = vunpack.c.l.b16 %v3224
        %v3245 = vpack.c.b16 %v3242, %v3241
        %v3246 = vpack.c.b16 %v3244, %v3243
        %v3250 = vsel %vm923, %v3225, 0
        %v3253 = vsel %vm923, %v3226, 0
        %v3256 = vsel %vm923, %v3227, 0
        %v3259 = vsel %vm923, %v3228, 0
        %v3262 = vsel %vm923, %v3229, 0
        %v3265 = vsel %vm923, %v3230, 0
        %v3268 = vsel %vm923, %v3231, 0
        %v3271 = vsel %vm923, %v3232, 0
        %3273 = vmatprep.subr.bf16.mxu0 0
        %3274 = vmatpush1.bf16.msra.mxu0 %v3245
        %3275 = vmatprep.subr.bf16.mxu0 0
        %3276 = vmatpush1.bf16.msra.mxu0 %v3246
        %3277 = vmatprep.subr.bf16.mxu0 0
        %3278 = vmatpush1.bf16.msra.mxu0 0
        %3279 = vmatprep.subr.bf16.mxu0 0
        %3280 = vmatpush1.bf16.msra.mxu0 0
        %3281 = vmatprep.subr.bf16.mxu0 0
        %3282 = vmatpush1.bf16.msra.mxu0 0
        %3283 = vmatprep.subr.bf16.mxu0 0
        %3284 = vmatpush1.bf16.msra.mxu0 0
        %3285 = vmatprep.subr.bf16.mxu0 0
        %3286 = vmatpush1.bf16.msra.mxu0 0
        %3287 = vmatprep.subr.bf16.mxu0 0
        %3288 = vmatpush1.bf16.msra.mxu0 0
        %3289 = vmatprep.subr.bf16.mxu0 0
        %3290 = vmatpush1.bf16.msra.mxu0 0
        %3291 = vmatprep.subr.bf16.mxu0 0
        %3292 = vmatpush1.bf16.msra.mxu0 0
        %3293 = vmatprep.subr.bf16.mxu0 0
        %3294 = vmatpush1.bf16.msra.mxu0 0
        %3295 = vmatprep.subr.bf16.mxu0 0
        %3296 = vmatpush1.bf16.msra.mxu0 0
        %3297 = vmatprep.subr.bf16.mxu0 0
        %3298 = vmatpush1.bf16.msra.mxu0 0
        %3299 = vmatprep.subr.bf16.mxu0 0
        %3300 = vmatpush1.bf16.msra.mxu0 0
        %3301 = vmatprep.subr.bf16.mxu0 0
        %3302 = vmatpush1.bf16.msra.mxu0 0
        %3303 = vmatprep.subr.bf16.mxu0 0
        %3304 = vmatpush1.bf16.msra.mxu0 0
        %3305 = vmatprep.mubr.bf16.mxu0 0
        %3306 = vmatmul.mubr.bf16.gmra.mrb[0].mxu0 %v3250
        %v3307 = vpop.f32.mrb[0].mxu0
        %v3308 = vadd.f32 %v3236, %v3307
        %v3309 = vpop.f32.mrb[0].mxu0
        %v3310 = vpop.f32.mrb[0].mxu0
        %v3311 = vadd.f32 %v3236, %v3310
        %v3312 = vpop.f32.mrb[0].mxu0
        %3313 = vmatprep.mubr.bf16.mxu0 0
        %3314 = vmatmul.mubr.bf16.gmra.mrb[0].mxu0 %v3253
        %v3315 = vpop.f32.mrb[0].mxu0
        %v3316 = vadd.f32 %v3236, %v3315
        %v3317 = vpop.f32.mrb[0].mxu0
        %v3318 = vpop.f32.mrb[0].mxu0
        %v3319 = vadd.f32 %v3236, %v3318
        %v3320 = vpop.f32.mrb[0].mxu0
        %3321 = vmatprep.mubr.bf16.mxu0 0
        %3322 = vmatmul.mubr.bf16.gmra.mrb[0].mxu0 %v3256
        %v3323 = vpop.f32.mrb[0].mxu0
        %v3324 = vadd.f32 %v3236, %v3323
        %v3325 = vpop.f32.mrb[0].mxu0
        %v3326 = vpop.f32.mrb[0].mxu0
        %v3327 = vadd.f32 %v3236, %v3326
        %v3328 = vpop.f32.mrb[0].mxu0
        %3329 = vmatprep.mubr.bf16.mxu0 0
        %3330 = vmatmul.mubr.bf16.gmra.mrb[0].mxu0 %v3259
        %v3331 = vpop.f32.mrb[0].mxu0
        %v3332 = vadd.f32 %v3236, %v3331
        %v3333 = vpop.f32.mrb[0].mxu0
        %v3334 = vpop.f32.mrb[0].mxu0
        %v3335 = vadd.f32 %v3236, %v3334
        %v3336 = vpop.f32.mrb[0].mxu0
        %3337 = vmatprep.mubr.bf16.mxu0 0
        %3338 = vmatmul.mubr.bf16.gmra.mrb[0].mxu0 %v3262
        %v3339 = vpop.f32.mrb[0].mxu0
        %v3340 = vadd.f32 %v3236, %v3339
        %v3341 = vpop.f32.mrb[0].mxu0
        %v3342 = vpop.f32.mrb[0].mxu0
        %v3343 = vadd.f32 %v3236, %v3342
        %v3344 = vpop.f32.mrb[0].mxu0
        %3345 = vmatprep.mubr.bf16.mxu0 0
        %3346 = vmatmul.mubr.bf16.gmra.mrb[0].mxu0 %v3265
        %v3347 = vpop.f32.mrb[0].mxu0
        %v3348 = vadd.f32 %v3236, %v3347
        %v3349 = vpop.f32.mrb[0].mxu0
        %v3350 = vpop.f32.mrb[0].mxu0
        %v3351 = vadd.f32 %v3236, %v3350
        %v3352 = vpop.f32.mrb[0].mxu0
        %3353 = vmatprep.mubr.bf16.mxu0 0
        %3354 = vmatmul.mubr.bf16.gmra.mrb[0].mxu0 %v3268
        %v3355 = vpop.f32.mrb[0].mxu0
        %v3356 = vadd.f32 %v3236, %v3355
        %v3357 = vpop.f32.mrb[0].mxu0
        %v3358 = vpop.f32.mrb[0].mxu0
        %v3359 = vadd.f32 %v3236, %v3358
        %v3360 = vpop.f32.mrb[0].mxu0
        %3361 = vmatprep.mubr.bf16.mxu0 0
        %3362 = vmatmul.mubr.bf16.gmra.mrb[0].mxu0 %v3271
        %v3363 = vpop.f32.mrb[0].mxu0
        %v3364 = vadd.f32 %v3236, %v3363
        %v3365 = vpop.f32.mrb[0].mxu0
        %v3366 = vpop.f32.mrb[0].mxu0
        %v3367 = vadd.f32 %v3236, %v3366
        %v3368 = vpop.f32.mrb[0].mxu0
        %3369 = vdwg.mxu0
        %v3370 = vadd.f32 %v3040, %v3308
        %v3371 = vadd.f32 %v3041, %v3311
        %v3372 = vadd.f32 %v3042, %v3316
        %v3373 = vadd.f32 %v3043, %v3319
        %v3374 = vadd.f32 %v3044, %v3324
        %v3375 = vadd.f32 %v3045, %v3327
        %v3376 = vadd.f32 %v3046, %v3332
        %v3377 = vadd.f32 %v3047, %v3335
        %v3378 = vadd.f32 %v3048, %v3340
        %v3379 = vadd.f32 %v3049, %v3343
        %v3380 = vadd.f32 %v3050, %v3348
        %v3381 = vadd.f32 %v3051, %v3351
        %v3382 = vadd.f32 %v3052, %v3356
        %v3383 = vadd.f32 %v3053, %v3359
        %v3384 = vadd.f32 %v3054, %v3364
        %v3385 = vadd.f32 %v3055, %v3367
        %v3386 = vsel %vm923, %v3370, 0.0
        %3387 = vadd.xlane.f32.xlu0 %v3386
        %v3388 = vpop.xlane.xlu0 %3387
        %v3389 = vsel %vm923, %v3371, 0.0
        %3390 = vadd.xlane.f32.xlu0 %v3389
        %v3391 = vpop.xlane.xlu0 %3390
        %v3392 = vsel %vm923, %v3372, 0.0
        %3393 = vadd.xlane.f32.xlu0 %v3392
        %v3394 = vpop.xlane.xlu0 %3393
        %v3395 = vsel %vm923, %v3373, 0.0
        %3396 = vadd.xlane.f32.xlu0 %v3395
        %v3397 = vpop.xlane.xlu0 %3396
        %v3398 = vsel %vm923, %v3374, 0.0
        %3399 = vadd.xlane.f32.xlu0 %v3398
        %v3400 = vpop.xlane.xlu0 %3399
        %v3401 = vsel %vm923, %v3375, 0.0
        %3402 = vadd.xlane.f32.xlu0 %v3401
        %v3403 = vpop.xlane.xlu0 %3402
        %v3404 = vsel %vm923, %v3376, 0.0
        %3405 = vadd.xlane.f32.xlu0 %v3404
        %v3406 = vpop.xlane.xlu0 %3405
        %v3407 = vsel %vm923, %v3377, 0.0
        %3408 = vadd.xlane.f32.xlu0 %v3407
        %v3409 = vpop.xlane.xlu0 %3408
        %v3410 = vsel %vm923, %v3378, 0.0
        %3411 = vadd.xlane.f32.xlu0 %v3410
        %v3412 = vpop.xlane.xlu0 %3411
        %v3413 = vsel %vm923, %v3379, 0.0
        %3414 = vadd.xlane.f32.xlu0 %v3413
        %v3415 = vpop.xlane.xlu0 %3414
        %v3416 = vsel %vm923, %v3380, 0.0
        %3417 = vadd.xlane.f32.xlu0 %v3416
        %v3418 = vpop.xlane.xlu0 %3417
        %v3419 = vsel %vm923, %v3381, 0.0
        %3420 = vadd.xlane.f32.xlu0 %v3419
        %v3421 = vpop.xlane.xlu0 %3420
        %v3422 = vsel %vm923, %v3382, 0.0
        %3423 = vadd.xlane.f32.xlu0 %v3422
        %v3424 = vpop.xlane.xlu0 %3423
        %v3425 = vsel %vm923, %v3383, 0.0
        %3426 = vadd.xlane.f32.xlu0 %v3425
        %v3427 = vpop.xlane.xlu0 %3426
        %v3428 = vsel %vm923, %v3384, 0.0
        %3429 = vadd.xlane.f32.xlu0 %v3428
        %v3430 = vpop.xlane.xlu0 %3429
        %v3431 = vsel %vm923, %v3385, 0.0
        %3432 = vadd.xlane.f32.xlu0 %v3431
        %v3433 = vpop.xlane.xlu0 %3432
        %v3434 = vmul.f32 %v3388, %v2855
        %v3435 = vmul.f32 %v3391, %v2855
        %v3436 = vmul.f32 %v3394, %v2855
        %v3437 = vmul.f32 %v3397, %v2855
        %v3438 = vmul.f32 %v3400, %v2855
        %v3439 = vmul.f32 %v3403, %v2855
        %v3440 = vmul.f32 %v3406, %v2855
        %v3441 = vmul.f32 %v3409, %v2855
        %v3442 = vmul.f32 %v3412, %v2855
        %v3443 = vmul.f32 %v3415, %v2855
        %v3444 = vmul.f32 %v3418, %v2855
        %v3445 = vmul.f32 %v3421, %v2855
        %v3446 = vmul.f32 %v3424, %v2855
        %v3447 = vmul.f32 %v3427, %v2855
        %v3448 = vmul.f32 %v3430, %v2855
        %v3449 = vmul.f32 %v3433, %v2855
        %v3450 = vsub.f32 %v3370, %v3434
        %v3451 = vsub.f32 %v3371, %v3435
        %v3452 = vsub.f32 %v3372, %v3436
        %v3453 = vsub.f32 %v3373, %v3437
        %v3454 = vsub.f32 %v3374, %v3438
        %v3455 = vsub.f32 %v3375, %v3439
        %v3456 = vsub.f32 %v3376, %v3440
        %v3457 = vsub.f32 %v3377, %v3441
        %v3458 = vsub.f32 %v3378, %v3442
        %v3459 = vsub.f32 %v3379, %v3443
        %v3460 = vsub.f32 %v3380, %v3444
        %v3461 = vsub.f32 %v3381, %v3445
        %v3462 = vsub.f32 %v3382, %v3446
        %v3463 = vsub.f32 %v3383, %v3447
        %v3464 = vsub.f32 %v3384, %v3448
        %v3465 = vsub.f32 %v3385, %v3449
        %v3466 = vmul.f32 %v3450, %v3450
        %v3467 = vmul.f32 %v3451, %v3451
        %v3468 = vmul.f32 %v3452, %v3452
        %v3469 = vmul.f32 %v3453, %v3453
        %v3470 = vmul.f32 %v3454, %v3454
        %v3471 = vmul.f32 %v3455, %v3455
        %v3472 = vmul.f32 %v3456, %v3456
        %v3473 = vmul.f32 %v3457, %v3457
        %v3474 = vmul.f32 %v3458, %v3458
        %v3475 = vmul.f32 %v3459, %v3459
        %v3476 = vmul.f32 %v3460, %v3460
        %v3477 = vmul.f32 %v3461, %v3461
        %v3478 = vmul.f32 %v3462, %v3462
        %v3479 = vmul.f32 %v3463, %v3463
        %v3480 = vmul.f32 %v3464, %v3464
        %v3481 = vmul.f32 %v3465, %v3465
        %v3482 = vsel %vm923, %v3466, 0.0
        %3483 = vadd.xlane.f32.xlu0 %v3482
        %v3484 = vpop.xlane.xlu0 %3483
        %v3485 = vsel %vm923, %v3467, 0.0
        %3486 = vadd.xlane.f32.xlu0 %v3485
        %v3487 = vpop.xlane.xlu0 %3486
        %v3488 = vsel %vm923, %v3468, 0.0
        %3489 = vadd.xlane.f32.xlu0 %v3488
        %v3490 = vpop.xlane.xlu0 %3489
        %v3491 = vsel %vm923, %v3469, 0.0
        %3492 = vadd.xlane.f32.xlu0 %v3491
        %v3493 = vpop.xlane.xlu0 %3492
        %v3494 = vsel %vm923, %v3470, 0.0
        %3495 = vadd.xlane.f32.xlu0 %v3494
        %v3496 = vpop.xlane.xlu0 %3495
        %v3497 = vsel %vm923, %v3471, 0.0
        %3498 = vadd.xlane.f32.xlu0 %v3497
        %v3499 = vpop.xlane.xlu0 %3498
        %v3500 = vsel %vm923, %v3472, 0.0
        %3501 = vadd.xlane.f32.xlu0 %v3500
        %v3502 = vpop.xlane.xlu0 %3501
        %v3503 = vsel %vm923, %v3473, 0.0
        %3504 = vadd.xlane.f32.xlu0 %v3503
        %v3505 = vpop.xlane.xlu0 %3504
        %v3506 = vsel %vm923, %v3474, 0.0
        %3507 = vadd.xlane.f32.xlu0 %v3506
        %v3508 = vpop.xlane.xlu0 %3507
        %v3509 = vsel %vm923, %v3475, 0.0
        %3510 = vadd.xlane.f32.xlu0 %v3509
        %v3511 = vpop.xlane.xlu0 %3510
        %v3512 = vsel %vm923, %v3476, 0.0
        %3513 = vadd.xlane.f32.xlu0 %v3512
        %v3514 = vpop.xlane.xlu0 %3513
        %v3515 = vsel %vm923, %v3477, 0.0
        %3516 = vadd.xlane.f32.xlu0 %v3515
        %v3517 = vpop.xlane.xlu0 %3516
        %v3518 = vsel %vm923, %v3478, 0.0
        %3519 = vadd.xlane.f32.xlu0 %v3518
        %v3520 = vpop.xlane.xlu0 %3519
        %v3521 = vsel %vm923, %v3479, 0.0
        %3522 = vadd.xlane.f32.xlu0 %v3521
        %v3523 = vpop.xlane.xlu0 %3522
        %v3524 = vsel %vm923, %v3480, 0.0
        %3525 = vadd.xlane.f32.xlu0 %v3524
        %v3526 = vpop.xlane.xlu0 %3525
        %v3527 = vsel %vm923, %v3481, 0.0
        %3528 = vadd.xlane.f32.xlu0 %v3527
        %v3529 = vpop.xlane.xlu0 %3528
        %v3530 = vmul.f32 %v3484, %v2855
        %v3531 = vmul.f32 %v3487, %v2855
        %v3532 = vmul.f32 %v3490, %v2855
        %v3533 = vmul.f32 %v3493, %v2855
        %v3534 = vmul.f32 %v3496, %v2855
        %v3535 = vmul.f32 %v3499, %v2855
        %v3536 = vmul.f32 %v3502, %v2855
        %v3537 = vmul.f32 %v3505, %v2855
        %v3538 = vmul.f32 %v3508, %v2855
        %v3539 = vmul.f32 %v3511, %v2855
        %v3540 = vmul.f32 %v3514, %v2855
        %v3541 = vmul.f32 %v3517, %v2855
        %v3542 = vmul.f32 %v3520, %v2855
        %v3543 = vmul.f32 %v3523, %v2855
        %v3544 = vmul.f32 %v3526, %v2855
        %v3545 = vmul.f32 %v3529, %v2855
        %v3546 = vadd.f32 %v3530, 1e-05
        %v3547 = vadd.f32 %v3531, 1e-05
        %v3548 = vadd.f32 %v3532, 1e-05
        %v3549 = vadd.f32 %v3533, 1e-05
        %v3550 = vadd.f32 %v3534, 1e-05
        %v3551 = vadd.f32 %v3535, 1e-05
        %v3552 = vadd.f32 %v3536, 1e-05
        %v3553 = vadd.f32 %v3537, 1e-05
        %v3554 = vadd.f32 %v3538, 1e-05
        %v3555 = vadd.f32 %v3539, 1e-05
        %v3556 = vadd.f32 %v3540, 1e-05
        %v3557 = vadd.f32 %v3541, 1e-05
        %v3558 = vadd.f32 %v3542, 1e-05
        %v3559 = vadd.f32 %v3543, 1e-05
        %v3560 = vadd.f32 %v3544, 1e-05
        %v3561 = vadd.f32 %v3545, 1e-05
        %v3562 = vrsqrt.pop %v3546
        %v3563 = vrsqrt.pop %v3547
        %v3564 = vrsqrt.pop %v3548
        %v3565 = vrsqrt.pop %v3549
        %v3566 = vrsqrt.pop %v3550
        %v3567 = vrsqrt.pop %v3551
        %v3568 = vrsqrt.pop %v3552
        %v3569 = vrsqrt.pop %v3553
        %v3570 = vrsqrt.pop %v3554
        %v3571 = vrsqrt.pop %v3555
        %v3572 = vrsqrt.pop %v3556
        %v3573 = vrsqrt.pop %v3557
        %v3574 = vrsqrt.pop %v3558
        %v3575 = vrsqrt.pop %v3559
        %v3576 = vrsqrt.pop %v3560
        %v3577 = vrsqrt.pop %v3561
        %v3578 = vmul.f32 %v3450, %v3562
        %v3579 = vmul.f32 %v3451, %v3563
        %v3580 = vmul.f32 %v3452, %v3564
        %v3581 = vmul.f32 %v3453, %v3565
        %v3582 = vmul.f32 %v3454, %v3566
        %v3583 = vmul.f32 %v3455, %v3567
        %v3584 = vmul.f32 %v3456, %v3568
        %v3585 = vmul.f32 %v3457, %v3569
        %v3586 = vmul.f32 %v3458, %v3570
        %v3587 = vmul.f32 %v3459, %v3571
        %v3588 = vmul.f32 %v3460, %v3572
        %v3589 = vmul.f32 %v3461, %v3573
        %v3590 = vmul.f32 %v3462, %v3574
        %v3591 = vmul.f32 %v3463, %v3575
        %v3592 = vmul.f32 %v3464, %v3576
        %v3593 = vmul.f32 %v3465, %v3577
        %v3594 = vlaneseq
        %v3595 = vshrl.u32 %v3594, 7
        %v3596 = vsub.s32 7, %v3595
        %v3597 = vrot.slane %v470, %v3596
        %v3598 = vmul.f32 %v3578, %v3597
        %v3599 = vmul.f32 %v3579, %v3597
        %v3600 = vmul.f32 %v3580, %v3597
        %v3601 = vmul.f32 %v3581, %v3597
        %v3602 = vmul.f32 %v3582, %v3597
        %v3603 = vmul.f32 %v3583, %v3597
        %v3604 = vmul.f32 %v3584, %v3597
        %v3605 = vmul.f32 %v3585, %v3597
        %v3606 = vmul.f32 %v3586, %v3597
        %v3607 = vmul.f32 %v3587, %v3597
        %v3608 = vmul.f32 %v3588, %v3597
        %v3609 = vmul.f32 %v3589, %v3597
        %v3610 = vmul.f32 %v3590, %v3597
        %v3611 = vmul.f32 %v3591, %v3597
        %v3612 = vmul.f32 %v3592, %v3597
        %v3613 = vmul.f32 %v3593, %v3597
        %v3614 = vlaneseq
        %v3615 = vshrl.u32 %v3614, 7
        %v3616 = vsub.s32 0, %v3615
        %v3617 = vrot.slane %v471, %v3616
        %v3618 = vadd.f32 %v3598, %v3617
        %v3619 = vadd.f32 %v3599, %v3617
        %v3620 = vadd.f32 %v3600, %v3617
        %v3621 = vadd.f32 %v3601, %v3617
        %v3622 = vadd.f32 %v3602, %v3617
        %v3623 = vadd.f32 %v3603, %v3617
        %v3624 = vadd.f32 %v3604, %v3617
        %v3625 = vadd.f32 %v3605, %v3617
        %v3626 = vadd.f32 %v3606, %v3617
        %v3627 = vadd.f32 %v3607, %v3617
        %v3628 = vadd.f32 %v3608, %v3617
        %v3629 = vadd.f32 %v3609, %v3617
        %v3630 = vadd.f32 %v3610, %v3617
        %v3631 = vadd.f32 %v3611, %v3617
        %v3632 = vadd.f32 %v3612, %v3617
        %v3633 = vadd.f32 %v3613, %v3617
        %vm3634 = vcmp.ge.f32.partialorder %v3618, 0.0
        %vm3635 = vcmp.ge.f32.partialorder %v3619, 0.0
        %vm3636 = vcmp.ge.f32.partialorder %v3620, 0.0
        %vm3637 = vcmp.ge.f32.partialorder %v3621, 0.0
        %vm3638 = vcmp.ge.f32.partialorder %v3622, 0.0
        %vm3639 = vcmp.ge.f32.partialorder %v3623, 0.0
        %vm3640 = vcmp.ge.f32.partialorder %v3624, 0.0
        %vm3641 = vcmp.ge.f32.partialorder %v3625, 0.0
        %vm3642 = vcmp.ge.f32.partialorder %v3626, 0.0
        %vm3643 = vcmp.ge.f32.partialorder %v3627, 0.0
        %vm3644 = vcmp.ge.f32.partialorder %v3628, 0.0
        %vm3645 = vcmp.ge.f32.partialorder %v3629, 0.0
        %vm3646 = vcmp.ge.f32.partialorder %v3630, 0.0
        %vm3647 = vcmp.ge.f32.partialorder %v3631, 0.0
        %vm3648 = vcmp.ge.f32.partialorder %v3632, 0.0
        %vm3649 = vcmp.ge.f32.partialorder %v3633, 0.0
        %v3650 = vmul.f32 %v3618, 0.01
        %v3651 = vmul.f32 %v3619, 0.01
        %v3652 = vmul.f32 %v3620, 0.01
        %v3653 = vmul.f32 %v3621, 0.01
        %v3654 = vmul.f32 %v3622, 0.01
        %v3655 = vmul.f32 %v3623, 0.01
        %v3656 = vmul.f32 %v3624, 0.01
        %v3657 = vmul.f32 %v3625, 0.01
        %v3658 = vmul.f32 %v3626, 0.01
        %v3659 = vmul.f32 %v3627, 0.01
        %v3660 = vmul.f32 %v3628, 0.01
        %v3661 = vmul.f32 %v3629, 0.01
        %v3662 = vmul.f32 %v3630, 0.01
        %v3663 = vmul.f32 %v3631, 0.01
        %v3664 = vmul.f32 %v3632, 0.01
        %v3665 = vmul.f32 %v3633, 0.01
        %v3666 = vsel %vm3634, %v3618, %v3650
        %v3667 = vsel %vm3635, %v3619, %v3651
        %v3668 = vsel %vm3636, %v3620, %v3652
        %v3669 = vsel %vm3637, %v3621, %v3653
        %v3670 = vsel %vm3638, %v3622, %v3654
        %v3671 = vsel %vm3639, %v3623, %v3655
        %v3672 = vsel %vm3640, %v3624, %v3656
        %v3673 = vsel %vm3641, %v3625, %v3657
        %v3674 = vsel %vm3642, %v3626, %v3658
        %v3675 = vsel %vm3643, %v3627, %v3659
        %v3676 = vsel %vm3644, %v3628, %v3660
        %v3677 = vsel %vm3645, %v3629, %v3661
        %v3678 = vsel %vm3646, %v3630, %v3662
        %v3679 = vsel %vm3647, %v3631, %v3663
        %v3680 = vsel %vm3648, %v3632, %v3664
        %v3681 = vsel %vm3649, %v3633, %v3665
        %v3682 = vld [vmem:[%s8] sm:$0xf]
        %v3683 = vld [vmem:[%s8 + $0x4] sm:$0xf]
        %v3684 = vld [vmem:[%s8 + $0x8] sm:$0xf]
        %v3685 = vld [vmem:[%s8 + $0xc] sm:$0xf]
        %v3686 = vpack.c.bf16 %v3667, %v3666
        %v3687 = vpack.c.bf16 %v3669, %v3668
        %v3688 = vpack.c.bf16 %v3671, %v3670
        %v3689 = vpack.c.bf16 %v3673, %v3672
        %v3690 = vpack.c.bf16 %v3675, %v3674
        %v3691 = vpack.c.bf16 %v3677, %v3676
        %v3692 = vpack.c.bf16 %v3679, %v3678
        %v3693 = vpack.c.bf16 %v3681, %v3680
        %v3694 = vlaneseq
        %v3695 = vshrl.u32 %v3694, 7
        %v3696 = vsub.s32 1, %v3695
        %v3697 = vrot.slane %v471, %v3696
        %v3702 = vunpack.c.l.b16 %v3682
        %v3703 = vunpack.c.l.b16 %v3683
        %v3704 = vunpack.c.l.b16 %v3684
        %v3705 = vunpack.c.l.b16 %v3685
        %v3706 = vpack.c.b16 %v3703, %v3702
        %v3707 = vpack.c.b16 %v3705, %v3704
        %v3711 = vsel %vm923, %v3686, 0
        %v3714 = vsel %vm923, %v3687, 0
        %v3717 = vsel %vm923, %v3688, 0
        %v3720 = vsel %vm923, %v3689, 0
        %v3723 = vsel %vm923, %v3690, 0
        %v3726 = vsel %vm923, %v3691, 0
        %v3729 = vsel %vm923, %v3692, 0
        %v3732 = vsel %vm923, %v3693, 0
        %3734 = vmatprep.subr.bf16.mxu0 0
        %3735 = vmatpush1.bf16.msra.mxu0 %v3706
        %3736 = vmatprep.subr.bf16.mxu0 0
        %3737 = vmatpush1.bf16.msra.mxu0 %v3707
        %3738 = vmatprep.subr.bf16.mxu0 0
        %3739 = vmatpush1.bf16.msra.mxu0 0
        %3740 = vmatprep.subr.bf16.mxu0 0
        %3741 = vmatpush1.bf16.msra.mxu0 0
        %3742 = vmatprep.subr.bf16.mxu0 0
        %3743 = vmatpush1.bf16.msra.mxu0 0
        %3744 = vmatprep.subr.bf16.mxu0 0
        %3745 = vmatpush1.bf16.msra.mxu0 0
        %3746 = vmatprep.subr.bf16.mxu0 0
        %3747 = vmatpush1.bf16.msra.mxu0 0
        %3748 = vmatprep.subr.bf16.mxu0 0
        %3749 = vmatpush1.bf16.msra.mxu0 0
        %3750 = vmatprep.subr.bf16.mxu0 0
        %3751 = vmatpush1.bf16.msra.mxu0 0
        %3752 = vmatprep.subr.bf16.mxu0 0
        %3753 = vmatpush1.bf16.msra.mxu0 0
        %3754 = vmatprep.subr.bf16.mxu0 0
        %3755 = vmatpush1.bf16.msra.mxu0 0
        %3756 = vmatprep.subr.bf16.mxu0 0
        %3757 = vmatpush1.bf16.msra.mxu0 0
        %3758 = vmatprep.subr.bf16.mxu0 0
        %3759 = vmatpush1.bf16.msra.mxu0 0
        %3760 = vmatprep.subr.bf16.mxu0 0
        %3761 = vmatpush1.bf16.msra.mxu0 0
        %3762 = vmatprep.subr.bf16.mxu0 0
        %3763 = vmatpush1.bf16.msra.mxu0 0
        %3764 = vmatprep.subr.bf16.mxu0 0
        %3765 = vmatpush1.bf16.msra.mxu0 0
        %3766 = vmatprep.mubr.bf16.mxu0 0
        %3767 = vmatmul.mubr.bf16.gmra.mrb[0].mxu0 %v3711
        %v3768 = vpop.f32.mrb[0].mxu0
        %v3769 = vadd.f32 %v3697, %v3768
        %v3770 = vpop.f32.mrb[0].mxu0
        %v3771 = vpop.f32.mrb[0].mxu0
        %v3772 = vadd.f32 %v3697, %v3771
        %v3773 = vpop.f32.mrb[0].mxu0
        %3774 = vmatprep.mubr.bf16.mxu0 0
        %3775 = vmatmul.mubr.bf16.gmra.mrb[0].mxu0 %v3714
        %v3776 = vpop.f32.mrb[0].mxu0
        %v3777 = vadd.f32 %v3697, %v3776
        %v3778 = vpop.f32.mrb[0].mxu0
        %v3779 = vpop.f32.mrb[0].mxu0
        %v3780 = vadd.f32 %v3697, %v3779
        %v3781 = vpop.f32.mrb[0].mxu0
        %3782 = vmatprep.mubr.bf16.mxu0 0
        %3783 = vmatmul.mubr.bf16.gmra.mrb[0].mxu0 %v3717
        %v3784 = vpop.f32.mrb[0].mxu0
        %v3785 = vadd.f32 %v3697, %v3784
        %v3786 = vpop.f32.mrb[0].mxu0
        %v3787 = vpop.f32.mrb[0].mxu0
        %v3788 = vadd.f32 %v3697, %v3787
        %v3789 = vpop.f32.mrb[0].mxu0
        %3790 = vmatprep.mubr.bf16.mxu0 0
        %3791 = vmatmul.mubr.bf16.gmra.mrb[0].mxu0 %v3720
        %v3792 = vpop.f32.mrb[0].mxu0
        %v3793 = vadd.f32 %v3697, %v3792
        %v3794 = vpop.f32.mrb[0].mxu0
        %v3795 = vpop.f32.mrb[0].mxu0
        %v3796 = vadd.f32 %v3697, %v3795
        %v3797 = vpop.f32.mrb[0].mxu0
        %3798 = vmatprep.mubr.bf16.mxu0 0
        %3799 = vmatmul.mubr.bf16.gmra.mrb[0].mxu0 %v3723
        %v3800 = vpop.f32.mrb[0].mxu0
        %v3801 = vadd.f32 %v3697, %v3800
        %v3802 = vpop.f32.mrb[0].mxu0
        %v3803 = vpop.f32.mrb[0].mxu0
        %v3804 = vadd.f32 %v3697, %v3803
        %v3805 = vpop.f32.mrb[0].mxu0
        %3806 = vmatprep.mubr.bf16.mxu0 0
        %3807 = vmatmul.mubr.bf16.gmra.mrb[0].mxu0 %v3726
        %v3808 = vpop.f32.mrb[0].mxu0
        %v3809 = vadd.f32 %v3697, %v3808
        %v3810 = vpop.f32.mrb[0].mxu0
        %v3811 = vpop.f32.mrb[0].mxu0
        %v3812 = vadd.f32 %v3697, %v3811
        %v3813 = vpop.f32.mrb[0].mxu0
        %3814 = vmatprep.mubr.bf16.mxu0 0
        %3815 = vmatmul.mubr.bf16.gmra.mrb[0].mxu0 %v3729
        %v3816 = vpop.f32.mrb[0].mxu0
        %v3817 = vadd.f32 %v3697, %v3816
        %v3818 = vpop.f32.mrb[0].mxu0
        %v3819 = vpop.f32.mrb[0].mxu0
        %v3820 = vadd.f32 %v3697, %v3819
        %v3821 = vpop.f32.mrb[0].mxu0
        %3822 = vmatprep.mubr.bf16.mxu0 0
        %3823 = vmatmul.mubr.bf16.gmra.mrb[0].mxu0 %v3732
        %v3824 = vpop.f32.mrb[0].mxu0
        %v3825 = vadd.f32 %v3697, %v3824
        %v3826 = vpop.f32.mrb[0].mxu0
        %v3827 = vpop.f32.mrb[0].mxu0
        %v3828 = vadd.f32 %v3697, %v3827
        %v3829 = vpop.f32.mrb[0].mxu0
        %3830 = vdwg.mxu0
        %vm3831 = vcmp.ge.f32.partialorder %v3769, 0.0
        %vm3832 = vcmp.ge.f32.partialorder %v3772, 0.0
        %vm3833 = vcmp.ge.f32.partialorder %v3777, 0.0
        %vm3834 = vcmp.ge.f32.partialorder %v3780, 0.0
        %vm3835 = vcmp.ge.f32.partialorder %v3785, 0.0
        %vm3836 = vcmp.ge.f32.partialorder %v3788, 0.0
        %vm3837 = vcmp.ge.f32.partialorder %v3793, 0.0
        %vm3838 = vcmp.ge.f32.partialorder %v3796, 0.0
        %vm3839 = vcmp.ge.f32.partialorder %v3801, 0.0
        %vm3840 = vcmp.ge.f32.partialorder %v3804, 0.0
        %vm3841 = vcmp.ge.f32.partialorder %v3809, 0.0
        %vm3842 = vcmp.ge.f32.partialorder %v3812, 0.0
        %vm3843 = vcmp.ge.f32.partialorder %v3817, 0.0
        %vm3844 = vcmp.ge.f32.partialorder %v3820, 0.0
        %vm3845 = vcmp.ge.f32.partialorder %v3825, 0.0
        %vm3846 = vcmp.ge.f32.partialorder %v3828, 0.0
        %v3847 = vmul.f32 %v3769, 0.01
        %v3848 = vmul.f32 %v3772, 0.01
        %v3849 = vmul.f32 %v3777, 0.01
        %v3850 = vmul.f32 %v3780, 0.01
        %v3851 = vmul.f32 %v3785, 0.01
        %v3852 = vmul.f32 %v3788, 0.01
        %v3853 = vmul.f32 %v3793, 0.01
        %v3854 = vmul.f32 %v3796, 0.01
        %v3855 = vmul.f32 %v3801, 0.01
        %v3856 = vmul.f32 %v3804, 0.01
        %v3857 = vmul.f32 %v3809, 0.01
        %v3858 = vmul.f32 %v3812, 0.01
        %v3859 = vmul.f32 %v3817, 0.01
        %v3860 = vmul.f32 %v3820, 0.01
        %v3861 = vmul.f32 %v3825, 0.01
        %v3862 = vmul.f32 %v3828, 0.01
        %v3863 = vsel %vm3831, %v3769, %v3847
        %v3864 = vsel %vm3832, %v3772, %v3848
        %v3865 = vsel %vm3833, %v3777, %v3849
        %v3866 = vsel %vm3834, %v3780, %v3850
        %v3867 = vsel %vm3835, %v3785, %v3851
        %v3868 = vsel %vm3836, %v3788, %v3852
        %v3869 = vsel %vm3837, %v3793, %v3853
        %v3870 = vsel %vm3838, %v3796, %v3854
        %v3871 = vsel %vm3839, %v3801, %v3855
        %v3872 = vsel %vm3840, %v3804, %v3856
        %v3873 = vsel %vm3841, %v3809, %v3857
        %v3874 = vsel %vm3842, %v3812, %v3858
        %v3875 = vsel %vm3843, %v3817, %v3859
        %v3876 = vsel %vm3844, %v3820, %v3860
        %v3877 = vsel %vm3845, %v3825, %v3861
        %v3878 = vsel %vm3846, %v3828, %v3862
        %v3879 = vadd.f32 %v3666, %v3863
        %v3880 = vadd.f32 %v3667, %v3864
        %v3881 = vadd.f32 %v3668, %v3865
        %v3882 = vadd.f32 %v3669, %v3866
        %v3883 = vadd.f32 %v3670, %v3867
        %v3884 = vadd.f32 %v3671, %v3868
        %v3885 = vadd.f32 %v3672, %v3869
        %v3886 = vadd.f32 %v3673, %v3870
        %v3887 = vadd.f32 %v3674, %v3871
        %v3888 = vadd.f32 %v3675, %v3872
        %v3889 = vadd.f32 %v3676, %v3873
        %v3890 = vadd.f32 %v3677, %v3874
        %v3891 = vadd.f32 %v3678, %v3875
        %v3892 = vadd.f32 %v3679, %v3876
        %v3893 = vadd.f32 %v3680, %v3877
        %v3894 = vadd.f32 %v3681, %v3878
        %v3895 = vld [vmem:[%s9] sm:$0xf]
        %v3896 = vld [vmem:[%s9 + $0x4] sm:$0xf]
        %v3897 = vld [vmem:[%s9 + $0x8] sm:$0xf]
        %v3898 = vld [vmem:[%s9 + $0xc] sm:$0xf]
        %v3899 = vpack.c.bf16 %v3880, %v3879
        %v3900 = vpack.c.bf16 %v3882, %v3881
        %v3901 = vpack.c.bf16 %v3884, %v3883
        %v3902 = vpack.c.bf16 %v3886, %v3885
        %v3903 = vpack.c.bf16 %v3888, %v3887
        %v3904 = vpack.c.bf16 %v3890, %v3889
        %v3905 = vpack.c.bf16 %v3892, %v3891
        %v3906 = vpack.c.bf16 %v3894, %v3893
        %v3907 = vlaneseq
        %v3908 = vshrl.u32 %v3907, 7
        %v3909 = vsub.s32 2, %v3908
        %v3910 = vrot.slane %v471, %v3909
        %v3915 = vunpack.c.l.b16 %v3895
        %v3916 = vunpack.c.l.b16 %v3896
        %v3917 = vunpack.c.l.b16 %v3897
        %v3918 = vunpack.c.l.b16 %v3898
        %v3919 = vpack.c.b16 %v3916, %v3915
        %v3920 = vpack.c.b16 %v3918, %v3917
        %v3924 = vsel %vm923, %v3899, 0
        %v3927 = vsel %vm923, %v3900, 0
        %v3930 = vsel %vm923, %v3901, 0
        %v3933 = vsel %vm923, %v3902, 0
        %v3936 = vsel %vm923, %v3903, 0
        %v3939 = vsel %vm923, %v3904, 0
        %v3942 = vsel %vm923, %v3905, 0
        %v3945 = vsel %vm923, %v3906, 0
        %3947 = vmatprep.subr.bf16.mxu0 0
        %3948 = vmatpush1.bf16.msra.mxu0 %v3919
        %3949 = vmatprep.subr.bf16.mxu0 0
        %3950 = vmatpush1.bf16.msra.mxu0 %v3920
        %3951 = vmatprep.subr.bf16.mxu0 0
        %3952 = vmatpush1.bf16.msra.mxu0 0
        %3953 = vmatprep.subr.bf16.mxu0 0
        %3954 = vmatpush1.bf16.msra.mxu0 0
        %3955 = vmatprep.subr.bf16.mxu0 0
        %3956 = vmatpush1.bf16.msra.mxu0 0
        %3957 = vmatprep.subr.bf16.mxu0 0
        %3958 = vmatpush1.bf16.msra.mxu0 0
        %3959 = vmatprep.subr.bf16.mxu0 0
        %3960 = vmatpush1.bf16.msra.mxu0 0
        %3961 = vmatprep.subr.bf16.mxu0 0
        %3962 = vmatpush1.bf16.msra.mxu0 0
        %3963 = vmatprep.subr.bf16.mxu0 0
        %3964 = vmatpush1.bf16.msra.mxu0 0
        %3965 = vmatprep.subr.bf16.mxu0 0
        %3966 = vmatpush1.bf16.msra.mxu0 0
        %3967 = vmatprep.subr.bf16.mxu0 0
        %3968 = vmatpush1.bf16.msra.mxu0 0
        %3969 = vmatprep.subr.bf16.mxu0 0
        %3970 = vmatpush1.bf16.msra.mxu0 0
        %3971 = vmatprep.subr.bf16.mxu0 0
        %3972 = vmatpush1.bf16.msra.mxu0 0
        %3973 = vmatprep.subr.bf16.mxu0 0
        %3974 = vmatpush1.bf16.msra.mxu0 0
        %3975 = vmatprep.subr.bf16.mxu0 0
        %3976 = vmatpush1.bf16.msra.mxu0 0
        %3977 = vmatprep.subr.bf16.mxu0 0
        %3978 = vmatpush1.bf16.msra.mxu0 0
        %3979 = vmatprep.mubr.bf16.mxu0 0
        %3980 = vmatmul.mubr.bf16.gmra.mrb[0].mxu0 %v3924
        %v3981 = vpop.f32.mrb[0].mxu0
        %v3982 = vadd.f32 %v3910, %v3981
        %v3983 = vpop.f32.mrb[0].mxu0
        %v3984 = vpop.f32.mrb[0].mxu0
        %v3985 = vadd.f32 %v3910, %v3984
        %v3986 = vpop.f32.mrb[0].mxu0
        %3987 = vmatprep.mubr.bf16.mxu0 0
        %3988 = vmatmul.mubr.bf16.gmra.mrb[0].mxu0 %v3927
        %v3989 = vpop.f32.mrb[0].mxu0
        %v3990 = vadd.f32 %v3910, %v3989
        %v3991 = vpop.f32.mrb[0].mxu0
        %v3992 = vpop.f32.mrb[0].mxu0
        %v3993 = vadd.f32 %v3910, %v3992
        %v3994 = vpop.f32.mrb[0].mxu0
        %3995 = vmatprep.mubr.bf16.mxu0 0
        %3996 = vmatmul.mubr.bf16.gmra.mrb[0].mxu0 %v3930
        %v3997 = vpop.f32.mrb[0].mxu0
        %v3998 = vadd.f32 %v3910, %v3997
        %v3999 = vpop.f32.mrb[0].mxu0
        %v4000 = vpop.f32.mrb[0].mxu0
        %v4001 = vadd.f32 %v3910, %v4000
        %v4002 = vpop.f32.mrb[0].mxu0
        %4003 = vmatprep.mubr.bf16.mxu0 0
        %4004 = vmatmul.mubr.bf16.gmra.mrb[0].mxu0 %v3933
        %v4005 = vpop.f32.mrb[0].mxu0
        %v4006 = vadd.f32 %v3910, %v4005
        %v4007 = vpop.f32.mrb[0].mxu0
        %v4008 = vpop.f32.mrb[0].mxu0
        %v4009 = vadd.f32 %v3910, %v4008
        %v4010 = vpop.f32.mrb[0].mxu0
        %4011 = vmatprep.mubr.bf16.mxu0 0
        %4012 = vmatmul.mubr.bf16.gmra.mrb[0].mxu0 %v3936
        %v4013 = vpop.f32.mrb[0].mxu0
        %v4014 = vadd.f32 %v3910, %v4013
        %v4015 = vpop.f32.mrb[0].mxu0
        %v4016 = vpop.f32.mrb[0].mxu0
        %v4017 = vadd.f32 %v3910, %v4016
        %v4018 = vpop.f32.mrb[0].mxu0
        %4019 = vmatprep.mubr.bf16.mxu0 0
        %4020 = vmatmul.mubr.bf16.gmra.mrb[0].mxu0 %v3939
        %v4021 = vpop.f32.mrb[0].mxu0
        %v4022 = vadd.f32 %v3910, %v4021
        %v4023 = vpop.f32.mrb[0].mxu0
        %v4024 = vpop.f32.mrb[0].mxu0
        %v4025 = vadd.f32 %v3910, %v4024
        %v4026 = vpop.f32.mrb[0].mxu0
        %4027 = vmatprep.mubr.bf16.mxu0 0
        %4028 = vmatmul.mubr.bf16.gmra.mrb[0].mxu0 %v3942
        %v4029 = vpop.f32.mrb[0].mxu0
        %v4030 = vadd.f32 %v3910, %v4029
        %v4031 = vpop.f32.mrb[0].mxu0
        %v4032 = vpop.f32.mrb[0].mxu0
        %v4033 = vadd.f32 %v3910, %v4032
        %v4034 = vpop.f32.mrb[0].mxu0
        %4035 = vmatprep.mubr.bf16.mxu0 0
        %4036 = vmatmul.mubr.bf16.gmra.mrb[0].mxu0 %v3945
        %v4037 = vpop.f32.mrb[0].mxu0
        %v4038 = vadd.f32 %v3910, %v4037
        %v4039 = vpop.f32.mrb[0].mxu0
        %v4040 = vpop.f32.mrb[0].mxu0
        %v4041 = vadd.f32 %v3910, %v4040
        %v4042 = vpop.f32.mrb[0].mxu0
        %4043 = vdwg.mxu0
        %vm4044 = vcmp.ge.f32.partialorder %v3982, 0.0
        %vm4045 = vcmp.ge.f32.partialorder %v3985, 0.0
        %vm4046 = vcmp.ge.f32.partialorder %v3990, 0.0
        %vm4047 = vcmp.ge.f32.partialorder %v3993, 0.0
        %vm4048 = vcmp.ge.f32.partialorder %v3998, 0.0
        %vm4049 = vcmp.ge.f32.partialorder %v4001, 0.0
        %vm4050 = vcmp.ge.f32.partialorder %v4006, 0.0
        %vm4051 = vcmp.ge.f32.partialorder %v4009, 0.0
        %vm4052 = vcmp.ge.f32.partialorder %v4014, 0.0
        %vm4053 = vcmp.ge.f32.partialorder %v4017, 0.0
        %vm4054 = vcmp.ge.f32.partialorder %v4022, 0.0
        %vm4055 = vcmp.ge.f32.partialorder %v4025, 0.0
        %vm4056 = vcmp.ge.f32.partialorder %v4030, 0.0
        %vm4057 = vcmp.ge.f32.partialorder %v4033, 0.0
        %vm4058 = vcmp.ge.f32.partialorder %v4038, 0.0
        %vm4059 = vcmp.ge.f32.partialorder %v4041, 0.0
        %v4060 = vmul.f32 %v3982, 0.01
        %v4061 = vmul.f32 %v3985, 0.01
        %v4062 = vmul.f32 %v3990, 0.01
        %v4063 = vmul.f32 %v3993, 0.01
        %v4064 = vmul.f32 %v3998, 0.01
        %v4065 = vmul.f32 %v4001, 0.01
        %v4066 = vmul.f32 %v4006, 0.01
        %v4067 = vmul.f32 %v4009, 0.01
        %v4068 = vmul.f32 %v4014, 0.01
        %v4069 = vmul.f32 %v4017, 0.01
        %v4070 = vmul.f32 %v4022, 0.01
        %v4071 = vmul.f32 %v4025, 0.01
        %v4072 = vmul.f32 %v4030, 0.01
        %v4073 = vmul.f32 %v4033, 0.01
        %v4074 = vmul.f32 %v4038, 0.01
        %v4075 = vmul.f32 %v4041, 0.01
        %v4076 = vsel %vm4044, %v3982, %v4060
        %v4077 = vsel %vm4045, %v3985, %v4061
        %v4078 = vsel %vm4046, %v3990, %v4062
        %v4079 = vsel %vm4047, %v3993, %v4063
        %v4080 = vsel %vm4048, %v3998, %v4064
        %v4081 = vsel %vm4049, %v4001, %v4065
        %v4082 = vsel %vm4050, %v4006, %v4066
        %v4083 = vsel %vm4051, %v4009, %v4067
        %v4084 = vsel %vm4052, %v4014, %v4068
        %v4085 = vsel %vm4053, %v4017, %v4069
        %v4086 = vsel %vm4054, %v4022, %v4070
        %v4087 = vsel %vm4055, %v4025, %v4071
        %v4088 = vsel %vm4056, %v4030, %v4072
        %v4089 = vsel %vm4057, %v4033, %v4073
        %v4090 = vsel %vm4058, %v4038, %v4074
        %v4091 = vsel %vm4059, %v4041, %v4075
        %v4092 = vadd.f32 %v3879, %v4076
        %v4093 = vadd.f32 %v3880, %v4077
        %v4094 = vadd.f32 %v3881, %v4078
        %v4095 = vadd.f32 %v3882, %v4079
        %v4096 = vadd.f32 %v3883, %v4080
        %v4097 = vadd.f32 %v3884, %v4081
        %v4098 = vadd.f32 %v3885, %v4082
        %v4099 = vadd.f32 %v3886, %v4083
        %v4100 = vadd.f32 %v3887, %v4084
        %v4101 = vadd.f32 %v3888, %v4085
        %v4102 = vadd.f32 %v3889, %v4086
        %v4103 = vadd.f32 %v3890, %v4087
        %v4104 = vadd.f32 %v3891, %v4088
        %v4105 = vadd.f32 %v3892, %v4089
        %v4106 = vadd.f32 %v3893, %v4090
        %v4107 = vadd.f32 %v3894, %v4091
        %v4108 = vld [vmem:[%s10] sm:$0xf]
        %v4109 = vld [vmem:[%s10 + $0x4] sm:$0xf]
        %v4110 = vld [vmem:[%s10 + $0x8] sm:$0xf]
        %v4111 = vld [vmem:[%s10 + $0xc] sm:$0xf]
        %v4112 = vpack.c.bf16 %v4093, %v4092
        %v4113 = vpack.c.bf16 %v4095, %v4094
        %v4114 = vpack.c.bf16 %v4097, %v4096
        %v4115 = vpack.c.bf16 %v4099, %v4098
        %v4116 = vpack.c.bf16 %v4101, %v4100
        %v4117 = vpack.c.bf16 %v4103, %v4102
        %v4118 = vpack.c.bf16 %v4105, %v4104
        %v4119 = vpack.c.bf16 %v4107, %v4106
        %v4120 = vld [vmem:[%s13] sm:$0x1]
        %v4122 = vlaneseq
        %v4123 = vshrl.u32 %v4122, 7
        %v4124 = vsub.s32 0, %v4123
        %v4125 = vrot.slane %v4120, %v4124
        %v4131 = vunpack.c.l.b16 %v4108
        %v4132 = vunpack.c.l.b16 %v4109
        %v4133 = vunpack.c.l.b16 %v4110
        %v4134 = vunpack.c.l.b16 %v4111
        %v4135 = vpack.c.b16 %v4132, %v4131
        %v4136 = vpack.c.b16 %v4134, %v4133
        %v4140 = vsel %vm923, %v4112, 0
        %v4143 = vsel %vm923, %v4113, 0
        %v4146 = vsel %vm923, %v4114, 0
        %v4149 = vsel %vm923, %v4115, 0
        %v4152 = vsel %vm923, %v4116, 0
        %v4155 = vsel %vm923, %v4117, 0
        %v4158 = vsel %vm923, %v4118, 0
        %v4161 = vsel %vm923, %v4119, 0
        %4163 = vmatprep.subr.bf16.mxu0 0
        %4164 = vmatpush1.bf16.msra.mxu0 %v4135
        %4165 = vmatprep.subr.bf16.mxu0 0
        %4166 = vmatpush1.bf16.msra.mxu0 %v4136
        %4167 = vmatprep.subr.bf16.mxu0 0
        %4168 = vmatpush1.bf16.msra.mxu0 0
        %4169 = vmatprep.subr.bf16.mxu0 0
        %4170 = vmatpush1.bf16.msra.mxu0 0
        %4171 = vmatprep.subr.bf16.mxu0 0
        %4172 = vmatpush1.bf16.msra.mxu0 0
        %4173 = vmatprep.subr.bf16.mxu0 0
        %4174 = vmatpush1.bf16.msra.mxu0 0
        %4175 = vmatprep.subr.bf16.mxu0 0
        %4176 = vmatpush1.bf16.msra.mxu0 0
        %4177 = vmatprep.subr.bf16.mxu0 0
        %4178 = vmatpush1.bf16.msra.mxu0 0
        %4179 = vmatprep.subr.bf16.mxu0 0
        %4180 = vmatpush1.bf16.msra.mxu0 0
        %4181 = vmatprep.subr.bf16.mxu0 0
        %4182 = vmatpush1.bf16.msra.mxu0 0
        %4183 = vmatprep.subr.bf16.mxu0 0
        %4184 = vmatpush1.bf16.msra.mxu0 0
        %4185 = vmatprep.subr.bf16.mxu0 0
        %4186 = vmatpush1.bf16.msra.mxu0 0
        %4187 = vmatprep.subr.bf16.mxu0 0
        %4188 = vmatpush1.bf16.msra.mxu0 0
        %4189 = vmatprep.subr.bf16.mxu0 0
        %4190 = vmatpush1.bf16.msra.mxu0 0
        %4191 = vmatprep.subr.bf16.mxu0 0
        %4192 = vmatpush1.bf16.msra.mxu0 0
        %4193 = vmatprep.subr.bf16.mxu0 0
        %4194 = vmatpush1.bf16.msra.mxu0 0
        %4195 = vmatprep.mubr.bf16.mxu0 0
        %4196 = vmatmul.mubr.bf16.gmra.mrb[0].mxu0 %v4140
        %v4197 = vpop.f32.mrb[0].mxu0
        %v4198 = vadd.f32 %v4125, %v4197
        %v4199 = vpop.f32.mrb[0].mxu0
        %v4200 = vpop.f32.mrb[0].mxu0
        %v4201 = vadd.f32 %v4125, %v4200
        %v4202 = vpop.f32.mrb[0].mxu0
        %4203 = vmatprep.mubr.bf16.mxu0 0
        %4204 = vmatmul.mubr.bf16.gmra.mrb[0].mxu0 %v4143
        %v4205 = vpop.f32.mrb[0].mxu0
        %v4206 = vadd.f32 %v4125, %v4205
        %v4207 = vpop.f32.mrb[0].mxu0
        %v4208 = vpop.f32.mrb[0].mxu0
        %v4209 = vadd.f32 %v4125, %v4208
        %v4210 = vpop.f32.mrb[0].mxu0
        %4211 = vmatprep.mubr.bf16.mxu0 0
        %4212 = vmatmul.mubr.bf16.gmra.mrb[0].mxu0 %v4146
        %v4213 = vpop.f32.mrb[0].mxu0
        %v4214 = vadd.f32 %v4125, %v4213
        %v4215 = vpop.f32.mrb[0].mxu0
        %v4216 = vpop.f32.mrb[0].mxu0
        %v4217 = vadd.f32 %v4125, %v4216
        %v4218 = vpop.f32.mrb[0].mxu0
        %4219 = vmatprep.mubr.bf16.mxu0 0
        %4220 = vmatmul.mubr.bf16.gmra.mrb[0].mxu0 %v4149
        %v4221 = vpop.f32.mrb[0].mxu0
        %v4222 = vadd.f32 %v4125, %v4221
        %v4223 = vpop.f32.mrb[0].mxu0
        %v4224 = vpop.f32.mrb[0].mxu0
        %v4225 = vadd.f32 %v4125, %v4224
        %v4226 = vpop.f32.mrb[0].mxu0
        %4227 = vmatprep.mubr.bf16.mxu0 0
        %4228 = vmatmul.mubr.bf16.gmra.mrb[0].mxu0 %v4152
        %v4229 = vpop.f32.mrb[0].mxu0
        %v4230 = vadd.f32 %v4125, %v4229
        %v4231 = vpop.f32.mrb[0].mxu0
        %v4232 = vpop.f32.mrb[0].mxu0
        %v4233 = vadd.f32 %v4125, %v4232
        %v4234 = vpop.f32.mrb[0].mxu0
        %4235 = vmatprep.mubr.bf16.mxu0 0
        %4236 = vmatmul.mubr.bf16.gmra.mrb[0].mxu0 %v4155
        %v4237 = vpop.f32.mrb[0].mxu0
        %v4238 = vadd.f32 %v4125, %v4237
        %v4239 = vpop.f32.mrb[0].mxu0
        %v4240 = vpop.f32.mrb[0].mxu0
        %v4241 = vadd.f32 %v4125, %v4240
        %v4242 = vpop.f32.mrb[0].mxu0
        %4243 = vmatprep.mubr.bf16.mxu0 0
        %4244 = vmatmul.mubr.bf16.gmra.mrb[0].mxu0 %v4158
        %v4245 = vpop.f32.mrb[0].mxu0
        %v4246 = vadd.f32 %v4125, %v4245
        %v4247 = vpop.f32.mrb[0].mxu0
        %v4248 = vpop.f32.mrb[0].mxu0
        %v4249 = vadd.f32 %v4125, %v4248
        %v4250 = vpop.f32.mrb[0].mxu0
        %4251 = vmatprep.mubr.bf16.mxu0 0
        %4252 = vmatmul.mubr.bf16.gmra.mrb[0].mxu0 %v4161
        %v4253 = vpop.f32.mrb[0].mxu0
        %v4254 = vadd.f32 %v4125, %v4253
        %v4255 = vpop.f32.mrb[0].mxu0
        %v4256 = vpop.f32.mrb[0].mxu0
        %v4257 = vadd.f32 %v4125, %v4256
        %v4258 = vpop.f32.mrb[0].mxu0
        %4259 = vdwg.mxu0
        %4260 = vst [vmem:[%s461] sm:$0xff] %v4198
        %4261 = vst [vmem:[%s461 + $0x8] sm:$0xff] %v4201
        %4262 = vst [vmem:[%s461 + $0x10] sm:$0xff] %v4206
        %4263 = vst [vmem:[%s461 + $0x18] sm:$0xff] %v4209
        %4264 = vst [vmem:[%s461 + $0x20] sm:$0xff] %v4214
        %4265 = vst [vmem:[%s461 + $0x28] sm:$0xff] %v4217
        %4266 = vst [vmem:[%s461 + $0x30] sm:$0xff] %v4222
        %4267 = vst [vmem:[%s461 + $0x38] sm:$0xff] %v4225
        %4268 = vst [vmem:[%s461 + $0x40] sm:$0xff] %v4230
        %4269 = vst [vmem:[%s461 + $0x48] sm:$0xff] %v4233
        %4270 = vst [vmem:[%s461 + $0x50] sm:$0xff] %v4238
        %4271 = vst [vmem:[%s461 + $0x58] sm:$0xff] %v4241
        %4272 = vst [vmem:[%s461 + $0x60] sm:$0xff] %v4246
        %4273 = vst [vmem:[%s461 + $0x68] sm:$0xff] %v4249
        %4274 = vst [vmem:[%s461 + $0x70] sm:$0xff] %v4254
        %4275 = vst [vmem:[%s461 + $0x78] sm:$0xff] %v4257
        %s4276 = sand.u32 %s335, 1
        %s4277 = scalar_lea.sflag [#allocation3], %s4276
        %s4278 = sand.u32 %s335, 1
        %s4279 = smul.addr %s4278, 128
        %s4280 = scalar_lea.vmem [#allocation2], %s4279
        // Predicated region
        $region77: #{tpu_custom_call.1} parent=75 // pred_check
          %p4281 = pneg %p345
        $region78: #{tpu_custom_call.1} parent=75 // pred_check_branch
          %4283 = sbr.rel (%p4281) target = $region80
        $region79: #{tpu_custom_call.1} parent=75 // pred_region
          %s4284 = smul.u32 16, %s28
          %s4286 = ssub.s32 2048, 2048
          %4287 = vsyncadd %s4277, %s4286
          %s4288 = smul.addr %s4284, 128
          %s4289 = scalar_lea.hbm %s14, %s4288
          %s4290 = sshll.u32 %s4280, 4
          %s4291 = int_to_ptr.vmem [resolvable:$true] %s4290
          %4296 = dma.vmem_to_hbm [thread:$0]  %s4291, 2048, %s4289, %s4277, 128, 128, 8
        $region80: #{tpu_custom_call.1} parent=75 // pred_fallthru
          _
      $region76: #{tpu_custom_call.1} parent=5 // pred_fallthru
        _
      %p4297 = scmp.le.s32.totalorder 2, %s23
      // Predicated region
      $region81: #{tpu_custom_call.1} parent=5 // pred_check
        %p4298 = pneg %p4297
      $region82: #{tpu_custom_call.1} parent=5 // pred_check_branch
        %4300 = sbr.rel (%p4298) target = $region84
      $region83: #{tpu_custom_call.1} parent=5 // pred_region
        %s4301 = ssub.s32 %s23, 2
        // Predicated region
        $region85: #{tpu_custom_call.1} parent=83 // pred_check
          %p4302 = pneg %p351
        $region86: #{tpu_custom_call.1} parent=83 // pred_check_branch
          %4304 = sbr.rel (%p4302) target = $region88
        $region87: #{tpu_custom_call.1} parent=83 // pred_region
          %s4305 = sand.u32 %s336, 1
          %s4306 = scalar_lea.sflag [#allocation3], %s4305
          %s4307 = sand.u32 %s336, 1
          %s4308 = smul.addr %s4307, 128
          %s4309 = scalar_lea.vmem [#allocation2], %s4308
          %4310 = dma.done %s4306, 2048
        $region88: #{tpu_custom_call.1} parent=83 // pred_fallthru
          _
      $region84: #{tpu_custom_call.1} parent=5 // pred_fallthru
        _
    $region6: #{tpu_custom_call.1} parent=1 // loop_footer
      %s27 = sadd.s32 1, %s23
    $region7: #{tpu_custom_call.1} parent=1 // loop_footer_branch
      %22 = sbr.rel target = $region3
    $region8: #{tpu_custom_call.1} parent=1 // loop_exit
      _
    %4311 = vsyncpa [#allocation3], 1
    %s4312 = scalar_lea.sflag [#allocation3], 1
    %4313 = vsyncpa %s4312, 1

// kernel: tpu_custom_call.1
$region0: #{tpu_custom_call.1}
  #allocation0 [shape = 'u32[]', space=smem, size = 0x4, offset = 0x4, fixed_abs, tag = 'smem constant byte address 0x4 - core index']
  #allocation1 [shape = 'u32[144,128]{1,0:T(1,128)}', space=vmem, size = 0x12000, scoped, tag = 'internal scratch']
  %s0 = inlined_call_operand.vmem [shape: f32[256,24], index: 0, kind: input, shape index: {}]
  %s1 = inlined_call_operand.vmem [shape: f32[256,24], index: 1, kind: input, shape index: {}]
  %s2 = inlined_call_operand.vmem [shape: bf16[24,32], index: 2, kind: input, shape index: {}]
  %s3 = inlined_call_operand.vmem [shape: bf16[32,32], index: 3, kind: input, shape index: {}]
  %s4 = inlined_call_operand.vmem [shape: bf16[32,64], index: 4, kind: input, shape index: {}]
  %s5 = inlined_call_operand.vmem [shape: bf16[32,32], index: 5, kind: input, shape index: {}]
  %s6 = inlined_call_operand.vmem [shape: bf16[32,32], index: 6, kind: input, shape index: {}]
  %s7 = inlined_call_operand.vmem [shape: bf16[32,32], index: 7, kind: input, shape index: {}]
  %s8 = inlined_call_operand.vmem [shape: bf16[32,32], index: 8, kind: input, shape index: {}]
  %s9 = inlined_call_operand.vmem [shape: bf16[32,32], index: 9, kind: input, shape index: {}]
  %s10 = inlined_call_operand.vmem [shape: bf16[32,128], index: 10, kind: input, shape index: {}]
  %s11 = inlined_call_operand.vmem [shape: f32[11,32], index: 11, kind: input, shape index: {}]
  %s12 = inlined_call_operand.vmem [shape: f32[1,64], index: 12, kind: input, shape index: {}]
  %s13 = inlined_call_operand.vmem [shape: f32[1,128], index: 13, kind: input, shape index: {}]
  %s14 = inlined_call_operand.hbm [shape: f32[256,128], index: 14, kind: output, shape index: {}]
  %s15 = sld [smem:[#allocation0]]
  $region89: #{tpu_custom_call.1} parent=0
    _
  %s17 = ssub.s32 1, %s15
  %s18 = scalar_select 0, %s17, %s15
  $region1: #{tpu_custom_call.1} parent=0
    #allocation2 [shape = 'u8[131072]{0}', space=vmem, size = 0x20000, scoped, tag = 'output window, operand 0']
    #allocation3 [shape = 's32[2]{0}', space=sflag, size = 0x8, scoped, tag = 'scoped memory for tpu_custom_call.1']
    %19 = vsyncpa [#allocation3], 0
    %s20 = scalar_lea.sflag [#allocation3], 1
    %21 = vsyncpa %s20, 0
    loop: start=0, step=1, limit=4
    $region2: #{tpu_custom_call.1} parent=1 // loop_pre_header
      _
    $region3: #{tpu_custom_call.1} parent=1 // loop_header
      %s23 = sphi 0, %s27
      %p24 = scmp.ge.s32.totalorder %s23, 4
      %s33 = sphi 0, %s35
      %s36 = sphi 0, %s33
      %s37 = sphi 0, %s36
      %s53 = sphi 0, %s37
      %s57 = sphi 0, %s57
      %s59 = sphi 0, %s57
      %s60 = sphi 0, %s59
      %s74 = sphi 0, %s60
      %s78 = sphi 0, %s78
      %s80 = sphi 0, %s78
      %s81 = sphi 0, %s80
      %s95 = sphi 0, %s81
      %s99 = sphi 0, %s99
      %s101 = sphi 0, %s99
      %s102 = sphi 0, %s101
      %s116 = sphi 0, %s102
      %s120 = sphi 0, %s120
      %s122 = sphi 0, %s120
      %s123 = sphi 0, %s122
      %s137 = sphi 0, %s123
      %s141 = sphi 0, %s141
      %s143 = sphi 0, %s141
      %s144 = sphi 0, %s143
      %s158 = sphi 0, %s144
      %s162 = sphi 0, %s162
      %s164 = sphi 0, %s162
      %s165 = sphi 0, %s164
      %s179 = sphi 0, %s165
      %s183 = sphi 0, %s183
      %s185 = sphi 0, %s183
      %s186 = sphi 0, %s185
      %s200 = sphi 0, %s186
      %s204 = sphi 0, %s204
      %s206 = sphi 0, %s204
      %s207 = sphi 0, %s206
      %s221 = sphi 0, %s207
      %s225 = sphi 0, %s225
      %s227 = sphi 0, %s225
      %s228 = sphi 0, %s227
      %s242 = sphi 0, %s228
      %s246 = sphi 0, %s246
      %s248 = sphi 0, %s246
      %s249 = sphi 0, %s248
      %s263 = sphi 0, %s249
      %s267 = sphi 0, %s267
      %s269 = sphi 0, %s267
      %s270 = sphi 0, %s269
      %s284 = sphi 0, %s270
      %s288 = sphi 0, %s288
      %s290 = sphi 0, %s288
      %s291 = sphi 0, %s290
      %s305 = sphi 0, %s291
      %s309 = sphi 0, %s309
      %s311 = sphi 0, %s309
      %s312 = sphi 0, %s311
      %s326 = sphi 0, %s312
      %s332 = sphi 0, %s334
      %s335 = sphi 0, %s332
      %s336 = sphi 0, %s335
      %s352 = sphi 0, %s336
    $region4: #{tpu_custom_call.1} parent=1 // loop_header_branch
      %26 = sbr.rel (%p24) target = $region8
    $region5: #{tpu_custom_call.1} parent=1 // loop_body
      %s28 = ssub.s32 %s23, 1
      %s29 = ssub.s32 %s23, 2
      %s30 = sadd.s32 %s23, 1
      %s31 = ssub.s32 %s23, %s30
      %p32 = scmp.eq.s32.totalorder %s31, 0
      %s34 = sadd.s32 %s33, 1
      %s35 = scalar_select %p32, %s33, %s34
      %p38 = pneg %p32
      %p39 = scmp.eq.s32.totalorder %s23, 1
      %p40 = por %p38, %p39
      %p41 = scmp.ne.s32.totalorder %s33, %s36
      %p42 = scmp.eq.s32.totalorder %s23, 0
      %p43 = por %p41, %p42
      %p44 = scmp.ne.s32.totalorder %s33, %s36
      %p45 = scmp.eq.s32.totalorder %s28, 1
      %p46 = por %p44, %p45
      %p47 = scmp.ne.s32.totalorder %s36, %s37
      %p48 = scmp.eq.s32.totalorder %s28, 0
      %p49 = por %p47, %p48
      %p50 = scmp.ne.s32.totalorder %s36, %s37
      %p51 = scmp.eq.s32.totalorder %s29, 1
      %p52 = por %p50, %p51
      %p54 = scmp.ne.s32.totalorder %s37, %s53
      %p55 = scmp.eq.s32.totalorder %s29, 0
      %p56 = por %p54, %p55
      %s58 = sadd.s32 %s57, 1
      %p61 = scmp.eq.s32.totalorder %s23, 1
      %p62 = scmp.ne.s32.totalorder %s57, %s59
      %p63 = scmp.eq.s32.totalorder %s23, 0
      %p64 = por %p62, %p63
      %p65 = scmp.ne.s32.totalorder %s57, %s59
      %p66 = scmp.eq.s32.totalorder %s28, 1
      %p67 = por %p65, %p66
      %p68 = scmp.ne.s32.totalorder %s59, %s60
      %p69 = scmp.eq.s32.totalorder %s28, 0
      %p70 = por %p68, %p69
      %p71 = scmp.ne.s32.totalorder %s59, %s60
      %p72 = scmp.eq.s32.totalorder %s29, 1
      %p73 = por %p71, %p72
      %p75 = scmp.ne.s32.totalorder %s60, %s74
      %p76 = scmp.eq.s32.totalorder %s29, 0
      %p77 = por %p75, %p76
      %s79 = sadd.s32 %s78, 1
      %p82 = scmp.eq.s32.totalorder %s23, 1
      %p83 = scmp.ne.s32.totalorder %s78, %s80
      %p84 = scmp.eq.s32.totalorder %s23, 0
      %p85 = por %p83, %p84
      %p86 = scmp.ne.s32.totalorder %s78, %s80
      %p87 = scmp.eq.s32.totalorder %s28, 1
      %p88 = por %p86, %p87
      %p89 = scmp.ne.s32.totalorder %s80, %s81
      %p90 = scmp.eq.s32.totalorder %s28, 0
      %p91 = por %p89, %p90
      %p92 = scmp.ne.s32.totalorder %s80, %s81
      %p93 = scmp.eq.s32.totalorder %s29, 1
      %p94 = por %p92, %p93
      %p96 = scmp.ne.s32.totalorder %s81, %s95
      %p97 = scmp.eq.s32.totalorder %s29, 0
      %p98 = por %p96, %p97
      %s100 = sadd.s32 %s99, 1
      %p103 = scmp.eq.s32.totalorder %s23, 1
      %p104 = scmp.ne.s32.totalorder %s99, %s101
      %p105 = scmp.eq.s32.totalorder %s23, 0
      %p106 = por %p104, %p105
      %p107 = scmp.ne.s32.totalorder %s99, %s101
      %p108 = scmp.eq.s32.totalorder %s28, 1
      %p109 = por %p107, %p108
      %p110 = scmp.ne.s32.totalorder %s101, %s102
      %p111 = scmp.eq.s32.totalorder %s28, 0
      %p112 = por %p110, %p111
      %p113 = scmp.ne.s32.totalorder %s101, %s102
      %p114 = scmp.eq.s32.totalorder %s29, 1
      %p115 = por %p113, %p114
      %p117 = scmp.ne.s32.totalorder %s102, %s116
      %p118 = scmp.eq.s32.totalorder %s29, 0
      %p119 = por %p117, %p118
      %s121 = sadd.s32 %s120, 1
      %p124 = scmp.eq.s32.totalorder %s23, 1
      %p125 = scmp.ne.s32.totalorder %s120, %s122
      %p126 = scmp.eq.s32.totalorder %s23, 0
      %p127 = por %p125, %p126
      %p128 = scmp.ne.s32.totalorder %s120, %s122
      %p129 = scmp.eq.s32.totalorder %s28, 1
      %p130 = por %p128, %p129
      %p131 = scmp.ne.s32.totalorder %s122, %s123
      %p132 = scmp.eq.s32.totalorder %s28, 0
      %p133 = por %p131, %p132
      %p134 = scmp.ne.s32.totalorder %s122, %s123
      %p135 = scmp.eq.s32.totalorder %s29, 1
      %p136 = por %p134, %p135
      %p138 = scmp.ne.s32.totalorder %s123, %s137
      %p139 = scmp.eq.s32.totalorder %s29, 0
      %p140 = por %p138, %p139
      %s142 = sadd.s32 %s141, 1
      %p145 = scmp.eq.s32.totalorder %s23, 1
      %p146 = scmp.ne.s32.totalorder %s141, %s143
      %p147 = scmp.eq.s32.totalorder %s23, 0
      %p148 = por %p146, %p147
      %p149 = scmp.ne.s32.totalorder %s141, %s143
      %p150 = scmp.eq.s32.totalorder %s28, 1
      %p151 = por %p149, %p150
      %p152 = scmp.ne.s32.totalorder %s143, %s144
      %p153 = scmp.eq.s32.totalorder %s28, 0
      %p154 = por %p152, %p153
      %p155 = scmp.ne.s32.totalorder %s143, %s144
      %p156 = scmp.eq.s32.totalorder %s29, 1
      %p157 = por %p155, %p156
      %p159 = scmp.ne.s32.totalorder %s144, %s158
      %p160 = scmp.eq.s32.totalorder %s29, 0
      %p161 = por %p159, %p160
      %s163 = sadd.s32 %s162, 1
      %p166 = scmp.eq.s32.totalorder %s23, 1
      %p167 = scmp.ne.s32.totalorder %s162, %s164
      %p168 = scmp.eq.s32.totalorder %s23, 0
      %p169 = por %p167, %p168
      %p170 = scmp.ne.s32.totalorder %s162, %s164
      %p171 = scmp.eq.s32.totalorder %s28, 1
      %p172 = por %p170, %p171
      %p173 = scmp.ne.s32.totalorder %s164, %s165
      %p174 = scmp.eq.s32.totalorder %s28, 0
      %p175 = por %p173, %p174
      %p176 = scmp.ne.s32.totalorder %s164, %s165
      %p177 = scmp.eq.s32.totalorder %s29, 1
      %p178 = por %p176, %p177
      %p180 = scmp.ne.s32.totalorder %s165, %s179
      %p181 = scmp.eq.s32.totalorder %s29, 0
      %p182 = por %p180, %p181
      %s184 = sadd.s32 %s183, 1
      %p187 = scmp.eq.s32.totalorder %s23, 1
      %p188 = scmp.ne.s32.totalorder %s183, %s185
      %p189 = scmp.eq.s32.totalorder %s23, 0
      %p190 = por %p188, %p189
      %p191 = scmp.ne.s32.totalorder %s183, %s185
      %p192 = scmp.eq.s32.totalorder %s28, 1
      %p193 = por %p191, %p192
      %p194 = scmp.ne.s32.totalorder %s185, %s186
      %p195 = scmp.eq.s32.totalorder %s28, 0
      %p196 = por %p194, %p195
      %p197 = scmp.ne.s32.totalorder %s185, %s186
      %p198 = scmp.eq.s32.totalorder %s29, 1
      %p199 = por %p197, %p198
      %p201 = scmp.ne.s32.totalorder %s186, %s200
      %p202 = scmp.eq.s32.totalorder %s29, 0
      %p203 = por %p201, %p202
      %s205 = sadd.s32 %s204, 1
      %p208 = scmp.eq.s32.totalorder %s23, 1
      %p209 = scmp.ne.s32.totalorder %s204, %s206
      %p210 = scmp.eq.s32.totalorder %s23, 0
      %p211 = por %p209, %p210
      %p212 = scmp.ne.s32.totalorder %s204, %s206
      %p213 = scmp.eq.s32.totalorder %s28, 1
      %p214 = por %p212, %p213
      %p215 = scmp.ne.s32.totalorder %s206, %s207
      %p216 = scmp.eq.s32.totalorder %s28, 0
      %p217 = por %p215, %p216
      %p218 = scmp.ne.s32.totalorder %s206, %s207
      %p219 = scmp.eq.s32.totalorder %s29, 1
      %p220 = por %p218, %p219
      %p222 = scmp.ne.s32.totalorder %s207, %s221
      %p223 = scmp.eq.s32.totalorder %s29, 0
      %p224 = por %p222, %p223
      %s226 = sadd.s32 %s225, 1
      %p229 = scmp.eq.s32.totalorder %s23, 1
      %p230 = scmp.ne.s32.totalorder %s225, %s227
      %p231 = scmp.eq.s32.totalorder %s23, 0
      %p232 = por %p230, %p231
      %p233 = scmp.ne.s32.totalorder %s225, %s227
      %p234 = scmp.eq.s32.totalorder %s28, 1
      %p235 = por %p233, %p234
      %p236 = scmp.ne.s32.totalorder %s227, %s228
      %p237 = scmp.eq.s32.totalorder %s28, 0
      %p238 = por %p236, %p237
      %p239 = scmp.ne.s32.totalorder %s227, %s228
      %p240 = scmp.eq.s32.totalorder %s29, 1
      %p241 = por %p239, %p240
      %p243 = scmp.ne.s32.totalorder %s228, %s242
      %p244 = scmp.eq.s32.totalorder %s29, 0
      %p245 = por %p243, %p244
      %s247 = sadd.s32 %s246, 1
      %p250 = scmp.eq.s32.totalorder %s23, 1
      %p251 = scmp.ne.s32.totalorder %s246, %s248
      %p252 = scmp.eq.s32.totalorder %s23, 0
      %p253 = por %p251, %p252
      %p254 = scmp.ne.s32.totalorder %s246, %s248
      %p255 = scmp.eq.s32.totalorder %s28, 1
      %p256 = por %p254, %p255
      %p257 = scmp.ne.s32.totalorder %s248, %s249
      %p258 = scmp.eq.s32.totalorder %s28, 0
      %p259 = por %p257, %p258
      %p260 = scmp.ne.s32.totalorder %s248, %s249
      %p261 = scmp.eq.s32.totalorder %s29, 1
      %p262 = por %p260, %p261
      %p264 = scmp.ne.s32.totalorder %s249, %s263
      %p265 = scmp.eq.s32.totalorder %s29, 0
      %p266 = por %p264, %p265
      %s268 = sadd.s32 %s267, 1
      %p271 = scmp.eq.s32.totalorder %s23, 1
      %p272 = scmp.ne.s32.totalorder %s267, %s269
      %p273 = scmp.eq.s32.totalorder %s23, 0
      %p274 = por %p272, %p273
      %p275 = scmp.ne.s32.totalorder %s267, %s269
      %p276 = scmp.eq.s32.totalorder %s28, 1
      %p277 = por %p275, %p276
      %p278 = scmp.ne.s32.totalorder %s269, %s270
      %p279 = scmp.eq.s32.totalorder %s28, 0
      %p280 = por %p278, %p279
      %p281 = scmp.ne.s32.totalorder %s269, %s270
      %p282 = scmp.eq.s32.totalorder %s29, 1
      %p283 = por %p281, %p282
      %p285 = scmp.ne.s32.totalorder %s270, %s284
      %p286 = scmp.eq.s32.totalorder %s29, 0
      %p287 = por %p285, %p286
      %s289 = sadd.s32 %s288, 1
      %p292 = scmp.eq.s32.totalorder %s23, 1
      %p293 = scmp.ne.s32.totalorder %s288, %s290
      %p294 = scmp.eq.s32.totalorder %s23, 0
      %p295 = por %p293, %p294
      %p296 = scmp.ne.s32.totalorder %s288, %s290
      %p297 = scmp.eq.s32.totalorder %s28, 1
      %p298 = por %p296, %p297
      %p299 = scmp.ne.s32.totalorder %s290, %s291
      %p300 = scmp.eq.s32.totalorder %s28, 0
      %p301 = por %p299, %p300
      %p302 = scmp.ne.s32.totalorder %s290, %s291
      %p303 = scmp.eq.s32.totalorder %s29, 1
      %p304 = por %p302, %p303
      %p306 = scmp.ne.s32.totalorder %s291, %s305
      %p307 = scmp.eq.s32.totalorder %s29, 0
      %p308 = por %p306, %p307
      %s310 = sadd.s32 %s309, 1
      %p313 = scmp.eq.s32.totalorder %s23, 1
      %p314 = scmp.ne.s32.totalorder %s309, %s311
      %p315 = scmp.eq.s32.totalorder %s23, 0
      %p316 = por %p314, %p315
      %p317 = scmp.ne.s32.totalorder %s309, %s311
      %p318 = scmp.eq.s32.totalorder %s28, 1
      %p319 = por %p317, %p318
      %p320 = scmp.ne.s32.totalorder %s311, %s312
      %p321 = scmp.eq.s32.totalorder %s28, 0
      %p322 = por %p320, %p321
      %p323 = scmp.ne.s32.totalorder %s311, %s312
      %p324 = scmp.eq.s32.totalorder %s29, 1
      %p325 = por %p323, %p324
      %p327 = scmp.ne.s32.totalorder %s312, %s326
      %p328 = scmp.eq.s32.totalorder %s29, 0
      %p329 = por %p327, %p328
      %s330 = ssub.s32 %s23, %s30
      %p331 = scmp.eq.s32.totalorder %s330, 0
      %s333 = sadd.s32 %s332, 1
      %s334 = scalar_select %p331, %s332, %s333
      %p337 = pneg %p331
      %p338 = scmp.eq.s32.totalorder %s23, 1
      %p339 = por %p337, %p338
      %p340 = scmp.ne.s32.totalorder %s332, %s335
      %p341 = scmp.eq.s32.totalorder %s23, 0
      %p342 = por %p340, %p341
      %p343 = scmp.ne.s32.totalorder %s332, %s335
      %p344 = scmp.eq.s32.totalorder %s28, 1
      %p345 = por %p343, %p344
      %p346 = scmp.ne.s32.totalorder %s335, %s336
      %p347 = scmp.eq.s32.totalorder %s28, 0
      %p348 = por %p346, %p347
      %p349 = scmp.ne.s32.totalorder %s335, %s336
      %p350 = scmp.eq.s32.totalorder %s29, 1
      %p351 = por %p349, %p350
      %p353 = scmp.ne.s32.totalorder %s336, %s352
      %p354 = scmp.eq.s32.totalorder %s29, 0
      %p355 = por %p353, %p354
      %p356 = scmp.le.s32.totalorder 1, %s23
      %p357 = scmp.lt.s32.totalorder %s23, 3
      %p358 = pnand %p356, %p357
      %p359 = pneg %p358
      // Predicated region
      $region9: #{tpu_custom_call.1} parent=5 // pred_check
        _
      $region10: #{tpu_custom_call.1} parent=5 // pred_check_branch
        %361 = sbr.rel (%p358) target = $region12
      $region11: #{tpu_custom_call.1} parent=5 // pred_region
        %s362 = ssub.s32 %s23, 1
        // Predicated region
        $region13: #{tpu_custom_call.1} parent=11 // pred_check
          %p363 = pneg %p70
        $region14: #{tpu_custom_call.1} parent=11 // pred_check_branch
          %365 = sbr.rel (%p363) target = $region16
        $region15: #{tpu_custom_call.1} parent=11 // pred_region
          _
        $region16: #{tpu_custom_call.1} parent=11 // pred_fallthru
          _
        // Predicated region
        $region17: #{tpu_custom_call.1} parent=11 // pred_check
          %p366 = pneg %p91
        $region18: #{tpu_custom_call.1} parent=11 // pred_check_branch
          %368 = sbr.rel (%p366) target = $region20
        $region19: #{tpu_custom_call.1} parent=11 // pred_region
          _
        $region20: #{tpu_custom_call.1} parent=11 // pred_fallthru
          _
        // Predicated region
        $region21: #{tpu_custom_call.1} parent=11 // pred_check
          %p369 = pneg %p112
        $region22: #{tpu_custom_call.1} parent=11 // pred_check_branch
          %371 = sbr.rel (%p369) target = $region24
        $region23: #{tpu_custom_call.1} parent=11 // pred_region
          _
        $region24: #{tpu_custom_call.1} parent=11 // pred_fallthru
          _
        // Predicated region
        $region25: #{tpu_custom_call.1} parent=11 // pred_check
          %p372 = pneg %p133
        $region26: #{tpu_custom_call.1} parent=11 // pred_check_branch
          %374 = sbr.rel (%p372) target = $region28
        $region27: #{tpu_custom_call.1} parent=11 // pred_region
          _
        $region28: #{tpu_custom_call.1} parent=11 // pred_fallthru
          _
        // Predicated region
        $region29: #{tpu_custom_call.1} parent=11 // pred_check
          %p375 = pneg %p154
        $region30: #{tpu_custom_call.1} parent=11 // pred_check_branch
          %377 = sbr.rel (%p375) target = $region32
        $region31: #{tpu_custom_call.1} parent=11 // pred_region
          _
        $region32: #{tpu_custom_call.1} parent=11 // pred_fallthru
          _
        // Predicated region
        $region33: #{tpu_custom_call.1} parent=11 // pred_check
          %p378 = pneg %p175
        $region34: #{tpu_custom_call.1} parent=11 // pred_check_branch
          %380 = sbr.rel (%p378) target = $region36
        $region35: #{tpu_custom_call.1} parent=11 // pred_region
          _
        $region36: #{tpu_custom_call.1} parent=11 // pred_fallthru
          _
        // Predicated region
        $region37: #{tpu_custom_call.1} parent=11 // pred_check
          %p381 = pneg %p196
        $region38: #{tpu_custom_call.1} parent=11 // pred_check_branch
          %383 = sbr.rel (%p381) target = $region40
        $region39: #{tpu_custom_call.1} parent=11 // pred_region
          _
        $region40: #{tpu_custom_call.1} parent=11 // pred_fallthru
          _
        // Predicated region
        $region41: #{tpu_custom_call.1} parent=11 // pred_check
          %p384 = pneg %p217
        $region42: #{tpu_custom_call.1} parent=11 // pred_check_branch
          %386 = sbr.rel (%p384) target = $region44
        $region43: #{tpu_custom_call.1} parent=11 // pred_region
          _
        $region44: #{tpu_custom_call.1} parent=11 // pred_fallthru
          _
        // Predicated region
        $region45: #{tpu_custom_call.1} parent=11 // pred_check
          %p387 = pneg %p238
        $region46: #{tpu_custom_call.1} parent=11 // pred_check_branch
          %389 = sbr.rel (%p387) target = $region48
        $region47: #{tpu_custom_call.1} parent=11 // pred_region
          _
        $region48: #{tpu_custom_call.1} parent=11 // pred_fallthru
          _
        // Predicated region
        $region49: #{tpu_custom_call.1} parent=11 // pred_check
          %p390 = pneg %p259
        $region50: #{tpu_custom_call.1} parent=11 // pred_check_branch
          %392 = sbr.rel (%p390) target = $region52
        $region51: #{tpu_custom_call.1} parent=11 // pred_region
          _
        $region52: #{tpu_custom_call.1} parent=11 // pred_fallthru
          _
        // Predicated region
        $region53: #{tpu_custom_call.1} parent=11 // pred_check
          %p393 = pneg %p280
        $region54: #{tpu_custom_call.1} parent=11 // pred_check_branch
          %395 = sbr.rel (%p393) target = $region56
        $region55: #{tpu_custom_call.1} parent=11 // pred_region
          _
        $region56: #{tpu_custom_call.1} parent=11 // pred_fallthru
          _
        // Predicated region
        $region57: #{tpu_custom_call.1} parent=11 // pred_check
          %p396 = pneg %p301
        $region58: #{tpu_custom_call.1} parent=11 // pred_check_branch
          %398 = sbr.rel (%p396) target = $region60
        $region59: #{tpu_custom_call.1} parent=11 // pred_region
          _
        $region60: #{tpu_custom_call.1} parent=11 // pred_fallthru
          _
        // Predicated region
        $region61: #{tpu_custom_call.1} parent=11 // pred_check
          %p399 = pneg %p322
        $region62: #{tpu_custom_call.1} parent=11 // pred_check_branch
          %401 = sbr.rel (%p399) target = $region64
        $region63: #{tpu_custom_call.1} parent=11 // pred_region
          _
        $region64: #{tpu_custom_call.1} parent=11 // pred_fallthru
          _
      $region12: #{tpu_custom_call.1} parent=5 // pred_fallthru
        _
      %p402 = scmp.lt.s32.totalorder %s23, 2
      // Predicated region
      $region65: #{tpu_custom_call.1} parent=5 // pred_check
        %p403 = pneg %p402
      $region66: #{tpu_custom_call.1} parent=5 // pred_check_branch
        %405 = sbr.rel (%p403) target = $region68
      $region67: #{tpu_custom_call.1} parent=5 // pred_region
        // Predicated region
        $region69: #{tpu_custom_call.1} parent=67 // pred_check
          %p406 = pneg %p43
        $region70: #{tpu_custom_call.1} parent=67 // pred_check_branch
          %408 = sbr.rel (%p406) target = $region72
        $region71: #{tpu_custom_call.1} parent=67 // pred_region
          %s409 = smul.u32 16, %s23
          %p410 = scmp.lt.s32.totalorder %s409, 31
          %s411 = scalar_select %p410, %s409, 31
          %s412 = smul.addr %s411, 8
          %s413 = scalar_lea.vmem %s0, %s412
          %s414 = smul.u32 16, %s23
        $region72: #{tpu_custom_call.1} parent=67 // pred_fallthru
          _
      $region68: #{tpu_custom_call.1} parent=5 // pred_fallthru
        _
      %p415 = scmp.le.s32.totalorder 1, %s23
      %p416 = scmp.lt.s32.totalorder %s23, 3
      %p417 = pnand %p415, %p416
      %p418 = pneg %p417
      // Predicated region
      $region73: #{tpu_custom_call.1} parent=5 // pred_check
        _
      $region74: #{tpu_custom_call.1} parent=5 // pred_check_branch
        %420 = sbr.rel (%p417) target = $region76
      $region75: #{tpu_custom_call.1} parent=5 // pred_region
        %s421 = ssub.s32 %s23, 1
        %s422 = smul.u32 16, %s28
        %p423 = scmp.lt.s32.totalorder %s422, 31
        %s424 = scalar_select %p423, %s422, 31
        %s425 = smul.addr %s424, 8
        %s426 = scalar_lea.vmem %s0, %s425
        %p427 = pneg %p49
        %p428 = pneg %p46
        %p429 = pneg %p70
        %p430 = pneg %p67
        %p431 = pneg %p91
        %p432 = pneg %p88
        %p433 = pneg %p112
        %p434 = pneg %p109
        %p435 = pneg %p133
        %p436 = pneg %p130
        %p437 = pneg %p154
        %p438 = pneg %p151
        %p439 = pneg %p175
        %p440 = pneg %p172
        %p441 = pneg %p196
        %p442 = pneg %p193
        %p443 = pneg %p217
        %p444 = pneg %p214
        %p445 = pneg %p238
        %p446 = pneg %p235
        %p447 = pneg %p259
        %p448 = pneg %p256
        %p449 = pneg %p280
        %p450 = pneg %p277
        %p451 = pneg %p301
        %p452 = pneg %p298
        %p453 = pneg %p322
        %p454 = pneg %p319
        %p455 = pneg %p348
        %p456 = pneg %p345
        %s457 = sand.u32 %s335, 1
        %s458 = scalar_lea.sflag [#allocation3], %s457
        %s459 = sand.u32 %s335, 1
        %s460 = smul.addr %s459, 128
        %s461 = scalar_lea.vmem [#allocation2], %s460
        %s462 = smul.u32 16, %s28
        %p463 = scmp.lt.s32.totalorder %s462, 31
        %s464 = scalar_select %p463, %s462, 31
        %s465 = smul.addr %s464, 8
        %s466 = scalar_lea.vmem %s0, %s465
        %s467 = smul.u32 16, %s28
        %s468 = smul.u32 16, %s28
        %v470 = vld [vmem:[%s11] sm:$0xff]
        %v471 = vld [vmem:[%s11 + $0x8] sm:$0x7]
        %v472 = vld [vmem:[%s466] sm:$0xff]
        %v473 = vld [vmem:[%s466 + $0x8] sm:$0xff]
        %v474 = vld [vmem:[%s466 + $0x10] sm:$0xff]
        %v475 = vld [vmem:[%s466 + $0x18] sm:$0xff]
        %v476 = vld [vmem:[%s466 + $0x20] sm:$0xff]
        %v477 = vld [vmem:[%s466 + $0x28] sm:$0xff]
        %v478 = vld [vmem:[%s466 + $0x30] sm:$0xff]
        %v479 = vld [vmem:[%s466 + $0x38] sm:$0xff]
        %v480 = vld [vmem:[%s466 + $0x40] sm:$0xff]
        %v481 = vld [vmem:[%s466 + $0x48] sm:$0xff]
        %v482 = vld [vmem:[%s466 + $0x50] sm:$0xff]
        %v483 = vld [vmem:[%s466 + $0x58] sm:$0xff]
        %v484 = vld [vmem:[%s466 + $0x60] sm:$0xff]
        %v485 = vld [vmem:[%s466 + $0x68] sm:$0xff]
        %v486 = vld [vmem:[%s466 + $0x70] sm:$0xff]
        %v487 = vld [vmem:[%s466 + $0x78] sm:$0xff]
        %v488 = vld [vmem:[%s2] sm:$0xf]
        %v489 = vld [vmem:[%s2 + $0x4] sm:$0xf]
        %v490 = vld [vmem:[%s2 + $0x8] sm:$0xf]
        %v491 = vpack.c.bf16 %v473, %v472
        %v492 = vpack.c.bf16 %v475, %v474
        %v493 = vpack.c.bf16 %v477, %v476
        %v494 = vpack.c.bf16 %v479, %v478
        %v495 = vpack.c.bf16 %v481, %v480
        %v496 = vpack.c.bf16 %v483, %v482
        %v497 = vpack.c.bf16 %v485, %v484
        %v498 = vpack.c.bf16 %v487, %v486
        %v499 = vlaneseq
        %v500 = vshrl.u32 %v499, 7
        %v501 = vsub.s32 0, %v500
        %v502 = vrot.slane %v470, %v501
        %v506 = vunpack.c.l.b16 %v488
        %v507 = vunpack.c.l.b16 %v489
        %v508 = vunpack.c.l.b16 %v490
        %v509 = vpack.c.b16 %v507, %v506
        %v510 = vpack.c.b16 %v508, %v508
        %vm512 = vcmask 195584
        %v514 = vsel %vm512, %v491, 0
        %v517 = vsel %vm512, %v492, 0
        %v520 = vsel %vm512, %v493, 0
        %v523 = vsel %vm512, %v494, 0
        %v526 = vsel %vm512, %v495, 0
        %v529 = vsel %vm512, %v496, 0
        %v532 = vsel %vm512, %v497, 0
        %v535 = vsel %vm512, %v498, 0
        %vm537 = vcmask 1043456
        %v539 = vsel %vm537, %v510, 0
        %541 = vmatprep.subr.bf16.mxu0 0
        %542 = vmatpush1.bf16.msra.mxu0 %v509
        %543 = vmatprep.subr.bf16.mxu0 0
        %544 = vmatpush1.bf16.msra.mxu0 %v539
        %545 = vmatprep.subr.bf16.mxu0 0
        %546 = vmatpush1.bf16.msra.mxu0 0
        %547 = vmatprep.subr.bf16.mxu0 0
        %548 = vmatpush1.bf16.msra.mxu0 0
        %549 = vmatprep.subr.bf16.mxu0 0
        %550 = vmatpush1.bf16.msra.mxu0 0
        %551 = vmatprep.subr.bf16.mxu0 0
        %552 = vmatpush1.bf16.msra.mxu0 0
        %553 = vmatprep.subr.bf16.mxu0 0
        %554 = vmatpush1.bf16.msra.mxu0 0
        %555 = vmatprep.subr.bf16.mxu0 0
        %556 = vmatpush1.bf16.msra.mxu0 0
        %557 = vmatprep.subr.bf16.mxu0 0
        %558 = vmatpush1.bf16.msra.mxu0 0
        %559 = vmatprep.subr.bf16.mxu0 0
        %560 = vmatpush1.bf16.msra.mxu0 0
        %561 = vmatprep.subr.bf16.mxu0 0
        %562 = vmatpush1.bf16.msra.mxu0 0
        %563 = vmatprep.subr.bf16.mxu0 0
        %564 = vmatpush1.bf16.msra.mxu0 0
        %565 = vmatprep.subr.bf16.mxu0 0
        %566 = vmatpush1.bf16.msra.mxu0 0
        %567 = vmatprep.subr.bf16.mxu0 0
        %568 = vmatpush1.bf16.msra.mxu0 0
        %569 = vmatprep.subr.bf16.mxu0 0
        %570 = vmatpush1.bf16.msra.mxu0 0
        %571 = vmatprep.subr.bf16.mxu0 0
        %572 = vmatpush1.bf16.msra.mxu0 0
        %573 = vmatprep.mubr.bf16.mxu0 0
        %574 = vmatmul.mubr.bf16.gmra.mrb[0].mxu0 %v514
        %v575 = vpop.f32.mrb[0].mxu0
        %v576 = vadd.f32 %v502, %v575
        %v577 = vpop.f32.mrb[0].mxu0
        %v578 = vpop.f32.mrb[0].mxu0
        %v579 = vadd.f32 %v502, %v578
        %v580 = vpop.f32.mrb[0].mxu0
        %581 = vmatprep.mubr.bf16.mxu0 0
        %582 = vmatmul.mubr.bf16.gmra.mrb[0].mxu0 %v517
        %v583 = vpop.f32.mrb[0].mxu0
        %v584 = vadd.f32 %v502, %v583
        %v585 = vpop.f32.mrb[0].mxu0
        %v586 = vpop.f32.mrb[0].mxu0
        %v587 = vadd.f32 %v502, %v586
        %v588 = vpop.f32.mrb[0].mxu0
        %589 = vmatprep.mubr.bf16.mxu0 0
        %590 = vmatmul.mubr.bf16.gmra.mrb[0].mxu0 %v520
        %v591 = vpop.f32.mrb[0].mxu0
        %v592 = vadd.f32 %v502, %v591
        %v593 = vpop.f32.mrb[0].mxu0
        %v594 = vpop.f32.mrb[0].mxu0
        %v595 = vadd.f32 %v502, %v594
        %v596 = vpop.f32.mrb[0].mxu0
        %597 = vmatprep.mubr.bf16.mxu0 0
        %598 = vmatmul.mubr.bf16.gmra.mrb[0].mxu0 %v523
        %v599 = vpop.f32.mrb[0].mxu0
        %v600 = vadd.f32 %v502, %v599
        %v601 = vpop.f32.mrb[0].mxu0
        %v602 = vpop.f32.mrb[0].mxu0
        %v603 = vadd.f32 %v502, %v602
        %v604 = vpop.f32.mrb[0].mxu0
        %605 = vmatprep.mubr.bf16.mxu0 0
        %606 = vmatmul.mubr.bf16.gmra.mrb[0].mxu0 %v526
        %v607 = vpop.f32.mrb[0].mxu0
        %v608 = vadd.f32 %v502, %v607
        %v609 = vpop.f32.mrb[0].mxu0
        %v610 = vpop.f32.mrb[0].mxu0
        %v611 = vadd.f32 %v502, %v610
        %v612 = vpop.f32.mrb[0].mxu0
        %613 = vmatprep.mubr.bf16.mxu0 0
        %614 = vmatmul.mubr.bf16.gmra.mrb[0].mxu0 %v529
        %v615 = vpop.f32.mrb[0].mxu0
        %v616 = vadd.f32 %v502, %v615
        %v617 = vpop.f32.mrb[0].mxu0
        %v618 = vpop.f32.mrb[0].mxu0
        %v619 = vadd.f32 %v502, %v618
        %v620 = vpop.f32.mrb[0].mxu0
        %621 = vmatprep.mubr.bf16.mxu0 0
        %622 = vmatmul.mubr.bf16.gmra.mrb[0].mxu0 %v532
        %v623 = vpop.f32.mrb[0].mxu0
        %v624 = vadd.f32 %v502, %v623
        %v625 = vpop.f32.mrb[0].mxu0
        %v626 = vpop.f32.mrb[0].mxu0
        %v627 = vadd.f32 %v502, %v626
        %v628 = vpop.f32.mrb[0].mxu0
        %629 = vmatprep.mubr.bf16.mxu0 0
        %630 = vmatmul.mubr.bf16.gmra.mrb[0].mxu0 %v535
        %v631 = vpop.f32.mrb[0].mxu0
        %v632 = vadd.f32 %v502, %v631
        %v633 = vpop.f32.mrb[0].mxu0
        %v634 = vpop.f32.mrb[0].mxu0
        %v635 = vadd.f32 %v502, %v634
        %v636 = vpop.f32.mrb[0].mxu0
        %637 = vdwg.mxu0
        %v638 = vld [vmem:[%s1] sm:$0xff]
        %v639 = vld [vmem:[%s1 + $0x8] sm:$0xff]
        %v640 = vld [vmem:[%s1 + $0x10] sm:$0xff]
        %v641 = vld [vmem:[%s1 + $0x18] sm:$0xff]
        %v642 = vld [vmem:[%s1 + $0x20] sm:$0xff]
        %v643 = vld [vmem:[%s1 + $0x28] sm:$0xff]
        %v644 = vld [vmem:[%s1 + $0x30] sm:$0xff]
        %v645 = vld [vmem:[%s1 + $0x38] sm:$0xff]
        %v646 = vld [vmem:[%s1 + $0x40] sm:$0xff]
        %v647 = vld [vmem:[%s1 + $0x48] sm:$0xff]
        %v648 = vld [vmem:[%s1 + $0x50] sm:$0xff]
        %v649 = vld [vmem:[%s1 + $0x58] sm:$0xff]
        %v650 = vld [vmem:[%s1 + $0x60] sm:$0xff]
        %v651 = vld [vmem:[%s1 + $0x68] sm:$0xff]
        %v652 = vld [vmem:[%s1 + $0x70] sm:$0xff]
        %v653 = vld [vmem:[%s1 + $0x78] sm:$0xff]
        %v654 = vld [vmem:[%s1 + $0x80] sm:$0xff]
        %v655 = vld [vmem:[%s1 + $0x88] sm:$0xff]
        %v656 = vld [vmem:[%s1 + $0x90] sm:$0xff]
        %v657 = vld [vmem:[%s1 + $0x98] sm:$0xff]
        %v658 = vld [vmem:[%s1 + $0xa0] sm:$0xff]
        %v659 = vld [vmem:[%s1 + $0xa8] sm:$0xff]
        %v660 = vld [vmem:[%s1 + $0xb0] sm:$0xff]
        %v661 = vld [vmem:[%s1 + $0xb8] sm:$0xff]
        %v662 = vld [vmem:[%s1 + $0xc0] sm:$0xff]
        %v663 = vld [vmem:[%s1 + $0xc8] sm:$0xff]
        %v664 = vld [vmem:[%s1 + $0xd0] sm:$0xff]
        %v665 = vld [vmem:[%s1 + $0xd8] sm:$0xff]
        %v666 = vld [vmem:[%s1 + $0xe0] sm:$0xff]
        %v667 = vld [vmem:[%s1 + $0xe8] sm:$0xff]
        %v668 = vld [vmem:[%s1 + $0xf0] sm:$0xff]
        %v669 = vld [vmem:[%s1 + $0xf8] sm:$0xff]
        %v670 = vpack.c.bf16 %v639, %v638
        %v671 = vpack.c.bf16 %v641, %v640
        %v672 = vpack.c.bf16 %v643, %v642
        %v673 = vpack.c.bf16 %v645, %v644
        %v674 = vpack.c.bf16 %v647, %v646
        %v675 = vpack.c.bf16 %v649, %v648
        %v676 = vpack.c.bf16 %v651, %v650
        %v677 = vpack.c.bf16 %v653, %v652
        %v678 = vpack.c.bf16 %v655, %v654
        %v679 = vpack.c.bf16 %v657, %v656
        %v680 = vpack.c.bf16 %v659, %v658
        %v681 = vpack.c.bf16 %v661, %v660
        %v682 = vpack.c.bf16 %v663, %v662
        %v683 = vpack.c.bf16 %v665, %v664
        %v684 = vpack.c.bf16 %v667, %v666
        %v685 = vpack.c.bf16 %v669, %v668
        %v687 = vsel %vm512, %v670, 0
        %v690 = vsel %vm512, %v671, 0
        %v693 = vsel %vm512, %v672, 0
        %v696 = vsel %vm512, %v673, 0
        %v699 = vsel %vm512, %v674, 0
        %v702 = vsel %vm512, %v675, 0
        %v705 = vsel %vm512, %v676, 0
        %v708 = vsel %vm512, %v677, 0
        %v711 = vsel %vm512, %v678, 0
        %v714 = vsel %vm512, %v679, 0
        %v717 = vsel %vm512, %v680, 0
        %v720 = vsel %vm512, %v681, 0
        %v723 = vsel %vm512, %v682, 0
        %v726 = vsel %vm512, %v683, 0
        %v729 = vsel %vm512, %v684, 0
        %v732 = vsel %vm512, %v685, 0
        %734 = vmatprep.subr.bf16.mxu0 0
        %735 = vmatpush1.bf16.msra.mxu0 %v509
        %736 = vmatprep.subr.bf16.mxu0 0
        %737 = vmatpush1.bf16.msra.mxu0 %v539
        %738 = vmatprep.subr.bf16.mxu0 0
        %739 = vmatpush1.bf16.msra.mxu0 0
        %740 = vmatprep.subr.bf16.mxu0 0
        %741 = vmatpush1.bf16.msra.mxu0 0
        %742 = vmatprep.subr.bf16.mxu0 0
        %743 = vmatpush1.bf16.msra.mxu0 0
        %744 = vmatprep.subr.bf16.mxu0 0
        %745 = vmatpush1.bf16.msra.mxu0 0
        %746 = vmatprep.subr.bf16.mxu0 0
        %747 = vmatpush1.bf16.msra.mxu0 0
        %748 = vmatprep.subr.bf16.mxu0 0
        %749 = vmatpush1.bf16.msra.mxu0 0
        %750 = vmatprep.subr.bf16.mxu0 0
        %751 = vmatpush1.bf16.msra.mxu0 0
        %752 = vmatprep.subr.bf16.mxu0 0
        %753 = vmatpush1.bf16.msra.mxu0 0
        %754 = vmatprep.subr.bf16.mxu0 0
        %755 = vmatpush1.bf16.msra.mxu0 0
        %756 = vmatprep.subr.bf16.mxu0 0
        %757 = vmatpush1.bf16.msra.mxu0 0
        %758 = vmatprep.subr.bf16.mxu0 0
        %759 = vmatpush1.bf16.msra.mxu0 0
        %760 = vmatprep.subr.bf16.mxu0 0
        %761 = vmatpush1.bf16.msra.mxu0 0
        %762 = vmatprep.subr.bf16.mxu0 0
        %763 = vmatpush1.bf16.msra.mxu0 0
        %764 = vmatprep.subr.bf16.mxu0 0
        %765 = vmatpush1.bf16.msra.mxu0 0
        %766 = vmatprep.mubr.bf16.mxu0 0
        %767 = vmatmul.mubr.bf16.gmra.mrb[0].mxu0 %v687
        %v768 = vpop.f32.mrb[0].mxu0
        %v769 = vadd.f32 %v502, %v768
        %v770 = vpop.f32.mrb[0].mxu0
        %v771 = vpop.f32.mrb[0].mxu0
        %v772 = vadd.f32 %v502, %v771
        %v773 = vpop.f32.mrb[0].mxu0
        %774 = vmatprep.mubr.bf16.mxu0 0
        %775 = vmatmul.mubr.bf16.gmra.mrb[0].mxu0 %v690
        %v776 = vpop.f32.mrb[0].mxu0
        %v777 = vadd.f32 %v502, %v776
        %v778 = vpop.f32.mrb[0].mxu0
        %v779 = vpop.f32.mrb[0].mxu0
        %v780 = vadd.f32 %v502, %v779
        %v781 = vpop.f32.mrb[0].mxu0
        %782 = vmatprep.mubr.bf16.mxu0 0
        %783 = vmatmul.mubr.bf16.gmra.mrb[0].mxu0 %v693
        %v784 = vpop.f32.mrb[0].mxu0
        %v785 = vadd.f32 %v502, %v784
        %v786 = vpop.f32.mrb[0].mxu0
        %v787 = vpop.f32.mrb[0].mxu0
        %v788 = vadd.f32 %v502, %v787
        %v789 = vpop.f32.mrb[0].mxu0
        %790 = vmatprep.mubr.bf16.mxu0 0
        %791 = vmatmul.mubr.bf16.gmra.mrb[0].mxu0 %v696
        %v792 = vpop.f32.mrb[0].mxu0
        %v793 = vadd.f32 %v502, %v792
        %v794 = vpop.f32.mrb[0].mxu0
        %v795 = vpop.f32.mrb[0].mxu0
        %v796 = vadd.f32 %v502, %v795
        %v797 = vpop.f32.mrb[0].mxu0
        %798 = vmatprep.mubr.bf16.mxu0 0
        %799 = vmatmul.mubr.bf16.gmra.mrb[0].mxu0 %v699
        %v800 = vpop.f32.mrb[0].mxu0
        %v801 = vadd.f32 %v502, %v800
        %v802 = vpop.f32.mrb[0].mxu0
        %v803 = vpop.f32.mrb[0].mxu0
        %v804 = vadd.f32 %v502, %v803
        %v805 = vpop.f32.mrb[0].mxu0
        %806 = vmatprep.mubr.bf16.mxu0 0
        %807 = vmatmul.mubr.bf16.gmra.mrb[0].mxu0 %v702
        %v808 = vpop.f32.mrb[0].mxu0
        %v809 = vadd.f32 %v502, %v808
        %v810 = vpop.f32.mrb[0].mxu0
        %v811 = vpop.f32.mrb[0].mxu0
        %v812 = vadd.f32 %v502, %v811
        %v813 = vpop.f32.mrb[0].mxu0
        %814 = vmatprep.mubr.bf16.mxu0 0
        %815 = vmatmul.mubr.bf16.gmra.mrb[0].mxu0 %v705
        %v816 = vpop.f32.mrb[0].mxu0
        %v817 = vadd.f32 %v502, %v816
        %v818 = vpop.f32.mrb[0].mxu0
        %v819 = vpop.f32.mrb[0].mxu0
        %v820 = vadd.f32 %v502, %v819
        %v821 = vpop.f32.mrb[0].mxu0
        %822 = vmatprep.mubr.bf16.mxu0 0
        %823 = vmatmul.mubr.bf16.gmra.mrb[0].mxu0 %v708
        %v824 = vpop.f32.mrb[0].mxu0
        %v825 = vadd.f32 %v502, %v824
        %v826 = vpop.f32.mrb[0].mxu0
        %v827 = vpop.f32.mrb[0].mxu0
        %v828 = vadd.f32 %v502, %v827
        %v829 = vpop.f32.mrb[0].mxu0
        %830 = vmatprep.mubr.bf16.mxu0 0
        %831 = vmatmul.mubr.bf16.gmra.mrb[0].mxu0 %v711
        %v832 = vpop.f32.mrb[0].mxu0
        %v833 = vadd.f32 %v502, %v832
        %v834 = vpop.f32.mrb[0].mxu0
        %v835 = vpop.f32.mrb[0].mxu0
        %v836 = vadd.f32 %v502, %v835
        %v837 = vpop.f32.mrb[0].mxu0
        %838 = vmatprep.mubr.bf16.mxu0 0
        %839 = vmatmul.mubr.bf16.gmra.mrb[0].mxu0 %v714
        %v840 = vpop.f32.mrb[0].mxu0
        %v841 = vadd.f32 %v502, %v840
        %v842 = vpop.f32.mrb[0].mxu0
        %v843 = vpop.f32.mrb[0].mxu0
        %v844 = vadd.f32 %v502, %v843
        %v845 = vpop.f32.mrb[0].mxu0
        %846 = vmatprep.mubr.bf16.mxu0 0
        %847 = vmatmul.mubr.bf16.gmra.mrb[0].mxu0 %v717
        %v848 = vpop.f32.mrb[0].mxu0
        %v849 = vadd.f32 %v502, %v848
        %v850 = vpop.f32.mrb[0].mxu0
        %v851 = vpop.f32.mrb[0].mxu0
        %v852 = vadd.f32 %v502, %v851
        %v853 = vpop.f32.mrb[0].mxu0
        %854 = vmatprep.mubr.bf16.mxu0 0
        %855 = vmatmul.mubr.bf16.gmra.mrb[0].mxu0 %v720
        %v856 = vpop.f32.mrb[0].mxu0
        %v857 = vadd.f32 %v502, %v856
        %v858 = vpop.f32.mrb[0].mxu0
        %v859 = vpop.f32.mrb[0].mxu0
        %v860 = vadd.f32 %v502, %v859
        %v861 = vpop.f32.mrb[0].mxu0
        %862 = vmatprep.mubr.bf16.mxu0 0
        %863 = vmatmul.mubr.bf16.gmra.mrb[0].mxu0 %v723
        %v864 = vpop.f32.mrb[0].mxu0
        %v865 = vadd.f32 %v502, %v864
        %v866 = vpop.f32.mrb[0].mxu0
        %v867 = vpop.f32.mrb[0].mxu0
        %v868 = vadd.f32 %v502, %v867
        %v869 = vpop.f32.mrb[0].mxu0
        %870 = vmatprep.mubr.bf16.mxu0 0
        %871 = vmatmul.mubr.bf16.gmra.mrb[0].mxu0 %v726
        %v872 = vpop.f32.mrb[0].mxu0
        %v873 = vadd.f32 %v502, %v872
        %v874 = vpop.f32.mrb[0].mxu0
        %v875 = vpop.f32.mrb[0].mxu0
        %v876 = vadd.f32 %v502, %v875
        %v877 = vpop.f32.mrb[0].mxu0
        %878 = vmatprep.mubr.bf16.mxu0 0
        %879 = vmatmul.mubr.bf16.gmra.mrb[0].mxu0 %v729
        %v880 = vpop.f32.mrb[0].mxu0
        %v881 = vadd.f32 %v502, %v880
        %v882 = vpop.f32.mrb[0].mxu0
        %v883 = vpop.f32.mrb[0].mxu0
        %v884 = vadd.f32 %v502, %v883
        %v885 = vpop.f32.mrb[0].mxu0
        %886 = vmatprep.mubr.bf16.mxu0 0
        %887 = vmatmul.mubr.bf16.gmra.mrb[0].mxu0 %v732
        %v888 = vpop.f32.mrb[0].mxu0
        %v889 = vadd.f32 %v502, %v888
        %v890 = vpop.f32.mrb[0].mxu0
        %v891 = vpop.f32.mrb[0].mxu0
        %v892 = vadd.f32 %v502, %v891
        %v893 = vpop.f32.mrb[0].mxu0
        %894 = vdwg.mxu0
        %v895 = vld [vmem:[%s3] sm:$0xf]
        %v896 = vld [vmem:[%s3 + $0x4] sm:$0xf]
        %v897 = vld [vmem:[%s3 + $0x8] sm:$0xf]
        %v898 = vld [vmem:[%s3 + $0xc] sm:$0xf]
        %v899 = vpack.c.bf16 %v579, %v576
        %v900 = vpack.c.bf16 %v587, %v584
        %v901 = vpack.c.bf16 %v595, %v592
        %v902 = vpack.c.bf16 %v603, %v600
        %v903 = vpack.c.bf16 %v611, %v608
        %v904 = vpack.c.bf16 %v619, %v616
        %v905 = vpack.c.bf16 %v627, %v624
        %v906 = vpack.c.bf16 %v635, %v632
        %v907 = vlaneseq
        %v908 = vshrl.u32 %v907, 7
        %v909 = vsub.s32 1, %v908
        %v910 = vrot.slane %v470, %v909
        %v915 = vunpack.c.l.b16 %v895
        %v916 = vunpack.c.l.b16 %v896
        %v917 = vunpack.c.l.b16 %v897
        %v918 = vunpack.c.l.b16 %v898
        %v919 = vpack.c.b16 %v916, %v915
        %v920 = vpack.c.b16 %v918, %v917
        %vm923 = vcmask 261120
        %v925 = vsel %vm923, %v899, 0
        %v928 = vsel %vm923, %v900, 0
        %v931 = vsel %vm923, %v901, 0
        %v934 = vsel %vm923, %v902, 0
        %v937 = vsel %vm923, %v903, 0
        %v940 = vsel %vm923, %v904, 0
        %v943 = vsel %vm923, %v905, 0
        %v946 = vsel %vm923, %v906, 0
        %948 = vmatprep.subr.bf16.mxu0 0
        %949 = vmatpush1.bf16.msra.mxu0 %v919
        %950 = vmatprep.subr.bf16.mxu0 0
        %951 = vmatpush1.bf16.msra.mxu0 %v920
        %952 = vmatprep.subr.bf16.mxu0 0
        %953 = vmatpush1.bf16.msra.mxu0 0
        %954 = vmatprep.subr.bf16.mxu0 0
        %955 = vmatpush1.bf16.msra.mxu0 0
        %956 = vmatprep.subr.bf16.mxu0 0
        %957 = vmatpush1.bf16.msra.mxu0 0
        %958 = vmatprep.subr.bf16.mxu0 0
        %959 = vmatpush1.bf16.msra.mxu0 0
        %960 = vmatprep.subr.bf16.mxu0 0
        %961 = vmatpush1.bf16.msra.mxu0 0
        %962 = vmatprep.subr.bf16.mxu0 0
        %963 = vmatpush1.bf16.msra.mxu0 0
        %964 = vmatprep.subr.bf16.mxu0 0
        %965 = vmatpush1.bf16.msra.mxu0 0
        %966 = vmatprep.subr.bf16.mxu0 0
        %967 = vmatpush1.bf16.msra.mxu0 0
        %968 = vmatprep.subr.bf16.mxu0 0
        %969 = vmatpush1.bf16.msra.mxu0 0
        %970 = vmatprep.subr.bf16.mxu0 0
        %971 = vmatpush1.bf16.msra.mxu0 0
        %972 = vmatprep.subr.bf16.mxu0 0
        %973 = vmatpush1.bf16.msra.mxu0 0
        %974 = vmatprep.subr.bf16.mxu0 0
        %975 = vmatpush1.bf16.msra.mxu0 0
        %976 = vmatprep.subr.bf16.mxu0 0
        %977 = vmatpush1.bf16.msra.mxu0 0
        %978 = vmatprep.subr.bf16.mxu0 0
        %979 = vmatpush1.bf16.msra.mxu0 0
        %980 = vmatprep.mubr.bf16.mxu0 0
        %981 = vmatmul.mubr.bf16.gmra.mrb[0].mxu0 %v925
        %v982 = vpop.f32.mrb[0].mxu0
        %v983 = vadd.f32 %v910, %v982
        %v984 = vpop.f32.mrb[0].mxu0
        %v985 = vpop.f32.mrb[0].mxu0
        %v986 = vadd.f32 %v910, %v985
        %v987 = vpop.f32.mrb[0].mxu0
        %988 = vmatprep.mubr.bf16.mxu0 0
        %989 = vmatmul.mubr.bf16.gmra.mrb[0].mxu0 %v928
        %v990 = vpop.f32.mrb[0].mxu0
        %v991 = vadd.f32 %v910, %v990
        %v992 = vpop.f32.mrb[0].mxu0
        %v993 = vpop.f32.mrb[0].mxu0
        %v994 = vadd.f32 %v910, %v993
        %v995 = vpop.f32.mrb[0].mxu0
        %996 = vmatprep.mubr.bf16.mxu0 0
        %997 = vmatmul.mubr.bf16.gmra.mrb[0].mxu0 %v931
        %v998 = vpop.f32.mrb[0].mxu0
        %v999 = vadd.f32 %v910, %v998
        %v1000 = vpop.f32.mrb[0].mxu0
        %v1001 = vpop.f32.mrb[0].mxu0
        %v1002 = vadd.f32 %v910, %v1001
        %v1003 = vpop.f32.mrb[0].mxu0
        %1004 = vmatprep.mubr.bf16.mxu0 0
        %1005 = vmatmul.mubr.bf16.gmra.mrb[0].mxu0 %v934
        %v1006 = vpop.f32.mrb[0].mxu0
        %v1007 = vadd.f32 %v910, %v1006
        %v1008 = vpop.f32.mrb[0].mxu0
        %v1009 = vpop.f32.mrb[0].mxu0
        %v1010 = vadd.f32 %v910, %v1009
        %v1011 = vpop.f32.mrb[0].mxu0
        %1012 = vmatprep.mubr.bf16.mxu0 0
        %1013 = vmatmul.mubr.bf16.gmra.mrb[0].mxu0 %v937
        %v1014 = vpop.f32.mrb[0].mxu0
        %v1015 = vadd.f32 %v910, %v1014
        %v1016 = vpop.f32.mrb[0].mxu0
        %v1017 = vpop.f32.mrb[0].mxu0
        %v1018 = vadd.f32 %v910, %v1017
        %v1019 = vpop.f32.mrb[0].mxu0
        %1020 = vmatprep.mubr.bf16.mxu0 0
        %1021 = vmatmul.mubr.bf16.gmra.mrb[0].mxu0 %v940
        %v1022 = vpop.f32.mrb[0].mxu0
        %v1023 = vadd.f32 %v910, %v1022
        %v1024 = vpop.f32.mrb[0].mxu0
        %v1025 = vpop.f32.mrb[0].mxu0
        %v1026 = vadd.f32 %v910, %v1025
        %v1027 = vpop.f32.mrb[0].mxu0
        %1028 = vmatprep.mubr.bf16.mxu0 0
        %1029 = vmatmul.mubr.bf16.gmra.mrb[0].mxu0 %v943
        %v1030 = vpop.f32.mrb[0].mxu0
        %v1031 = vadd.f32 %v910, %v1030
        %v1032 = vpop.f32.mrb[0].mxu0
        %v1033 = vpop.f32.mrb[0].mxu0
        %v1034 = vadd.f32 %v910, %v1033
        %v1035 = vpop.f32.mrb[0].mxu0
        %1036 = vmatprep.mubr.bf16.mxu0 0
        %1037 = vmatmul.mubr.bf16.gmra.mrb[0].mxu0 %v946
        %v1038 = vpop.f32.mrb[0].mxu0
        %v1039 = vadd.f32 %v910, %v1038
        %v1040 = vpop.f32.mrb[0].mxu0
        %v1041 = vpop.f32.mrb[0].mxu0
        %v1042 = vadd.f32 %v910, %v1041
        %v1043 = vpop.f32.mrb[0].mxu0
        %1044 = vdwg.mxu0
        %v1045 = vld [vmem:[%s4] sm:$0xf]
        %v1046 = vld [vmem:[%s4 + $0x4] sm:$0xf]
        %v1047 = vld [vmem:[%s4 + $0x8] sm:$0xf]
        %v1048 = vld [vmem:[%s4 + $0xc] sm:$0xf]
        %v1049 = vpack.c.bf16 %v772, %v769
        %v1050 = vpack.c.bf16 %v780, %v777
        %v1051 = vpack.c.bf16 %v788, %v785
        %v1052 = vpack.c.bf16 %v796, %v793
        %v1053 = vpack.c.bf16 %v804, %v801
        %v1054 = vpack.c.bf16 %v812, %v809
        %v1055 = vpack.c.bf16 %v820, %v817
        %v1056 = vpack.c.bf16 %v828, %v825
        %v1057 = vpack.c.bf16 %v836, %v833
        %v1058 = vpack.c.bf16 %v844, %v841
        %v1059 = vpack.c.bf16 %v852, %v849
        %v1060 = vpack.c.bf16 %v860, %v857
        %v1061 = vpack.c.bf16 %v868, %v865
        %v1062 = vpack.c.bf16 %v876, %v873
        %v1063 = vpack.c.bf16 %v884, %v881
        %v1064 = vpack.c.bf16 %v892, %v889
        %v1065 = vld [vmem:[%s12] sm:$0x1]
        %v1067 = vlaneseq
        %v1068 = vshrl.u32 %v1067, 7
        %v1069 = vsub.s32 0, %v1068
        %v1070 = vrot.slane %v1065, %v1069
        %v1076 = vunpack.c.l.b16 %v1045
        %v1077 = vunpack.c.l.b16 %v1046
        %v1078 = vunpack.c.l.b16 %v1047
        %v1079 = vunpack.c.l.b16 %v1048
        %v1080 = vpack.c.b16 %v1077, %v1076
        %v1081 = vpack.c.b16 %v1079, %v1078
        %v1085 = vsel %vm923, %v1049, 0
        %v1088 = vsel %vm923, %v1050, 0
        %v1091 = vsel %vm923, %v1051, 0
        %v1094 = vsel %vm923, %v1052, 0
        %v1097 = vsel %vm923, %v1053, 0
        %v1100 = vsel %vm923, %v1054, 0
        %v1103 = vsel %vm923, %v1055, 0
        %v1106 = vsel %vm923, %v1056, 0
        %v1109 = vsel %vm923, %v1057, 0
        %v1112 = vsel %vm923, %v1058, 0
        %v1115 = vsel %vm923, %v1059, 0
        %v1118 = vsel %vm923, %v1060, 0
        %v1121 = vsel %vm923, %v1061, 0
        %v1124 = vsel %vm923, %v1062, 0
        %v1127 = vsel %vm923, %v1063, 0
        %v1130 = vsel %vm923, %v1064, 0
        %1132 = vmatprep.subr.bf16.mxu0 0
        %1133 = vmatpush1.bf16.msra.mxu0 %v1080
        %1134 = vmatprep.subr.bf16.mxu0 0
        %1135 = vmatpush1.bf16.msra.mxu0 %v1081
        %1136 = vmatprep.subr.bf16.mxu0 0
        %1137 = vmatpush1.bf16.msra.mxu0 0
        %1138 = vmatprep.subr.bf16.mxu0 0
        %1139 = vmatpush1.bf16.msra.mxu0 0
        %1140 = vmatprep.subr.bf16.mxu0 0
        %1141 = vmatpush1.bf16.msra.mxu0 0
        %1142 = vmatprep.subr.bf16.mxu0 0
        %1143 = vmatpush1.bf16.msra.mxu0 0
        %1144 = vmatprep.subr.bf16.mxu0 0
        %1145 = vmatpush1.bf16.msra.mxu0 0
        %1146 = vmatprep.subr.bf16.mxu0 0
        %1147 = vmatpush1.bf16.msra.mxu0 0
        %1148 = vmatprep.subr.bf16.mxu0 0
        %1149 = vmatpush1.bf16.msra.mxu0 0
        %1150 = vmatprep.subr.bf16.mxu0 0
        %1151 = vmatpush1.bf16.msra.mxu0 0
        %1152 = vmatprep.subr.bf16.mxu0 0
        %1153 = vmatpush1.bf16.msra.mxu0 0
        %1154 = vmatprep.subr.bf16.mxu0 0
        %1155 = vmatpush1.bf16.msra.mxu0 0
        %1156 = vmatprep.subr.bf16.mxu0 0
        %1157 = vmatpush1.bf16.msra.mxu0 0
        %1158 = vmatprep.subr.bf16.mxu0 0
        %1159 = vmatpush1.bf16.msra.mxu0 0
        %1160 = vmatprep.subr.bf16.mxu0 0
        %1161 = vmatpush1.bf16.msra.mxu0 0
        %1162 = vmatprep.subr.bf16.mxu0 0
        %1163 = vmatpush1.bf16.msra.mxu0 0
        %1164 = vmatprep.mubr.bf16.mxu0 0
        %1165 = vmatmul.mubr.bf16.gmra.mrb[0].mxu0 %v1085
        %v1166 = vpop.f32.mrb[0].mxu0
        %v1167 = vadd.f32 %v1070, %v1166
        %v1168 = vpop.f32.mrb[0].mxu0
        %v1169 = vpop.f32.mrb[0].mxu0
        %v1170 = vadd.f32 %v1070, %v1169
        %v1171 = vpop.f32.mrb[0].mxu0
        %1172 = vmatprep.mubr.bf16.mxu0 0
        %1173 = vmatmul.mubr.bf16.gmra.mrb[0].mxu0 %v1088
        %v1174 = vpop.f32.mrb[0].mxu0
        %v1175 = vadd.f32 %v1070, %v1174
        %v1176 = vpop.f32.mrb[0].mxu0
        %v1177 = vpop.f32.mrb[0].mxu0
        %v1178 = vadd.f32 %v1070, %v1177
        %v1179 = vpop.f32.mrb[0].mxu0
        %1180 = vmatprep.mubr.bf16.mxu0 0
        %1181 = vmatmul.mubr.bf16.gmra.mrb[0].mxu0 %v1091
        %v1182 = vpop.f32.mrb[0].mxu0
        %v1183 = vadd.f32 %v1070, %v1182
        %v1184 = vpop.f32.mrb[0].mxu0
        %v1185 = vpop.f32.mrb[0].mxu0
        %v1186 = vadd.f32 %v1070, %v1185
        %v1187 = vpop.f32.mrb[0].mxu0
        %1188 = vmatprep.mubr.bf16.mxu0 0
        %1189 = vmatmul.mubr.bf16.gmra.mrb[0].mxu0 %v1094
        %v1190 = vpop.f32.mrb[0].mxu0
        %v1191 = vadd.f32 %v1070, %v1190
        %v1192 = vpop.f32.mrb[0].mxu0
        %v1193 = vpop.f32.mrb[0].mxu0
        %v1194 = vadd.f32 %v1070, %v1193
        %v1195 = vpop.f32.mrb[0].mxu0
        %1196 = vmatprep.mubr.bf16.mxu0 0
        %1197 = vmatmul.mubr.bf16.gmra.mrb[0].mxu0 %v1097
        %v1198 = vpop.f32.mrb[0].mxu0
        %v1199 = vadd.f32 %v1070, %v1198
        %v1200 = vpop.f32.mrb[0].mxu0
        %v1201 = vpop.f32.mrb[0].mxu0
        %v1202 = vadd.f32 %v1070, %v1201
        %v1203 = vpop.f32.mrb[0].mxu0
        %1204 = vmatprep.mubr.bf16.mxu0 0
        %1205 = vmatmul.mubr.bf16.gmra.mrb[0].mxu0 %v1100
        %v1206 = vpop.f32.mrb[0].mxu0
        %v1207 = vadd.f32 %v1070, %v1206
        %v1208 = vpop.f32.mrb[0].mxu0
        %v1209 = vpop.f32.mrb[0].mxu0
        %v1210 = vadd.f32 %v1070, %v1209
        %v1211 = vpop.f32.mrb[0].mxu0
        %1212 = vmatprep.mubr.bf16.mxu0 0
        %1213 = vmatmul.mubr.bf16.gmra.mrb[0].mxu0 %v1103
        %v1214 = vpop.f32.mrb[0].mxu0
        %v1215 = vadd.f32 %v1070, %v1214
        %v1216 = vpop.f32.mrb[0].mxu0
        %v1217 = vpop.f32.mrb[0].mxu0
        %v1218 = vadd.f32 %v1070, %v1217
        %v1219 = vpop.f32.mrb[0].mxu0
        %1220 = vmatprep.mubr.bf16.mxu0 0
        %1221 = vmatmul.mubr.bf16.gmra.mrb[0].mxu0 %v1106
        %v1222 = vpop.f32.mrb[0].mxu0
        %v1223 = vadd.f32 %v1070, %v1222
        %v1224 = vpop.f32.mrb[0].mxu0
        %v1225 = vpop.f32.mrb[0].mxu0
        %v1226 = vadd.f32 %v1070, %v1225
        %v1227 = vpop.f32.mrb[0].mxu0
        %1228 = vmatprep.mubr.bf16.mxu0 0
        %1229 = vmatmul.mubr.bf16.gmra.mrb[0].mxu0 %v1109
        %v1230 = vpop.f32.mrb[0].mxu0
        %v1231 = vadd.f32 %v1070, %v1230
        %v1232 = vpop.f32.mrb[0].mxu0
        %v1233 = vpop.f32.mrb[0].mxu0
        %v1234 = vadd.f32 %v1070, %v1233
        %v1235 = vpop.f32.mrb[0].mxu0
        %1236 = vmatprep.mubr.bf16.mxu0 0
        %1237 = vmatmul.mubr.bf16.gmra.mrb[0].mxu0 %v1112
        %v1238 = vpop.f32.mrb[0].mxu0
        %v1239 = vadd.f32 %v1070, %v1238
        %v1240 = vpop.f32.mrb[0].mxu0
        %v1241 = vpop.f32.mrb[0].mxu0
        %v1242 = vadd.f32 %v1070, %v1241
        %v1243 = vpop.f32.mrb[0].mxu0
        %1244 = vmatprep.mubr.bf16.mxu0 0
        %1245 = vmatmul.mubr.bf16.gmra.mrb[0].mxu0 %v1115
        %v1246 = vpop.f32.mrb[0].mxu0
        %v1247 = vadd.f32 %v1070, %v1246
        %v1248 = vpop.f32.mrb[0].mxu0
        %v1249 = vpop.f32.mrb[0].mxu0
        %v1250 = vadd.f32 %v1070, %v1249
        %v1251 = vpop.f32.mrb[0].mxu0
        %1252 = vmatprep.mubr.bf16.mxu0 0
        %1253 = vmatmul.mubr.bf16.gmra.mrb[0].mxu0 %v1118
        %v1254 = vpop.f32.mrb[0].mxu0
        %v1255 = vadd.f32 %v1070, %v1254
        %v1256 = vpop.f32.mrb[0].mxu0
        %v1257 = vpop.f32.mrb[0].mxu0
        %v1258 = vadd.f32 %v1070, %v1257
        %v1259 = vpop.f32.mrb[0].mxu0
        %1260 = vmatprep.mubr.bf16.mxu0 0
        %1261 = vmatmul.mubr.bf16.gmra.mrb[0].mxu0 %v1121
        %v1262 = vpop.f32.mrb[0].mxu0
        %v1263 = vadd.f32 %v1070, %v1262
        %v1264 = vpop.f32.mrb[0].mxu0
        %v1265 = vpop.f32.mrb[0].mxu0
        %v1266 = vadd.f32 %v1070, %v1265
        %v1267 = vpop.f32.mrb[0].mxu0
        %1268 = vmatprep.mubr.bf16.mxu0 0
        %1269 = vmatmul.mubr.bf16.gmra.mrb[0].mxu0 %v1124
        %v1270 = vpop.f32.mrb[0].mxu0
        %v1271 = vadd.f32 %v1070, %v1270
        %v1272 = vpop.f32.mrb[0].mxu0
        %v1273 = vpop.f32.mrb[0].mxu0
        %v1274 = vadd.f32 %v1070, %v1273
        %v1275 = vpop.f32.mrb[0].mxu0
        %1276 = vmatprep.mubr.bf16.mxu0 0
        %1277 = vmatmul.mubr.bf16.gmra.mrb[0].mxu0 %v1127
        %v1278 = vpop.f32.mrb[0].mxu0
        %v1279 = vadd.f32 %v1070, %v1278
        %v1280 = vpop.f32.mrb[0].mxu0
        %v1281 = vpop.f32.mrb[0].mxu0
        %v1282 = vadd.f32 %v1070, %v1281
        %v1283 = vpop.f32.mrb[0].mxu0
        %1284 = vmatprep.mubr.bf16.mxu0 0
        %1285 = vmatmul.mubr.bf16.gmra.mrb[0].mxu0 %v1130
        %v1286 = vpop.f32.mrb[0].mxu0
        %v1287 = vadd.f32 %v1070, %v1286
        %v1288 = vpop.f32.mrb[0].mxu0
        %v1289 = vpop.f32.mrb[0].mxu0
        %v1290 = vadd.f32 %v1070, %v1289
        %v1291 = vpop.f32.mrb[0].mxu0
        %1292 = vdwg.mxu0
        %v1293 = vpack.c.bf16 %v986, %v983
        %v1294 = vpack.c.bf16 %v994, %v991
        %v1295 = vpack.c.bf16 %v1002, %v999
        %v1296 = vpack.c.bf16 %v1010, %v1007
        %v1297 = vpack.c.bf16 %v1018, %v1015
        %v1298 = vpack.c.bf16 %v1026, %v1023
        %v1299 = vpack.c.bf16 %v1034, %v1031
        %v1300 = vpack.c.bf16 %v1042, %v1039
        %v1301 = vpack.c.bf16 %v1170, %v1167
        %v1302 = vpack.c.bf16 %v1178, %v1175
        %v1303 = vpack.c.bf16 %v1186, %v1183
        %v1304 = vpack.c.bf16 %v1194, %v1191
        %v1305 = vpack.c.bf16 %v1202, %v1199
        %v1306 = vpack.c.bf16 %v1210, %v1207
        %v1307 = vpack.c.bf16 %v1218, %v1215
        %v1308 = vpack.c.bf16 %v1226, %v1223
        %v1309 = vpack.c.bf16 %v1234, %v1231
        %v1310 = vpack.c.bf16 %v1242, %v1239
        %v1311 = vpack.c.bf16 %v1250, %v1247
        %v1312 = vpack.c.bf16 %v1258, %v1255
        %v1313 = vpack.c.bf16 %v1266, %v1263
        %v1314 = vpack.c.bf16 %v1274, %v1271
        %v1315 = vpack.c.bf16 %v1282, %v1279
        %v1316 = vpack.c.bf16 %v1290, %v1287
        %vm1317 = vcmask 130048
        %v1319 = vsel %vm1317, %v1293, 0
        %v1322 = vsel %vm1317, %v1294, 0
        %v1325 = vsel %vm1317, %v1295, 0
        %v1328 = vsel %vm1317, %v1296, 0
        %v1331 = vsel %vm1317, %v1297, 0
        %v1334 = vsel %vm1317, %v1298, 0
        %v1337 = vsel %vm1317, %v1299, 0
        %v1340 = vsel %vm1317, %v1300, 0
        %v1343 = vsel %vm1317, %v1301, 0
        %v1346 = vsel %vm1317, %v1302, 0
        %v1349 = vsel %vm1317, %v1303, 0
        %v1352 = vsel %vm1317, %v1304, 0
        %v1355 = vsel %vm1317, %v1305, 0
        %v1358 = vsel %vm1317, %v1306, 0
        %v1361 = vsel %vm1317, %v1307, 0
        %v1364 = vsel %vm1317, %v1308, 0
        %v1367 = vsel %vm1317, %v1309, 0
        %v1370 = vsel %vm1317, %v1310, 0
        %v1373 = vsel %vm1317, %v1311, 0
        %v1376 = vsel %vm1317, %v1312, 0
        %v1379 = vsel %vm1317, %v1313, 0
        %v1382 = vsel %vm1317, %v1314, 0
        %v1385 = vsel %vm1317, %v1315, 0
        %v1388 = vsel %vm1317, %v1316, 0
        %1390 = vmatprep.subr.bf16.mxu0 0
        %1391 = vmatpush1.bf16.xpose.msra.mxu0 %v1343
        %1392 = vmatprep.subr.bf16.mxu0 0
        %1393 = vmatpush1.bf16.xpose.msra.mxu0 %v1346
        %1394 = vmatprep.subr.bf16.mxu0 0
        %1395 = vmatpush1.bf16.xpose.msra.mxu0 %v1349
        %1396 = vmatprep.subr.bf16.mxu0 0
        %1397 = vmatpush1.bf16.xpose.msra.mxu0 %v1352
        %1398 = vmatprep.subr.bf16.mxu0 0
        %1399 = vmatpush1.bf16.xpose.msra.mxu0 %v1355
        %1400 = vmatprep.subr.bf16.mxu0 0
        %1401 = vmatpush1.bf16.xpose.msra.mxu0 %v1358
        %1402 = vmatprep.subr.bf16.mxu0 0
        %1403 = vmatpush1.bf16.xpose.msra.mxu0 %v1361
        %1404 = vmatprep.subr.bf16.mxu0 0
        %1405 = vmatpush1.bf16.xpose.msra.mxu0 %v1364
        %1406 = vmatprep.subr.bf16.mxu0 0
        %1407 = vmatpush1.bf16.xpose.msra.mxu0 %v1367
        %1408 = vmatprep.subr.bf16.mxu0 0
        %1409 = vmatpush1.bf16.xpose.msra.mxu0 %v1370
        %1410 = vmatprep.subr.bf16.mxu0 0
        %1411 = vmatpush1.bf16.xpose.msra.mxu0 %v1373
        %1412 = vmatprep.subr.bf16.mxu0 0
        %1413 = vmatpush1.bf16.xpose.msra.mxu0 %v1376
        %1414 = vmatprep.subr.bf16.mxu0 0
        %1415 = vmatpush1.bf16.xpose.msra.mxu0 %v1379
        %1416 = vmatprep.subr.bf16.mxu0 0
        %1417 = vmatpush1.bf16.xpose.msra.mxu0 %v1382
        %1418 = vmatprep.subr.bf16.mxu0 0
        %1419 = vmatpush1.bf16.xpose.msra.mxu0 %v1385
        %1420 = vmatprep.subr.bf16.mxu0 0
        %1421 = vmatpush1.bf16.xpose.msra.mxu0 %v1388
        %1422 = vmatprep.mubr.bf16.mxu0 0
        %1423 = vmatmul.mubr.bf16.gmra.mrb[0].mxu0 %v1319
        %v1424 = vpop.f32.mrb[0].mxu0
        %v1425 = vadd.f32 0.0, %v1424
        %v1426 = vpop.f32.mrb[0].mxu0
        %v1427 = vadd.f32 0.0, %v1426
        %v1428 = vpop.f32.mrb[0].mxu0
        %v1429 = vadd.f32 0.0, %v1428
        %v1430 = vpop.f32.mrb[0].mxu0
        %v1431 = vadd.f32 0.0, %v1430
        %1432 = vmatprep.mubr.bf16.mxu0 0
        %1433 = vmatmul.mubr.bf16.gmra.mrb[0].mxu0 %v1322
        %v1434 = vpop.f32.mrb[0].mxu0
        %v1435 = vadd.f32 0.0, %v1434
        %v1436 = vpop.f32.mrb[0].mxu0
        %v1437 = vadd.f32 0.0, %v1436
        %v1438 = vpop.f32.mrb[0].mxu0
        %v1439 = vadd.f32 0.0, %v1438
        %v1440 = vpop.f32.mrb[0].mxu0
        %v1441 = vadd.f32 0.0, %v1440
        %1442 = vmatprep.mubr.bf16.mxu0 0
        %1443 = vmatmul.mubr.bf16.gmra.mrb[0].mxu0 %v1325
        %v1444 = vpop.f32.mrb[0].mxu0
        %v1445 = vadd.f32 0.0, %v1444
        %v1446 = vpop.f32.mrb[0].mxu0
        %v1447 = vadd.f32 0.0, %v1446
        %v1448 = vpop.f32.mrb[0].mxu0
        %v1449 = vadd.f32 0.0, %v1448
        %v1450 = vpop.f32.mrb[0].mxu0
        %v1451 = vadd.f32 0.0, %v1450
        %1452 = vmatprep.mubr.bf16.mxu0 0
        %1453 = vmatmul.mubr.bf16.gmra.mrb[0].mxu0 %v1328
        %v1454 = vpop.f32.mrb[0].mxu0
        %v1455 = vadd.f32 0.0, %v1454
        %v1456 = vpop.f32.mrb[0].mxu0
        %v1457 = vadd.f32 0.0, %v1456
        %v1458 = vpop.f32.mrb[0].mxu0
        %v1459 = vadd.f32 0.0, %v1458
        %v1460 = vpop.f32.mrb[0].mxu0
        %v1461 = vadd.f32 0.0, %v1460
        %1462 = vmatprep.mubr.bf16.mxu0 0
        %1463 = vmatmul.mubr.bf16.gmra.mrb[0].mxu0 %v1331
        %v1464 = vpop.f32.mrb[0].mxu0
        %v1465 = vadd.f32 0.0, %v1464
        %v1466 = vpop.f32.mrb[0].mxu0
        %v1467 = vadd.f32 0.0, %v1466
        %v1468 = vpop.f32.mrb[0].mxu0
        %v1469 = vadd.f32 0.0, %v1468
        %v1470 = vpop.f32.mrb[0].mxu0
        %v1471 = vadd.f32 0.0, %v1470
        %1472 = vmatprep.mubr.bf16.mxu0 0
        %1473 = vmatmul.mubr.bf16.gmra.mrb[0].mxu0 %v1334
        %v1474 = vpop.f32.mrb[0].mxu0
        %v1475 = vadd.f32 0.0, %v1474
        %v1476 = vpop.f32.mrb[0].mxu0
        %v1477 = vadd.f32 0.0, %v1476
        %v1478 = vpop.f32.mrb[0].mxu0
        %v1479 = vadd.f32 0.0, %v1478
        %v1480 = vpop.f32.mrb[0].mxu0
        %v1481 = vadd.f32 0.0, %v1480
        %1482 = vmatprep.mubr.bf16.mxu0 0
        %1483 = vmatmul.mubr.bf16.gmra.mrb[0].mxu0 %v1337
        %v1484 = vpop.f32.mrb[0].mxu0
        %v1485 = vadd.f32 0.0, %v1484
        %v1486 = vpop.f32.mrb[0].mxu0
        %v1487 = vadd.f32 0.0, %v1486
        %v1488 = vpop.f32.mrb[0].mxu0
        %v1489 = vadd.f32 0.0, %v1488
        %v1490 = vpop.f32.mrb[0].mxu0
        %v1491 = vadd.f32 0.0, %v1490
        %1492 = vmatprep.mubr.bf16.mxu0 0
        %1493 = vmatmul.mubr.bf16.gmra.mrb[0].mxu0 %v1340
        %v1494 = vpop.f32.mrb[0].mxu0
        %v1495 = vadd.f32 0.0, %v1494
        %v1496 = vpop.f32.mrb[0].mxu0
        %v1497 = vadd.f32 0.0, %v1496
        %v1498 = vpop.f32.mrb[0].mxu0
        %v1499 = vadd.f32 0.0, %v1498
        %v1500 = vpop.f32.mrb[0].mxu0
        %v1501 = vadd.f32 0.0, %v1500
        %1502 = vdwg.mxu0
        %v1503 = vmax.f32 %v1425, %v1427
        %1504 = vmax.xlane.f32.xlu0 %v1503
        %v1505 = vpop.xlane.xlu0 %1504
        %v1506 = vmax.f32 %v1429, %v1431
        %1507 = vmax.xlane.f32.xlu0 %v1506
        %v1508 = vpop.xlane.xlu0 %1507
        %v1509 = vmax.f32 %v1435, %v1437
        %1510 = vmax.xlane.f32.xlu0 %v1509
        %v1511 = vpop.xlane.xlu0 %1510
        %v1512 = vmax.f32 %v1439, %v1441
        %1513 = vmax.xlane.f32.xlu0 %v1512
        %v1514 = vpop.xlane.xlu0 %1513
        %v1515 = vmax.f32 %v1445, %v1447
        %1516 = vmax.xlane.f32.xlu0 %v1515
        %v1517 = vpop.xlane.xlu0 %1516
        %v1518 = vmax.f32 %v1449, %v1451
        %1519 = vmax.xlane.f32.xlu0 %v1518
        %v1520 = vpop.xlane.xlu0 %1519
        %v1521 = vmax.f32 %v1455, %v1457
        %1522 = vmax.xlane.f32.xlu0 %v1521
        %v1523 = vpop.xlane.xlu0 %1522
        %v1524 = vmax.f32 %v1459, %v1461
        %1525 = vmax.xlane.f32.xlu0 %v1524
        %v1526 = vpop.xlane.xlu0 %1525
        %v1527 = vmax.f32 %v1465, %v1467
        %1528 = vmax.xlane.f32.xlu0 %v1527
        %v1529 = vpop.xlane.xlu0 %1528
        %v1530 = vmax.f32 %v1469, %v1471
        %1531 = vmax.xlane.f32.xlu0 %v1530
        %v1532 = vpop.xlane.xlu0 %1531
        %v1533 = vmax.f32 %v1475, %v1477
        %1534 = vmax.xlane.f32.xlu0 %v1533
        %v1535 = vpop.xlane.xlu0 %1534
        %v1536 = vmax.f32 %v1479, %v1481
        %1537 = vmax.xlane.f32.xlu0 %v1536
        %v1538 = vpop.xlane.xlu0 %1537
        %v1539 = vmax.f32 %v1485, %v1487
        %1540 = vmax.xlane.f32.xlu0 %v1539
        %v1541 = vpop.xlane.xlu0 %1540
        %v1542 = vmax.f32 %v1489, %v1491
        %1543 = vmax.xlane.f32.xlu0 %v1542
        %v1544 = vpop.xlane.xlu0 %1543
        %v1545 = vmax.f32 %v1495, %v1497
        %1546 = vmax.xlane.f32.xlu0 %v1545
        %v1547 = vpop.xlane.xlu0 %1546
        %v1548 = vmax.f32 %v1499, %v1501
        %1549 = vmax.xlane.f32.xlu0 %v1548
        %v1550 = vpop.xlane.xlu0 %1549
        %v1551 = vsub.f32 %v1425, %v1505
        %v1552 = vsub.f32 %v1427, %v1505
        %v1553 = vsub.f32 %v1429, %v1508
        %v1554 = vsub.f32 %v1431, %v1508
        %v1555 = vsub.f32 %v1435, %v1511
        %v1556 = vsub.f32 %v1437, %v1511
        %v1557 = vsub.f32 %v1439, %v1514
        %v1558 = vsub.f32 %v1441, %v1514
        %v1559 = vsub.f32 %v1445, %v1517
        %v1560 = vsub.f32 %v1447, %v1517
        %v1561 = vsub.f32 %v1449, %v1520
        %v1562 = vsub.f32 %v1451, %v1520
        %v1563 = vsub.f32 %v1455, %v1523
        %v1564 = vsub.f32 %v1457, %v1523
        %v1565 = vsub.f32 %v1459, %v1526
        %v1566 = vsub.f32 %v1461, %v1526
        %v1567 = vsub.f32 %v1465, %v1529
        %v1568 = vsub.f32 %v1467, %v1529
        %v1569 = vsub.f32 %v1469, %v1532
        %v1570 = vsub.f32 %v1471, %v1532
        %v1571 = vsub.f32 %v1475, %v1535
        %v1572 = vsub.f32 %v1477, %v1535
        %v1573 = vsub.f32 %v1479, %v1538
        %v1574 = vsub.f32 %v1481, %v1538
        %v1575 = vsub.f32 %v1485, %v1541
        %v1576 = vsub.f32 %v1487, %v1541
        %v1577 = vsub.f32 %v1489, %v1544
        %v1578 = vsub.f32 %v1491, %v1544
        %v1579 = vsub.f32 %v1495, %v1547
        %v1580 = vsub.f32 %v1497, %v1547
        %v1581 = vsub.f32 %v1499, %v1550
        %v1582 = vsub.f32 %v1501, %v1550
        %v1583 = vmul.f32 %v1551, 1.442695
        %v1584 = vpow.pop %v1583
        %v1585 = vmul.f32 %v1552, 1.442695
        %v1586 = vpow.pop %v1585
        %v1587 = vmul.f32 %v1553, 1.442695
        %v1588 = vpow.pop %v1587
        %v1589 = vmul.f32 %v1554, 1.442695
        %v1590 = vpow.pop %v1589
        %v1591 = vmul.f32 %v1555, 1.442695
        %v1592 = vpow.pop %v1591
        %v1593 = vmul.f32 %v1556, 1.442695
        %v1594 = vpow.pop %v1593
        %v1595 = vmul.f32 %v1557, 1.442695
        %v1596 = vpow.pop %v1595
        %v1597 = vmul.f32 %v1558, 1.442695
        %v1598 = vpow.pop %v1597
        %v1599 = vmul.f32 %v1559, 1.442695
        %v1600 = vpow.pop %v1599
        %v1601 = vmul.f32 %v1560, 1.442695
        %v1602 = vpow.pop %v1601
        %v1603 = vmul.f32 %v1561, 1.442695
        %v1604 = vpow.pop %v1603
        %v1605 = vmul.f32 %v1562, 1.442695
        %v1606 = vpow.pop %v1605
        %v1607 = vmul.f32 %v1563, 1.442695
        %v1608 = vpow.pop %v1607
        %v1609 = vmul.f32 %v1564, 1.442695
        %v1610 = vpow.pop %v1609
        %v1611 = vmul.f32 %v1565, 1.442695
        %v1612 = vpow.pop %v1611
        %v1613 = vmul.f32 %v1566, 1.442695
        %v1614 = vpow.pop %v1613
        %v1615 = vmul.f32 %v1567, 1.442695
        %v1616 = vpow.pop %v1615
        %v1617 = vmul.f32 %v1568, 1.442695
        %v1618 = vpow.pop %v1617
        %v1619 = vmul.f32 %v1569, 1.442695
        %v1620 = vpow.pop %v1619
        %v1621 = vmul.f32 %v1570, 1.442695
        %v1622 = vpow.pop %v1621
        %v1623 = vmul.f32 %v1571, 1.442695
        %v1624 = vpow.pop %v1623
        %v1625 = vmul.f32 %v1572, 1.442695
        %v1626 = vpow.pop %v1625
        %v1627 = vmul.f32 %v1573, 1.442695
        %v1628 = vpow.pop %v1627
        %v1629 = vmul.f32 %v1574, 1.442695
        %v1630 = vpow.pop %v1629
        %v1631 = vmul.f32 %v1575, 1.442695
        %v1632 = vpow.pop %v1631
        %v1633 = vmul.f32 %v1576, 1.442695
        %v1634 = vpow.pop %v1633
        %v1635 = vmul.f32 %v1577, 1.442695
        %v1636 = vpow.pop %v1635
        %v1637 = vmul.f32 %v1578, 1.442695
        %v1638 = vpow.pop %v1637
        %v1639 = vmul.f32 %v1579, 1.442695
        %v1640 = vpow.pop %v1639
        %v1641 = vmul.f32 %v1580, 1.442695
        %v1642 = vpow.pop %v1641
        %v1643 = vmul.f32 %v1581, 1.442695
        %v1644 = vpow.pop %v1643
        %v1645 = vmul.f32 %v1582, 1.442695
        %v1646 = vpow.pop %v1645
        %v1647 = vadd.f32 %v1584, %v1586
        %1648 = vadd.xlane.f32.xlu0 %v1647
        %v1649 = vpop.xlane.xlu0 %1648
        %v1650 = vadd.f32 %v1588, %v1590
        %1651 = vadd.xlane.f32.xlu0 %v1650
        %v1652 = vpop.xlane.xlu0 %1651
        %v1653 = vadd.f32 %v1592, %v1594
        %1654 = vadd.xlane.f32.xlu0 %v1653
        %v1655 = vpop.xlane.xlu0 %1654
        %v1656 = vadd.f32 %v1596, %v1598
        %1657 = vadd.xlane.f32.xlu0 %v1656
        %v1658 = vpop.xlane.xlu0 %1657
        %v1659 = vadd.f32 %v1600, %v1602
        %1660 = vadd.xlane.f32.xlu0 %v1659
        %v1661 = vpop.xlane.xlu0 %1660
        %v1662 = vadd.f32 %v1604, %v1606
        %1663 = vadd.xlane.f32.xlu0 %v1662
        %v1664 = vpop.xlane.xlu0 %1663
        %v1665 = vadd.f32 %v1608, %v1610
        %1666 = vadd.xlane.f32.xlu0 %v1665
        %v1667 = vpop.xlane.xlu0 %1666
        %v1668 = vadd.f32 %v1612, %v1614
        %1669 = vadd.xlane.f32.xlu0 %v1668
        %v1670 = vpop.xlane.xlu0 %1669
        %v1671 = vadd.f32 %v1616, %v1618
        %1672 = vadd.xlane.f32.xlu0 %v1671
        %v1673 = vpop.xlane.xlu0 %1672
        %v1674 = vadd.f32 %v1620, %v1622
        %1675 = vadd.xlane.f32.xlu0 %v1674
        %v1676 = vpop.xlane.xlu0 %1675
        %v1677 = vadd.f32 %v1624, %v1626
        %1678 = vadd.xlane.f32.xlu0 %v1677
        %v1679 = vpop.xlane.xlu0 %1678
        %v1680 = vadd.f32 %v1628, %v1630
        %1681 = vadd.xlane.f32.xlu0 %v1680
        %v1682 = vpop.xlane.xlu0 %1681
        %v1683 = vadd.f32 %v1632, %v1634
        %1684 = vadd.xlane.f32.xlu0 %v1683
        %v1685 = vpop.xlane.xlu0 %1684
        %v1686 = vadd.f32 %v1636, %v1638
        %1687 = vadd.xlane.f32.xlu0 %v1686
        %v1688 = vpop.xlane.xlu0 %1687
        %v1689 = vadd.f32 %v1640, %v1642
        %1690 = vadd.xlane.f32.xlu0 %v1689
        %v1691 = vpop.xlane.xlu0 %1690
        %v1692 = vadd.f32 %v1644, %v1646
        %1693 = vadd.xlane.f32.xlu0 %v1692
        %v1694 = vpop.xlane.xlu0 %1693
        %v1695 = vrcp.pop %v1649
        %v1696 = vrcp.pop %v1652
        %v1697 = vrcp.pop %v1655
        %v1698 = vrcp.pop %v1658
        %v1699 = vrcp.pop %v1661
        %v1700 = vrcp.pop %v1664
        %v1701 = vrcp.pop %v1667
        %v1702 = vrcp.pop %v1670
        %v1703 = vrcp.pop %v1673
        %v1704 = vrcp.pop %v1676
        %v1705 = vrcp.pop %v1679
        %v1706 = vrcp.pop %v1682
        %v1707 = vrcp.pop %v1685
        %v1708 = vrcp.pop %v1688
        %v1709 = vrcp.pop %v1691
        %v1710 = vrcp.pop %v1694
        %v1711 = vmul.f32 %v1584, %v1695
        %v1712 = vmul.f32 %v1586, %v1695
        %v1713 = vmul.f32 %v1588, %v1696
        %v1714 = vmul.f32 %v1590, %v1696
        %v1715 = vmul.f32 %v1592, %v1697
        %v1716 = vmul.f32 %v1594, %v1697
        %v1717 = vmul.f32 %v1596, %v1698
        %v1718 = vmul.f32 %v1598, %v1698
        %v1719 = vmul.f32 %v1600, %v1699
        %v1720 = vmul.f32 %v1602, %v1699
        %v1721 = vmul.f32 %v1604, %v1700
        %v1722 = vmul.f32 %v1606, %v1700
        %v1723 = vmul.f32 %v1608, %v1701
        %v1724 = vmul.f32 %v1610, %v1701
        %v1725 = vmul.f32 %v1612, %v1702
        %v1726 = vmul.f32 %v1614, %v1702
        %v1727 = vmul.f32 %v1616, %v1703
        %v1728 = vmul.f32 %v1618, %v1703
        %v1729 = vmul.f32 %v1620, %v1704
        %v1730 = vmul.f32 %v1622, %v1704
        %v1731 = vmul.f32 %v1624, %v1705
        %v1732 = vmul.f32 %v1626, %v1705
        %v1733 = vmul.f32 %v1628, %v1706
        %v1734 = vmul.f32 %v1630, %v1706
        %v1735 = vmul.f32 %v1632, %v1707
        %v1736 = vmul.f32 %v1634, %v1707
        %v1737 = vmul.f32 %v1636, %v1708
        %v1738 = vmul.f32 %v1638, %v1708
        %v1739 = vmul.f32 %v1640, %v1709
        %v1740 = vmul.f32 %v1642, %v1709
        %v1741 = vmul.f32 %v1644, %v1710
        %v1742 = vmul.f32 %v1646, %v1710
        %v1743 = vpack.c.bf16 %v1713, %v1711
        %v1744 = vpack.c.bf16 %v1714, %v1712
        %v1745 = vpack.c.bf16 %v1717, %v1715
        %v1746 = vpack.c.bf16 %v1718, %v1716
        %v1747 = vpack.c.bf16 %v1721, %v1719
        %v1748 = vpack.c.bf16 %v1722, %v1720
        %v1749 = vpack.c.bf16 %v1725, %v1723
        %v1750 = vpack.c.bf16 %v1726, %v1724
        %v1751 = vpack.c.bf16 %v1729, %v1727
        %v1752 = vpack.c.bf16 %v1730, %v1728
        %v1753 = vpack.c.bf16 %v1733, %v1731
        %v1754 = vpack.c.bf16 %v1734, %v1732
        %v1755 = vpack.c.bf16 %v1737, %v1735
        %v1756 = vpack.c.bf16 %v1738, %v1736
        %v1757 = vpack.c.bf16 %v1741, %v1739
        %v1758 = vpack.c.bf16 %v1742, %v1740
        %1775 = vrot.lane.b32.xlu0 %v1301, 96
        %v1776 = vpop.permute.xlu0 %1775
        %1777 = vrot.lane.b32.xlu0 %v1302, 96
        %v1778 = vpop.permute.xlu0 %1777
        %1779 = vrot.lane.b32.xlu0 %v1303, 96
        %v1780 = vpop.permute.xlu0 %1779
        %1781 = vrot.lane.b32.xlu0 %v1304, 96
        %v1782 = vpop.permute.xlu0 %1781
        %1783 = vrot.lane.b32.xlu0 %v1305, 96
        %v1784 = vpop.permute.xlu0 %1783
        %1785 = vrot.lane.b32.xlu0 %v1306, 96
        %v1786 = vpop.permute.xlu0 %1785
        %1787 = vrot.lane.b32.xlu0 %v1307, 96
        %v1788 = vpop.permute.xlu0 %1787
        %1789 = vrot.lane.b32.xlu0 %v1308, 96
        %v1790 = vpop.permute.xlu0 %1789
        %1791 = vrot.lane.b32.xlu0 %v1309, 96
        %v1792 = vpop.permute.xlu0 %1791
        %1793 = vrot.lane.b32.xlu0 %v1310, 96
        %v1794 = vpop.permute.xlu0 %1793
        %1795 = vrot.lane.b32.xlu0 %v1311, 96
        %v1796 = vpop.permute.xlu0 %1795
        %1797 = vrot.lane.b32.xlu0 %v1312, 96
        %v1798 = vpop.permute.xlu0 %1797
        %1799 = vrot.lane.b32.xlu0 %v1313, 96
        %v1800 = vpop.permute.xlu0 %1799
        %1801 = vrot.lane.b32.xlu0 %v1314, 96
        %v1802 = vpop.permute.xlu0 %1801
        %1803 = vrot.lane.b32.xlu0 %v1315, 96
        %v1804 = vpop.permute.xlu0 %1803
        %1805 = vrot.lane.b32.xlu0 %v1316, 96
        %v1806 = vpop.permute.xlu0 %1805
        %1823 = vmatprep.subr.bf16.mxu0 0
        %1824 = vmatpush1.bf16.msra.mxu0 %v1776
        %1825 = vmatprep.subr.bf16.mxu0 0
        %1826 = vmatpush1.bf16.msra.mxu0 %v1778
        %1827 = vmatprep.subr.bf16.mxu0 0
        %1828 = vmatpush1.bf16.msra.mxu0 %v1780
        %1829 = vmatprep.subr.bf16.mxu0 0
        %1830 = vmatpush1.bf16.msra.mxu0 %v1782
        %1831 = vmatprep.subr.bf16.mxu0 0
        %1832 = vmatpush1.bf16.msra.mxu0 %v1784
        %1833 = vmatprep.subr.bf16.mxu0 0
        %1834 = vmatpush1.bf16.msra.mxu0 %v1786
        %1835 = vmatprep.subr.bf16.mxu0 0
        %1836 = vmatpush1.bf16.msra.mxu0 %v1788
        %1837 = vmatprep.subr.bf16.mxu0 0
        %1838 = vmatpush1.bf16.msra.mxu0 %v1790
        %1839 = vmatprep.subr.bf16.mxu0 0
        %1840 = vmatpush1.bf16.msra.mxu0 %v1792
        %1841 = vmatprep.subr.bf16.mxu0 0
        %1842 = vmatpush1.bf16.msra.mxu0 %v1794
        %1843 = vmatprep.subr.bf16.mxu0 0
        %1844 = vmatpush1.bf16.msra.mxu0 %v1796
        %1845 = vmatprep.subr.bf16.mxu0 0
        %1846 = vmatpush1.bf16.msra.mxu0 %v1798
        %1847 = vmatprep.subr.bf16.mxu0 0
        %1848 = vmatpush1.bf16.msra.mxu0 %v1800
        %1849 = vmatprep.subr.bf16.mxu0 0
        %1850 = vmatpush1.bf16.msra.mxu0 %v1802
        %1851 = vmatprep.subr.bf16.mxu0 0
        %1852 = vmatpush1.bf16.msra.mxu0 %v1804
        %1853 = vmatprep.subr.bf16.mxu0 0
        %1854 = vmatpush1.bf16.msra.mxu0 %v1806
        %1855 = vmatprep.mubr.bf16.mxu0 %v1744
        %1856 = vmatmul.mubr.bf16.gmra.mrb[0].mxu0 %v1743
        %v1857 = vpop.f32.mrb[0].mxu0
        %v1858 = vadd.f32 0.0, %v1857
        %v1859 = vpop.f32.mrb[0].mxu0
        %v1860 = vpop.f32.mrb[0].mxu0
        %v1861 = vadd.f32 0.0, %v1860
        %v1862 = vpop.f32.mrb[0].mxu0
        %1863 = vmatprep.mubr.bf16.mxu0 %v1746
        %1864 = vmatmul.mubr.bf16.gmra.mrb[0].mxu0 %v1745
        %v1865 = vpop.f32.mrb[0].mxu0
        %v1866 = vadd.f32 0.0, %v1865
        %v1867 = vpop.f32.mrb[0].mxu0
        %v1868 = vpop.f32.mrb[0].mxu0
        %v1869 = vadd.f32 0.0, %v1868
        %v1870 = vpop.f32.mrb[0].mxu0
        %1871 = vmatprep.mubr.bf16.mxu0 %v1748
        %1872 = vmatmul.mubr.bf16.gmra.mrb[0].mxu0 %v1747
        %v1873 = vpop.f32.mrb[0].mxu0
        %v1874 = vadd.f32 0.0, %v1873
        %v1875 = vpop.f32.mrb[0].mxu0
        %v1876 = vpop.f32.mrb[0].mxu0
        %v1877 = vadd.f32 0.0, %v1876
        %v1878 = vpop.f32.mrb[0].mxu0
        %1879 = vmatprep.mubr.bf16.mxu0 %v1750
        %1880 = vmatmul.mubr.bf16.gmra.mrb[0].mxu0 %v1749
        %v1881 = vpop.f32.mrb[0].mxu0
        %v1882 = vadd.f32 0.0, %v1881
        %v1883 = vpop.f32.mrb[0].mxu0
        %v1884 = vpop.f32.mrb[0].mxu0
        %v1885 = vadd.f32 0.0, %v1884
        %v1886 = vpop.f32.mrb[0].mxu0
        %1887 = vmatprep.mubr.bf16.mxu0 %v1752
        %1888 = vmatmul.mubr.bf16.gmra.mrb[0].mxu0 %v1751
        %v1889 = vpop.f32.mrb[0].mxu0
        %v1890 = vadd.f32 0.0, %v1889
        %v1891 = vpop.f32.mrb[0].mxu0
        %v1892 = vpop.f32.mrb[0].mxu0
        %v1893 = vadd.f32 0.0, %v1892
        %v1894 = vpop.f32.mrb[0].mxu0
        %1895 = vmatprep.mubr.bf16.mxu0 %v1754
        %1896 = vmatmul.mubr.bf16.gmra.mrb[0].mxu0 %v1753
        %v1897 = vpop.f32.mrb[0].mxu0
        %v1898 = vadd.f32 0.0, %v1897
        %v1899 = vpop.f32.mrb[0].mxu0
        %v1900 = vpop.f32.mrb[0].mxu0
        %v1901 = vadd.f32 0.0, %v1900
        %v1902 = vpop.f32.mrb[0].mxu0
        %1903 = vmatprep.mubr.bf16.mxu0 %v1756
        %1904 = vmatmul.mubr.bf16.gmra.mrb[0].mxu0 %v1755
        %v1905 = vpop.f32.mrb[0].mxu0
        %v1906 = vadd.f32 0.0, %v1905
        %v1907 = vpop.f32.mrb[0].mxu0
        %v1908 = vpop.f32.mrb[0].mxu0
        %v1909 = vadd.f32 0.0, %v1908
        %v1910 = vpop.f32.mrb[0].mxu0
        %1911 = vmatprep.mubr.bf16.mxu0 %v1758
        %1912 = vmatmul.mubr.bf16.gmra.mrb[0].mxu0 %v1757
        %v1913 = vpop.f32.mrb[0].mxu0
        %v1914 = vadd.f32 0.0, %v1913
        %v1915 = vpop.f32.mrb[0].mxu0
        %v1916 = vpop.f32.mrb[0].mxu0
        %v1917 = vadd.f32 0.0, %v1916
        %v1918 = vpop.f32.mrb[0].mxu0
        %1919 = vdwg.mxu0
        %1928 = vrot.lane.b32.xlu0 %v1293, 112
        %v1929 = vpop.permute.xlu0 %1928
        %1930 = vrot.lane.b32.xlu0 %v1294, 112
        %v1931 = vpop.permute.xlu0 %1930
        %1932 = vrot.lane.b32.xlu0 %v1295, 112
        %v1933 = vpop.permute.xlu0 %1932
        %1934 = vrot.lane.b32.xlu0 %v1296, 112
        %v1935 = vpop.permute.xlu0 %1934
        %1936 = vrot.lane.b32.xlu0 %v1297, 112
        %v1937 = vpop.permute.xlu0 %1936
        %1938 = vrot.lane.b32.xlu0 %v1298, 112
        %v1939 = vpop.permute.xlu0 %1938
        %1940 = vrot.lane.b32.xlu0 %v1299, 112
        %v1941 = vpop.permute.xlu0 %1940
        %1942 = vrot.lane.b32.xlu0 %v1300, 112
        %v1943 = vpop.permute.xlu0 %1942
        %1944 = vrot.lane.b32.xlu0 %v1301, 112
        %v1945 = vpop.permute.xlu0 %1944
        %1946 = vrot.lane.b32.xlu0 %v1302, 112
        %v1947 = vpop.permute.xlu0 %1946
        %1948 = vrot.lane.b32.xlu0 %v1303, 112
        %v1949 = vpop.permute.xlu0 %1948
        %1950 = vrot.lane.b32.xlu0 %v1304, 112
        %v1951 = vpop.permute.xlu0 %1950
        %1952 = vrot.lane.b32.xlu0 %v1305, 112
        %v1953 = vpop.permute.xlu0 %1952
        %1954 = vrot.lane.b32.xlu0 %v1306, 112
        %v1955 = vpop.permute.xlu0 %1954
        %1956 = vrot.lane.b32.xlu0 %v1307, 112
        %v1957 = vpop.permute.xlu0 %1956
        %1958 = vrot.lane.b32.xlu0 %v1308, 112
        %v1959 = vpop.permute.xlu0 %1958
        %1960 = vrot.lane.b32.xlu0 %v1309, 112
        %v1961 = vpop.permute.xlu0 %1960
        %1962 = vrot.lane.b32.xlu0 %v1310, 112
        %v1963 = vpop.permute.xlu0 %1962
        %1964 = vrot.lane.b32.xlu0 %v1311, 112
        %v1965 = vpop.permute.xlu0 %1964
        %1966 = vrot.lane.b32.xlu0 %v1312, 112
        %v1967 = vpop.permute.xlu0 %1966
        %1968 = vrot.lane.b32.xlu0 %v1313, 112
        %v1969 = vpop.permute.xlu0 %1968
        %1970 = vrot.lane.b32.xlu0 %v1314, 112
        %v1971 = vpop.permute.xlu0 %1970
        %1972 = vrot.lane.b32.xlu0 %v1315, 112
        %v1973 = vpop.permute.xlu0 %1972
        %1974 = vrot.lane.b32.xlu0 %v1316, 112
        %v1975 = vpop.permute.xlu0 %1974
        %v1977 = vsel %vm1317, %v1929, 0
        %v1980 = vsel %vm1317, %v1931, 0
        %v1983 = vsel %vm1317, %v1933, 0
        %v1986 = vsel %vm1317, %v1935, 0
        %v1989 = vsel %vm1317, %v1937, 0
        %v1992 = vsel %vm1317, %v1939, 0
        %v1995 = vsel %vm1317, %v1941, 0
        %v1998 = vsel %vm1317, %v1943, 0
        %v2001 = vsel %vm1317, %v1945, 0
        %v2004 = vsel %vm1317, %v1947, 0
        %v2007 = vsel %vm1317, %v1949, 0
        %v2010 = vsel %vm1317, %v1951, 0
        %v2013 = vsel %vm1317, %v1953, 0
        %v2016 = vsel %vm1317, %v1955, 0
        %v2019 = vsel %vm1317, %v1957, 0
        %v2022 = vsel %vm1317, %v1959, 0
        %v2025 = vsel %vm1317, %v1961, 0
        %v2028 = vsel %vm1317, %v1963, 0
        %v2031 = vsel %vm1317, %v1965, 0
        %v2034 = vsel %vm1317, %v1967, 0
        %v2037 = vsel %vm1317, %v1969, 0
        %v2040 = vsel %vm1317, %v1971, 0
        %v2043 = vsel %vm1317, %v1973, 0
        %v2046 = vsel %vm1317, %v1975, 0
        %2048 = vmatprep.subr.bf16.mxu0 0
        %2049 = vmatpush1.bf16.xpose.msra.mxu0 %v2001
        %2050 = vmatprep.subr.bf16.mxu0 0
        %2051 = vmatpush1.bf16.xpose.msra.mxu0 %v2004
        %2052 = vmatprep.subr.bf16.mxu0 0
        %2053 = vmatpush1.bf16.xpose.msra.mxu0 %v2007
        %2054 = vmatprep.subr.bf16.mxu0 0
        %2055 = vmatpush1.bf16.xpose.msra.mxu0 %v2010
        %2056 = vmatprep.subr.bf16.mxu0 0
        %2057 = vmatpush1.bf16.xpose.msra.mxu0 %v2013
        %2058 = vmatprep.subr.bf16.mxu0 0
        %2059 = vmatpush1.bf16.xpose.msra.mxu0 %v2016
        %2060 = vmatprep.subr.bf16.mxu0 0
        %2061 = vmatpush1.bf16.xpose.msra.mxu0 %v2019
        %2062 = vmatprep.subr.bf16.mxu0 0
        %2063 = vmatpush1.bf16.xpose.msra.mxu0 %v2022
        %2064 = vmatprep.subr.bf16.mxu0 0
        %2065 = vmatpush1.bf16.xpose.msra.mxu0 %v2025
        %2066 = vmatprep.subr.bf16.mxu0 0
        %2067 = vmatpush1.bf16.xpose.msra.mxu0 %v2028
        %2068 = vmatprep.subr.bf16.mxu0 0
        %2069 = vmatpush1.bf16.xpose.msra.mxu0 %v2031
        %2070 = vmatprep.subr.bf16.mxu0 0
        %2071 = vmatpush1.bf16.xpose.msra.mxu0 %v2034
        %2072 = vmatprep.subr.bf16.mxu0 0
        %2073 = vmatpush1.bf16.xpose.msra.mxu0 %v2037
        %2074 = vmatprep.subr.bf16.mxu0 0
        %2075 = vmatpush1.bf16.xpose.msra.mxu0 %v2040
        %2076 = vmatprep.subr.bf16.mxu0 0
        %2077 = vmatpush1.bf16.xpose.msra.mxu0 %v2043
        %2078 = vmatprep.subr.bf16.mxu0 0
        %2079 = vmatpush1.bf16.xpose.msra.mxu0 %v2046
        %2080 = vmatprep.mubr.bf16.mxu0 0
        %2081 = vmatmul.mubr.bf16.gmra.mrb[0].mxu0 %v1977
        %v2082 = vpop.f32.mrb[0].mxu0
        %v2083 = vadd.f32 0.0, %v2082
        %v2084 = vpop.f32.mrb[0].mxu0
        %v2085 = vadd.f32 0.0, %v2084
        %v2086 = vpop.f32.mrb[0].mxu0
        %v2087 = vadd.f32 0.0, %v2086
        %v2088 = vpop.f32.mrb[0].mxu0
        %v2089 = vadd.f32 0.0, %v2088
        %2090 = vmatprep.mubr.bf16.mxu0 0
        %2091 = vmatmul.mubr.bf16.gmra.mrb[0].mxu0 %v1980
        %v2092 = vpop.f32.mrb[0].mxu0
        %v2093 = vadd.f32 0.0, %v2092
        %v2094 = vpop.f32.mrb[0].mxu0
        %v2095 = vadd.f32 0.0, %v2094
        %v2096 = vpop.f32.mrb[0].mxu0
        %v2097 = vadd.f32 0.0, %v2096
        %v2098 = vpop.f32.mrb[0].mxu0
        %v2099 = vadd.f32 0.0, %v2098
        %2100 = vmatprep.mubr.bf16.mxu0 0
        %2101 = vmatmul.mubr.bf16.gmra.mrb[0].mxu0 %v1983
        %v2102 = vpop.f32.mrb[0].mxu0
        %v2103 = vadd.f32 0.0, %v2102
        %v2104 = vpop.f32.mrb[0].mxu0
        %v2105 = vadd.f32 0.0, %v2104
        %v2106 = vpop.f32.mrb[0].mxu0
        %v2107 = vadd.f32 0.0, %v2106
        %v2108 = vpop.f32.mrb[0].mxu0
        %v2109 = vadd.f32 0.0, %v2108
        %2110 = vmatprep.mubr.bf16.mxu0 0
        %2111 = vmatmul.mubr.bf16.gmra.mrb[0].mxu0 %v1986
        %v2112 = vpop.f32.mrb[0].mxu0
        %v2113 = vadd.f32 0.0, %v2112
        %v2114 = vpop.f32.mrb[0].mxu0
        %v2115 = vadd.f32 0.0, %v2114
        %v2116 = vpop.f32.mrb[0].mxu0
        %v2117 = vadd.f32 0.0, %v2116
        %v2118 = vpop.f32.mrb[0].mxu0
        %v2119 = vadd.f32 0.0, %v2118
        %2120 = vmatprep.mubr.bf16.mxu0 0
        %2121 = vmatmul.mubr.bf16.gmra.mrb[0].mxu0 %v1989
        %v2122 = vpop.f32.mrb[0].mxu0
        %v2123 = vadd.f32 0.0, %v2122
        %v2124 = vpop.f32.mrb[0].mxu0
        %v2125 = vadd.f32 0.0, %v2124
        %v2126 = vpop.f32.mrb[0].mxu0
        %v2127 = vadd.f32 0.0, %v2126
        %v2128 = vpop.f32.mrb[0].mxu0
        %v2129 = vadd.f32 0.0, %v2128
        %2130 = vmatprep.mubr.bf16.mxu0 0
        %2131 = vmatmul.mubr.bf16.gmra.mrb[0].mxu0 %v1992
        %v2132 = vpop.f32.mrb[0].mxu0
        %v2133 = vadd.f32 0.0, %v2132
        %v2134 = vpop.f32.mrb[0].mxu0
        %v2135 = vadd.f32 0.0, %v2134
        %v2136 = vpop.f32.mrb[0].mxu0
        %v2137 = vadd.f32 0.0, %v2136
        %v2138 = vpop.f32.mrb[0].mxu0
        %v2139 = vadd.f32 0.0, %v2138
        %2140 = vmatprep.mubr.bf16.mxu0 0
        %2141 = vmatmul.mubr.bf16.gmra.mrb[0].mxu0 %v1995
        %v2142 = vpop.f32.mrb[0].mxu0
        %v2143 = vadd.f32 0.0, %v2142
        %v2144 = vpop.f32.mrb[0].mxu0
        %v2145 = vadd.f32 0.0, %v2144
        %v2146 = vpop.f32.mrb[0].mxu0
        %v2147 = vadd.f32 0.0, %v2146
        %v2148 = vpop.f32.mrb[0].mxu0
        %v2149 = vadd.f32 0.0, %v2148
        %2150 = vmatprep.mubr.bf16.mxu0 0
        %2151 = vmatmul.mubr.bf16.gmra.mrb[0].mxu0 %v1998
        %v2152 = vpop.f32.mrb[0].mxu0
        %v2153 = vadd.f32 0.0, %v2152
        %v2154 = vpop.f32.mrb[0].mxu0
        %v2155 = vadd.f32 0.0, %v2154
        %v2156 = vpop.f32.mrb[0].mxu0
        %v2157 = vadd.f32 0.0, %v2156
        %v2158 = vpop.f32.mrb[0].mxu0
        %v2159 = vadd.f32 0.0, %v2158
        %2160 = vdwg.mxu0
        %v2161 = vmax.f32 %v2083, %v2085
        %2162 = vmax.xlane.f32.xlu0 %v2161
        %v2163 = vpop.xlane.xlu0 %2162
        %v2164 = vmax.f32 %v2087, %v2089
        %2165 = vmax.xlane.f32.xlu0 %v2164
        %v2166 = vpop.xlane.xlu0 %2165
        %v2167 = vmax.f32 %v2093, %v2095
        %2168 = vmax.xlane.f32.xlu0 %v2167
        %v2169 = vpop.xlane.xlu0 %2168
        %v2170 = vmax.f32 %v2097, %v2099
        %2171 = vmax.xlane.f32.xlu0 %v2170
        %v2172 = vpop.xlane.xlu0 %2171
        %v2173 = vmax.f32 %v2103, %v2105
        %2174 = vmax.xlane.f32.xlu0 %v2173
        %v2175 = vpop.xlane.xlu0 %2174
        %v2176 = vmax.f32 %v2107, %v2109
        %2177 = vmax.xlane.f32.xlu0 %v2176
        %v2178 = vpop.xlane.xlu0 %2177
        %v2179 = vmax.f32 %v2113, %v2115
        %2180 = vmax.xlane.f32.xlu0 %v2179
        %v2181 = vpop.xlane.xlu0 %2180
        %v2182 = vmax.f32 %v2117, %v2119
        %2183 = vmax.xlane.f32.xlu0 %v2182
        %v2184 = vpop.xlane.xlu0 %2183
        %v2185 = vmax.f32 %v2123, %v2125
        %2186 = vmax.xlane.f32.xlu0 %v2185
        %v2187 = vpop.xlane.xlu0 %2186
        %v2188 = vmax.f32 %v2127, %v2129
        %2189 = vmax.xlane.f32.xlu0 %v2188
        %v2190 = vpop.xlane.xlu0 %2189
        %v2191 = vmax.f32 %v2133, %v2135
        %2192 = vmax.xlane.f32.xlu0 %v2191
        %v2193 = vpop.xlane.xlu0 %2192
        %v2194 = vmax.f32 %v2137, %v2139
        %2195 = vmax.xlane.f32.xlu0 %v2194
        %v2196 = vpop.xlane.xlu0 %2195
        %v2197 = vmax.f32 %v2143, %v2145
        %2198 = vmax.xlane.f32.xlu0 %v2197
        %v2199 = vpop.xlane.xlu0 %2198
        %v2200 = vmax.f32 %v2147, %v2149
        %2201 = vmax.xlane.f32.xlu0 %v2200
        %v2202 = vpop.xlane.xlu0 %2201
        %v2203 = vmax.f32 %v2153, %v2155
        %2204 = vmax.xlane.f32.xlu0 %v2203
        %v2205 = vpop.xlane.xlu0 %2204
        %v2206 = vmax.f32 %v2157, %v2159
        %2207 = vmax.xlane.f32.xlu0 %v2206
        %v2208 = vpop.xlane.xlu0 %2207
        %v2209 = vsub.f32 %v2083, %v2163
        %v2210 = vsub.f32 %v2085, %v2163
        %v2211 = vsub.f32 %v2087, %v2166
        %v2212 = vsub.f32 %v2089, %v2166
        %v2213 = vsub.f32 %v2093, %v2169
        %v2214 = vsub.f32 %v2095, %v2169
        %v2215 = vsub.f32 %v2097, %v2172
        %v2216 = vsub.f32 %v2099, %v2172
        %v2217 = vsub.f32 %v2103, %v2175
        %v2218 = vsub.f32 %v2105, %v2175
        %v2219 = vsub.f32 %v2107, %v2178
        %v2220 = vsub.f32 %v2109, %v2178
        %v2221 = vsub.f32 %v2113, %v2181
        %v2222 = vsub.f32 %v2115, %v2181
        %v2223 = vsub.f32 %v2117, %v2184
        %v2224 = vsub.f32 %v2119, %v2184
        %v2225 = vsub.f32 %v2123, %v2187
        %v2226 = vsub.f32 %v2125, %v2187
        %v2227 = vsub.f32 %v2127, %v2190
        %v2228 = vsub.f32 %v2129, %v2190
        %v2229 = vsub.f32 %v2133, %v2193
        %v2230 = vsub.f32 %v2135, %v2193
        %v2231 = vsub.f32 %v2137, %v2196
        %v2232 = vsub.f32 %v2139, %v2196
        %v2233 = vsub.f32 %v2143, %v2199
        %v2234 = vsub.f32 %v2145, %v2199
        %v2235 = vsub.f32 %v2147, %v2202
        %v2236 = vsub.f32 %v2149, %v2202
        %v2237 = vsub.f32 %v2153, %v2205
        %v2238 = vsub.f32 %v2155, %v2205
        %v2239 = vsub.f32 %v2157, %v2208
        %v2240 = vsub.f32 %v2159, %v2208
        %v2241 = vmul.f32 %v2209, 1.442695
        %v2242 = vpow.pop %v2241
        %v2243 = vmul.f32 %v2210, 1.442695
        %v2244 = vpow.pop %v2243
        %v2245 = vmul.f32 %v2211, 1.442695
        %v2246 = vpow.pop %v2245
        %v2247 = vmul.f32 %v2212, 1.442695
        %v2248 = vpow.pop %v2247
        %v2249 = vmul.f32 %v2213, 1.442695
        %v2250 = vpow.pop %v2249
        %v2251 = vmul.f32 %v2214, 1.442695
        %v2252 = vpow.pop %v2251
        %v2253 = vmul.f32 %v2215, 1.442695
        %v2254 = vpow.pop %v2253
        %v2255 = vmul.f32 %v2216, 1.442695
        %v2256 = vpow.pop %v2255
        %v2257 = vmul.f32 %v2217, 1.442695
        %v2258 = vpow.pop %v2257
        %v2259 = vmul.f32 %v2218, 1.442695
        %v2260 = vpow.pop %v2259
        %v2261 = vmul.f32 %v2219, 1.442695
        %v2262 = vpow.pop %v2261
        %v2263 = vmul.f32 %v2220, 1.442695
        %v2264 = vpow.pop %v2263
        %v2265 = vmul.f32 %v2221, 1.442695
        %v2266 = vpow.pop %v2265
        %v2267 = vmul.f32 %v2222, 1.442695
        %v2268 = vpow.pop %v2267
        %v2269 = vmul.f32 %v2223, 1.442695
        %v2270 = vpow.pop %v2269
        %v2271 = vmul.f32 %v2224, 1.442695
        %v2272 = vpow.pop %v2271
        %v2273 = vmul.f32 %v2225, 1.442695
        %v2274 = vpow.pop %v2273
        %v2275 = vmul.f32 %v2226, 1.442695
        %v2276 = vpow.pop %v2275
        %v2277 = vmul.f32 %v2227, 1.442695
        %v2278 = vpow.pop %v2277
        %v2279 = vmul.f32 %v2228, 1.442695
        %v2280 = vpow.pop %v2279
        %v2281 = vmul.f32 %v2229, 1.442695
        %v2282 = vpow.pop %v2281
        %v2283 = vmul.f32 %v2230, 1.442695
        %v2284 = vpow.pop %v2283
        %v2285 = vmul.f32 %v2231, 1.442695
        %v2286 = vpow.pop %v2285
        %v2287 = vmul.f32 %v2232, 1.442695
        %v2288 = vpow.pop %v2287
        %v2289 = vmul.f32 %v2233, 1.442695
        %v2290 = vpow.pop %v2289
        %v2291 = vmul.f32 %v2234, 1.442695
        %v2292 = vpow.pop %v2291
        %v2293 = vmul.f32 %v2235, 1.442695
        %v2294 = vpow.pop %v2293
        %v2295 = vmul.f32 %v2236, 1.442695
        %v2296 = vpow.pop %v2295
        %v2297 = vmul.f32 %v2237, 1.442695
        %v2298 = vpow.pop %v2297
        %v2299 = vmul.f32 %v2238, 1.442695
        %v2300 = vpow.pop %v2299
        %v2301 = vmul.f32 %v2239, 1.442695
        %v2302 = vpow.pop %v2301
        %v2303 = vmul.f32 %v2240, 1.442695
        %v2304 = vpow.pop %v2303
        %v2305 = vadd.f32 %v2242, %v2244
        %2306 = vadd.xlane.f32.xlu0 %v2305
        %v2307 = vpop.xlane.xlu0 %2306
        %v2308 = vadd.f32 %v2246, %v2248
        %2309 = vadd.xlane.f32.xlu0 %v2308
        %v2310 = vpop.xlane.xlu0 %2309
        %v2311 = vadd.f32 %v2250, %v2252
        %2312 = vadd.xlane.f32.xlu0 %v2311
        %v2313 = vpop.xlane.xlu0 %2312
        %v2314 = vadd.f32 %v2254, %v2256
        %2315 = vadd.xlane.f32.xlu0 %v2314
        %v2316 = vpop.xlane.xlu0 %2315
        %v2317 = vadd.f32 %v2258, %v2260
        %2318 = vadd.xlane.f32.xlu0 %v2317
        %v2319 = vpop.xlane.xlu0 %2318
        %v2320 = vadd.f32 %v2262, %v2264
        %2321 = vadd.xlane.f32.xlu0 %v2320
        %v2322 = vpop.xlane.xlu0 %2321
        %v2323 = vadd.f32 %v2266, %v2268
        %2324 = vadd.xlane.f32.xlu0 %v2323
        %v2325 = vpop.xlane.xlu0 %2324
        %v2326 = vadd.f32 %v2270, %v2272
        %2327 = vadd.xlane.f32.xlu0 %v2326
        %v2328 = vpop.xlane.xlu0 %2327
        %v2329 = vadd.f32 %v2274, %v2276
        %2330 = vadd.xlane.f32.xlu0 %v2329
        %v2331 = vpop.xlane.xlu0 %2330
        %v2332 = vadd.f32 %v2278, %v2280
        %2333 = vadd.xlane.f32.xlu0 %v2332
        %v2334 = vpop.xlane.xlu0 %2333
        %v2335 = vadd.f32 %v2282, %v2284
        %2336 = vadd.xlane.f32.xlu0 %v2335
        %v2337 = vpop.xlane.xlu0 %2336
        %v2338 = vadd.f32 %v2286, %v2288
        %2339 = vadd.xlane.f32.xlu0 %v2338
        %v2340 = vpop.xlane.xlu0 %2339
        %v2341 = vadd.f32 %v2290, %v2292
        %2342 = vadd.xlane.f32.xlu0 %v2341
        %v2343 = vpop.xlane.xlu0 %2342
        %v2344 = vadd.f32 %v2294, %v2296
        %2345 = vadd.xlane.f32.xlu0 %v2344
        %v2346 = vpop.xlane.xlu0 %2345
        %v2347 = vadd.f32 %v2298, %v2300
        %2348 = vadd.xlane.f32.xlu0 %v2347
        %v2349 = vpop.xlane.xlu0 %2348
        %v2350 = vadd.f32 %v2302, %v2304
        %2351 = vadd.xlane.f32.xlu0 %v2350
        %v2352 = vpop.xlane.xlu0 %2351
        %v2353 = vrcp.pop %v2307
        %v2354 = vrcp.pop %v2310
        %v2355 = vrcp.pop %v2313
        %v2356 = vrcp.pop %v2316
        %v2357 = vrcp.pop %v2319
        %v2358 = vrcp.pop %v2322
        %v2359 = vrcp.pop %v2325
        %v2360 = vrcp.pop %v2328
        %v2361 = vrcp.pop %v2331
        %v2362 = vrcp.pop %v2334
        %v2363 = vrcp.pop %v2337
        %v2364 = vrcp.pop %v2340
        %v2365 = vrcp.pop %v2343
        %v2366 = vrcp.pop %v2346
        %v2367 = vrcp.pop %v2349
        %v2368 = vrcp.pop %v2352
        %v2369 = vmul.f32 %v2242, %v2353
        %v2370 = vmul.f32 %v2244, %v2353
        %v2371 = vmul.f32 %v2246, %v2354
        %v2372 = vmul.f32 %v2248, %v2354
        %v2373 = vmul.f32 %v2250, %v2355
        %v2374 = vmul.f32 %v2252, %v2355
        %v2375 = vmul.f32 %v2254, %v2356
        %v2376 = vmul.f32 %v2256, %v2356
        %v2377 = vmul.f32 %v2258, %v2357
        %v2378 = vmul.f32 %v2260, %v2357
        %v2379 = vmul.f32 %v2262, %v2358
        %v2380 = vmul.f32 %v2264, %v2358
        %v2381 = vmul.f32 %v2266, %v2359
        %v2382 = vmul.f32 %v2268, %v2359
        %v2383 = vmul.f32 %v2270, %v2360
        %v2384 = vmul.f32 %v2272, %v2360
        %v2385 = vmul.f32 %v2274, %v2361
        %v2386 = vmul.f32 %v2276, %v2361
        %v2387 = vmul.f32 %v2278, %v2362
        %v2388 = vmul.f32 %v2280, %v2362
        %v2389 = vmul.f32 %v2282, %v2363
        %v2390 = vmul.f32 %v2284, %v2363
        %v2391 = vmul.f32 %v2286, %v2364
        %v2392 = vmul.f32 %v2288, %v2364
        %v2393 = vmul.f32 %v2290, %v2365
        %v2394 = vmul.f32 %v2292, %v2365
        %v2395 = vmul.f32 %v2294, %v2366
        %v2396 = vmul.f32 %v2296, %v2366
        %v2397 = vmul.f32 %v2298, %v2367
        %v2398 = vmul.f32 %v2300, %v2367
        %v2399 = vmul.f32 %v2302, %v2368
        %v2400 = vmul.f32 %v2304, %v2368
        %v2401 = vpack.c.bf16 %v2371, %v2369
        %v2402 = vpack.c.bf16 %v2372, %v2370
        %v2403 = vpack.c.bf16 %v2375, %v2373
        %v2404 = vpack.c.bf16 %v2376, %v2374
        %v2405 = vpack.c.bf16 %v2379, %v2377
        %v2406 = vpack.c.bf16 %v2380, %v2378
        %v2407 = vpack.c.bf16 %v2383, %v2381
        %v2408 = vpack.c.bf16 %v2384, %v2382
        %v2409 = vpack.c.bf16 %v2387, %v2385
        %v2410 = vpack.c.bf16 %v2388, %v2386
        %v2411 = vpack.c.bf16 %v2391, %v2389
        %v2412 = vpack.c.bf16 %v2392, %v2390
        %v2413 = vpack.c.bf16 %v2395, %v2393
        %v2414 = vpack.c.bf16 %v2396, %v2394
        %v2415 = vpack.c.bf16 %v2399, %v2397
        %v2416 = vpack.c.bf16 %v2400, %v2398
        %2417 = vrot.lane.b32.xlu0 %v1301, 80
        %v2418 = vpop.permute.xlu0 %2417
        %2419 = vrot.lane.b32.xlu0 %v1302, 80
        %v2420 = vpop.permute.xlu0 %2419
        %2421 = vrot.lane.b32.xlu0 %v1303, 80
        %v2422 = vpop.permute.xlu0 %2421
        %2423 = vrot.lane.b32.xlu0 %v1304, 80
        %v2424 = vpop.permute.xlu0 %2423
        %2425 = vrot.lane.b32.xlu0 %v1305, 80
        %v2426 = vpop.permute.xlu0 %2425
        %2427 = vrot.lane.b32.xlu0 %v1306, 80
        %v2428 = vpop.permute.xlu0 %2427
        %2429 = vrot.lane.b32.xlu0 %v1307, 80
        %v2430 = vpop.permute.xlu0 %2429
        %2431 = vrot.lane.b32.xlu0 %v1308, 80
        %v2432 = vpop.permute.xlu0 %2431
        %2433 = vrot.lane.b32.xlu0 %v1309, 80
        %v2434 = vpop.permute.xlu0 %2433
        %2435 = vrot.lane.b32.xlu0 %v1310, 80
        %v2436 = vpop.permute.xlu0 %2435
        %2437 = vrot.lane.b32.xlu0 %v1311, 80
        %v2438 = vpop.permute.xlu0 %2437
        %2439 = vrot.lane.b32.xlu0 %v1312, 80
        %v2440 = vpop.permute.xlu0 %2439
        %2441 = vrot.lane.b32.xlu0 %v1313, 80
        %v2442 = vpop.permute.xlu0 %2441
        %2443 = vrot.lane.b32.xlu0 %v1314, 80
        %v2444 = vpop.permute.xlu0 %2443
        %2445 = vrot.lane.b32.xlu0 %v1315, 80
        %v2446 = vpop.permute.xlu0 %2445
        %2447 = vrot.lane.b32.xlu0 %v1316, 80
        %v2448 = vpop.permute.xlu0 %2447
        %2465 = vmatprep.subr.bf16.mxu0 0
        %2466 = vmatpush1.bf16.msra.mxu0 %v2418
        %2467 = vmatprep.subr.bf16.mxu0 0
        %2468 = vmatpush1.bf16.msra.mxu0 %v2420
        %2469 = vmatprep.subr.bf16.mxu0 0
        %2470 = vmatpush1.bf16.msra.mxu0 %v2422
        %2471 = vmatprep.subr.bf16.mxu0 0
        %2472 = vmatpush1.bf16.msra.mxu0 %v2424
        %2473 = vmatprep.subr.bf16.mxu0 0
        %2474 = vmatpush1.bf16.msra.mxu0 %v2426
        %2475 = vmatprep.subr.bf16.mxu0 0
        %2476 = vmatpush1.bf16.msra.mxu0 %v2428
        %2477 = vmatprep.subr.bf16.mxu0 0
        %2478 = vmatpush1.bf16.msra.mxu0 %v2430
        %2479 = vmatprep.subr.bf16.mxu0 0
        %2480 = vmatpush1.bf16.msra.mxu0 %v2432
        %2481 = vmatprep.subr.bf16.mxu0 0
        %2482 = vmatpush1.bf16.msra.mxu0 %v2434
        %2483 = vmatprep.subr.bf16.mxu0 0
        %2484 = vmatpush1.bf16.msra.mxu0 %v2436
        %2485 = vmatprep.subr.bf16.mxu0 0
        %2486 = vmatpush1.bf16.msra.mxu0 %v2438
        %2487 = vmatprep.subr.bf16.mxu0 0
        %2488 = vmatpush1.bf16.msra.mxu0 %v2440
        %2489 = vmatprep.subr.bf16.mxu0 0
        %2490 = vmatpush1.bf16.msra.mxu0 %v2442
        %2491 = vmatprep.subr.bf16.mxu0 0
        %2492 = vmatpush1.bf16.msra.mxu0 %v2444
        %2493 = vmatprep.subr.bf16.mxu0 0
        %2494 = vmatpush1.bf16.msra.mxu0 %v2446
        %2495 = vmatprep.subr.bf16.mxu0 0
        %2496 = vmatpush1.bf16.msra.mxu0 %v2448
        %2497 = vmatprep.mubr.bf16.mxu0 %v2402
        %2498 = vmatmul.mubr.bf16.gmra.mrb[0].mxu0 %v2401
        %v2499 = vpop.f32.mrb[0].mxu0
        %v2500 = vadd.f32 0.0, %v2499
        %v2501 = vpop.f32.mrb[0].mxu0
        %v2502 = vpop.f32.mrb[0].mxu0
        %v2503 = vadd.f32 0.0, %v2502
        %v2504 = vpop.f32.mrb[0].mxu0
        %2505 = vmatprep.mubr.bf16.mxu0 %v2404
        %2506 = vmatmul.mubr.bf16.gmra.mrb[0].mxu0 %v2403
        %v2507 = vpop.f32.mrb[0].mxu0
        %v2508 = vadd.f32 0.0, %v2507
        %v2509 = vpop.f32.mrb[0].mxu0
        %v2510 = vpop.f32.mrb[0].mxu0
        %v2511 = vadd.f32 0.0, %v2510
        %v2512 = vpop.f32.mrb[0].mxu0
        %2513 = vmatprep.mubr.bf16.mxu0 %v2406
        %2514 = vmatmul.mubr.bf16.gmra.mrb[0].mxu0 %v2405
        %v2515 = vpop.f32.mrb[0].mxu0
        %v2516 = vadd.f32 0.0, %v2515
        %v2517 = vpop.f32.mrb[0].mxu0
        %v2518 = vpop.f32.mrb[0].mxu0
        %v2519 = vadd.f32 0.0, %v2518
        %v2520 = vpop.f32.mrb[0].mxu0
        %2521 = vmatprep.mubr.bf16.mxu0 %v2408
        %2522 = vmatmul.mubr.bf16.gmra.mrb[0].mxu0 %v2407
        %v2523 = vpop.f32.mrb[0].mxu0
        %v2524 = vadd.f32 0.0, %v2523
        %v2525 = vpop.f32.mrb[0].mxu0
        %v2526 = vpop.f32.mrb[0].mxu0
        %v2527 = vadd.f32 0.0, %v2526
        %v2528 = vpop.f32.mrb[0].mxu0
        %2529 = vmatprep.mubr.bf16.mxu0 %v2410
        %2530 = vmatmul.mubr.bf16.gmra.mrb[0].mxu0 %v2409
        %v2531 = vpop.f32.mrb[0].mxu0
        %v2532 = vadd.f32 0.0, %v2531
        %v2533 = vpop.f32.mrb[0].mxu0
        %v2534 = vpop.f32.mrb[0].mxu0
        %v2535 = vadd.f32 0.0, %v2534
        %v2536 = vpop.f32.mrb[0].mxu0
        %2537 = vmatprep.mubr.bf16.mxu0 %v2412
        %2538 = vmatmul.mubr.bf16.gmra.mrb[0].mxu0 %v2411
        %v2539 = vpop.f32.mrb[0].mxu0
        %v2540 = vadd.f32 0.0, %v2539
        %v2541 = vpop.f32.mrb[0].mxu0
        %v2542 = vpop.f32.mrb[0].mxu0
        %v2543 = vadd.f32 0.0, %v2542
        %v2544 = vpop.f32.mrb[0].mxu0
        %2545 = vmatprep.mubr.bf16.mxu0 %v2414
        %2546 = vmatmul.mubr.bf16.gmra.mrb[0].mxu0 %v2413
        %v2547 = vpop.f32.mrb[0].mxu0
        %v2548 = vadd.f32 0.0, %v2547
        %v2549 = vpop.f32.mrb[0].mxu0
        %v2550 = vpop.f32.mrb[0].mxu0
        %v2551 = vadd.f32 0.0, %v2550
        %v2552 = vpop.f32.mrb[0].mxu0
        %2553 = vmatprep.mubr.bf16.mxu0 %v2416
        %2554 = vmatmul.mubr.bf16.gmra.mrb[0].mxu0 %v2415
        %v2555 = vpop.f32.mrb[0].mxu0
        %v2556 = vadd.f32 0.0, %v2555
        %v2557 = vpop.f32.mrb[0].mxu0
        %v2558 = vpop.f32.mrb[0].mxu0
        %v2559 = vadd.f32 0.0, %v2558
        %v2560 = vpop.f32.mrb[0].mxu0
        %2561 = vdwg.mxu0
        %2578 = vrot.lane.b32.xlu0 %v2500, 16
        %v2579 = vpop.permute.xlu0 %2578
        %2580 = vrot.lane.b32.xlu0 %v2503, 16
        %v2581 = vpop.permute.xlu0 %2580
        %2582 = vrot.lane.b32.xlu0 %v2508, 16
        %v2583 = vpop.permute.xlu0 %2582
        %2584 = vrot.lane.b32.xlu0 %v2511, 16
        %v2585 = vpop.permute.xlu0 %2584
        %2586 = vrot.lane.b32.xlu0 %v2516, 16
        %v2587 = vpop.permute.xlu0 %2586
        %2588 = vrot.lane.b32.xlu0 %v2519, 16
        %v2589 = vpop.permute.xlu0 %2588
        %2590 = vrot.lane.b32.xlu0 %v2524, 16
        %v2591 = vpop.permute.xlu0 %2590
        %2592 = vrot.lane.b32.xlu0 %v2527, 16
        %v2593 = vpop.permute.xlu0 %2592
        %2594 = vrot.lane.b32.xlu0 %v2532, 16
        %v2595 = vpop.permute.xlu0 %2594
        %2596 = vrot.lane.b32.xlu0 %v2535, 16
        %v2597 = vpop.permute.xlu0 %2596
        %2598 = vrot.lane.b32.xlu0 %v2540, 16
        %v2599 = vpop.permute.xlu0 %2598
        %2600 = vrot.lane.b32.xlu0 %v2543, 16
        %v2601 = vpop.permute.xlu0 %2600
        %2602 = vrot.lane.b32.xlu0 %v2548, 16
        %v2603 = vpop.permute.xlu0 %2602
        %2604 = vrot.lane.b32.xlu0 %v2551, 16
        %v2605 = vpop.permute.xlu0 %2604
        %2606 = vrot.lane.b32.xlu0 %v2556, 16
        %v2607 = vpop.permute.xlu0 %2606
        %2608 = vrot.lane.b32.xlu0 %v2559, 16
        %v2609 = vpop.permute.xlu0 %2608
        %v2626 = vsel %vm1317, %v1858, %v2579
        %v2627 = vsel %vm1317, %v1861, %v2581
        %v2628 = vsel %vm1317, %v1866, %v2583
        %v2629 = vsel %vm1317, %v1869, %v2585
        %v2630 = vsel %vm1317, %v1874, %v2587
        %v2631 = vsel %vm1317, %v1877, %v2589
        %v2632 = vsel %vm1317, %v1882, %v2591
        %v2633 = vsel %vm1317, %v1885, %v2593
        %v2634 = vsel %vm1317, %v1890, %v2595
        %v2635 = vsel %vm1317, %v1893, %v2597
        %v2636 = vsel %vm1317, %v1898, %v2599
        %v2637 = vsel %vm1317, %v1901, %v2601
        %v2638 = vsel %vm1317, %v1906, %v2603
        %v2639 = vsel %vm1317, %v1909, %v2605
        %v2640 = vsel %vm1317, %v1914, %v2607
        %v2641 = vsel %vm1317, %v1917, %v2609
        %v2642 = vld [vmem:[%s5] sm:$0xf]
        %v2643 = vld [vmem:[%s5 + $0x4] sm:$0xf]
        %v2644 = vld [vmem:[%s5 + $0x8] sm:$0xf]
        %v2645 = vld [vmem:[%s5 + $0xc] sm:$0xf]
        %v2646 = vpack.c.bf16 %v2627, %v2626
        %v2647 = vpack.c.bf16 %v2629, %v2628
        %v2648 = vpack.c.bf16 %v2631, %v2630
        %v2649 = vpack.c.bf16 %v2633, %v2632
        %v2650 = vpack.c.bf16 %v2635, %v2634
        %v2651 = vpack.c.bf16 %v2637, %v2636
        %v2652 = vpack.c.bf16 %v2639, %v2638
        %v2653 = vpack.c.bf16 %v2641, %v2640
        %v2654 = vlaneseq
        %v2655 = vshrl.u32 %v2654, 7
        %v2656 = vsub.s32 2, %v2655
        %v2657 = vrot.slane %v470, %v2656
        %v2662 = vunpack.c.l.b16 %v2642
        %v2663 = vunpack.c.l.b16 %v2643
        %v2664 = vunpack.c.l.b16 %v2644
        %v2665 = vunpack.c.l.b16 %v2645
        %v2666 = vpack.c.b16 %v2663, %v2662
        %v2667 = vpack.c.b16 %v2665, %v2664
        %v2671 = vsel %vm923, %v2646, 0
        %v2674 = vsel %vm923, %v2647, 0
        %v2677 = vsel %vm923, %v2648, 0
        %v2680 = vsel %vm923, %v2649, 0
        %v2683 = vsel %vm923, %v2650, 0
        %v2686 = vsel %vm923, %v2651, 0
        %v2689 = vsel %vm923, %v2652, 0
        %v2692 = vsel %vm923, %v2653, 0
        %2694 = vmatprep.subr.bf16.mxu0 0
        %2695 = vmatpush1.bf16.msra.mxu0 %v2666
        %2696 = vmatprep.subr.bf16.mxu0 0
        %2697 = vmatpush1.bf16.msra.mxu0 %v2667
        %2698 = vmatprep.subr.bf16.mxu0 0
        %2699 = vmatpush1.bf16.msra.mxu0 0
        %2700 = vmatprep.subr.bf16.mxu0 0
        %2701 = vmatpush1.bf16.msra.mxu0 0
        %2702 = vmatprep.subr.bf16.mxu0 0
        %2703 = vmatpush1.bf16.msra.mxu0 0
        %2704 = vmatprep.subr.bf16.mxu0 0
        %2705 = vmatpush1.bf16.msra.mxu0 0
        %2706 = vmatprep.subr.bf16.mxu0 0
        %2707 = vmatpush1.bf16.msra.mxu0 0
        %2708 = vmatprep.subr.bf16.mxu0 0
        %2709 = vmatpush1.bf16.msra.mxu0 0
        %2710 = vmatprep.subr.bf16.mxu0 0
        %2711 = vmatpush1.bf16.msra.mxu0 0
        %2712 = vmatprep.subr.bf16.mxu0 0
        %2713 = vmatpush1.bf16.msra.mxu0 0
        %2714 = vmatprep.subr.bf16.mxu0 0
        %2715 = vmatpush1.bf16.msra.mxu0 0
        %2716 = vmatprep.subr.bf16.mxu0 0
        %2717 = vmatpush1.bf16.msra.mxu0 0
        %2718 = vmatprep.subr.bf16.mxu0 0
        %2719 = vmatpush1.bf16.msra.mxu0 0
        %2720 = vmatprep.subr.bf16.mxu0 0
        %2721 = vmatpush1.bf16.msra.mxu0 0
        %2722 = vmatprep.subr.bf16.mxu0 0
        %2723 = vmatpush1.bf16.msra.mxu0 0
        %2724 = vmatprep.subr.bf16.mxu0 0
        %2725 = vmatpush1.bf16.msra.mxu0 0
        %2726 = vmatprep.mubr.bf16.mxu0 0
        %2727 = vmatmul.mubr.bf16.gmra.mrb[0].mxu0 %v2671
        %v2728 = vpop.f32.mrb[0].mxu0
        %v2729 = vadd.f32 %v2657, %v2728
        %v2730 = vpop.f32.mrb[0].mxu0
        %v2731 = vpop.f32.mrb[0].mxu0
        %v2732 = vadd.f32 %v2657, %v2731
        %v2733 = vpop.f32.mrb[0].mxu0
        %2734 = vmatprep.mubr.bf16.mxu0 0
        %2735 = vmatmul.mubr.bf16.gmra.mrb[0].mxu0 %v2674
        %v2736 = vpop.f32.mrb[0].mxu0
        %v2737 = vadd.f32 %v2657, %v2736
        %v2738 = vpop.f32.mrb[0].mxu0
        %v2739 = vpop.f32.mrb[0].mxu0
        %v2740 = vadd.f32 %v2657, %v2739
        %v2741 = vpop.f32.mrb[0].mxu0
        %2742 = vmatprep.mubr.bf16.mxu0 0
        %2743 = vmatmul.mubr.bf16.gmra.mrb[0].mxu0 %v2677
        %v2744 = vpop.f32.mrb[0].mxu0
        %v2745 = vadd.f32 %v2657, %v2744
        %v2746 = vpop.f32.mrb[0].mxu0
        %v2747 = vpop.f32.mrb[0].mxu0
        %v2748 = vadd.f32 %v2657, %v2747
        %v2749 = vpop.f32.mrb[0].mxu0
        %2750 = vmatprep.mubr.bf16.mxu0 0
        %2751 = vmatmul.mubr.bf16.gmra.mrb[0].mxu0 %v2680
        %v2752 = vpop.f32.mrb[0].mxu0
        %v2753 = vadd.f32 %v2657, %v2752
        %v2754 = vpop.f32.mrb[0].mxu0
        %v2755 = vpop.f32.mrb[0].mxu0
        %v2756 = vadd.f32 %v2657, %v2755
        %v2757 = vpop.f32.mrb[0].mxu0
        %2758 = vmatprep.mubr.bf16.mxu0 0
        %2759 = vmatmul.mubr.bf16.gmra.mrb[0].mxu0 %v2683
        %v2760 = vpop.f32.mrb[0].mxu0
        %v2761 = vadd.f32 %v2657, %v2760
        %v2762 = vpop.f32.mrb[0].mxu0
        %v2763 = vpop.f32.mrb[0].mxu0
        %v2764 = vadd.f32 %v2657, %v2763
        %v2765 = vpop.f32.mrb[0].mxu0
        %2766 = vmatprep.mubr.bf16.mxu0 0
        %2767 = vmatmul.mubr.bf16.gmra.mrb[0].mxu0 %v2686
        %v2768 = vpop.f32.mrb[0].mxu0
        %v2769 = vadd.f32 %v2657, %v2768
        %v2770 = vpop.f32.mrb[0].mxu0
        %v2771 = vpop.f32.mrb[0].mxu0
        %v2772 = vadd.f32 %v2657, %v2771
        %v2773 = vpop.f32.mrb[0].mxu0
        %2774 = vmatprep.mubr.bf16.mxu0 0
        %2775 = vmatmul.mubr.bf16.gmra.mrb[0].mxu0 %v2689
        %v2776 = vpop.f32.mrb[0].mxu0
        %v2777 = vadd.f32 %v2657, %v2776
        %v2778 = vpop.f32.mrb[0].mxu0
        %v2779 = vpop.f32.mrb[0].mxu0
        %v2780 = vadd.f32 %v2657, %v2779
        %v2781 = vpop.f32.mrb[0].mxu0
        %2782 = vmatprep.mubr.bf16.mxu0 0
        %2783 = vmatmul.mubr.bf16.gmra.mrb[0].mxu0 %v2692
        %v2784 = vpop.f32.mrb[0].mxu0
        %v2785 = vadd.f32 %v2657, %v2784
        %v2786 = vpop.f32.mrb[0].mxu0
        %v2787 = vpop.f32.mrb[0].mxu0
        %v2788 = vadd.f32 %v2657, %v2787
        %v2789 = vpop.f32.mrb[0].mxu0
        %2790 = vdwg.mxu0
        %v2791 = vadd.f32 %v576, %v2729
        %v2792 = vadd.f32 %v579, %v2732
        %v2793 = vadd.f32 %v584, %v2737
        %v2794 = vadd.f32 %v587, %v2740
        %v2795 = vadd.f32 %v592, %v2745
        %v2796 = vadd.f32 %v595, %v2748
        %v2797 = vadd.f32 %v600, %v2753
        %v2798 = vadd.f32 %v603, %v2756
        %v2799 = vadd.f32 %v608, %v2761
        %v2800 = vadd.f32 %v611, %v2764
        %v2801 = vadd.f32 %v616, %v2769
        %v2802 = vadd.f32 %v619, %v2772
        %v2803 = vadd.f32 %v624, %v2777
        %v2804 = vadd.f32 %v627, %v2780
        %v2805 = vadd.f32 %v632, %v2785
        %v2806 = vadd.f32 %v635, %v2788
        %v2807 = vsel %vm923, %v2791, 0.0
        %2808 = vadd.xlane.f32.xlu0 %v2807
        %v2809 = vpop.xlane.xlu0 %2808
        %v2810 = vsel %vm923, %v2792, 0.0
        %2811 = vadd.xlane.f32.xlu0 %v2810
        %v2812 = vpop.xlane.xlu0 %2811
        %v2813 = vsel %vm923, %v2793, 0.0
        %2814 = vadd.xlane.f32.xlu0 %v2813
        %v2815 = vpop.xlane.xlu0 %2814
        %v2816 = vsel %vm923, %v2794, 0.0
        %2817 = vadd.xlane.f32.xlu0 %v2816
        %v2818 = vpop.xlane.xlu0 %2817
        %v2819 = vsel %vm923, %v2795, 0.0
        %2820 = vadd.xlane.f32.xlu0 %v2819
        %v2821 = vpop.xlane.xlu0 %2820
        %v2822 = vsel %vm923, %v2796, 0.0
        %2823 = vadd.xlane.f32.xlu0 %v2822
        %v2824 = vpop.xlane.xlu0 %2823
        %v2825 = vsel %vm923, %v2797, 0.0
        %2826 = vadd.xlane.f32.xlu0 %v2825
        %v2827 = vpop.xlane.xlu0 %2826
        %v2828 = vsel %vm923, %v2798, 0.0
        %2829 = vadd.xlane.f32.xlu0 %v2828
        %v2830 = vpop.xlane.xlu0 %2829
        %v2831 = vsel %vm923, %v2799, 0.0
        %2832 = vadd.xlane.f32.xlu0 %v2831
        %v2833 = vpop.xlane.xlu0 %2832
        %v2834 = vsel %vm923, %v2800, 0.0
        %2835 = vadd.xlane.f32.xlu0 %v2834
        %v2836 = vpop.xlane.xlu0 %2835
        %v2837 = vsel %vm923, %v2801, 0.0
        %2838 = vadd.xlane.f32.xlu0 %v2837
        %v2839 = vpop.xlane.xlu0 %2838
        %v2840 = vsel %vm923, %v2802, 0.0
        %2841 = vadd.xlane.f32.xlu0 %v2840
        %v2842 = vpop.xlane.xlu0 %2841
        %v2843 = vsel %vm923, %v2803, 0.0
        %2844 = vadd.xlane.f32.xlu0 %v2843
        %v2845 = vpop.xlane.xlu0 %2844
        %v2846 = vsel %vm923, %v2804, 0.0
        %2847 = vadd.xlane.f32.xlu0 %v2846
        %v2848 = vpop.xlane.xlu0 %2847
        %v2849 = vsel %vm923, %v2805, 0.0
        %2850 = vadd.xlane.f32.xlu0 %v2849
        %v2851 = vpop.xlane.xlu0 %2850
        %v2852 = vsel %vm923, %v2806, 0.0
        %2853 = vadd.xlane.f32.xlu0 %v2852
        %v2854 = vpop.xlane.xlu0 %2853
        %v2855 = vrcp.pop 32.0
        %v2856 = vmul.f32 %v2809, %v2855
        %v2857 = vmul.f32 %v2812, %v2855
        %v2858 = vmul.f32 %v2815, %v2855
        %v2859 = vmul.f32 %v2818, %v2855
        %v2860 = vmul.f32 %v2821, %v2855
        %v2861 = vmul.f32 %v2824, %v2855
        %v2862 = vmul.f32 %v2827, %v2855
        %v2863 = vmul.f32 %v2830, %v2855
        %v2864 = vmul.f32 %v2833, %v2855
        %v2865 = vmul.f32 %v2836, %v2855
        %v2866 = vmul.f32 %v2839, %v2855
        %v2867 = vmul.f32 %v2842, %v2855
        %v2868 = vmul.f32 %v2845, %v2855
        %v2869 = vmul.f32 %v2848, %v2855
        %v2870 = vmul.f32 %v2851, %v2855
        %v2871 = vmul.f32 %v2854, %v2855
        %v2872 = vsub.f32 %v2791, %v2856
        %v2873 = vsub.f32 %v2792, %v2857
        %v2874 = vsub.f32 %v2793, %v2858
        %v2875 = vsub.f32 %v2794, %v2859
        %v2876 = vsub.f32 %v2795, %v2860
        %v2877 = vsub.f32 %v2796, %v2861
        %v2878 = vsub.f32 %v2797, %v2862
        %v2879 = vsub.f32 %v2798, %v2863
        %v2880 = vsub.f32 %v2799, %v2864
        %v2881 = vsub.f32 %v2800, %v2865
        %v2882 = vsub.f32 %v2801, %v2866
        %v2883 = vsub.f32 %v2802, %v2867
        %v2884 = vsub.f32 %v2803, %v2868
        %v2885 = vsub.f32 %v2804, %v2869
        %v2886 = vsub.f32 %v2805, %v2870
        %v2887 = vsub.f32 %v2806, %v2871
        %v2888 = vmul.f32 %v2872, %v2872
        %v2889 = vmul.f32 %v2873, %v2873
        %v2890 = vmul.f32 %v2874, %v2874
        %v2891 = vmul.f32 %v2875, %v2875
        %v2892 = vmul.f32 %v2876, %v2876
        %v2893 = vmul.f32 %v2877, %v2877
        %v2894 = vmul.f32 %v2878, %v2878
        %v2895 = vmul.f32 %v2879, %v2879
        %v2896 = vmul.f32 %v2880, %v2880
        %v2897 = vmul.f32 %v2881, %v2881
        %v2898 = vmul.f32 %v2882, %v2882
        %v2899 = vmul.f32 %v2883, %v2883
        %v2900 = vmul.f32 %v2884, %v2884
        %v2901 = vmul.f32 %v2885, %v2885
        %v2902 = vmul.f32 %v2886, %v2886
        %v2903 = vmul.f32 %v2887, %v2887
        %v2904 = vsel %vm923, %v2888, 0.0
        %2905 = vadd.xlane.f32.xlu0 %v2904
        %v2906 = vpop.xlane.xlu0 %2905
        %v2907 = vsel %vm923, %v2889, 0.0
        %2908 = vadd.xlane.f32.xlu0 %v2907
        %v2909 = vpop.xlane.xlu0 %2908
        %v2910 = vsel %vm923, %v2890, 0.0
        %2911 = vadd.xlane.f32.xlu0 %v2910
        %v2912 = vpop.xlane.xlu0 %2911
        %v2913 = vsel %vm923, %v2891, 0.0
        %2914 = vadd.xlane.f32.xlu0 %v2913
        %v2915 = vpop.xlane.xlu0 %2914
        %v2916 = vsel %vm923, %v2892, 0.0
        %2917 = vadd.xlane.f32.xlu0 %v2916
        %v2918 = vpop.xlane.xlu0 %2917
        %v2919 = vsel %vm923, %v2893, 0.0
        %2920 = vadd.xlane.f32.xlu0 %v2919
        %v2921 = vpop.xlane.xlu0 %2920
        %v2922 = vsel %vm923, %v2894, 0.0
        %2923 = vadd.xlane.f32.xlu0 %v2922
        %v2924 = vpop.xlane.xlu0 %2923
        %v2925 = vsel %vm923, %v2895, 0.0
        %2926 = vadd.xlane.f32.xlu0 %v2925
        %v2927 = vpop.xlane.xlu0 %2926
        %v2928 = vsel %vm923, %v2896, 0.0
        %2929 = vadd.xlane.f32.xlu0 %v2928
        %v2930 = vpop.xlane.xlu0 %2929
        %v2931 = vsel %vm923, %v2897, 0.0
        %2932 = vadd.xlane.f32.xlu0 %v2931
        %v2933 = vpop.xlane.xlu0 %2932
        %v2934 = vsel %vm923, %v2898, 0.0
        %2935 = vadd.xlane.f32.xlu0 %v2934
        %v2936 = vpop.xlane.xlu0 %2935
        %v2937 = vsel %vm923, %v2899, 0.0
        %2938 = vadd.xlane.f32.xlu0 %v2937
        %v2939 = vpop.xlane.xlu0 %2938
        %v2940 = vsel %vm923, %v2900, 0.0
        %2941 = vadd.xlane.f32.xlu0 %v2940
        %v2942 = vpop.xlane.xlu0 %2941
        %v2943 = vsel %vm923, %v2901, 0.0
        %2944 = vadd.xlane.f32.xlu0 %v2943
        %v2945 = vpop.xlane.xlu0 %2944
        %v2946 = vsel %vm923, %v2902, 0.0
        %2947 = vadd.xlane.f32.xlu0 %v2946
        %v2948 = vpop.xlane.xlu0 %2947
        %v2949 = vsel %vm923, %v2903, 0.0
        %2950 = vadd.xlane.f32.xlu0 %v2949
        %v2951 = vpop.xlane.xlu0 %2950
        %v2952 = vmul.f32 %v2906, %v2855
        %v2953 = vmul.f32 %v2909, %v2855
        %v2954 = vmul.f32 %v2912, %v2855
        %v2955 = vmul.f32 %v2915, %v2855
        %v2956 = vmul.f32 %v2918, %v2855
        %v2957 = vmul.f32 %v2921, %v2855
        %v2958 = vmul.f32 %v2924, %v2855
        %v2959 = vmul.f32 %v2927, %v2855
        %v2960 = vmul.f32 %v2930, %v2855
        %v2961 = vmul.f32 %v2933, %v2855
        %v2962 = vmul.f32 %v2936, %v2855
        %v2963 = vmul.f32 %v2939, %v2855
        %v2964 = vmul.f32 %v2942, %v2855
        %v2965 = vmul.f32 %v2945, %v2855
        %v2966 = vmul.f32 %v2948, %v2855
        %v2967 = vmul.f32 %v2951, %v2855
        %v2968 = vadd.f32 %v2952, 1e-05
        %v2969 = vadd.f32 %v2953, 1e-05
        %v2970 = vadd.f32 %v2954, 1e-05
        %v2971 = vadd.f32 %v2955, 1e-05
        %v2972 = vadd.f32 %v2956, 1e-05
        %v2973 = vadd.f32 %v2957, 1e-05
        %v2974 = vadd.f32 %v2958, 1e-05
        %v2975 = vadd.f32 %v2959, 1e-05
        %v2976 = vadd.f32 %v2960, 1e-05
        %v2977 = vadd.f32 %v2961, 1e-05
        %v2978 = vadd.f32 %v2962, 1e-05
        %v2979 = vadd.f32 %v2963, 1e-05
        %v2980 = vadd.f32 %v2964, 1e-05
        %v2981 = vadd.f32 %v2965, 1e-05
        %v2982 = vadd.f32 %v2966, 1e-05
        %v2983 = vadd.f32 %v2967, 1e-05
        %v2984 = vrsqrt.pop %v2968
        %v2985 = vrsqrt.pop %v2969
        %v2986 = vrsqrt.pop %v2970
        %v2987 = vrsqrt.pop %v2971
        %v2988 = vrsqrt.pop %v2972
        %v2989 = vrsqrt.pop %v2973
        %v2990 = vrsqrt.pop %v2974
        %v2991 = vrsqrt.pop %v2975
        %v2992 = vrsqrt.pop %v2976
        %v2993 = vrsqrt.pop %v2977
        %v2994 = vrsqrt.pop %v2978
        %v2995 = vrsqrt.pop %v2979
        %v2996 = vrsqrt.pop %v2980
        %v2997 = vrsqrt.pop %v2981
        %v2998 = vrsqrt.pop %v2982
        %v2999 = vrsqrt.pop %v2983
        %v3000 = vmul.f32 %v2872, %v2984
        %v3001 = vmul.f32 %v2873, %v2985
        %v3002 = vmul.f32 %v2874, %v2986
        %v3003 = vmul.f32 %v2875, %v2987
        %v3004 = vmul.f32 %v2876, %v2988
        %v3005 = vmul.f32 %v2877, %v2989
        %v3006 = vmul.f32 %v2878, %v2990
        %v3007 = vmul.f32 %v2879, %v2991
        %v3008 = vmul.f32 %v2880, %v2992
        %v3009 = vmul.f32 %v2881, %v2993
        %v3010 = vmul.f32 %v2882, %v2994
        %v3011 = vmul.f32 %v2883, %v2995
        %v3012 = vmul.f32 %v2884, %v2996
        %v3013 = vmul.f32 %v2885, %v2997
        %v3014 = vmul.f32 %v2886, %v2998
        %v3015 = vmul.f32 %v2887, %v2999
        %v3016 = vlaneseq
        %v3017 = vshrl.u32 %v3016, 7
        %v3018 = vsub.s32 3, %v3017
        %v3019 = vrot.slane %v470, %v3018
        %v3020 = vmul.f32 %v3000, %v3019
        %v3021 = vmul.f32 %v3001, %v3019
        %v3022 = vmul.f32 %v3002, %v3019
        %v3023 = vmul.f32 %v3003, %v3019
        %v3024 = vmul.f32 %v3004, %v3019
        %v3025 = vmul.f32 %v3005, %v3019
        %v3026 = vmul.f32 %v3006, %v3019
        %v3027 = vmul.f32 %v3007, %v3019
        %v3028 = vmul.f32 %v3008, %v3019
        %v3029 = vmul.f32 %v3009, %v3019
        %v3030 = vmul.f32 %v3010, %v3019
        %v3031 = vmul.f32 %v3011, %v3019
        %v3032 = vmul.f32 %v3012, %v3019
        %v3033 = vmul.f32 %v3013, %v3019
        %v3034 = vmul.f32 %v3014, %v3019
        %v3035 = vmul.f32 %v3015, %v3019
        %v3036 = vlaneseq
        %v3037 = vshrl.u32 %v3036, 7
        %v3038 = vsub.s32 4, %v3037
        %v3039 = vrot.slane %v470, %v3038
        %v3040 = vadd.f32 %v3020, %v3039
        %v3041 = vadd.f32 %v3021, %v3039
        %v3042 = vadd.f32 %v3022, %v3039
        %v3043 = vadd.f32 %v3023, %v3039
        %v3044 = vadd.f32 %v3024, %v3039
        %v3045 = vadd.f32 %v3025, %v3039
        %v3046 = vadd.f32 %v3026, %v3039
        %v3047 = vadd.f32 %v3027, %v3039
        %v3048 = vadd.f32 %v3028, %v3039
        %v3049 = vadd.f32 %v3029, %v3039
        %v3050 = vadd.f32 %v3030, %v3039
        %v3051 = vadd.f32 %v3031, %v3039
        %v3052 = vadd.f32 %v3032, %v3039
        %v3053 = vadd.f32 %v3033, %v3039
        %v3054 = vadd.f32 %v3034, %v3039
        %v3055 = vadd.f32 %v3035, %v3039
        %v3056 = vld [vmem:[%s6] sm:$0xf]
        %v3057 = vld [vmem:[%s6 + $0x4] sm:$0xf]
        %v3058 = vld [vmem:[%s6 + $0x8] sm:$0xf]
        %v3059 = vld [vmem:[%s6 + $0xc] sm:$0xf]
        %v3060 = vpack.c.bf16 %v3041, %v3040
        %v3061 = vpack.c.bf16 %v3043, %v3042
        %v3062 = vpack.c.bf16 %v3045, %v3044
        %v3063 = vpack.c.bf16 %v3047, %v3046
        %v3064 = vpack.c.bf16 %v3049, %v3048
        %v3065 = vpack.c.bf16 %v3051, %v3050
        %v3066 = vpack.c.bf16 %v3053, %v3052
        %v3067 = vpack.c.bf16 %v3055, %v3054
        %v3068 = vlaneseq
        %v3069 = vshrl.u32 %v3068, 7
        %v3070 = vsub.s32 5, %v3069
        %v3071 = vrot.slane %v470, %v3070
        %v3076 = vunpack.c.l.b16 %v3056
        %v3077 = vunpack.c.l.b16 %v3057
        %v3078 = vunpack.c.l.b16 %v3058
        %v3079 = vunpack.c.l.b16 %v3059
        %v3080 = vpack.c.b16 %v3077, %v3076
        %v3081 = vpack.c.b16 %v3079, %v3078
        %v3085 = vsel %vm923, %v3060, 0
        %v3088 = vsel %vm923, %v3061, 0
        %v3091 = vsel %vm923, %v3062, 0
        %v3094 = vsel %vm923, %v3063, 0
        %v3097 = vsel %vm923, %v3064, 0
        %v3100 = vsel %vm923, %v3065, 0
        %v3103 = vsel %vm923, %v3066, 0
        %v3106 = vsel %vm923, %v3067, 0
        %3108 = vmatprep.subr.bf16.mxu0 0
        %3109 = vmatpush1.bf16.msra.mxu0 %v3080
        %3110 = vmatprep.subr.bf16.mxu0 0
        %3111 = vmatpush1.bf16.msra.mxu0 %v3081
        %3112 = vmatprep.subr.bf16.mxu0 0
        %3113 = vmatpush1.bf16.msra.mxu0 0
        %3114 = vmatprep.subr.bf16.mxu0 0
        %3115 = vmatpush1.bf16.msra.mxu0 0
        %3116 = vmatprep.subr.bf16.mxu0 0
        %3117 = vmatpush1.bf16.msra.mxu0 0
        %3118 = vmatprep.subr.bf16.mxu0 0
        %3119 = vmatpush1.bf16.msra.mxu0 0
        %3120 = vmatprep.subr.bf16.mxu0 0
        %3121 = vmatpush1.bf16.msra.mxu0 0
        %3122 = vmatprep.subr.bf16.mxu0 0
        %3123 = vmatpush1.bf16.msra.mxu0 0
        %3124 = vmatprep.subr.bf16.mxu0 0
        %3125 = vmatpush1.bf16.msra.mxu0 0
        %3126 = vmatprep.subr.bf16.mxu0 0
        %3127 = vmatpush1.bf16.msra.mxu0 0
        %3128 = vmatprep.subr.bf16.mxu0 0
        %3129 = vmatpush1.bf16.msra.mxu0 0
        %3130 = vmatprep.subr.bf16.mxu0 0
        %3131 = vmatpush1.bf16.msra.mxu0 0
        %3132 = vmatprep.subr.bf16.mxu0 0
        %3133 = vmatpush1.bf16.msra.mxu0 0
        %3134 = vmatprep.subr.bf16.mxu0 0
        %3135 = vmatpush1.bf16.msra.mxu0 0
        %3136 = vmatprep.subr.bf16.mxu0 0
        %3137 = vmatpush1.bf16.msra.mxu0 0
        %3138 = vmatprep.subr.bf16.mxu0 0
        %3139 = vmatpush1.bf16.msra.mxu0 0
        %3140 = vmatprep.mubr.bf16.mxu0 0
        %3141 = vmatmul.mubr.bf16.gmra.mrb[0].mxu0 %v3085
        %v3142 = vpop.f32.mrb[0].mxu0
        %v3143 = vadd.f32 %v3071, %v3142
        %v3144 = vpop.f32.mrb[0].mxu0
        %v3145 = vpop.f32.mrb[0].mxu0
        %v3146 = vadd.f32 %v3071, %v3145
        %v3147 = vpop.f32.mrb[0].mxu0
        %3148 = vmatprep.mubr.bf16.mxu0 0
        %3149 = vmatmul.mubr.bf16.gmra.mrb[0].mxu0 %v3088
        %v3150 = vpop.f32.mrb[0].mxu0
        %v3151 = vadd.f32 %v3071, %v3150
        %v3152 = vpop.f32.mrb[0].mxu0
        %v3153 = vpop.f32.mrb[0].mxu0
        %v3154 = vadd.f32 %v3071, %v3153
        %v3155 = vpop.f32.mrb[0].mxu0
        %3156 = vmatprep.mubr.bf16.mxu0 0
        %3157 = vmatmul.mubr.bf16.gmra.mrb[0].mxu0 %v3091
        %v3158 = vpop.f32.mrb[0].mxu0
        %v3159 = vadd.f32 %v3071, %v3158
        %v3160 = vpop.f32.mrb[0].mxu0
        %v3161 = vpop.f32.mrb[0].mxu0
        %v3162 = vadd.f32 %v3071, %v3161
        %v3163 = vpop.f32.mrb[0].mxu0
        %3164 = vmatprep.mubr.bf16.mxu0 0
        %3165 = vmatmul.mubr.bf16.gmra.mrb[0].mxu0 %v3094
        %v3166 = vpop.f32.mrb[0].mxu0
        %v3167 = vadd.f32 %v3071, %v3166
        %v3168 = vpop.f32.mrb[0].mxu0
        %v3169 = vpop.f32.mrb[0].mxu0
        %v3170 = vadd.f32 %v3071, %v3169
        %v3171 = vpop.f32.mrb[0].mxu0
        %3172 = vmatprep.mubr.bf16.mxu0 0
        %3173 = vmatmul.mubr.bf16.gmra.mrb[0].mxu0 %v3097
        %v3174 = vpop.f32.mrb[0].mxu0
        %v3175 = vadd.f32 %v3071, %v3174
        %v3176 = vpop.f32.mrb[0].mxu0
        %v3177 = vpop.f32.mrb[0].mxu0
        %v3178 = vadd.f32 %v3071, %v3177
        %v3179 = vpop.f32.mrb[0].mxu0
        %3180 = vmatprep.mubr.bf16.mxu0 0
        %3181 = vmatmul.mubr.bf16.gmra.mrb[0].mxu0 %v3100
        %v3182 = vpop.f32.mrb[0].mxu0
        %v3183 = vadd.f32 %v3071, %v3182
        %v3184 = vpop.f32.mrb[0].mxu0
        %v3185 = vpop.f32.mrb[0].mxu0
        %v3186 = vadd.f32 %v3071, %v3185
        %v3187 = vpop.f32.mrb[0].mxu0
        %3188 = vmatprep.mubr.bf16.mxu0 0
        %3189 = vmatmul.mubr.bf16.gmra.mrb[0].mxu0 %v3103
        %v3190 = vpop.f32.mrb[0].mxu0
        %v3191 = vadd.f32 %v3071, %v3190
        %v3192 = vpop.f32.mrb[0].mxu0
        %v3193 = vpop.f32.mrb[0].mxu0
        %v3194 = vadd.f32 %v3071, %v3193
        %v3195 = vpop.f32.mrb[0].mxu0
        %3196 = vmatprep.mubr.bf16.mxu0 0
        %3197 = vmatmul.mubr.bf16.gmra.mrb[0].mxu0 %v3106
        %v3198 = vpop.f32.mrb[0].mxu0
        %v3199 = vadd.f32 %v3071, %v3198
        %v3200 = vpop.f32.mrb[0].mxu0
        %v3201 = vpop.f32.mrb[0].mxu0
        %v3202 = vadd.f32 %v3071, %v3201
        %v3203 = vpop.f32.mrb[0].mxu0
        %3204 = vdwg.mxu0
        %v3205 = vmax.f32 %v3143, 0.0
        %v3206 = vmax.f32 %v3146, 0.0
        %v3207 = vmax.f32 %v3151, 0.0
        %v3208 = vmax.f32 %v3154, 0.0
        %v3209 = vmax.f32 %v3159, 0.0
        %v3210 = vmax.f32 %v3162, 0.0
        %v3211 = vmax.f32 %v3167, 0.0
        %v3212 = vmax.f32 %v3170, 0.0
        %v3213 = vmax.f32 %v3175, 0.0
        %v3214 = vmax.f32 %v3178, 0.0
        %v3215 = vmax.f32 %v3183, 0.0
        %v3216 = vmax.f32 %v3186, 0.0
        %v3217 = vmax.f32 %v3191, 0.0
        %v3218 = vmax.f32 %v3194, 0.0
        %v3219 = vmax.f32 %v3199, 0.0
        %v3220 = vmax.f32 %v3202, 0.0
        %v3221 = vld [vmem:[%s7] sm:$0xf]
        %v3222 = vld [vmem:[%s7 + $0x4] sm:$0xf]
        %v3223 = vld [vmem:[%s7 + $0x8] sm:$0xf]
        %v3224 = vld [vmem:[%s7 + $0xc] sm:$0xf]
        %v3225 = vpack.c.bf16 %v3206, %v3205
        %v3226 = vpack.c.bf16 %v3208, %v3207
        %v3227 = vpack.c.bf16 %v3210, %v3209
        %v3228 = vpack.c.bf16 %v3212, %v3211
        %v3229 = vpack.c.bf16 %v3214, %v3213
        %v3230 = vpack.c.bf16 %v3216, %v3215
        %v3231 = vpack.c.bf16 %v3218, %v3217
        %v3232 = vpack.c.bf16 %v3220, %v3219
        %v3233 = vlaneseq
        %v3234 = vshrl.u32 %v3233, 7
        %v3235 = vsub.s32 6, %v3234
        %v3236 = vrot.slane %v470, %v3235
        %v3241 = vunpack.c.l.b16 %v3221
        %v3242 = vunpack.c.l.b16 %v3222
        %v3243 = vunpack.c.l.b16 %v3223
        %v3244 = vunpack.c.l.b16 %v3224
        %v3245 = vpack.c.b16 %v3242, %v3241
        %v3246 = vpack.c.b16 %v3244, %v3243
        %v3250 = vsel %vm923, %v3225, 0
        %v3253 = vsel %vm923, %v3226, 0
        %v3256 = vsel %vm923, %v3227, 0
        %v3259 = vsel %vm923, %v3228, 0
        %v3262 = vsel %vm923, %v3229, 0
        %v3265 = vsel %vm923, %v3230, 0
        %v3268 = vsel %vm923, %v3231, 0
        %v3271 = vsel %vm923, %v3232, 0
        %3273 = vmatprep.subr.bf16.mxu0 0
        %3274 = vmatpush1.bf16.msra.mxu0 %v3245
        %3275 = vmatprep.subr.bf16.mxu0 0
        %3276 = vmatpush1.bf16.msra.mxu0 %v3246
        %3277 = vmatprep.subr.bf16.mxu0 0
        %3278 = vmatpush1.bf16.msra.mxu0 0
        %3279 = vmatprep.subr.bf16.mxu0 0
        %3280 = vmatpush1.bf16.msra.mxu0 0
        %3281 = vmatprep.subr.bf16.mxu0 0
        %3282 = vmatpush1.bf16.msra.mxu0 0
        %3283 = vmatprep.subr.bf16.mxu0 0
        %3284 = vmatpush1.bf16.msra.mxu0 0
        %3285 = vmatprep.subr.bf16.mxu0 0
        %3286 = vmatpush1.bf16.msra.mxu0 0
        %3287 = vmatprep.subr.bf16.mxu0 0
        %3288 = vmatpush1.bf16.msra.mxu0 0
        %3289 = vmatprep.subr.bf16.mxu0 0
        %3290 = vmatpush1.bf16.msra.mxu0 0
        %3291 = vmatprep.subr.bf16.mxu0 0
        %3292 = vmatpush1.bf16.msra.mxu0 0
        %3293 = vmatprep.subr.bf16.mxu0 0
        %3294 = vmatpush1.bf16.msra.mxu0 0
        %3295 = vmatprep.subr.bf16.mxu0 0
        %3296 = vmatpush1.bf16.msra.mxu0 0
        %3297 = vmatprep.subr.bf16.mxu0 0
        %3298 = vmatpush1.bf16.msra.mxu0 0
        %3299 = vmatprep.subr.bf16.mxu0 0
        %3300 = vmatpush1.bf16.msra.mxu0 0
        %3301 = vmatprep.subr.bf16.mxu0 0
        %3302 = vmatpush1.bf16.msra.mxu0 0
        %3303 = vmatprep.subr.bf16.mxu0 0
        %3304 = vmatpush1.bf16.msra.mxu0 0
        %3305 = vmatprep.mubr.bf16.mxu0 0
        %3306 = vmatmul.mubr.bf16.gmra.mrb[0].mxu0 %v3250
        %v3307 = vpop.f32.mrb[0].mxu0
        %v3308 = vadd.f32 %v3236, %v3307
        %v3309 = vpop.f32.mrb[0].mxu0
        %v3310 = vpop.f32.mrb[0].mxu0
        %v3311 = vadd.f32 %v3236, %v3310
        %v3312 = vpop.f32.mrb[0].mxu0
        %3313 = vmatprep.mubr.bf16.mxu0 0
        %3314 = vmatmul.mubr.bf16.gmra.mrb[0].mxu0 %v3253
        %v3315 = vpop.f32.mrb[0].mxu0
        %v3316 = vadd.f32 %v3236, %v3315
        %v3317 = vpop.f32.mrb[0].mxu0
        %v3318 = vpop.f32.mrb[0].mxu0
        %v3319 = vadd.f32 %v3236, %v3318
        %v3320 = vpop.f32.mrb[0].mxu0
        %3321 = vmatprep.mubr.bf16.mxu0 0
        %3322 = vmatmul.mubr.bf16.gmra.mrb[0].mxu0 %v3256
        %v3323 = vpop.f32.mrb[0].mxu0
        %v3324 = vadd.f32 %v3236, %v3323
        %v3325 = vpop.f32.mrb[0].mxu0
        %v3326 = vpop.f32.mrb[0].mxu0
        %v3327 = vadd.f32 %v3236, %v3326
        %v3328 = vpop.f32.mrb[0].mxu0
        %3329 = vmatprep.mubr.bf16.mxu0 0
        %3330 = vmatmul.mubr.bf16.gmra.mrb[0].mxu0 %v3259
        %v3331 = vpop.f32.mrb[0].mxu0
        %v3332 = vadd.f32 %v3236, %v3331
        %v3333 = vpop.f32.mrb[0].mxu0
        %v3334 = vpop.f32.mrb[0].mxu0
        %v3335 = vadd.f32 %v3236, %v3334
        %v3336 = vpop.f32.mrb[0].mxu0
        %3337 = vmatprep.mubr.bf16.mxu0 0
        %3338 = vmatmul.mubr.bf16.gmra.mrb[0].mxu0 %v3262
        %v3339 = vpop.f32.mrb[0].mxu0
        %v3340 = vadd.f32 %v3236, %v3339
        %v3341 = vpop.f32.mrb[0].mxu0
        %v3342 = vpop.f32.mrb[0].mxu0
        %v3343 = vadd.f32 %v3236, %v3342
        %v3344 = vpop.f32.mrb[0].mxu0
        %3345 = vmatprep.mubr.bf16.mxu0 0
        %3346 = vmatmul.mubr.bf16.gmra.mrb[0].mxu0 %v3265
        %v3347 = vpop.f32.mrb[0].mxu0
        %v3348 = vadd.f32 %v3236, %v3347
        %v3349 = vpop.f32.mrb[0].mxu0
        %v3350 = vpop.f32.mrb[0].mxu0
        %v3351 = vadd.f32 %v3236, %v3350
        %v3352 = vpop.f32.mrb[0].mxu0
        %3353 = vmatprep.mubr.bf16.mxu0 0
        %3354 = vmatmul.mubr.bf16.gmra.mrb[0].mxu0 %v3268
        %v3355 = vpop.f32.mrb[0].mxu0
        %v3356 = vadd.f32 %v3236, %v3355
        %v3357 = vpop.f32.mrb[0].mxu0
        %v3358 = vpop.f32.mrb[0].mxu0
        %v3359 = vadd.f32 %v3236, %v3358
        %v3360 = vpop.f32.mrb[0].mxu0
        %3361 = vmatprep.mubr.bf16.mxu0 0
        %3362 = vmatmul.mubr.bf16.gmra.mrb[0].mxu0 %v3271
        %v3363 = vpop.f32.mrb[0].mxu0
        %v3364 = vadd.f32 %v3236, %v3363
        %v3365 = vpop.f32.mrb[0].mxu0
        %v3366 = vpop.f32.mrb[0].mxu0
        %v3367 = vadd.f32 %v3236, %v3366
        %v3368 = vpop.f32.mrb[0].mxu0
        %3369 = vdwg.mxu0
        %v3370 = vadd.f32 %v3040, %v3308
        %v3371 = vadd.f32 %v3041, %v3311
        %v3372 = vadd.f32 %v3042, %v3316
        %v3373 = vadd.f32 %v3043, %v3319
        %v3374 = vadd.f32 %v3044, %v3324
        %v3375 = vadd.f32 %v3045, %v3327
        %v3376 = vadd.f32 %v3046, %v3332
        %v3377 = vadd.f32 %v3047, %v3335
        %v3378 = vadd.f32 %v3048, %v3340
        %v3379 = vadd.f32 %v3049, %v3343
        %v3380 = vadd.f32 %v3050, %v3348
        %v3381 = vadd.f32 %v3051, %v3351
        %v3382 = vadd.f32 %v3052, %v3356
        %v3383 = vadd.f32 %v3053, %v3359
        %v3384 = vadd.f32 %v3054, %v3364
        %v3385 = vadd.f32 %v3055, %v3367
        %v3386 = vsel %vm923, %v3370, 0.0
        %3387 = vadd.xlane.f32.xlu0 %v3386
        %v3388 = vpop.xlane.xlu0 %3387
        %v3389 = vsel %vm923, %v3371, 0.0
        %3390 = vadd.xlane.f32.xlu0 %v3389
        %v3391 = vpop.xlane.xlu0 %3390
        %v3392 = vsel %vm923, %v3372, 0.0
        %3393 = vadd.xlane.f32.xlu0 %v3392
        %v3394 = vpop.xlane.xlu0 %3393
        %v3395 = vsel %vm923, %v3373, 0.0
        %3396 = vadd.xlane.f32.xlu0 %v3395
        %v3397 = vpop.xlane.xlu0 %3396
        %v3398 = vsel %vm923, %v3374, 0.0
        %3399 = vadd.xlane.f32.xlu0 %v3398
        %v3400 = vpop.xlane.xlu0 %3399
        %v3401 = vsel %vm923, %v3375, 0.0
        %3402 = vadd.xlane.f32.xlu0 %v3401
        %v3403 = vpop.xlane.xlu0 %3402
        %v3404 = vsel %vm923, %v3376, 0.0
        %3405 = vadd.xlane.f32.xlu0 %v3404
        %v3406 = vpop.xlane.xlu0 %3405
        %v3407 = vsel %vm923, %v3377, 0.0
        %3408 = vadd.xlane.f32.xlu0 %v3407
        %v3409 = vpop.xlane.xlu0 %3408
        %v3410 = vsel %vm923, %v3378, 0.0
        %3411 = vadd.xlane.f32.xlu0 %v3410
        %v3412 = vpop.xlane.xlu0 %3411
        %v3413 = vsel %vm923, %v3379, 0.0
        %3414 = vadd.xlane.f32.xlu0 %v3413
        %v3415 = vpop.xlane.xlu0 %3414
        %v3416 = vsel %vm923, %v3380, 0.0
        %3417 = vadd.xlane.f32.xlu0 %v3416
        %v3418 = vpop.xlane.xlu0 %3417
        %v3419 = vsel %vm923, %v3381, 0.0
        %3420 = vadd.xlane.f32.xlu0 %v3419
        %v3421 = vpop.xlane.xlu0 %3420
        %v3422 = vsel %vm923, %v3382, 0.0
        %3423 = vadd.xlane.f32.xlu0 %v3422
        %v3424 = vpop.xlane.xlu0 %3423
        %v3425 = vsel %vm923, %v3383, 0.0
        %3426 = vadd.xlane.f32.xlu0 %v3425
        %v3427 = vpop.xlane.xlu0 %3426
        %v3428 = vsel %vm923, %v3384, 0.0
        %3429 = vadd.xlane.f32.xlu0 %v3428
        %v3430 = vpop.xlane.xlu0 %3429
        %v3431 = vsel %vm923, %v3385, 0.0
        %3432 = vadd.xlane.f32.xlu0 %v3431
        %v3433 = vpop.xlane.xlu0 %3432
        %v3434 = vmul.f32 %v3388, %v2855
        %v3435 = vmul.f32 %v3391, %v2855
        %v3436 = vmul.f32 %v3394, %v2855
        %v3437 = vmul.f32 %v3397, %v2855
        %v3438 = vmul.f32 %v3400, %v2855
        %v3439 = vmul.f32 %v3403, %v2855
        %v3440 = vmul.f32 %v3406, %v2855
        %v3441 = vmul.f32 %v3409, %v2855
        %v3442 = vmul.f32 %v3412, %v2855
        %v3443 = vmul.f32 %v3415, %v2855
        %v3444 = vmul.f32 %v3418, %v2855
        %v3445 = vmul.f32 %v3421, %v2855
        %v3446 = vmul.f32 %v3424, %v2855
        %v3447 = vmul.f32 %v3427, %v2855
        %v3448 = vmul.f32 %v3430, %v2855
        %v3449 = vmul.f32 %v3433, %v2855
        %v3450 = vsub.f32 %v3370, %v3434
        %v3451 = vsub.f32 %v3371, %v3435
        %v3452 = vsub.f32 %v3372, %v3436
        %v3453 = vsub.f32 %v3373, %v3437
        %v3454 = vsub.f32 %v3374, %v3438
        %v3455 = vsub.f32 %v3375, %v3439
        %v3456 = vsub.f32 %v3376, %v3440
        %v3457 = vsub.f32 %v3377, %v3441
        %v3458 = vsub.f32 %v3378, %v3442
        %v3459 = vsub.f32 %v3379, %v3443
        %v3460 = vsub.f32 %v3380, %v3444
        %v3461 = vsub.f32 %v3381, %v3445
        %v3462 = vsub.f32 %v3382, %v3446
        %v3463 = vsub.f32 %v3383, %v3447
        %v3464 = vsub.f32 %v3384, %v3448
        %v3465 = vsub.f32 %v3385, %v3449
        %v3466 = vmul.f32 %v3450, %v3450
        %v3467 = vmul.f32 %v3451, %v3451
        %v3468 = vmul.f32 %v3452, %v3452
        %v3469 = vmul.f32 %v3453, %v3453
        %v3470 = vmul.f32 %v3454, %v3454
        %v3471 = vmul.f32 %v3455, %v3455
        %v3472 = vmul.f32 %v3456, %v3456
        %v3473 = vmul.f32 %v3457, %v3457
        %v3474 = vmul.f32 %v3458, %v3458
        %v3475 = vmul.f32 %v3459, %v3459
        %v3476 = vmul.f32 %v3460, %v3460
        %v3477 = vmul.f32 %v3461, %v3461
        %v3478 = vmul.f32 %v3462, %v3462
        %v3479 = vmul.f32 %v3463, %v3463
        %v3480 = vmul.f32 %v3464, %v3464
        %v3481 = vmul.f32 %v3465, %v3465
        %v3482 = vsel %vm923, %v3466, 0.0
        %3483 = vadd.xlane.f32.xlu0 %v3482
        %v3484 = vpop.xlane.xlu0 %3483
        %v3485 = vsel %vm923, %v3467, 0.0
        %3486 = vadd.xlane.f32.xlu0 %v3485
        %v3487 = vpop.xlane.xlu0 %3486
        %v3488 = vsel %vm923, %v3468, 0.0
        %3489 = vadd.xlane.f32.xlu0 %v3488
        %v3490 = vpop.xlane.xlu0 %3489
        %v3491 = vsel %vm923, %v3469, 0.0
        %3492 = vadd.xlane.f32.xlu0 %v3491
        %v3493 = vpop.xlane.xlu0 %3492
        %v3494 = vsel %vm923, %v3470, 0.0
        %3495 = vadd.xlane.f32.xlu0 %v3494
        %v3496 = vpop.xlane.xlu0 %3495
        %v3497 = vsel %vm923, %v3471, 0.0
        %3498 = vadd.xlane.f32.xlu0 %v3497
        %v3499 = vpop.xlane.xlu0 %3498
        %v3500 = vsel %vm923, %v3472, 0.0
        %3501 = vadd.xlane.f32.xlu0 %v3500
        %v3502 = vpop.xlane.xlu0 %3501
        %v3503 = vsel %vm923, %v3473, 0.0
        %3504 = vadd.xlane.f32.xlu0 %v3503
        %v3505 = vpop.xlane.xlu0 %3504
        %v3506 = vsel %vm923, %v3474, 0.0
        %3507 = vadd.xlane.f32.xlu0 %v3506
        %v3508 = vpop.xlane.xlu0 %3507
        %v3509 = vsel %vm923, %v3475, 0.0
        %3510 = vadd.xlane.f32.xlu0 %v3509
        %v3511 = vpop.xlane.xlu0 %3510
        %v3512 = vsel %vm923, %v3476, 0.0
        %3513 = vadd.xlane.f32.xlu0 %v3512
        %v3514 = vpop.xlane.xlu0 %3513
        %v3515 = vsel %vm923, %v3477, 0.0
        %3516 = vadd.xlane.f32.xlu0 %v3515
        %v3517 = vpop.xlane.xlu0 %3516
        %v3518 = vsel %vm923, %v3478, 0.0
        %3519 = vadd.xlane.f32.xlu0 %v3518
        %v3520 = vpop.xlane.xlu0 %3519
        %v3521 = vsel %vm923, %v3479, 0.0
        %3522 = vadd.xlane.f32.xlu0 %v3521
        %v3523 = vpop.xlane.xlu0 %3522
        %v3524 = vsel %vm923, %v3480, 0.0
        %3525 = vadd.xlane.f32.xlu0 %v3524
        %v3526 = vpop.xlane.xlu0 %3525
        %v3527 = vsel %vm923, %v3481, 0.0
        %3528 = vadd.xlane.f32.xlu0 %v3527
        %v3529 = vpop.xlane.xlu0 %3528
        %v3530 = vmul.f32 %v3484, %v2855
        %v3531 = vmul.f32 %v3487, %v2855
        %v3532 = vmul.f32 %v3490, %v2855
        %v3533 = vmul.f32 %v3493, %v2855
        %v3534 = vmul.f32 %v3496, %v2855
        %v3535 = vmul.f32 %v3499, %v2855
        %v3536 = vmul.f32 %v3502, %v2855
        %v3537 = vmul.f32 %v3505, %v2855
        %v3538 = vmul.f32 %v3508, %v2855
        %v3539 = vmul.f32 %v3511, %v2855
        %v3540 = vmul.f32 %v3514, %v2855
        %v3541 = vmul.f32 %v3517, %v2855
        %v3542 = vmul.f32 %v3520, %v2855
        %v3543 = vmul.f32 %v3523, %v2855
        %v3544 = vmul.f32 %v3526, %v2855
        %v3545 = vmul.f32 %v3529, %v2855
        %v3546 = vadd.f32 %v3530, 1e-05
        %v3547 = vadd.f32 %v3531, 1e-05
        %v3548 = vadd.f32 %v3532, 1e-05
        %v3549 = vadd.f32 %v3533, 1e-05
        %v3550 = vadd.f32 %v3534, 1e-05
        %v3551 = vadd.f32 %v3535, 1e-05
        %v3552 = vadd.f32 %v3536, 1e-05
        %v3553 = vadd.f32 %v3537, 1e-05
        %v3554 = vadd.f32 %v3538, 1e-05
        %v3555 = vadd.f32 %v3539, 1e-05
        %v3556 = vadd.f32 %v3540, 1e-05
        %v3557 = vadd.f32 %v3541, 1e-05
        %v3558 = vadd.f32 %v3542, 1e-05
        %v3559 = vadd.f32 %v3543, 1e-05
        %v3560 = vadd.f32 %v3544, 1e-05
        %v3561 = vadd.f32 %v3545, 1e-05
        %v3562 = vrsqrt.pop %v3546
        %v3563 = vrsqrt.pop %v3547
        %v3564 = vrsqrt.pop %v3548
        %v3565 = vrsqrt.pop %v3549
        %v3566 = vrsqrt.pop %v3550
        %v3567 = vrsqrt.pop %v3551
        %v3568 = vrsqrt.pop %v3552
        %v3569 = vrsqrt.pop %v3553
        %v3570 = vrsqrt.pop %v3554
        %v3571 = vrsqrt.pop %v3555
        %v3572 = vrsqrt.pop %v3556
        %v3573 = vrsqrt.pop %v3557
        %v3574 = vrsqrt.pop %v3558
        %v3575 = vrsqrt.pop %v3559
        %v3576 = vrsqrt.pop %v3560
        %v3577 = vrsqrt.pop %v3561
        %v3578 = vmul.f32 %v3450, %v3562
        %v3579 = vmul.f32 %v3451, %v3563
        %v3580 = vmul.f32 %v3452, %v3564
        %v3581 = vmul.f32 %v3453, %v3565
        %v3582 = vmul.f32 %v3454, %v3566
        %v3583 = vmul.f32 %v3455, %v3567
        %v3584 = vmul.f32 %v3456, %v3568
        %v3585 = vmul.f32 %v3457, %v3569
        %v3586 = vmul.f32 %v3458, %v3570
        %v3587 = vmul.f32 %v3459, %v3571
        %v3588 = vmul.f32 %v3460, %v3572
        %v3589 = vmul.f32 %v3461, %v3573
        %v3590 = vmul.f32 %v3462, %v3574
        %v3591 = vmul.f32 %v3463, %v3575
        %v3592 = vmul.f32 %v3464, %v3576
        %v3593 = vmul.f32 %v3465, %v3577
        %v3594 = vlaneseq
        %v3595 = vshrl.u32 %v3594, 7
        %v3596 = vsub.s32 7, %v3595
        %v3597 = vrot.slane %v470, %v3596
        %v3598 = vmul.f32 %v3578, %v3597
        %v3599 = vmul.f32 %v3579, %v3597
        %v3600 = vmul.f32 %v3580, %v3597
        %v3601 = vmul.f32 %v3581, %v3597
        %v3602 = vmul.f32 %v3582, %v3597
        %v3603 = vmul.f32 %v3583, %v3597
        %v3604 = vmul.f32 %v3584, %v3597
        %v3605 = vmul.f32 %v3585, %v3597
        %v3606 = vmul.f32 %v3586, %v3597
        %v3607 = vmul.f32 %v3587, %v3597
        %v3608 = vmul.f32 %v3588, %v3597
        %v3609 = vmul.f32 %v3589, %v3597
        %v3610 = vmul.f32 %v3590, %v3597
        %v3611 = vmul.f32 %v3591, %v3597
        %v3612 = vmul.f32 %v3592, %v3597
        %v3613 = vmul.f32 %v3593, %v3597
        %v3614 = vlaneseq
        %v3615 = vshrl.u32 %v3614, 7
        %v3616 = vsub.s32 0, %v3615
        %v3617 = vrot.slane %v471, %v3616
        %v3618 = vadd.f32 %v3598, %v3617
        %v3619 = vadd.f32 %v3599, %v3617
        %v3620 = vadd.f32 %v3600, %v3617
        %v3621 = vadd.f32 %v3601, %v3617
        %v3622 = vadd.f32 %v3602, %v3617
        %v3623 = vadd.f32 %v3603, %v3617
        %v3624 = vadd.f32 %v3604, %v3617
        %v3625 = vadd.f32 %v3605, %v3617
        %v3626 = vadd.f32 %v3606, %v3617
        %v3627 = vadd.f32 %v3607, %v3617
        %v3628 = vadd.f32 %v3608, %v3617
        %v3629 = vadd.f32 %v3609, %v3617
        %v3630 = vadd.f32 %v3610, %v3617
        %v3631 = vadd.f32 %v3611, %v3617
        %v3632 = vadd.f32 %v3612, %v3617
        %v3633 = vadd.f32 %v3613, %v3617
        %vm3634 = vcmp.ge.f32.partialorder %v3618, 0.0
        %vm3635 = vcmp.ge.f32.partialorder %v3619, 0.0
        %vm3636 = vcmp.ge.f32.partialorder %v3620, 0.0
        %vm3637 = vcmp.ge.f32.partialorder %v3621, 0.0
        %vm3638 = vcmp.ge.f32.partialorder %v3622, 0.0
        %vm3639 = vcmp.ge.f32.partialorder %v3623, 0.0
        %vm3640 = vcmp.ge.f32.partialorder %v3624, 0.0
        %vm3641 = vcmp.ge.f32.partialorder %v3625, 0.0
        %vm3642 = vcmp.ge.f32.partialorder %v3626, 0.0
        %vm3643 = vcmp.ge.f32.partialorder %v3627, 0.0
        %vm3644 = vcmp.ge.f32.partialorder %v3628, 0.0
        %vm3645 = vcmp.ge.f32.partialorder %v3629, 0.0
        %vm3646 = vcmp.ge.f32.partialorder %v3630, 0.0
        %vm3647 = vcmp.ge.f32.partialorder %v3631, 0.0
        %vm3648 = vcmp.ge.f32.partialorder %v3632, 0.0
        %vm3649 = vcmp.ge.f32.partialorder %v3633, 0.0
        %v3650 = vmul.f32 %v3618, 0.01
        %v3651 = vmul.f32 %v3619, 0.01
        %v3652 = vmul.f32 %v3620, 0.01
        %v3653 = vmul.f32 %v3621, 0.01
        %v3654 = vmul.f32 %v3622, 0.01
        %v3655 = vmul.f32 %v3623, 0.01
        %v3656 = vmul.f32 %v3624, 0.01
        %v3657 = vmul.f32 %v3625, 0.01
        %v3658 = vmul.f32 %v3626, 0.01
        %v3659 = vmul.f32 %v3627, 0.01
        %v3660 = vmul.f32 %v3628, 0.01
        %v3661 = vmul.f32 %v3629, 0.01
        %v3662 = vmul.f32 %v3630, 0.01
        %v3663 = vmul.f32 %v3631, 0.01
        %v3664 = vmul.f32 %v3632, 0.01
        %v3665 = vmul.f32 %v3633, 0.01
        %v3666 = vsel %vm3634, %v3618, %v3650
        %v3667 = vsel %vm3635, %v3619, %v3651
        %v3668 = vsel %vm3636, %v3620, %v3652
        %v3669 = vsel %vm3637, %v3621, %v3653
        %v3670 = vsel %vm3638, %v3622, %v3654
        %v3671 = vsel %vm3639, %v3623, %v3655
        %v3672 = vsel %vm3640, %v3624, %v3656
        %v3673 = vsel %vm3641, %v3625, %v3657
        %v3674 = vsel %vm3642, %v3626, %v3658
        %v3675 = vsel %vm3643, %v3627, %v3659
        %v3676 = vsel %vm3644, %v3628, %v3660
        %v3677 = vsel %vm3645, %v3629, %v3661
        %v3678 = vsel %vm3646, %v3630, %v3662
        %v3679 = vsel %vm3647, %v3631, %v3663
        %v3680 = vsel %vm3648, %v3632, %v3664
        %v3681 = vsel %vm3649, %v3633, %v3665
        %v3682 = vld [vmem:[%s8] sm:$0xf]
        %v3683 = vld [vmem:[%s8 + $0x4] sm:$0xf]
        %v3684 = vld [vmem:[%s8 + $0x8] sm:$0xf]
        %v3685 = vld [vmem:[%s8 + $0xc] sm:$0xf]
        %v3686 = vpack.c.bf16 %v3667, %v3666
        %v3687 = vpack.c.bf16 %v3669, %v3668
        %v3688 = vpack.c.bf16 %v3671, %v3670
        %v3689 = vpack.c.bf16 %v3673, %v3672
        %v3690 = vpack.c.bf16 %v3675, %v3674
        %v3691 = vpack.c.bf16 %v3677, %v3676
        %v3692 = vpack.c.bf16 %v3679, %v3678
        %v3693 = vpack.c.bf16 %v3681, %v3680
        %v3694 = vlaneseq
        %v3695 = vshrl.u32 %v3694, 7
        %v3696 = vsub.s32 1, %v3695
        %v3697 = vrot.slane %v471, %v3696
        %v3702 = vunpack.c.l.b16 %v3682
        %v3703 = vunpack.c.l.b16 %v3683
        %v3704 = vunpack.c.l.b16 %v3684
        %v3705 = vunpack.c.l.b16 %v3685
        %v3706 = vpack.c.b16 %v3703, %v3702
        %v3707 = vpack.c.b16 %v3705, %v3704
        %v3711 = vsel %vm923, %v3686, 0
        %v3714 = vsel %vm923, %v3687, 0
        %v3717 = vsel %vm923, %v3688, 0
        %v3720 = vsel %vm923, %v3689, 0
        %v3723 = vsel %vm923, %v3690, 0
        %v3726 = vsel %vm923, %v3691, 0
        %v3729 = vsel %vm923, %v3692, 0
        %v3732 = vsel %vm923, %v3693, 0
        %3734 = vmatprep.subr.bf16.mxu0 0
        %3735 = vmatpush1.bf16.msra.mxu0 %v3706
        %3736 = vmatprep.subr.bf16.mxu0 0
        %3737 = vmatpush1.bf16.msra.mxu0 %v3707
        %3738 = vmatprep.subr.bf16.mxu0 0
        %3739 = vmatpush1.bf16.msra.mxu0 0
        %3740 = vmatprep.subr.bf16.mxu0 0
        %3741 = vmatpush1.bf16.msra.mxu0 0
        %3742 = vmatprep.subr.bf16.mxu0 0
        %3743 = vmatpush1.bf16.msra.mxu0 0
        %3744 = vmatprep.subr.bf16.mxu0 0
        %3745 = vmatpush1.bf16.msra.mxu0 0
        %3746 = vmatprep.subr.bf16.mxu0 0
        %3747 = vmatpush1.bf16.msra.mxu0 0
        %3748 = vmatprep.subr.bf16.mxu0 0
        %3749 = vmatpush1.bf16.msra.mxu0 0
        %3750 = vmatprep.subr.bf16.mxu0 0
        %3751 = vmatpush1.bf16.msra.mxu0 0
        %3752 = vmatprep.subr.bf16.mxu0 0
        %3753 = vmatpush1.bf16.msra.mxu0 0
        %3754 = vmatprep.subr.bf16.mxu0 0
        %3755 = vmatpush1.bf16.msra.mxu0 0
        %3756 = vmatprep.subr.bf16.mxu0 0
        %3757 = vmatpush1.bf16.msra.mxu0 0
        %3758 = vmatprep.subr.bf16.mxu0 0
        %3759 = vmatpush1.bf16.msra.mxu0 0
        %3760 = vmatprep.subr.bf16.mxu0 0
        %3761 = vmatpush1.bf16.msra.mxu0 0
        %3762 = vmatprep.subr.bf16.mxu0 0
        %3763 = vmatpush1.bf16.msra.mxu0 0
        %3764 = vmatprep.subr.bf16.mxu0 0
        %3765 = vmatpush1.bf16.msra.mxu0 0
        %3766 = vmatprep.mubr.bf16.mxu0 0
        %3767 = vmatmul.mubr.bf16.gmra.mrb[0].mxu0 %v3711
        %v3768 = vpop.f32.mrb[0].mxu0
        %v3769 = vadd.f32 %v3697, %v3768
        %v3770 = vpop.f32.mrb[0].mxu0
        %v3771 = vpop.f32.mrb[0].mxu0
        %v3772 = vadd.f32 %v3697, %v3771
        %v3773 = vpop.f32.mrb[0].mxu0
        %3774 = vmatprep.mubr.bf16.mxu0 0
        %3775 = vmatmul.mubr.bf16.gmra.mrb[0].mxu0 %v3714
        %v3776 = vpop.f32.mrb[0].mxu0
        %v3777 = vadd.f32 %v3697, %v3776
        %v3778 = vpop.f32.mrb[0].mxu0
        %v3779 = vpop.f32.mrb[0].mxu0
        %v3780 = vadd.f32 %v3697, %v3779
        %v3781 = vpop.f32.mrb[0].mxu0
        %3782 = vmatprep.mubr.bf16.mxu0 0
        %3783 = vmatmul.mubr.bf16.gmra.mrb[0].mxu0 %v3717
        %v3784 = vpop.f32.mrb[0].mxu0
        %v3785 = vadd.f32 %v3697, %v3784
        %v3786 = vpop.f32.mrb[0].mxu0
        %v3787 = vpop.f32.mrb[0].mxu0
        %v3788 = vadd.f32 %v3697, %v3787
        %v3789 = vpop.f32.mrb[0].mxu0
        %3790 = vmatprep.mubr.bf16.mxu0 0
        %3791 = vmatmul.mubr.bf16.gmra.mrb[0].mxu0 %v3720
        %v3792 = vpop.f32.mrb[0].mxu0
        %v3793 = vadd.f32 %v3697, %v3792
        %v3794 = vpop.f32.mrb[0].mxu0
        %v3795 = vpop.f32.mrb[0].mxu0
        %v3796 = vadd.f32 %v3697, %v3795
        %v3797 = vpop.f32.mrb[0].mxu0
        %3798 = vmatprep.mubr.bf16.mxu0 0
        %3799 = vmatmul.mubr.bf16.gmra.mrb[0].mxu0 %v3723
        %v3800 = vpop.f32.mrb[0].mxu0
        %v3801 = vadd.f32 %v3697, %v3800
        %v3802 = vpop.f32.mrb[0].mxu0
        %v3803 = vpop.f32.mrb[0].mxu0
        %v3804 = vadd.f32 %v3697, %v3803
        %v3805 = vpop.f32.mrb[0].mxu0
        %3806 = vmatprep.mubr.bf16.mxu0 0
        %3807 = vmatmul.mubr.bf16.gmra.mrb[0].mxu0 %v3726
        %v3808 = vpop.f32.mrb[0].mxu0
        %v3809 = vadd.f32 %v3697, %v3808
        %v3810 = vpop.f32.mrb[0].mxu0
        %v3811 = vpop.f32.mrb[0].mxu0
        %v3812 = vadd.f32 %v3697, %v3811
        %v3813 = vpop.f32.mrb[0].mxu0
        %3814 = vmatprep.mubr.bf16.mxu0 0
        %3815 = vmatmul.mubr.bf16.gmra.mrb[0].mxu0 %v3729
        %v3816 = vpop.f32.mrb[0].mxu0
        %v3817 = vadd.f32 %v3697, %v3816
        %v3818 = vpop.f32.mrb[0].mxu0
        %v3819 = vpop.f32.mrb[0].mxu0
        %v3820 = vadd.f32 %v3697, %v3819
        %v3821 = vpop.f32.mrb[0].mxu0
        %3822 = vmatprep.mubr.bf16.mxu0 0
        %3823 = vmatmul.mubr.bf16.gmra.mrb[0].mxu0 %v3732
        %v3824 = vpop.f32.mrb[0].mxu0
        %v3825 = vadd.f32 %v3697, %v3824
        %v3826 = vpop.f32.mrb[0].mxu0
        %v3827 = vpop.f32.mrb[0].mxu0
        %v3828 = vadd.f32 %v3697, %v3827
        %v3829 = vpop.f32.mrb[0].mxu0
        %3830 = vdwg.mxu0
        %vm3831 = vcmp.ge.f32.partialorder %v3769, 0.0
        %vm3832 = vcmp.ge.f32.partialorder %v3772, 0.0
        %vm3833 = vcmp.ge.f32.partialorder %v3777, 0.0
        %vm3834 = vcmp.ge.f32.partialorder %v3780, 0.0
        %vm3835 = vcmp.ge.f32.partialorder %v3785, 0.0
        %vm3836 = vcmp.ge.f32.partialorder %v3788, 0.0
        %vm3837 = vcmp.ge.f32.partialorder %v3793, 0.0
        %vm3838 = vcmp.ge.f32.partialorder %v3796, 0.0
        %vm3839 = vcmp.ge.f32.partialorder %v3801, 0.0
        %vm3840 = vcmp.ge.f32.partialorder %v3804, 0.0
        %vm3841 = vcmp.ge.f32.partialorder %v3809, 0.0
        %vm3842 = vcmp.ge.f32.partialorder %v3812, 0.0
        %vm3843 = vcmp.ge.f32.partialorder %v3817, 0.0
        %vm3844 = vcmp.ge.f32.partialorder %v3820, 0.0
        %vm3845 = vcmp.ge.f32.partialorder %v3825, 0.0
        %vm3846 = vcmp.ge.f32.partialorder %v3828, 0.0
        %v3847 = vmul.f32 %v3769, 0.01
        %v3848 = vmul.f32 %v3772, 0.01
        %v3849 = vmul.f32 %v3777, 0.01
        %v3850 = vmul.f32 %v3780, 0.01
        %v3851 = vmul.f32 %v3785, 0.01
        %v3852 = vmul.f32 %v3788, 0.01
        %v3853 = vmul.f32 %v3793, 0.01
        %v3854 = vmul.f32 %v3796, 0.01
        %v3855 = vmul.f32 %v3801, 0.01
        %v3856 = vmul.f32 %v3804, 0.01
        %v3857 = vmul.f32 %v3809, 0.01
        %v3858 = vmul.f32 %v3812, 0.01
        %v3859 = vmul.f32 %v3817, 0.01
        %v3860 = vmul.f32 %v3820, 0.01
        %v3861 = vmul.f32 %v3825, 0.01
        %v3862 = vmul.f32 %v3828, 0.01
        %v3863 = vsel %vm3831, %v3769, %v3847
        %v3864 = vsel %vm3832, %v3772, %v3848
        %v3865 = vsel %vm3833, %v3777, %v3849
        %v3866 = vsel %vm3834, %v3780, %v3850
        %v3867 = vsel %vm3835, %v3785, %v3851
        %v3868 = vsel %vm3836, %v3788, %v3852
        %v3869 = vsel %vm3837, %v3793, %v3853
        %v3870 = vsel %vm3838, %v3796, %v3854
        %v3871 = vsel %vm3839, %v3801, %v3855
        %v3872 = vsel %vm3840, %v3804, %v3856
        %v3873 = vsel %vm3841, %v3809, %v3857
        %v3874 = vsel %vm3842, %v3812, %v3858
        %v3875 = vsel %vm3843, %v3817, %v3859
        %v3876 = vsel %vm3844, %v3820, %v3860
        %v3877 = vsel %vm3845, %v3825, %v3861
        %v3878 = vsel %vm3846, %v3828, %v3862
        %v3879 = vadd.f32 %v3666, %v3863
        %v3880 = vadd.f32 %v3667, %v3864
        %v3881 = vadd.f32 %v3668, %v3865
        %v3882 = vadd.f32 %v3669, %v3866
        %v3883 = vadd.f32 %v3670, %v3867
        %v3884 = vadd.f32 %v3671, %v3868
        %v3885 = vadd.f32 %v3672, %v3869
        %v3886 = vadd.f32 %v3673, %v3870
        %v3887 = vadd.f32 %v3674, %v3871
        %v3888 = vadd.f32 %v3675, %v3872
        %v3889 = vadd.f32 %v3676, %v3873
        %v3890 = vadd.f32 %v3677, %v3874
        %v3891 = vadd.f32 %v3678, %v3875
        %v3892 = vadd.f32 %v3679, %v3876
        %v3893 = vadd.f32 %v3680, %v3877
        %v3894 = vadd.f32 %v3681, %v3878
        %v3895 = vld [vmem:[%s9] sm:$0xf]
        %v3896 = vld [vmem:[%s9 + $0x4] sm:$0xf]
        %v3897 = vld [vmem:[%s9 + $0x8] sm:$0xf]
        %v3898 = vld [vmem:[%s9 + $0xc] sm:$0xf]
        %v3899 = vpack.c.bf16 %v3880, %v3879
        %v3900 = vpack.c.bf16 %v3882, %v3881
        %v3901 = vpack.c.bf16 %v3884, %v3883
        %v3902 = vpack.c.bf16 %v3886, %v3885
        %v3903 = vpack.c.bf16 %v3888, %v3887
        %v3904 = vpack.c.bf16 %v3890, %v3889
        %v3905 = vpack.c.bf16 %v3892, %v3891
        %v3906 = vpack.c.bf16 %v3894, %v3893
        %v3907 = vlaneseq
        %v3908 = vshrl.u32 %v3907, 7
        %v3909 = vsub.s32 2, %v3908
        %v3910 = vrot.slane %v471, %v3909
        %v3915 = vunpack.c.l.b16 %v3895
        %v3916 = vunpack.c.l.b16 %v3896
        %v3917 = vunpack.c.l.b16 %v3897
        %v3918 = vunpack.c.l.b16 %v3898
        %v3919 = vpack.c.b16 %v3916, %v3915
        %v3920 = vpack.c.b16 %v3918, %v3917
        %v3924 = vsel %vm923, %v3899, 0
        %v3927 = vsel %vm923, %v3900, 0
        %v3930 = vsel %vm923, %v3901, 0
        %v3933 = vsel %vm923, %v3902, 0
        %v3936 = vsel %vm923, %v3903, 0
        %v3939 = vsel %vm923, %v3904, 0
        %v3942 = vsel %vm923, %v3905, 0
        %v3945 = vsel %vm923, %v3906, 0
        %3947 = vmatprep.subr.bf16.mxu0 0
        %3948 = vmatpush1.bf16.msra.mxu0 %v3919
        %3949 = vmatprep.subr.bf16.mxu0 0
        %3950 = vmatpush1.bf16.msra.mxu0 %v3920
        %3951 = vmatprep.subr.bf16.mxu0 0
        %3952 = vmatpush1.bf16.msra.mxu0 0
        %3953 = vmatprep.subr.bf16.mxu0 0
        %3954 = vmatpush1.bf16.msra.mxu0 0
        %3955 = vmatprep.subr.bf16.mxu0 0
        %3956 = vmatpush1.bf16.msra.mxu0 0
        %3957 = vmatprep.subr.bf16.mxu0 0
        %3958 = vmatpush1.bf16.msra.mxu0 0
        %3959 = vmatprep.subr.bf16.mxu0 0
        %3960 = vmatpush1.bf16.msra.mxu0 0
        %3961 = vmatprep.subr.bf16.mxu0 0
        %3962 = vmatpush1.bf16.msra.mxu0 0
        %3963 = vmatprep.subr.bf16.mxu0 0
        %3964 = vmatpush1.bf16.msra.mxu0 0
        %3965 = vmatprep.subr.bf16.mxu0 0
        %3966 = vmatpush1.bf16.msra.mxu0 0
        %3967 = vmatprep.subr.bf16.mxu0 0
        %3968 = vmatpush1.bf16.msra.mxu0 0
        %3969 = vmatprep.subr.bf16.mxu0 0
        %3970 = vmatpush1.bf16.msra.mxu0 0
        %3971 = vmatprep.subr.bf16.mxu0 0
        %3972 = vmatpush1.bf16.msra.mxu0 0
        %3973 = vmatprep.subr.bf16.mxu0 0
        %3974 = vmatpush1.bf16.msra.mxu0 0
        %3975 = vmatprep.subr.bf16.mxu0 0
        %3976 = vmatpush1.bf16.msra.mxu0 0
        %3977 = vmatprep.subr.bf16.mxu0 0
        %3978 = vmatpush1.bf16.msra.mxu0 0
        %3979 = vmatprep.mubr.bf16.mxu0 0
        %3980 = vmatmul.mubr.bf16.gmra.mrb[0].mxu0 %v3924
        %v3981 = vpop.f32.mrb[0].mxu0
        %v3982 = vadd.f32 %v3910, %v3981
        %v3983 = vpop.f32.mrb[0].mxu0
        %v3984 = vpop.f32.mrb[0].mxu0
        %v3985 = vadd.f32 %v3910, %v3984
        %v3986 = vpop.f32.mrb[0].mxu0
        %3987 = vmatprep.mubr.bf16.mxu0 0
        %3988 = vmatmul.mubr.bf16.gmra.mrb[0].mxu0 %v3927
        %v3989 = vpop.f32.mrb[0].mxu0
        %v3990 = vadd.f32 %v3910, %v3989
        %v3991 = vpop.f32.mrb[0].mxu0
        %v3992 = vpop.f32.mrb[0].mxu0
        %v3993 = vadd.f32 %v3910, %v3992
        %v3994 = vpop.f32.mrb[0].mxu0
        %3995 = vmatprep.mubr.bf16.mxu0 0
        %3996 = vmatmul.mubr.bf16.gmra.mrb[0].mxu0 %v3930
        %v3997 = vpop.f32.mrb[0].mxu0
        %v3998 = vadd.f32 %v3910, %v3997
        %v3999 = vpop.f32.mrb[0].mxu0
        %v4000 = vpop.f32.mrb[0].mxu0
        %v4001 = vadd.f32 %v3910, %v4000
        %v4002 = vpop.f32.mrb[0].mxu0
        %4003 = vmatprep.mubr.bf16.mxu0 0
        %4004 = vmatmul.mubr.bf16.gmra.mrb[0].mxu0 %v3933
        %v4005 = vpop.f32.mrb[0].mxu0
        %v4006 = vadd.f32 %v3910, %v4005
        %v4007 = vpop.f32.mrb[0].mxu0
        %v4008 = vpop.f32.mrb[0].mxu0
        %v4009 = vadd.f32 %v3910, %v4008
        %v4010 = vpop.f32.mrb[0].mxu0
        %4011 = vmatprep.mubr.bf16.mxu0 0
        %4012 = vmatmul.mubr.bf16.gmra.mrb[0].mxu0 %v3936
        %v4013 = vpop.f32.mrb[0].mxu0
        %v4014 = vadd.f32 %v3910, %v4013
        %v4015 = vpop.f32.mrb[0].mxu0
        %v4016 = vpop.f32.mrb[0].mxu0
        %v4017 = vadd.f32 %v3910, %v4016
        %v4018 = vpop.f32.mrb[0].mxu0
        %4019 = vmatprep.mubr.bf16.mxu0 0
        %4020 = vmatmul.mubr.bf16.gmra.mrb[0].mxu0 %v3939
        %v4021 = vpop.f32.mrb[0].mxu0
        %v4022 = vadd.f32 %v3910, %v4021
        %v4023 = vpop.f32.mrb[0].mxu0
        %v4024 = vpop.f32.mrb[0].mxu0
        %v4025 = vadd.f32 %v3910, %v4024
        %v4026 = vpop.f32.mrb[0].mxu0
        %4027 = vmatprep.mubr.bf16.mxu0 0
        %4028 = vmatmul.mubr.bf16.gmra.mrb[0].mxu0 %v3942
        %v4029 = vpop.f32.mrb[0].mxu0
        %v4030 = vadd.f32 %v3910, %v4029
        %v4031 = vpop.f32.mrb[0].mxu0
        %v4032 = vpop.f32.mrb[0].mxu0
        %v4033 = vadd.f32 %v3910, %v4032
        %v4034 = vpop.f32.mrb[0].mxu0
        %4035 = vmatprep.mubr.bf16.mxu0 0
        %4036 = vmatmul.mubr.bf16.gmra.mrb[0].mxu0 %v3945
        %v4037 = vpop.f32.mrb[0].mxu0
        %v4038 = vadd.f32 %v3910, %v4037
        %v4039 = vpop.f32.mrb[0].mxu0
        %v4040 = vpop.f32.mrb[0].mxu0
        %v4041 = vadd.f32 %v3910, %v4040
        %v4042 = vpop.f32.mrb[0].mxu0
        %4043 = vdwg.mxu0
        %vm4044 = vcmp.ge.f32.partialorder %v3982, 0.0
        %vm4045 = vcmp.ge.f32.partialorder %v3985, 0.0
        %vm4046 = vcmp.ge.f32.partialorder %v3990, 0.0
        %vm4047 = vcmp.ge.f32.partialorder %v3993, 0.0
        %vm4048 = vcmp.ge.f32.partialorder %v3998, 0.0
        %vm4049 = vcmp.ge.f32.partialorder %v4001, 0.0
        %vm4050 = vcmp.ge.f32.partialorder %v4006, 0.0
        %vm4051 = vcmp.ge.f32.partialorder %v4009, 0.0
        %vm4052 = vcmp.ge.f32.partialorder %v4014, 0.0
        %vm4053 = vcmp.ge.f32.partialorder %v4017, 0.0
        %vm4054 = vcmp.ge.f32.partialorder %v4022, 0.0
        %vm4055 = vcmp.ge.f32.partialorder %v4025, 0.0
        %vm4056 = vcmp.ge.f32.partialorder %v4030, 0.0
        %vm4057 = vcmp.ge.f32.partialorder %v4033, 0.0
        %vm4058 = vcmp.ge.f32.partialorder %v4038, 0.0
        %vm4059 = vcmp.ge.f32.partialorder %v4041, 0.0
        %v4060 = vmul.f32 %v3982, 0.01
        %v4061 = vmul.f32 %v3985, 0.01
        %v4062 = vmul.f32 %v3990, 0.01
        %v4063 = vmul.f32 %v3993, 0.01
        %v4064 = vmul.f32 %v3998, 0.01
        %v4065 = vmul.f32 %v4001, 0.01
        %v4066 = vmul.f32 %v4006, 0.01
        %v4067 = vmul.f32 %v4009, 0.01
        %v4068 = vmul.f32 %v4014, 0.01
        %v4069 = vmul.f32 %v4017, 0.01
        %v4070 = vmul.f32 %v4022, 0.01
        %v4071 = vmul.f32 %v4025, 0.01
        %v4072 = vmul.f32 %v4030, 0.01
        %v4073 = vmul.f32 %v4033, 0.01
        %v4074 = vmul.f32 %v4038, 0.01
        %v4075 = vmul.f32 %v4041, 0.01
        %v4076 = vsel %vm4044, %v3982, %v4060
        %v4077 = vsel %vm4045, %v3985, %v4061
        %v4078 = vsel %vm4046, %v3990, %v4062
        %v4079 = vsel %vm4047, %v3993, %v4063
        %v4080 = vsel %vm4048, %v3998, %v4064
        %v4081 = vsel %vm4049, %v4001, %v4065
        %v4082 = vsel %vm4050, %v4006, %v4066
        %v4083 = vsel %vm4051, %v4009, %v4067
        %v4084 = vsel %vm4052, %v4014, %v4068
        %v4085 = vsel %vm4053, %v4017, %v4069
        %v4086 = vsel %vm4054, %v4022, %v4070
        %v4087 = vsel %vm4055, %v4025, %v4071
        %v4088 = vsel %vm4056, %v4030, %v4072
        %v4089 = vsel %vm4057, %v4033, %v4073
        %v4090 = vsel %vm4058, %v4038, %v4074
        %v4091 = vsel %vm4059, %v4041, %v4075
        %v4092 = vadd.f32 %v3879, %v4076
        %v4093 = vadd.f32 %v3880, %v4077
        %v4094 = vadd.f32 %v3881, %v4078
        %v4095 = vadd.f32 %v3882, %v4079
        %v4096 = vadd.f32 %v3883, %v4080
        %v4097 = vadd.f32 %v3884, %v4081
        %v4098 = vadd.f32 %v3885, %v4082
        %v4099 = vadd.f32 %v3886, %v4083
        %v4100 = vadd.f32 %v3887, %v4084
        %v4101 = vadd.f32 %v3888, %v4085
        %v4102 = vadd.f32 %v3889, %v4086
        %v4103 = vadd.f32 %v3890, %v4087
        %v4104 = vadd.f32 %v3891, %v4088
        %v4105 = vadd.f32 %v3892, %v4089
        %v4106 = vadd.f32 %v3893, %v4090
        %v4107 = vadd.f32 %v3894, %v4091
        %v4108 = vld [vmem:[%s10] sm:$0xf]
        %v4109 = vld [vmem:[%s10 + $0x4] sm:$0xf]
        %v4110 = vld [vmem:[%s10 + $0x8] sm:$0xf]
        %v4111 = vld [vmem:[%s10 + $0xc] sm:$0xf]
        %v4112 = vpack.c.bf16 %v4093, %v4092
        %v4113 = vpack.c.bf16 %v4095, %v4094
        %v4114 = vpack.c.bf16 %v4097, %v4096
        %v4115 = vpack.c.bf16 %v4099, %v4098
        %v4116 = vpack.c.bf16 %v4101, %v4100
        %v4117 = vpack.c.bf16 %v4103, %v4102
        %v4118 = vpack.c.bf16 %v4105, %v4104
        %v4119 = vpack.c.bf16 %v4107, %v4106
        %v4120 = vld [vmem:[%s13] sm:$0x1]
        %v4122 = vlaneseq
        %v4123 = vshrl.u32 %v4122, 7
        %v4124 = vsub.s32 0, %v4123
        %v4125 = vrot.slane %v4120, %v4124
        %v4131 = vunpack.c.l.b16 %v4108
        %v4132 = vunpack.c.l.b16 %v4109
        %v4133 = vunpack.c.l.b16 %v4110
        %v4134 = vunpack.c.l.b16 %v4111
        %v4135 = vpack.c.b16 %v4132, %v4131
        %v4136 = vpack.c.b16 %v4134, %v4133
        %v4140 = vsel %vm923, %v4112, 0
        %v4143 = vsel %vm923, %v4113, 0
        %v4146 = vsel %vm923, %v4114, 0
        %v4149 = vsel %vm923, %v4115, 0
        %v4152 = vsel %vm923, %v4116, 0
        %v4155 = vsel %vm923, %v4117, 0
        %v4158 = vsel %vm923, %v4118, 0
        %v4161 = vsel %vm923, %v4119, 0
        %4163 = vmatprep.subr.bf16.mxu0 0
        %4164 = vmatpush1.bf16.msra.mxu0 %v4135
        %4165 = vmatprep.subr.bf16.mxu0 0
        %4166 = vmatpush1.bf16.msra.mxu0 %v4136
        %4167 = vmatprep.subr.bf16.mxu0 0
        %4168 = vmatpush1.bf16.msra.mxu0 0
        %4169 = vmatprep.subr.bf16.mxu0 0
        %4170 = vmatpush1.bf16.msra.mxu0 0
        %4171 = vmatprep.subr.bf16.mxu0 0
        %4172 = vmatpush1.bf16.msra.mxu0 0
        %4173 = vmatprep.subr.bf16.mxu0 0
        %4174 = vmatpush1.bf16.msra.mxu0 0
        %4175 = vmatprep.subr.bf16.mxu0 0
        %4176 = vmatpush1.bf16.msra.mxu0 0
        %4177 = vmatprep.subr.bf16.mxu0 0
        %4178 = vmatpush1.bf16.msra.mxu0 0
        %4179 = vmatprep.subr.bf16.mxu0 0
        %4180 = vmatpush1.bf16.msra.mxu0 0
        %4181 = vmatprep.subr.bf16.mxu0 0
        %4182 = vmatpush1.bf16.msra.mxu0 0
        %4183 = vmatprep.subr.bf16.mxu0 0
        %4184 = vmatpush1.bf16.msra.mxu0 0
        %4185 = vmatprep.subr.bf16.mxu0 0
        %4186 = vmatpush1.bf16.msra.mxu0 0
        %4187 = vmatprep.subr.bf16.mxu0 0
        %4188 = vmatpush1.bf16.msra.mxu0 0
        %4189 = vmatprep.subr.bf16.mxu0 0
        %4190 = vmatpush1.bf16.msra.mxu0 0
        %4191 = vmatprep.subr.bf16.mxu0 0
        %4192 = vmatpush1.bf16.msra.mxu0 0
        %4193 = vmatprep.subr.bf16.mxu0 0
        %4194 = vmatpush1.bf16.msra.mxu0 0
        %4195 = vmatprep.mubr.bf16.mxu0 0
        %4196 = vmatmul.mubr.bf16.gmra.mrb[0].mxu0 %v4140
        %v4197 = vpop.f32.mrb[0].mxu0
        %v4198 = vadd.f32 %v4125, %v4197
        %v4199 = vpop.f32.mrb[0].mxu0
        %v4200 = vpop.f32.mrb[0].mxu0
        %v4201 = vadd.f32 %v4125, %v4200
        %v4202 = vpop.f32.mrb[0].mxu0
        %4203 = vmatprep.mubr.bf16.mxu0 0
        %4204 = vmatmul.mubr.bf16.gmra.mrb[0].mxu0 %v4143
        %v4205 = vpop.f32.mrb[0].mxu0
        %v4206 = vadd.f32 %v4125, %v4205
        %v4207 = vpop.f32.mrb[0].mxu0
        %v4208 = vpop.f32.mrb[0].mxu0
        %v4209 = vadd.f32 %v4125, %v4208
        %v4210 = vpop.f32.mrb[0].mxu0
        %4211 = vmatprep.mubr.bf16.mxu0 0
        %4212 = vmatmul.mubr.bf16.gmra.mrb[0].mxu0 %v4146
        %v4213 = vpop.f32.mrb[0].mxu0
        %v4214 = vadd.f32 %v4125, %v4213
        %v4215 = vpop.f32.mrb[0].mxu0
        %v4216 = vpop.f32.mrb[0].mxu0
        %v4217 = vadd.f32 %v4125, %v4216
        %v4218 = vpop.f32.mrb[0].mxu0
        %4219 = vmatprep.mubr.bf16.mxu0 0
        %4220 = vmatmul.mubr.bf16.gmra.mrb[0].mxu0 %v4149
        %v4221 = vpop.f32.mrb[0].mxu0
        %v4222 = vadd.f32 %v4125, %v4221
        %v4223 = vpop.f32.mrb[0].mxu0
        %v4224 = vpop.f32.mrb[0].mxu0
        %v4225 = vadd.f32 %v4125, %v4224
        %v4226 = vpop.f32.mrb[0].mxu0
        %4227 = vmatprep.mubr.bf16.mxu0 0
        %4228 = vmatmul.mubr.bf16.gmra.mrb[0].mxu0 %v4152
        %v4229 = vpop.f32.mrb[0].mxu0
        %v4230 = vadd.f32 %v4125, %v4229
        %v4231 = vpop.f32.mrb[0].mxu0
        %v4232 = vpop.f32.mrb[0].mxu0
        %v4233 = vadd.f32 %v4125, %v4232
        %v4234 = vpop.f32.mrb[0].mxu0
        %4235 = vmatprep.mubr.bf16.mxu0 0
        %4236 = vmatmul.mubr.bf16.gmra.mrb[0].mxu0 %v4155
        %v4237 = vpop.f32.mrb[0].mxu0
        %v4238 = vadd.f32 %v4125, %v4237
        %v4239 = vpop.f32.mrb[0].mxu0
        %v4240 = vpop.f32.mrb[0].mxu0
        %v4241 = vadd.f32 %v4125, %v4240
        %v4242 = vpop.f32.mrb[0].mxu0
        %4243 = vmatprep.mubr.bf16.mxu0 0
        %4244 = vmatmul.mubr.bf16.gmra.mrb[0].mxu0 %v4158
        %v4245 = vpop.f32.mrb[0].mxu0
        %v4246 = vadd.f32 %v4125, %v4245
        %v4247 = vpop.f32.mrb[0].mxu0
        %v4248 = vpop.f32.mrb[0].mxu0
        %v4249 = vadd.f32 %v4125, %v4248
        %v4250 = vpop.f32.mrb[0].mxu0
        %4251 = vmatprep.mubr.bf16.mxu0 0
        %4252 = vmatmul.mubr.bf16.gmra.mrb[0].mxu0 %v4161
        %v4253 = vpop.f32.mrb[0].mxu0
        %v4254 = vadd.f32 %v4125, %v4253
        %v4255 = vpop.f32.mrb[0].mxu0
        %v4256 = vpop.f32.mrb[0].mxu0
        %v4257 = vadd.f32 %v4125, %v4256
        %v4258 = vpop.f32.mrb[0].mxu0
        %4259 = vdwg.mxu0
        %4260 = vst [vmem:[%s461] sm:$0xff] %v4198
        %4261 = vst [vmem:[%s461 + $0x8] sm:$0xff] %v4201
        %4262 = vst [vmem:[%s461 + $0x10] sm:$0xff] %v4206
        %4263 = vst [vmem:[%s461 + $0x18] sm:$0xff] %v4209
        %4264 = vst [vmem:[%s461 + $0x20] sm:$0xff] %v4214
        %4265 = vst [vmem:[%s461 + $0x28] sm:$0xff] %v4217
        %4266 = vst [vmem:[%s461 + $0x30] sm:$0xff] %v4222
        %4267 = vst [vmem:[%s461 + $0x38] sm:$0xff] %v4225
        %4268 = vst [vmem:[%s461 + $0x40] sm:$0xff] %v4230
        %4269 = vst [vmem:[%s461 + $0x48] sm:$0xff] %v4233
        %4270 = vst [vmem:[%s461 + $0x50] sm:$0xff] %v4238
        %4271 = vst [vmem:[%s461 + $0x58] sm:$0xff] %v4241
        %4272 = vst [vmem:[%s461 + $0x60] sm:$0xff] %v4246
        %4273 = vst [vmem:[%s461 + $0x68] sm:$0xff] %v4249
        %4274 = vst [vmem:[%s461 + $0x70] sm:$0xff] %v4254
        %4275 = vst [vmem:[%s461 + $0x78] sm:$0xff] %v4257
        %s4276 = sand.u32 %s335, 1
        %s4277 = scalar_lea.sflag [#allocation3], %s4276
        %s4278 = sand.u32 %s335, 1
        %s4279 = smul.addr %s4278, 128
        %s4280 = scalar_lea.vmem [#allocation2], %s4279
        // Predicated region
        $region77: #{tpu_custom_call.1} parent=75 // pred_check
          %p4281 = pneg %p345
        $region78: #{tpu_custom_call.1} parent=75 // pred_check_branch
          %4283 = sbr.rel (%p4281) target = $region80
        $region79: #{tpu_custom_call.1} parent=75 // pred_region
          %s4284 = smul.u32 16, %s28
          %s4286 = ssub.s32 2048, 2048
          %4287 = vsyncadd %s4277, %s4286
          %s4288 = smul.addr %s4284, 128
          %s4289 = scalar_lea.hbm %s14, %s4288
          %s4290 = sshll.u32 %s4280, 4
          %s4291 = int_to_ptr.vmem [resolvable:$true] %s4290
          %4296 = dma.vmem_to_hbm [thread:$0]  %s4291, 2048, %s4289, %s4277, 128, 128, 8
        $region80: #{tpu_custom_call.1} parent=75 // pred_fallthru
          _
      $region76: #{tpu_custom_call.1} parent=5 // pred_fallthru
        _
      %p4297 = scmp.le.s32.totalorder 2, %s23
      // Predicated region
      $region81: #{tpu_custom_call.1} parent=5 // pred_check
        %p4298 = pneg %p4297
      $region82: #{tpu_custom_call.1} parent=5 // pred_check_branch
        %4300 = sbr.rel (%p4298) target = $region84
      $region83: #{tpu_custom_call.1} parent=5 // pred_region
        %s4301 = ssub.s32 %s23, 2
        // Predicated region
        $region85: #{tpu_custom_call.1} parent=83 // pred_check
          %p4302 = pneg %p351
        $region86: #{tpu_custom_call.1} parent=83 // pred_check_branch
          %4304 = sbr.rel (%p4302) target = $region88
        $region87: #{tpu_custom_call.1} parent=83 // pred_region
          %s4305 = sand.u32 %s336, 1
          %s4306 = scalar_lea.sflag [#allocation3], %s4305
          %s4307 = sand.u32 %s336, 1
          %s4308 = smul.addr %s4307, 128
          %s4309 = scalar_lea.vmem [#allocation2], %s4308
          %4310 = dma.done %s4306, 2048
        $region88: #{tpu_custom_call.1} parent=83 // pred_fallthru
          _
      $region84: #{tpu_custom_call.1} parent=5 // pred_fallthru
        _
    $region6: #{tpu_custom_call.1} parent=1 // loop_footer
      %s27 = sadd.s32 1, %s23
    $region7: #{tpu_custom_call.1} parent=1 // loop_footer_branch
      %22 = sbr.rel target = $region3
    $region8: #{tpu_custom_call.1} parent=1 // loop_exit
      _
    %4311 = vsyncpa [#allocation3], 1
    %s4312 = scalar_lea.sflag [#allocation3], 1
    %4313 = vsyncpa %s4312, 1

</llo_original>
